<compile_context>
chip_gen: v5e
topology: v5e:2x2
jax: 0.10.0
libtpu: 0.0.40
codegen_flags: <defaults>
</compile_context>

<pallas_src>
import jax
import jax.numpy as jnp
from jax import lax
from jax.experimental import pallas as pl
from jax.experimental.pallas import tpu as pltpu

LEAK = 0.333   # scn default leakiness
PADL = 16      # xpad interior column offset = one bf16 sublane tile


def _resblock_kernel(x_ref, w1_ref, w2_ref, b_ref, out_ref, xpad, patches):
    # x_ref  : (1, H, W, C)  f32   one batch element (NHWC)
    # w1_ref : (12*C, C)     bf16  conv1 weight * BN1 scale, row = k*C + ci
    #                              (k = dy*3 + dx), rows 9C..12C-1 are zero
    # w2_ref : (12*C, C)     bf16  conv2 weight * BN2 scale, same layout
    # b_ref  : (2, C)        f32   [bias1, bias2] (BN biases; scales folded)
    # out_ref: (1, H, W, C)  f32
    # xpad   : VMEM (H+2, PADL+W+16, C) bf16  activations, interior at
    #          rows [1, H+1), cols [PADL, PADL+W); rows 0/H+1 are the dy halo
    # patches: VMEM (H*W, 12*C) bf16  im2col patch matrix (K padded to 12C)
    H, W, C = out_ref.shape[1], out_ref.shape[2], out_ref.shape[3]
    HW = H * W

    # Column-edge register masks: the w==0 / w==W-1 taps read the (garbage)
    # columns PADL-1 / PADL+W and are zeroed in-register (VALU slack slot)
    # instead of maintaining zero border columns with masked stores.
    colv = lax.broadcasted_iota(jnp.int32, (W, C), 0)
    first_col = colv == 0
    last_col = colv == W - 1
    zero_tap = jnp.zeros((H, W, C), jnp.bfloat16)

    # Zero the dy-halo rows every grid step (NOT gated on program_id, so each
    # TensorCore's private scratch stays correct under "parallel" sharding).
    zrow = jnp.zeros((1, W, C), jnp.bfloat16)
    xpad[0:1, PADL:PADL + W, :] = zrow
    xpad[H + 1:H + 2, PADL:PADL + W, :] = zrow

    def im2col():
        # Gather the 9 taps as three 128-lane groups (4 taps x C=32 lanes,
        # last group zero-padded) -> every patches store is a dense, aligned
        # full-lane store.  K order matches the weight layout (k = dy*3+dx).
        def tap(k):
            dy, dx = k // 3, k % 3
            t = xpad[dy:dy + H, PADL - 1 + dx:PADL - 1 + dx + W, :]
            if dx == 0:
                t = jnp.where(first_col, 0.0, t)
            elif dx == 2:
                t = jnp.where(last_col, 0.0, t)
            return t

        for g in range(3):
            taps = [tap(4 * g + j) if 4 * g + j < 9 else zero_tap
                    for j in range(4)]
            grp = jnp.concatenate(taps, axis=-1)            # (H, W, 4C) bf16
            patches[:, 4 * C * g:4 * C * (g + 1)] = grp.reshape(HW, 4 * C)

    # ---- conv1: stage x (bf16, sublane-aligned interior), one MXU matmul ---
    xpad[1:1 + H, PADL:PADL + W, :] = x_ref[0].astype(jnp.bfloat16)
    im2col()
    acc1 = jnp.dot(patches[...], w1_ref[...],
                   preferred_element_type=jnp.float32)       # (HW, C) f32

    # ---- BN1 (scale folded into w1) + LeakyReLU ----------------------------
    act1 = acc1 + b_ref[0:1, :]
    act1 = jnp.where(act1 > 0, act1, LEAK * act1)

    # ---- conv2: restage (halo rows untouched, still zero) ------------------
    xpad[1:1 + H, PADL:PADL + W, :] = act1.reshape(H, W, C).astype(jnp.bfloat16)
    im2col()
    acc2 = jnp.dot(patches[...], w2_ref[...],
                   preferred_element_type=jnp.float32)       # (HW, C) f32

    # ---- BN2 + residual add + LeakyReLU (f32 residual from x_ref) ----------
    y = acc2 + b_ref[1:2, :] + x_ref[0].reshape(HW, C)
    y = jnp.where(y > 0, y, LEAK * y)
    out_ref[0] = y.reshape(H, W, C).astype(out_ref.dtype)


def _fold_weight(w, scale, C):
    """(9, Cin, Cout) f32 -> (12C, Cout) bf16 with BN scale folded, K zero-padded."""
    wm = (w * scale[None, None, :]).reshape(9 * C, C)
    wm = jnp.concatenate([wm, jnp.zeros((3 * C, C), wm.dtype)], axis=0)
    return wm.astype(jnp.bfloat16)


def sparse_residual_block(x, w1, w2, sb1, sb2):
    """x: (N,H,W,C) f32; w*: (9, Cin, Cout), k = dy*3+dx; sb*: (2,C) [scale, bias]."""
    N, H, W, C = x.shape
    assert 4 * C == 128, "128-lane patch groups assume C == 32"

    w1m = _fold_weight(w1, sb1[0], C)
    w2m = _fold_weight(w2, sb2[0], C)
    bias = jnp.stack([sb1[1], sb2[1]]).astype(jnp.float32)    # (2, C)
    xpad_cols = PADL + W + 16                                 # aligned halo buffer

    return pl.pallas_call(
        _resblock_kernel,
        out_shape=jax.ShapeDtypeStruct((N, H, W, C), x.dtype),
        grid_spec=pltpu.PrefetchScalarGridSpec(
            num_scalar_prefetch=0,
            grid=(N,),
            in_specs=[
                pl.BlockSpec((1, H, W, C), lambda n: (n, 0, 0, 0)),
                pl.BlockSpec((12 * C, C), lambda n: (0, 0)),
                pl.BlockSpec((12 * C, C), lambda n: (0, 0)),
                pl.BlockSpec((2, C), lambda n: (0, 0)),
            ],
            out_specs=pl.BlockSpec((1, H, W, C), lambda n: (n, 0, 0, 0)),
            scratch_shapes=[
                pltpu.VMEM((H + 2, xpad_cols, C), jnp.bfloat16),  # activations
                pltpu.VMEM((H * W, 12 * C), jnp.bfloat16),        # im2col patches
            ],
        ),
        compiler_params=pltpu.CompilerParams(
            dimension_semantics=("parallel",),
            vmem_limit_bytes=32 * 1024 * 1024),
    )(x, w1m, w2m, bias)


def _reference(x, w1, w2, sb1, sb2):
    """Pure-JAX f32 reference (dense equivalent of the scn block)."""
    C = x.shape[-1]

    def conv(inp, w):
        return lax.conv_general_dilated(
            inp, w.reshape(3, 3, C, C), (1, 1), "SAME",
            dimension_numbers=("NHWC", "HWIO", "NHWC"))

    h = conv(x, w1)
    h = h * sb1[0] + sb1[1]
    h = jnp.where(h > 0, h, LEAK * h)
    h = conv(h, w2)
    h = h * sb2[0] + sb2[1]
    y = h + x
    return jnp.where(y > 0, y, LEAK * y)


if __name__ == "__main__":
    # Small shapes: batch=2, inplanes=outplanes=32, spatial 16x16, nplanes=1.
    N, H, W, C = 2, 16, 16, 32
    key = jax.random.PRNGKey(0)
    k_x, k_w1, k_w2, k_g1, k_b1, k_m1, k_v1, k_g2, k_b2, k_m2, k_v2 = (
        jax.random.split(key, 11))

    x = jax.random.normal(k_x, (N, H, W, C), jnp.float32)

    # Conv weights, fan-in scaled.  Stored as (9, Cin, Cout), k = dy*3 + dx.
    fan_in = 9 * C
    w1 = jax.random.normal(k_w1, (9, C, C), jnp.float32) / jnp.sqrt(fan_in)
    w2 = jax.random.normal(k_w2, (9, C, C), jnp.float32) / jnp.sqrt(fan_in)

    # BatchNorm (eval-mode) params folded into per-channel scale/bias.
    eps = 1e-4  # scn BatchNormalization default eps
    gamma1 = 1.0 + 0.1 * jax.random.normal(k_g1, (C,), jnp.float32)
    beta1 = 0.1 * jax.random.normal(k_b1, (C,), jnp.float32)
    mean1 = 0.1 * jax.random.normal(k_m1, (C,), jnp.float32)
    var1 = jax.random.uniform(k_v1, (C,), jnp.float32, 0.5, 1.5)
    gamma2 = 1.0 + 0.1 * jax.random.normal(k_g2, (C,), jnp.float32)
    beta2 = 0.1 * jax.random.normal(k_b2, (C,), jnp.float32)
    mean2 = 0.1 * jax.random.normal(k_m2, (C,), jnp.float32)
    var2 = jax.random.uniform(k_v2, (C,), jnp.float32, 0.5, 1.5)

    scale1 = gamma1 / jnp.sqrt(var1 + eps)
    bias1 = beta1 - mean1 * scale1
    scale2 = gamma2 / jnp.sqrt(var2 + eps)
    bias2 = beta2 - mean2 * scale2
    sb1 = jnp.stack([scale1, bias1])  # (2, C)
    sb2 = jnp.stack([scale2, bias2])  # (2, C)

    out = sparse_residual_block(x, w1, w2, sb1, sb2)
    out = jax.block_until_ready(out)

    ref = jax.block_until_ready(_reference(x, w1, w2, sb1, sb2))
    assert out.shape == (N, H, W, C)
    # Tolerance reflects bf16 matmul operands (f32 accumulation) vs f32 reference.
    assert jnp.allclose(out, ref, atol=2e-2, rtol=2e-2), (
        float(jnp.max(jnp.abs(out - ref))))

    print("KERNEL_OK")
</pallas_src>

<mosaic_0001>
module attributes {stable_mosaic.version = 11 : i64} {
  func.func @_resblock_kernel(%arg0: i32, %arg1: memref<1x16x16x32xf32, #tpu.memory_space<vmem>>, %arg2: memref<384x32xbf16, #tpu.memory_space<vmem>>, %arg3: memref<384x32xbf16, #tpu.memory_space<vmem>>, %arg4: memref<2x32xf32, #tpu.memory_space<vmem>>, %arg5: memref<1x16x16x32xf32, #tpu.memory_space<vmem>>, %arg6: memref<18x48x32xbf16, #tpu.memory_space<vmem>>, %arg7: memref<256x384xbf16, #tpu.memory_space<vmem>>) attributes {dimension_semantics = [#tpu.dimension_semantics<parallel>], iteration_bounds = array<i64: 2>, scalar_prefetch = 0 : i64, scratch_operands = 2 : i64, tpu.core_type = #tpu.core_type<tc>, window_params = [{transform_indices = @transform_0, window_bounds = array<i64: 1, 16, 16, 32>}, {pipeline_mode = #tpu.pipeline_mode<synchronous>, transform_indices = @transform_1, window_bounds = array<i64: 384, 32>}, {pipeline_mode = #tpu.pipeline_mode<synchronous>, transform_indices = @transform_2, window_bounds = array<i64: 384, 32>}, {pipeline_mode = #tpu.pipeline_mode<synchronous>, transform_indices = @transform_3, window_bounds = array<i64: 2, 32>}, {transform_indices = @transform_4, window_bounds = array<i64: 1, 16, 16, 32>}]} {
    %0 = tpu.iota {dimensions = array<i32: 0>} : vector<16x32xi32>
    %c0_i32 = arith.constant 0 : i32
    %1 = vector.broadcast %c0_i32 : i32 to vector<16x32xi32>
    %2 = arith.cmpi eq, %0, %1 : vector<16x32xi32>
    %c15_i32 = arith.constant 15 : i32
    %3 = vector.broadcast %c15_i32 : i32 to vector<16x32xi32>
    %4 = arith.cmpi eq, %0, %3 : vector<16x32xi32>
    %cst = arith.constant 0.000000e+00 : bf16
    %5 = vector.broadcast %cst : bf16 to vector<16x16x32xbf16>
    %cst_0 = arith.constant 0.000000e+00 : bf16
    %6 = vector.broadcast %cst_0 : bf16 to vector<1x16x32xbf16>
    %c0 = arith.constant 0 : index
    %c16 = arith.constant 16 : index
    %c0_1 = arith.constant 0 : index
    %7 = vector.load %arg6[%c0, %c16, %c0_1] : memref<18x48x32xbf16, #tpu.memory_space<vmem>>, vector<1x16x32xbf16>
    tpu.vector_store %arg6[%c0, %c16, %c0_1], %6 {strides = array<i32>} : memref<18x48x32xbf16, #tpu.memory_space<vmem>>, vector<1x16x32xbf16>,
    %c17 = arith.constant 17 : index
    %c16_2 = arith.constant 16 : index
    %c0_3 = arith.constant 0 : index
    %8 = vector.load %arg6[%c17, %c16_2, %c0_3] : memref<18x48x32xbf16, #tpu.memory_space<vmem>>, vector<1x16x32xbf16>
    tpu.vector_store %arg6[%c17, %c16_2, %c0_3], %6 {strides = array<i32>} : memref<18x48x32xbf16, #tpu.memory_space<vmem>>, vector<1x16x32xbf16>,
    %c0_4 = arith.constant 0 : index
    %c0_5 = arith.constant 0 : index
    %c0_6 = arith.constant 0 : index
    %c0_7 = arith.constant 0 : index
    %9 = vector.load %arg1[%c0_4, %c0_5, %c0_6, %c0_7] : memref<1x16x16x32xf32, #tpu.memory_space<vmem>>, vector<1x16x16x32xf32>
    %10 = vector.shape_cast %9 : vector<1x16x16x32xf32> to vector<16x16x32xf32>
    %11 = arith.truncf %10 : vector<16x16x32xf32> to vector<16x16x32xbf16>
    %c1 = arith.constant 1 : index
    %c16_8 = arith.constant 16 : index
    %c0_9 = arith.constant 0 : index
    %12 = vector.load %arg6[%c1, %c16_8, %c0_9] : memref<18x48x32xbf16, #tpu.memory_space<vmem>>, vector<16x16x32xbf16>
    tpu.vector_store %arg6[%c1, %c16_8, %c0_9], %11 {strides = array<i32>} : memref<18x48x32xbf16, #tpu.memory_space<vmem>>, vector<16x16x32xbf16>,
    %c0_10 = arith.constant 0 : index
    %c15 = arith.constant 15 : index
    %c0_11 = arith.constant 0 : index
    %13 = vector.load %arg6[%c0_10, %c15, %c0_11] : memref<18x48x32xbf16, #tpu.memory_space<vmem>>, vector<16x16x32xbf16>
    %cst_12 = arith.constant 0.000000e+00 : f32
    %14 = arith.truncf %cst_12 : f32 to bf16
    %15 = vector.shape_cast %2 : vector<16x32xi1> to vector<1x16x32xi1>
    %16 = vector.broadcast %15 : vector<1x16x32xi1> to vector<16x16x32xi1>
    %17 = vector.broadcast %14 : bf16 to vector<16x16x32xbf16>
    %18 = arith.select %16, %17, %13 : vector<16x16x32xi1>, vector<16x16x32xbf16>
    %c0_13 = arith.constant 0 : index
    %c16_14 = arith.constant 16 : index
    %c0_15 = arith.constant 0 : index
    %19 = vector.load %arg6[%c0_13, %c16_14, %c0_15] : memref<18x48x32xbf16, #tpu.memory_space<vmem>>, vector<16x16x32xbf16>
    %c0_16 = arith.constant 0 : index
    %c17_17 = arith.constant 17 : index
    %c0_18 = arith.constant 0 : index
    %20 = vector.load %arg6[%c0_16, %c17_17, %c0_18] : memref<18x48x32xbf16, #tpu.memory_space<vmem>>, vector<16x16x32xbf16>
    %cst_19 = arith.constant 0.000000e+00 : f32
    %21 = arith.truncf %cst_19 : f32 to bf16
    %22 = vector.shape_cast %4 : vector<16x32xi1> to vector<1x16x32xi1>
    %23 = vector.broadcast %22 : vector<1x16x32xi1> to vector<16x16x32xi1>
    %24 = vector.broadcast %21 : bf16 to vector<16x16x32xbf16>
    %25 = arith.select %23, %24, %20 : vector<16x16x32xi1>, vector<16x16x32xbf16>
    %c1_20 = arith.constant 1 : index
    %c15_21 = arith.constant 15 : index
    %c0_22 = arith.constant 0 : index
    %26 = vector.load %arg6[%c1_20, %c15_21, %c0_22] : memref<18x48x32xbf16, #tpu.memory_space<vmem>>, vector<16x16x32xbf16>
    %cst_23 = arith.constant 0.000000e+00 : f32
    %27 = arith.truncf %cst_23 : f32 to bf16
    %28 = vector.shape_cast %2 : vector<16x32xi1> to vector<1x16x32xi1>
    %29 = vector.broadcast %28 : vector<1x16x32xi1> to vector<16x16x32xi1>
    %30 = vector.broadcast %27 : bf16 to vector<16x16x32xbf16>
    %31 = arith.select %29, %30, %26 : vector<16x16x32xi1>, vector<16x16x32xbf16>
    %32 = tpu.concatenate %18, %19, %25, %31 in 2 : vector<16x16x32xbf16>, vector<16x16x32xbf16>, vector<16x16x32xbf16>, vector<16x16x32xbf16> -> vector<16x16x128xbf16>
    %33 = vector.shape_cast %32 : vector<16x16x128xbf16> to vector<256x128xbf16>
    %c0_24 = arith.constant 0 : index
    %c0_25 = arith.constant 0 : index
    %34 = vector.load %arg7[%c0_24, %c0_25] : memref<256x384xbf16, #tpu.memory_space<vmem>>, vector<256x128xbf16>
    tpu.vector_store %arg7[%c0_24, %c0_25], %33 {strides = array<i32>} : memref<256x384xbf16, #tpu.memory_space<vmem>>, vector<256x128xbf16>,
    %c1_26 = arith.constant 1 : index
    %c16_27 = arith.constant 16 : index
    %c0_28 = arith.constant 0 : index
    %35 = vector.load %arg6[%c1_26, %c16_27, %c0_28] : memref<18x48x32xbf16, #tpu.memory_space<vmem>>, vector<16x16x32xbf16>
    %c1_29 = arith.constant 1 : index
    %c17_30 = arith.constant 17 : index
    %c0_31 = arith.constant 0 : index
    %36 = vector.load %arg6[%c1_29, %c17_30, %c0_31] : memref<18x48x32xbf16, #tpu.memory_space<vmem>>, vector<16x16x32xbf16>
    %cst_32 = arith.constant 0.000000e+00 : f32
    %37 = arith.truncf %cst_32 : f32 to bf16
    %38 = vector.shape_cast %4 : vector<16x32xi1> to vector<1x16x32xi1>
    %39 = vector.broadcast %38 : vector<1x16x32xi1> to vector<16x16x32xi1>
    %40 = vector.broadcast %37 : bf16 to vector<16x16x32xbf16>
    %41 = arith.select %39, %40, %36 : vector<16x16x32xi1>, vector<16x16x32xbf16>
    %c2 = arith.constant 2 : index
    %c15_33 = arith.constant 15 : index
    %c0_34 = arith.constant 0 : index
    %42 = vector.load %arg6[%c2, %c15_33, %c0_34] : memref<18x48x32xbf16, #tpu.memory_space<vmem>>, vector<16x16x32xbf16>
    %cst_35 = arith.constant 0.000000e+00 : f32
    %43 = arith.truncf %cst_35 : f32 to bf16
    %44 = vector.shape_cast %2 : vector<16x32xi1> to vector<1x16x32xi1>
    %45 = vector.broadcast %44 : vector<1x16x32xi1> to vector<16x16x32xi1>
    %46 = vector.broadcast %43 : bf16 to vector<16x16x32xbf16>
    %47 = arith.select %45, %46, %42 : vector<16x16x32xi1>, vector<16x16x32xbf16>
    %c2_36 = arith.constant 2 : index
    %c16_37 = arith.constant 16 : index
    %c0_38 = arith.constant 0 : index
    %48 = vector.load %arg6[%c2_36, %c16_37, %c0_38] : memref<18x48x32xbf16, #tpu.memory_space<vmem>>, vector<16x16x32xbf16>
    %49 = tpu.concatenate %35, %41, %47, %48 in 2 : vector<16x16x32xbf16>, vector<16x16x32xbf16>, vector<16x16x32xbf16>, vector<16x16x32xbf16> -> vector<16x16x128xbf16>
    %50 = vector.shape_cast %49 : vector<16x16x128xbf16> to vector<256x128xbf16>
    %c0_39 = arith.constant 0 : index
    %c128 = arith.constant 128 : index
    %51 = vector.load %arg7[%c0_39, %c128] : memref<256x384xbf16, #tpu.memory_space<vmem>>, vector<256x128xbf16>
    tpu.vector_store %arg7[%c0_39, %c128], %50 {strides = array<i32>} : memref<256x384xbf16, #tpu.memory_space<vmem>>, vector<256x128xbf16>,
    %c2_40 = arith.constant 2 : index
    %c17_41 = arith.constant 17 : index
    %c0_42 = arith.constant 0 : index
    %52 = vector.load %arg6[%c2_40, %c17_41, %c0_42] : memref<18x48x32xbf16, #tpu.memory_space<vmem>>, vector<16x16x32xbf16>
    %cst_43 = arith.constant 0.000000e+00 : f32
    %53 = arith.truncf %cst_43 : f32 to bf16
    %54 = vector.shape_cast %4 : vector<16x32xi1> to vector<1x16x32xi1>
    %55 = vector.broadcast %54 : vector<1x16x32xi1> to vector<16x16x32xi1>
    %56 = vector.broadcast %53 : bf16 to vector<16x16x32xbf16>
    %57 = arith.select %55, %56, %52 : vector<16x16x32xi1>, vector<16x16x32xbf16>
    %58 = tpu.concatenate %57, %5, %5, %5 in 2 : vector<16x16x32xbf16>, vector<16x16x32xbf16>, vector<16x16x32xbf16>, vector<16x16x32xbf16> -> vector<16x16x128xbf16>
    %59 = vector.shape_cast %58 : vector<16x16x128xbf16> to vector<256x128xbf16>
    %c0_44 = arith.constant 0 : index
    %c256 = arith.constant 256 : index
    %60 = vector.load %arg7[%c0_44, %c256] : memref<256x384xbf16, #tpu.memory_space<vmem>>, vector<256x128xbf16>
    tpu.vector_store %arg7[%c0_44, %c256], %59 {strides = array<i32>} : memref<256x384xbf16, #tpu.memory_space<vmem>>, vector<256x128xbf16>,
    %c0_45 = arith.constant 0 : index
    %c0_46 = arith.constant 0 : index
    %61 = vector.load %arg7[%c0_45, %c0_46] : memref<256x384xbf16, #tpu.memory_space<vmem>>, vector<256x384xbf16>
    %c0_47 = arith.constant 0 : index
    %c0_48 = arith.constant 0 : index
    %62 = vector.load %arg2[%c0_47, %c0_48] : memref<384x32xbf16, #tpu.memory_space<vmem>>, vector<384x32xbf16>
    %cst_49 = arith.constant dense<0.000000e+00> : vector<256x32xf32>
    %63 = tpu.matmul %61, %62, %cst_49 {dimension_numbers = #tpu.dot_dimension_numbers<[1], [0], [0], [1], [0, 0, 1, 1], [], []>} : vector<256x384xbf16>, vector<384x32xbf16>, vector<256x32xf32> -> vector<256x32xf32>
    %c0_50 = arith.constant 0 : index
    %c0_51 = arith.constant 0 : index
    %64 = vector.load %arg4[%c0_50, %c0_51] : memref<2x32xf32, #tpu.memory_space<vmem>>, vector<1x32xf32>
    %65 = vector.broadcast %64 : vector<1x32xf32> to vector<256x32xf32>
    %66 = arith.addf %63, %65 : vector<256x32xf32>
    %cst_52 = arith.constant 0.000000e+00 : f32
    %67 = vector.broadcast %cst_52 : f32 to vector<256x32xf32>
    %68 = arith.cmpf ogt, %66, %67 : vector<256x32xf32>
    %cst_53 = arith.constant 3.330000e-01 : f32
    %69 = vector.broadcast %cst_53 : f32 to vector<256x32xf32>
    %70 = arith.mulf %69, %66 : vector<256x32xf32>
    %71 = arith.select %68, %66, %70 : vector<256x32xi1>, vector<256x32xf32>
    %72 = vector.shape_cast %71 : vector<256x32xf32> to vector<16x16x32xf32>
    %73 = arith.truncf %72 : vector<16x16x32xf32> to vector<16x16x32xbf16>
    %c1_54 = arith.constant 1 : index
    %c16_55 = arith.constant 16 : index
    %c0_56 = arith.constant 0 : index
    %74 = vector.load %arg6[%c1_54, %c16_55, %c0_56] : memref<18x48x32xbf16, #tpu.memory_space<vmem>>, vector<16x16x32xbf16>
    tpu.vector_store %arg6[%c1_54, %c16_55, %c0_56], %73 {strides = array<i32>} : memref<18x48x32xbf16, #tpu.memory_space<vmem>>, vector<16x16x32xbf16>,
    %c0_57 = arith.constant 0 : index
    %c15_58 = arith.constant 15 : index
    %c0_59 = arith.constant 0 : index
    %75 = vector.load %arg6[%c0_57, %c15_58, %c0_59] : memref<18x48x32xbf16, #tpu.memory_space<vmem>>, vector<16x16x32xbf16>
    %cst_60 = arith.constant 0.000000e+00 : f32
    %76 = arith.truncf %cst_60 : f32 to bf16
    %77 = vector.shape_cast %2 : vector<16x32xi1> to vector<1x16x32xi1>
    %78 = vector.broadcast %77 : vector<1x16x32xi1> to vector<16x16x32xi1>
    %79 = vector.broadcast %76 : bf16 to vector<16x16x32xbf16>
    %80 = arith.select %78, %79, %75 : vector<16x16x32xi1>, vector<16x16x32xbf16>
    %c0_61 = arith.constant 0 : index
    %c16_62 = arith.constant 16 : index
    %c0_63 = arith.constant 0 : index
    %81 = vector.load %arg6[%c0_61, %c16_62, %c0_63] : memref<18x48x32xbf16, #tpu.memory_space<vmem>>, vector<16x16x32xbf16>
    %c0_64 = arith.constant 0 : index
    %c17_65 = arith.constant 17 : index
    %c0_66 = arith.constant 0 : index
    %82 = vector.load %arg6[%c0_64, %c17_65, %c0_66] : memref<18x48x32xbf16, #tpu.memory_space<vmem>>, vector<16x16x32xbf16>
    %cst_67 = arith.constant 0.000000e+00 : f32
    %83 = arith.truncf %cst_67 : f32 to bf16
    %84 = vector.shape_cast %4 : vector<16x32xi1> to vector<1x16x32xi1>
    %85 = vector.broadcast %84 : vector<1x16x32xi1> to vector<16x16x32xi1>
    %86 = vector.broadcast %83 : bf16 to vector<16x16x32xbf16>
    %87 = arith.select %85, %86, %82 : vector<16x16x32xi1>, vector<16x16x32xbf16>
    %c1_68 = arith.constant 1 : index
    %c15_69 = arith.constant 15 : index
    %c0_70 = arith.constant 0 : index
    %88 = vector.load %arg6[%c1_68, %c15_69, %c0_70] : memref<18x48x32xbf16, #tpu.memory_space<vmem>>, vector<16x16x32xbf16>
    %cst_71 = arith.constant 0.000000e+00 : f32
    %89 = arith.truncf %cst_71 : f32 to bf16
    %90 = vector.shape_cast %2 : vector<16x32xi1> to vector<1x16x32xi1>
    %91 = vector.broadcast %90 : vector<1x16x32xi1> to vector<16x16x32xi1>
    %92 = vector.broadcast %89 : bf16 to vector<16x16x32xbf16>
    %93 = arith.select %91, %92, %88 : vector<16x16x32xi1>, vector<16x16x32xbf16>
    %94 = tpu.concatenate %80, %81, %87, %93 in 2 : vector<16x16x32xbf16>, vector<16x16x32xbf16>, vector<16x16x32xbf16>, vector<16x16x32xbf16> -> vector<16x16x128xbf16>
    %95 = vector.shape_cast %94 : vector<16x16x128xbf16> to vector<256x128xbf16>
    %c0_72 = arith.constant 0 : index
    %c0_73 = arith.constant 0 : index
    %96 = vector.load %arg7[%c0_72, %c0_73] : memref<256x384xbf16, #tpu.memory_space<vmem>>, vector<256x128xbf16>
    tpu.vector_store %arg7[%c0_72, %c0_73], %95 {strides = array<i32>} : memref<256x384xbf16, #tpu.memory_space<vmem>>, vector<256x128xbf16>,
    %c1_74 = arith.constant 1 : index
    %c16_75 = arith.constant 16 : index
    %c0_76 = arith.constant 0 : index
    %97 = vector.load %arg6[%c1_74, %c16_75, %c0_76] : memref<18x48x32xbf16, #tpu.memory_space<vmem>>, vector<16x16x32xbf16>
    %c1_77 = arith.constant 1 : index
    %c17_78 = arith.constant 17 : index
    %c0_79 = arith.constant 0 : index
    %98 = vector.load %arg6[%c1_77, %c17_78, %c0_79] : memref<18x48x32xbf16, #tpu.memory_space<vmem>>, vector<16x16x32xbf16>
    %cst_80 = arith.constant 0.000000e+00 : f32
    %99 = arith.truncf %cst_80 : f32 to bf16
    %100 = vector.shape_cast %4 : vector<16x32xi1> to vector<1x16x32xi1>
    %101 = vector.broadcast %100 : vector<1x16x32xi1> to vector<16x16x32xi1>
    %102 = vector.broadcast %99 : bf16 to vector<16x16x32xbf16>
    %103 = arith.select %101, %102, %98 : vector<16x16x32xi1>, vector<16x16x32xbf16>
    %c2_81 = arith.constant 2 : index
    %c15_82 = arith.constant 15 : index
    %c0_83 = arith.constant 0 : index
    %104 = vector.load %arg6[%c2_81, %c15_82, %c0_83] : memref<18x48x32xbf16, #tpu.memory_space<vmem>>, vector<16x16x32xbf16>
    %cst_84 = arith.constant 0.000000e+00 : f32
    %105 = arith.truncf %cst_84 : f32 to bf16
    %106 = vector.shape_cast %2 : vector<16x32xi1> to vector<1x16x32xi1>
    %107 = vector.broadcast %106 : vector<1x16x32xi1> to vector<16x16x32xi1>
    %108 = vector.broadcast %105 : bf16 to vector<16x16x32xbf16>
    %109 = arith.select %107, %108, %104 : vector<16x16x32xi1>, vector<16x16x32xbf16>
    %c2_85 = arith.constant 2 : index
    %c16_86 = arith.constant 16 : index
    %c0_87 = arith.constant 0 : index
    %110 = vector.load %arg6[%c2_85, %c16_86, %c0_87] : memref<18x48x32xbf16, #tpu.memory_space<vmem>>, vector<16x16x32xbf16>
    %111 = tpu.concatenate %97, %103, %109, %110 in 2 : vector<16x16x32xbf16>, vector<16x16x32xbf16>, vector<16x16x32xbf16>, vector<16x16x32xbf16> -> vector<16x16x128xbf16>
    %112 = vector.shape_cast %111 : vector<16x16x128xbf16> to vector<256x128xbf16>
    %c0_88 = arith.constant 0 : index
    %c128_89 = arith.constant 128 : index
    %113 = vector.load %arg7[%c0_88, %c128_89] : memref<256x384xbf16, #tpu.memory_space<vmem>>, vector<256x128xbf16>
    tpu.vector_store %arg7[%c0_88, %c128_89], %112 {strides = array<i32>} : memref<256x384xbf16, #tpu.memory_space<vmem>>, vector<256x128xbf16>,
    %c2_90 = arith.constant 2 : index
    %c17_91 = arith.constant 17 : index
    %c0_92 = arith.constant 0 : index
    %114 = vector.load %arg6[%c2_90, %c17_91, %c0_92] : memref<18x48x32xbf16, #tpu.memory_space<vmem>>, vector<16x16x32xbf16>
    %cst_93 = arith.constant 0.000000e+00 : f32
    %115 = arith.truncf %cst_93 : f32 to bf16
    %116 = vector.shape_cast %4 : vector<16x32xi1> to vector<1x16x32xi1>
    %117 = vector.broadcast %116 : vector<1x16x32xi1> to vector<16x16x32xi1>
    %118 = vector.broadcast %115 : bf16 to vector<16x16x32xbf16>
    %119 = arith.select %117, %118, %114 : vector<16x16x32xi1>, vector<16x16x32xbf16>
    %120 = tpu.concatenate %119, %5, %5, %5 in 2 : vector<16x16x32xbf16>, vector<16x16x32xbf16>, vector<16x16x32xbf16>, vector<16x16x32xbf16> -> vector<16x16x128xbf16>
    %121 = vector.shape_cast %120 : vector<16x16x128xbf16> to vector<256x128xbf16>
    %c0_94 = arith.constant 0 : index
    %c256_95 = arith.constant 256 : index
    %122 = vector.load %arg7[%c0_94, %c256_95] : memref<256x384xbf16, #tpu.memory_space<vmem>>, vector<256x128xbf16>
    tpu.vector_store %arg7[%c0_94, %c256_95], %121 {strides = array<i32>} : memref<256x384xbf16, #tpu.memory_space<vmem>>, vector<256x128xbf16>,
    %c0_96 = arith.constant 0 : index
    %c0_97 = arith.constant 0 : index
    %123 = vector.load %arg7[%c0_96, %c0_97] : memref<256x384xbf16, #tpu.memory_space<vmem>>, vector<256x384xbf16>
    %c0_98 = arith.constant 0 : index
    %c0_99 = arith.constant 0 : index
    %124 = vector.load %arg3[%c0_98, %c0_99] : memref<384x32xbf16, #tpu.memory_space<vmem>>, vector<384x32xbf16>
    %cst_100 = arith.constant dense<0.000000e+00> : vector<256x32xf32>
    %125 = tpu.matmul %123, %124, %cst_100 {dimension_numbers = #tpu.dot_dimension_numbers<[1], [0], [0], [1], [0, 0, 1, 1], [], []>} : vector<256x384xbf16>, vector<384x32xbf16>, vector<256x32xf32> -> vector<256x32xf32>
    %c1_101 = arith.constant 1 : index
    %c0_102 = arith.constant 0 : index
    %126 = vector.load %arg4[%c1_101, %c0_102] : memref<2x32xf32, #tpu.memory_space<vmem>>, vector<1x32xf32>
    %127 = vector.broadcast %126 : vector<1x32xf32> to vector<256x32xf32>
    %128 = arith.addf %125, %127 : vector<256x32xf32>
    %c0_103 = arith.constant 0 : index
    %c0_104 = arith.constant 0 : index
    %c0_105 = arith.constant 0 : index
    %c0_106 = arith.constant 0 : index
    %129 = vector.load %arg1[%c0_103, %c0_104, %c0_105, %c0_106] : memref<1x16x16x32xf32, #tpu.memory_space<vmem>>, vector<1x16x16x32xf32>
    %130 = vector.shape_cast %129 : vector<1x16x16x32xf32> to vector<16x16x32xf32>
    %131 = vector.shape_cast %130 : vector<16x16x32xf32> to vector<256x32xf32>
    %132 = arith.addf %128, %131 : vector<256x32xf32>
    %cst_107 = arith.constant 0.000000e+00 : f32
    %133 = vector.broadcast %cst_107 : f32 to vector<256x32xf32>
    %134 = arith.cmpf ogt, %132, %133 : vector<256x32xf32>
    %cst_108 = arith.constant 3.330000e-01 : f32
    %135 = vector.broadcast %cst_108 : f32 to vector<256x32xf32>
    %136 = arith.mulf %135, %132 : vector<256x32xf32>
    %137 = arith.select %134, %132, %136 : vector<256x32xi1>, vector<256x32xf32>
    %138 = vector.shape_cast %137 : vector<256x32xf32> to vector<16x16x32xf32>
    %c0_109 = arith.constant 0 : index
    %c0_110 = arith.constant 0 : index
    %c0_111 = arith.constant 0 : index
    %c0_112 = arith.constant 0 : index
    %139 = vector.load %arg5[%c0_109, %c0_110, %c0_111, %c0_112] : memref<1x16x16x32xf32, #tpu.memory_space<vmem>>, vector<1x16x16x32xf32>
    %140 = vector.shape_cast %139 : vector<1x16x16x32xf32> to vector<16x16x32xf32>
    %141 = vector.shape_cast %138 : vector<16x16x32xf32> to vector<1x16x16x32xf32>
    tpu.vector_store %arg5[%c0_109, %c0_110, %c0_111, %c0_112], %141 {strides = array<i32>} : memref<1x16x16x32xf32, #tpu.memory_space<vmem>>, vector<1x16x16x32xf32>,
    return
  }
  func.func @transform_0(%arg0: i32) -> (i32, i32, i32, i32) {
    %c0_i32 = arith.constant 0 : i32
    %c0_i32_0 = arith.constant 0 : i32
    %c0_i32_1 = arith.constant 0 : i32
    %c0_i32_2 = arith.constant 0 : i32
    return %arg0, %c0_i32, %c0_i32_0, %c0_i32_1 : i32, i32, i32, i32
  }
  func.func @transform_1(%arg0: i32) -> (i32, i32) {
    %c0_i32 = arith.constant 0 : i32
    %c0_i32_0 = arith.constant 0 : i32
    %c0_i32_1 = arith.constant 0 : i32
    return %c0_i32, %c0_i32_0 : i32, i32
  }
  func.func @transform_2(%arg0: i32) -> (i32, i32) {
    %c0_i32 = arith.constant 0 : i32
    %c0_i32_0 = arith.constant 0 : i32
    %c0_i32_1 = arith.constant 0 : i32
    return %c0_i32, %c0_i32_0 : i32, i32
  }
  func.func @transform_3(%arg0: i32) -> (i32, i32) {
    %c0_i32 = arith.constant 0 : i32
    %c0_i32_0 = arith.constant 0 : i32
    %c0_i32_1 = arith.constant 0 : i32
    return %c0_i32, %c0_i32_0 : i32, i32
  }
  func.func @transform_4(%arg0: i32) -> (i32, i32, i32, i32) {
    %c0_i32 = arith.constant 0 : i32
    %c0_i32_0 = arith.constant 0 : i32
    %c0_i32_1 = arith.constant 0 : i32
    %c0_i32_2 = arith.constant 0 : i32
    return %arg0, %c0_i32, %c0_i32_0, %c0_i32_1 : i32, i32, i32, i32
  }
}

</mosaic_0001>

<llo_original>
// kernel: tpu_custom_call.1
$region0: #{tpu_custom_call.1}
  #allocation0 [shape = 'u32[]', space=smem, size = 0x4, offset = 0x4, fixed_abs, tag = 'smem constant byte address 0x4 - core index']
  #allocation1 [shape = 'u32[72,128]{1,0:T(1,128)}', space=vmem, size = 0x9000, scoped, tag = 'internal scratch']
  #allocation2 [shape = 'bf16[18,48,32]{2,1,0:T(8,128)(2,1)}', space=vmem, size = 0x36000, scoped, tag = 'scratch operand']
  #allocation3 [shape = 'bf16[256,384]{1,0:T(8,128)(2,1)}', space=vmem, size = 0x30000, scoped, tag = 'scratch operand']
  %s0 = inlined_call_operand.hbm [shape: f32[2,16,16,32], index: 0, kind: input, shape index: {}]
  %s1 = inlined_call_operand.vmem [shape: bf16[384,32], index: 1, kind: input, shape index: {}]
  %s2 = inlined_call_operand.vmem [shape: bf16[384,32], index: 2, kind: input, shape index: {}]
  %s3 = inlined_call_operand.vmem [shape: f32[2,32], index: 3, kind: input, shape index: {}]
  %s4 = inlined_call_operand.hbm [shape: f32[2,16,16,32], index: 4, kind: output, shape index: {}]
  %s5 = sld [smem:[#allocation0]]
  $region53: #{tpu_custom_call.1} parent=0
    _
  %s7 = ssub.s32 1, %s5
  %s8 = scalar_select 0, %s7, %s5
  $region1: #{tpu_custom_call.1} parent=0
    #allocation4 [shape = 'u8[262144]{0}', space=vmem, size = 0x40000, scoped, tag = 'input window, operand 0']
    #allocation5 [shape = 's32[2]{0}', space=sflag, size = 0x8, scoped, tag = 'scoped memory for tpu_custom_call.1']
    #allocation6 [shape = 's32[2]{0}', space=sflag, size = 0x8, scoped, tag = 'scoped memory for tpu_custom_call.1']
    #allocation7 [shape = 'u8[262144]{0}', space=vmem, size = 0x40000, scoped, tag = 'output window, operand 0']
    %9 = vsyncpa [#allocation5], 0
    %s10 = scalar_lea.sflag [#allocation5], 1
    %11 = vsyncpa %s10, 0
    %12 = vsyncpa [#allocation6], 0
    %s13 = scalar_lea.sflag [#allocation6], 1
    %14 = vsyncpa %s13, 0
    loop: start=0, step=1, limit=4
    $region2: #{tpu_custom_call.1} parent=1 // loop_pre_header
      _
    $region3: #{tpu_custom_call.1} parent=1 // loop_header
      %s16 = sphi 0, %s20
      %p17 = scmp.ge.s32.totalorder %s16, 4
      %s26 = sphi 0, %s28
      %s29 = sphi 0, %s26
      %s30 = sphi 0, %s29
      %s46 = sphi 0, %s30
      %s50 = sphi 0, %s50
      %s52 = sphi 0, %s50
      %s53 = sphi 0, %s52
      %s67 = sphi 0, %s53
      %s71 = sphi 0, %s71
      %s73 = sphi 0, %s71
      %s74 = sphi 0, %s73
      %s88 = sphi 0, %s74
      %s92 = sphi 0, %s92
      %s94 = sphi 0, %s92
      %s95 = sphi 0, %s94
      %s109 = sphi 0, %s95
      %s115 = sphi 0, %s117
      %s118 = sphi 0, %s115
      %s119 = sphi 0, %s118
      %s135 = sphi 0, %s119
    $region4: #{tpu_custom_call.1} parent=1 // loop_header_branch
      %19 = sbr.rel (%p17) target = $region8
    $region5: #{tpu_custom_call.1} parent=1 // loop_body
      %s21 = ssub.s32 %s16, 1
      %s22 = ssub.s32 %s16, 2
      %s23 = sadd.s32 %s16, 1
      %s24 = ssub.s32 %s16, %s23
      %p25 = scmp.eq.s32.totalorder %s24, 0
      %s27 = sadd.s32 %s26, 1
      %s28 = scalar_select %p25, %s26, %s27
      %p31 = pneg %p25
      %p32 = scmp.eq.s32.totalorder %s16, 1
      %p33 = por %p31, %p32
      %p34 = scmp.ne.s32.totalorder %s26, %s29
      %p35 = scmp.eq.s32.totalorder %s16, 0
      %p36 = por %p34, %p35
      %p37 = scmp.ne.s32.totalorder %s26, %s29
      %p38 = scmp.eq.s32.totalorder %s21, 1
      %p39 = por %p37, %p38
      %p40 = scmp.ne.s32.totalorder %s29, %s30
      %p41 = scmp.eq.s32.totalorder %s21, 0
      %p42 = por %p40, %p41
      %p43 = scmp.ne.s32.totalorder %s29, %s30
      %p44 = scmp.eq.s32.totalorder %s22, 1
      %p45 = por %p43, %p44
      %p47 = scmp.ne.s32.totalorder %s30, %s46
      %p48 = scmp.eq.s32.totalorder %s22, 0
      %p49 = por %p47, %p48
      %s51 = sadd.s32 %s50, 1
      %p54 = scmp.eq.s32.totalorder %s16, 1
      %p55 = scmp.ne.s32.totalorder %s50, %s52
      %p56 = scmp.eq.s32.totalorder %s16, 0
      %p57 = por %p55, %p56
      %p58 = scmp.ne.s32.totalorder %s50, %s52
      %p59 = scmp.eq.s32.totalorder %s21, 1
      %p60 = por %p58, %p59
      %p61 = scmp.ne.s32.totalorder %s52, %s53
      %p62 = scmp.eq.s32.totalorder %s21, 0
      %p63 = por %p61, %p62
      %p64 = scmp.ne.s32.totalorder %s52, %s53
      %p65 = scmp.eq.s32.totalorder %s22, 1
      %p66 = por %p64, %p65
      %p68 = scmp.ne.s32.totalorder %s53, %s67
      %p69 = scmp.eq.s32.totalorder %s22, 0
      %p70 = por %p68, %p69
      %s72 = sadd.s32 %s71, 1
      %p75 = scmp.eq.s32.totalorder %s16, 1
      %p76 = scmp.ne.s32.totalorder %s71, %s73
      %p77 = scmp.eq.s32.totalorder %s16, 0
      %p78 = por %p76, %p77
      %p79 = scmp.ne.s32.totalorder %s71, %s73
      %p80 = scmp.eq.s32.totalorder %s21, 1
      %p81 = por %p79, %p80
      %p82 = scmp.ne.s32.totalorder %s73, %s74
      %p83 = scmp.eq.s32.totalorder %s21, 0
      %p84 = por %p82, %p83
      %p85 = scmp.ne.s32.totalorder %s73, %s74
      %p86 = scmp.eq.s32.totalorder %s22, 1
      %p87 = por %p85, %p86
      %p89 = scmp.ne.s32.totalorder %s74, %s88
      %p90 = scmp.eq.s32.totalorder %s22, 0
      %p91 = por %p89, %p90
      %s93 = sadd.s32 %s92, 1
      %p96 = scmp.eq.s32.totalorder %s16, 1
      %p97 = scmp.ne.s32.totalorder %s92, %s94
      %p98 = scmp.eq.s32.totalorder %s16, 0
      %p99 = por %p97, %p98
      %p100 = scmp.ne.s32.totalorder %s92, %s94
      %p101 = scmp.eq.s32.totalorder %s21, 1
      %p102 = por %p100, %p101
      %p103 = scmp.ne.s32.totalorder %s94, %s95
      %p104 = scmp.eq.s32.totalorder %s21, 0
      %p105 = por %p103, %p104
      %p106 = scmp.ne.s32.totalorder %s94, %s95
      %p107 = scmp.eq.s32.totalorder %s22, 1
      %p108 = por %p106, %p107
      %p110 = scmp.ne.s32.totalorder %s95, %s109
      %p111 = scmp.eq.s32.totalorder %s22, 0
      %p112 = por %p110, %p111
      %s113 = ssub.s32 %s16, %s23
      %p114 = scmp.eq.s32.totalorder %s113, 0
      %s116 = sadd.s32 %s115, 1
      %s117 = scalar_select %p114, %s115, %s116
      %p120 = pneg %p114
      %p121 = scmp.eq.s32.totalorder %s16, 1
      %p122 = por %p120, %p121
      %p123 = scmp.ne.s32.totalorder %s115, %s118
      %p124 = scmp.eq.s32.totalorder %s16, 0
      %p125 = por %p123, %p124
      %p126 = scmp.ne.s32.totalorder %s115, %s118
      %p127 = scmp.eq.s32.totalorder %s21, 1
      %p128 = por %p126, %p127
      %p129 = scmp.ne.s32.totalorder %s118, %s119
      %p130 = scmp.eq.s32.totalorder %s21, 0
      %p131 = por %p129, %p130
      %p132 = scmp.ne.s32.totalorder %s118, %s119
      %p133 = scmp.eq.s32.totalorder %s22, 1
      %p134 = por %p132, %p133
      %p136 = scmp.ne.s32.totalorder %s119, %s135
      %p137 = scmp.eq.s32.totalorder %s22, 0
      %p138 = por %p136, %p137
      %p139 = scmp.le.s32.totalorder 1, %s16
      %p140 = scmp.lt.s32.totalorder %s16, 3
      %p141 = pnand %p139, %p140
      %p142 = pneg %p141
      // Predicated region
      $region9: #{tpu_custom_call.1} parent=5 // pred_check
        _
      $region10: #{tpu_custom_call.1} parent=5 // pred_check_branch
        %144 = sbr.rel (%p141) target = $region12
      $region11: #{tpu_custom_call.1} parent=5 // pred_region
        %s145 = ssub.s32 %s16, 1
        // Predicated region
        $region13: #{tpu_custom_call.1} parent=11 // pred_check
          %p146 = pneg %p63
        $region14: #{tpu_custom_call.1} parent=11 // pred_check_branch
          %148 = sbr.rel (%p146) target = $region16
        $region15: #{tpu_custom_call.1} parent=11 // pred_region
          _
        $region16: #{tpu_custom_call.1} parent=11 // pred_fallthru
          _
        // Predicated region
        $region17: #{tpu_custom_call.1} parent=11 // pred_check
          %p149 = pneg %p84
        $region18: #{tpu_custom_call.1} parent=11 // pred_check_branch
          %151 = sbr.rel (%p149) target = $region20
        $region19: #{tpu_custom_call.1} parent=11 // pred_region
          _
        $region20: #{tpu_custom_call.1} parent=11 // pred_fallthru
          _
        // Predicated region
        $region21: #{tpu_custom_call.1} parent=11 // pred_check
          %p152 = pneg %p105
        $region22: #{tpu_custom_call.1} parent=11 // pred_check_branch
          %154 = sbr.rel (%p152) target = $region24
        $region23: #{tpu_custom_call.1} parent=11 // pred_region
          _
        $region24: #{tpu_custom_call.1} parent=11 // pred_fallthru
          _
      $region12: #{tpu_custom_call.1} parent=5 // pred_fallthru
        _
      %p155 = scmp.lt.s32.totalorder %s16, 2
      // Predicated region
      $region25: #{tpu_custom_call.1} parent=5 // pred_check
        %p156 = pneg %p155
      $region26: #{tpu_custom_call.1} parent=5 // pred_check_branch
        %158 = sbr.rel (%p156) target = $region28
      $region27: #{tpu_custom_call.1} parent=5 // pred_region
        // Predicated region
        $region29: #{tpu_custom_call.1} parent=27 // pred_check
          %p159 = pneg %p36
        $region30: #{tpu_custom_call.1} parent=27 // pred_check_branch
          %161 = sbr.rel (%p159) target = $region32
        $region31: #{tpu_custom_call.1} parent=27 // pred_region
          %s162 = sand.u32 %s26, 1
          %s163 = scalar_lea.sflag [#allocation5], %s162
          %s164 = sand.u32 %s26, 1
          %s165 = smul.addr %s164, 256
          %s166 = scalar_lea.vmem [#allocation4], %s165
          %168 = vsyncadd %s163, 0
          %s169 = smul.addr %s16, 32
          %s170 = smul.addr %s169, 8
          %s171 = scalar_lea.hbm %s0, %s170
          %s172 = sshll.u32 %s171, 4
          %s173 = int_to_ptr.hbm [resolvable:$true] %s172
          %s174 = sshll.u32 %s166, 4
          %s175 = int_to_ptr.vmem [resolvable:$true] %s174
          %180 = dma.hbm_to_vmem [thread:$0]  %s173, 4096, %s175, %s163, 128, 128, 8
        $region32: #{tpu_custom_call.1} parent=27 // pred_fallthru
          _
      $region28: #{tpu_custom_call.1} parent=5 // pred_fallthru
        _
      %p181 = scmp.le.s32.totalorder 1, %s16
      %p182 = scmp.lt.s32.totalorder %s16, 3
      %p183 = pnand %p181, %p182
      %p184 = pneg %p183
      // Predicated region
      $region33: #{tpu_custom_call.1} parent=5 // pred_check
        _
      $region34: #{tpu_custom_call.1} parent=5 // pred_check_branch
        %186 = sbr.rel (%p183) target = $region36
      $region35: #{tpu_custom_call.1} parent=5 // pred_region
        %s187 = ssub.s32 %s16, 1
        %s188 = sand.u32 %s29, 1
        %s189 = scalar_lea.sflag [#allocation5], %s188
        %s190 = sand.u32 %s29, 1
        %s191 = smul.addr %s190, 256
        %s192 = scalar_lea.vmem [#allocation4], %s191
        // Predicated region
        $region37: #{tpu_custom_call.1} parent=35 // pred_check
          %p193 = pneg %p42
        $region38: #{tpu_custom_call.1} parent=35 // pred_check_branch
          %195 = sbr.rel (%p193) target = $region40
        $region39: #{tpu_custom_call.1} parent=35 // pred_region
          %197 = dma.done %s189, 4096
        $region40: #{tpu_custom_call.1} parent=35 // pred_fallthru
          _
        %s198 = sand.u32 %s29, 1
        %s199 = scalar_lea.sflag [#allocation5], %s198
        %s200 = sand.u32 %s29, 1
        %s201 = smul.addr %s200, 256
        %s202 = scalar_lea.vmem [#allocation4], %s201
        %p203 = pneg %p42
        %p204 = pneg %p39
        %p205 = pneg %p63
        %p206 = pneg %p60
        %p207 = pneg %p84
        %p208 = pneg %p81
        %p209 = pneg %p105
        %p210 = pneg %p102
        %p211 = pneg %p131
        %p212 = pneg %p128
        %s213 = sand.u32 %s118, 1
        %s214 = scalar_lea.sflag [#allocation6], %s213
        %s215 = sand.u32 %s118, 1
        %s216 = smul.addr %s215, 256
        %s217 = scalar_lea.vmem [#allocation7], %s216
        %v221 = vlaneseq
        %v222 = vshrl.u32 %v221, 7
        %v223 = vadd.s32 %v222, 8
        %vm224 = vcmp.eq.s32.totalorder %v222, 0
        %vm225 = vcmp.eq.s32.totalorder %v223, 0
        %vm226 = vcmp.eq.s32.totalorder %v222, 15
        %vm227 = vcmp.eq.s32.totalorder %v223, 15
        %vm228 = vcmask 257024
        %229 = vst.msk [vmem:[#allocation2 + $0x8] sm:$0xf] %vm228, 0
        %230 = vst.msk [vmem:[#allocation2 + $0xc] sm:$0xf] %vm228, 0
        %s231 = scalar_lea.vmem [#allocation2], 408
        %232 = vst.msk [vmem:[%s231 + $0x8] sm:$0xf] %vm228, 0
        %233 = vst.msk [vmem:[%s231 + $0xc] sm:$0xf] %vm228, 0
        %v234 = vld [vmem:[%s192] sm:$0xff]
        %v235 = vld [vmem:[%s192 + $0x8] sm:$0xff]
        %v236 = vld [vmem:[%s192 + $0x10] sm:$0xff]
        %v237 = vld [vmem:[%s192 + $0x18] sm:$0xff]
        %v238 = vld [vmem:[%s192 + $0x20] sm:$0xff]
        %v239 = vld [vmem:[%s192 + $0x28] sm:$0xff]
        %v240 = vld [vmem:[%s192 + $0x30] sm:$0xff]
        %v241 = vld [vmem:[%s192 + $0x38] sm:$0xff]
        %v242 = vld [vmem:[%s192 + $0x40] sm:$0xff]
        %v243 = vld [vmem:[%s192 + $0x48] sm:$0xff]
        %v244 = vld [vmem:[%s192 + $0x50] sm:$0xff]
        %v245 = vld [vmem:[%s192 + $0x58] sm:$0xff]
        %v246 = vld [vmem:[%s192 + $0x60] sm:$0xff]
        %v247 = vld [vmem:[%s192 + $0x68] sm:$0xff]
        %v248 = vld [vmem:[%s192 + $0x70] sm:$0xff]
        %v249 = vld [vmem:[%s192 + $0x78] sm:$0xff]
        %v250 = vld [vmem:[%s192 + $0x80] sm:$0xff]
        %v251 = vld [vmem:[%s192 + $0x88] sm:$0xff]
        %v252 = vld [vmem:[%s192 + $0x90] sm:$0xff]
        %v253 = vld [vmem:[%s192 + $0x98] sm:$0xff]
        %v254 = vld [vmem:[%s192 + $0xa0] sm:$0xff]
        %v255 = vld [vmem:[%s192 + $0xa8] sm:$0xff]
        %v256 = vld [vmem:[%s192 + $0xb0] sm:$0xff]
        %v257 = vld [vmem:[%s192 + $0xb8] sm:$0xff]
        %v258 = vld [vmem:[%s192 + $0xc0] sm:$0xff]
        %v259 = vld [vmem:[%s192 + $0xc8] sm:$0xff]
        %v260 = vld [vmem:[%s192 + $0xd0] sm:$0xff]
        %v261 = vld [vmem:[%s192 + $0xd8] sm:$0xff]
        %v262 = vld [vmem:[%s192 + $0xe0] sm:$0xff]
        %v263 = vld [vmem:[%s192 + $0xe8] sm:$0xff]
        %v264 = vld [vmem:[%s192 + $0xf0] sm:$0xff]
        %v265 = vld [vmem:[%s192 + $0xf8] sm:$0xff]
        %v266 = vpack.c.bf16 %v234, %v234
        %v267 = vpack.c.bf16 %v235, %v235
        %v268 = vpack.c.bf16 %v236, %v236
        %v269 = vpack.c.bf16 %v237, %v237
        %v270 = vpack.c.bf16 %v238, %v238
        %v271 = vpack.c.bf16 %v239, %v239
        %v272 = vpack.c.bf16 %v240, %v240
        %v273 = vpack.c.bf16 %v241, %v241
        %v274 = vpack.c.bf16 %v242, %v242
        %v275 = vpack.c.bf16 %v243, %v243
        %v276 = vpack.c.bf16 %v244, %v244
        %v277 = vpack.c.bf16 %v245, %v245
        %v278 = vpack.c.bf16 %v246, %v246
        %v279 = vpack.c.bf16 %v247, %v247
        %v280 = vpack.c.bf16 %v248, %v248
        %v281 = vpack.c.bf16 %v249, %v249
        %v282 = vpack.c.bf16 %v250, %v250
        %v283 = vpack.c.bf16 %v251, %v251
        %v284 = vpack.c.bf16 %v252, %v252
        %v285 = vpack.c.bf16 %v253, %v253
        %v286 = vpack.c.bf16 %v254, %v254
        %v287 = vpack.c.bf16 %v255, %v255
        %v288 = vpack.c.bf16 %v256, %v256
        %v289 = vpack.c.bf16 %v257, %v257
        %v290 = vpack.c.bf16 %v258, %v258
        %v291 = vpack.c.bf16 %v259, %v259
        %v292 = vpack.c.bf16 %v260, %v260
        %v293 = vpack.c.bf16 %v261, %v261
        %v294 = vpack.c.bf16 %v262, %v262
        %v295 = vpack.c.bf16 %v263, %v263
        %v296 = vpack.c.bf16 %v264, %v264
        %v297 = vpack.c.bf16 %v265, %v265
        %s298 = scalar_lea.vmem [#allocation2], 24
        %299 = vst.msk [vmem:[%s298 + $0x8] sm:$0xf] %vm228, %v266
        %300 = vst.msk [vmem:[%s298 + $0xc] sm:$0xf] %vm228, %v267
        %301 = vst.msk [vmem:[%s298 + $0x20] sm:$0xf] %vm228, %v268
        %302 = vst.msk [vmem:[%s298 + $0x24] sm:$0xf] %vm228, %v269
        %303 = vst.msk [vmem:[%s298 + $0x38] sm:$0xf] %vm228, %v270
        %304 = vst.msk [vmem:[%s298 + $0x3c] sm:$0xf] %vm228, %v271
        %305 = vst.msk [vmem:[%s298 + $0x50] sm:$0xf] %vm228, %v272
        %306 = vst.msk [vmem:[%s298 + $0x54] sm:$0xf] %vm228, %v273
        %307 = vst.msk [vmem:[%s298 + $0x68] sm:$0xf] %vm228, %v274
        %308 = vst.msk [vmem:[%s298 + $0x6c] sm:$0xf] %vm228, %v275
        %309 = vst.msk [vmem:[%s298 + $0x80] sm:$0xf] %vm228, %v276
        %310 = vst.msk [vmem:[%s298 + $0x84] sm:$0xf] %vm228, %v277
        %311 = vst.msk [vmem:[%s298 + $0x98] sm:$0xf] %vm228, %v278
        %312 = vst.msk [vmem:[%s298 + $0x9c] sm:$0xf] %vm228, %v279
        %313 = vst.msk [vmem:[%s298 + $0xb0] sm:$0xf] %vm228, %v280
        %314 = vst.msk [vmem:[%s298 + $0xb4] sm:$0xf] %vm228, %v281
        %315 = vst.msk [vmem:[%s298 + $0xc8] sm:$0xf] %vm228, %v282
        %316 = vst.msk [vmem:[%s298 + $0xcc] sm:$0xf] %vm228, %v283
        %317 = vst.msk [vmem:[%s298 + $0xe0] sm:$0xf] %vm228, %v284
        %318 = vst.msk [vmem:[%s298 + $0xe4] sm:$0xf] %vm228, %v285
        %319 = vst.msk [vmem:[%s298 + $0xf8] sm:$0xf] %vm228, %v286
        %320 = vst.msk [vmem:[%s298 + $0xfc] sm:$0xf] %vm228, %v287
        %321 = vst.msk [vmem:[%s298 + $0x110] sm:$0xf] %vm228, %v288
        %322 = vst.msk [vmem:[%s298 + $0x114] sm:$0xf] %vm228, %v289
        %323 = vst.msk [vmem:[%s298 + $0x128] sm:$0xf] %vm228, %v290
        %324 = vst.msk [vmem:[%s298 + $0x12c] sm:$0xf] %vm228, %v291
        %325 = vst.msk [vmem:[%s298 + $0x140] sm:$0xf] %vm228, %v292
        %326 = vst.msk [vmem:[%s298 + $0x144] sm:$0xf] %vm228, %v293
        %327 = vst.msk [vmem:[%s298 + $0x158] sm:$0xf] %vm228, %v294
        %328 = vst.msk [vmem:[%s298 + $0x15c] sm:$0xf] %vm228, %v295
        %329 = vst.msk [vmem:[%s298 + $0x170] sm:$0xf] %vm228, %v296
        %330 = vst.msk [vmem:[%s298 + $0x174] sm:$0xf] %vm228, %v297
        %v331 = vld [vmem:[#allocation2 + $0x4] sm:$0x8]
        %v332 = vld [vmem:[#allocation2 + $0x8] sm:$0xf]
        %v333 = vld [vmem:[#allocation2 + $0xc] sm:$0xf]
        %v334 = vld [vmem:[#allocation2 + $0x1c] sm:$0x8]
        %v335 = vld [vmem:[#allocation2 + $0x20] sm:$0xf]
        %v336 = vld [vmem:[#allocation2 + $0x24] sm:$0xf]
        %v337 = vld [vmem:[#allocation2 + $0x34] sm:$0x8]
        %v338 = vld [vmem:[#allocation2 + $0x38] sm:$0xf]
        %v339 = vld [vmem:[#allocation2 + $0x3c] sm:$0xf]
        %v340 = vld [vmem:[#allocation2 + $0x4c] sm:$0x8]
        %v341 = vld [vmem:[#allocation2 + $0x50] sm:$0xf]
        %v342 = vld [vmem:[#allocation2 + $0x54] sm:$0xf]
        %v343 = vld [vmem:[#allocation2 + $0x64] sm:$0x8]
        %v344 = vld [vmem:[#allocation2 + $0x68] sm:$0xf]
        %v345 = vld [vmem:[#allocation2 + $0x6c] sm:$0xf]
        %v346 = vld [vmem:[#allocation2 + $0x7c] sm:$0x8]
        %v347 = vld [vmem:[#allocation2 + $0x80] sm:$0xf]
        %v348 = vld [vmem:[#allocation2 + $0x84] sm:$0xf]
        %v349 = vld [vmem:[#allocation2 + $0x94] sm:$0x8]
        %v350 = vld [vmem:[#allocation2 + $0x98] sm:$0xf]
        %v351 = vld [vmem:[#allocation2 + $0x9c] sm:$0xf]
        %v352 = vld [vmem:[#allocation2 + $0xac] sm:$0x8]
        %v353 = vld [vmem:[#allocation2 + $0xb0] sm:$0xf]
        %v354 = vld [vmem:[#allocation2 + $0xb4] sm:$0xf]
        %v355 = vld [vmem:[#allocation2 + $0xc4] sm:$0x8]
        %v356 = vld [vmem:[#allocation2 + $0xc8] sm:$0xf]
        %v357 = vld [vmem:[#allocation2 + $0xcc] sm:$0xf]
        %v358 = vld [vmem:[#allocation2 + $0xdc] sm:$0x8]
        %v359 = vld [vmem:[#allocation2 + $0xe0] sm:$0xf]
        %v360 = vld [vmem:[#allocation2 + $0xe4] sm:$0xf]
        %v361 = vld [vmem:[#allocation2 + $0xf4] sm:$0x8]
        %v362 = vld [vmem:[#allocation2 + $0xf8] sm:$0xf]
        %v363 = vld [vmem:[#allocation2 + $0xfc] sm:$0xf]
        %v364 = vld [vmem:[#allocation2 + $0x10c] sm:$0x8]
        %v365 = vld [vmem:[#allocation2 + $0x110] sm:$0xf]
        %v366 = vld [vmem:[#allocation2 + $0x114] sm:$0xf]
        %v367 = vld [vmem:[#allocation2 + $0x124] sm:$0x8]
        %v368 = vld [vmem:[#allocation2 + $0x128] sm:$0xf]
        %v369 = vld [vmem:[#allocation2 + $0x12c] sm:$0xf]
        %v370 = vld [vmem:[#allocation2 + $0x13c] sm:$0x8]
        %v371 = vld [vmem:[#allocation2 + $0x140] sm:$0xf]
        %v372 = vld [vmem:[#allocation2 + $0x144] sm:$0xf]
        %v373 = vld [vmem:[#allocation2 + $0x154] sm:$0x8]
        %v374 = vld [vmem:[#allocation2 + $0x158] sm:$0xf]
        %v375 = vld [vmem:[#allocation2 + $0x15c] sm:$0xf]
        %v376 = vld [vmem:[#allocation2 + $0x16c] sm:$0x8]
        %v377 = vld [vmem:[#allocation2 + $0x170] sm:$0xf]
        %v378 = vld [vmem:[#allocation2 + $0x174] sm:$0xf]
        %v379 = vsel %vm224, 1, 0
        %v380 = vsel %vm225, 1, 0
        %vm381 = vcmp.eq.s32.totalorder %v379, 1
        %vm382 = vcmp.eq.s32.totalorder %v380, 1
        %vm383 = vmpackc.low %vm381, %vm381
        %vm384 = vmpackc.low %vm382, %vm382
        %v385 = vsel %vm383, 65537, 0
        %v386 = vsel %vm384, 65537, 0
        %vm387 = vsmask.f32 3328
        %vm388 = vsmask.f32 7440
        %vm389 = vmor %vm387, %vm388
        %v391 = vshll.u32 %v385, 16
        %v393 = vrot.slane %v391, 5
        %v394 = vshrl.u32 %v385, 16
        %v396 = vrot.slane %v394, 4
        %v397 = vor.u32 %v396, %v393
        %v398 = vrot.slane %v397, 4
        %v400 = vshll.u32 %v386, 16
        %v402 = vrot.slane %v400, 5
        %v403 = vsel %vm389, %v398, %v402
        %v404 = vshrl.u32 %v386, 16
        %v406 = vrot.slane %v404, 4
        %v407 = vor.u32 %v406, %v402
        %v408 = vrot.slane %v407, 4
        %v409 = vunpack.c.l.b16 %v393
        %v410 = vunpack.c.h.b16 %v393
        %v411 = vunpack.c.l.b16 0
        %v412 = vunpack.c.h.b16 0
        %vm413 = vcmp.ne.s32.totalorder %v409, %v411
        %vm414 = vcmp.ne.s32.totalorder %v410, %v412
        %vm415 = vmpackc.low %vm414, %vm413
        %v416 = vunpack.c.l.b16 %v403
        %v417 = vunpack.c.h.b16 %v403
        %v418 = vunpack.c.l.b16 0
        %v419 = vunpack.c.h.b16 0
        %vm420 = vcmp.ne.s32.totalorder %v416, %v418
        %vm421 = vcmp.ne.s32.totalorder %v417, %v419
        %vm422 = vmpackc.low %vm421, %vm420
        %v423 = vunpack.c.l.b16 %v408
        %v424 = vunpack.c.h.b16 %v408
        %v425 = vunpack.c.l.b16 0
        %v426 = vunpack.c.h.b16 0
        %vm427 = vcmp.ne.s32.totalorder %v423, %v425
        %vm428 = vcmp.ne.s32.totalorder %v424, %v426
        %vm429 = vmpackc.low %vm428, %vm427
        %v430 = vsel %vm415, 0, %v331
        %v431 = vsel %vm422, 0, %v332
        %v432 = vsel %vm429, 0, %v333
        %v433 = vsel %vm415, 0, %v334
        %v434 = vsel %vm422, 0, %v335
        %v435 = vsel %vm429, 0, %v336
        %v436 = vsel %vm415, 0, %v337
        %v437 = vsel %vm422, 0, %v338
        %v438 = vsel %vm429, 0, %v339
        %v439 = vsel %vm415, 0, %v340
        %v440 = vsel %vm422, 0, %v341
        %v441 = vsel %vm429, 0, %v342
        %v442 = vsel %vm415, 0, %v343
        %v443 = vsel %vm422, 0, %v344
        %v444 = vsel %vm429, 0, %v345
        %v445 = vsel %vm415, 0, %v346
        %v446 = vsel %vm422, 0, %v347
        %v447 = vsel %vm429, 0, %v348
        %v448 = vsel %vm415, 0, %v349
        %v449 = vsel %vm422, 0, %v350
        %v450 = vsel %vm429, 0, %v351
        %v451 = vsel %vm415, 0, %v352
        %v452 = vsel %vm422, 0, %v353
        %v453 = vsel %vm429, 0, %v354
        %v454 = vsel %vm415, 0, %v355
        %v455 = vsel %vm422, 0, %v356
        %v456 = vsel %vm429, 0, %v357
        %v457 = vsel %vm415, 0, %v358
        %v458 = vsel %vm422, 0, %v359
        %v459 = vsel %vm429, 0, %v360
        %v460 = vsel %vm415, 0, %v361
        %v461 = vsel %vm422, 0, %v362
        %v462 = vsel %vm429, 0, %v363
        %v463 = vsel %vm415, 0, %v364
        %v464 = vsel %vm422, 0, %v365
        %v465 = vsel %vm429, 0, %v366
        %v466 = vsel %vm415, 0, %v367
        %v467 = vsel %vm422, 0, %v368
        %v468 = vsel %vm429, 0, %v369
        %v469 = vsel %vm415, 0, %v370
        %v470 = vsel %vm422, 0, %v371
        %v471 = vsel %vm429, 0, %v372
        %v472 = vsel %vm415, 0, %v373
        %v473 = vsel %vm422, 0, %v374
        %v474 = vsel %vm429, 0, %v375
        %v475 = vsel %vm415, 0, %v376
        %v476 = vsel %vm422, 0, %v377
        %v477 = vsel %vm429, 0, %v378
        %v478 = vld [vmem:[#allocation2 + $0x10] sm:$0x1]
        %v479 = vld [vmem:[#allocation2 + $0x28] sm:$0x1]
        %v480 = vld [vmem:[#allocation2 + $0x40] sm:$0x1]
        %v481 = vld [vmem:[#allocation2 + $0x58] sm:$0x1]
        %v482 = vld [vmem:[#allocation2 + $0x70] sm:$0x1]
        %v483 = vld [vmem:[#allocation2 + $0x88] sm:$0x1]
        %v484 = vld [vmem:[#allocation2 + $0xa0] sm:$0x1]
        %v485 = vld [vmem:[#allocation2 + $0xb8] sm:$0x1]
        %v486 = vld [vmem:[#allocation2 + $0xd0] sm:$0x1]
        %v487 = vld [vmem:[#allocation2 + $0xe8] sm:$0x1]
        %v488 = vld [vmem:[#allocation2 + $0x100] sm:$0x1]
        %v489 = vld [vmem:[#allocation2 + $0x118] sm:$0x1]
        %v490 = vld [vmem:[#allocation2 + $0x130] sm:$0x1]
        %v491 = vld [vmem:[#allocation2 + $0x148] sm:$0x1]
        %v492 = vld [vmem:[#allocation2 + $0x160] sm:$0x1]
        %v493 = vld [vmem:[#allocation2 + $0x178] sm:$0x1]
        %v494 = vsel %vm226, 1, 0
        %v495 = vsel %vm227, 1, 0
        %vm496 = vcmp.eq.s32.totalorder %v494, 1
        %vm497 = vcmp.eq.s32.totalorder %v495, 1
        %vm498 = vmpackc.low %vm496, %vm496
        %vm499 = vmpackc.low %vm497, %vm497
        %v500 = vsel %vm498, 65537, 0
        %v501 = vsel %vm499, 65537, 0
        %vm502 = vsmask.f32 256
        %vm503 = vsmask.f32 4368
        %vm504 = vmor %vm502, %vm503
        %v506 = vshrl.u32 %v500, 16
        %v508 = vrot.slane %v506, 7
        %v509 = vshll.u32 %v500, 16
        %v511 = vor.u32 %v508, %v509
        %v512 = vrot.slane %v508, 4
        %v514 = vshrl.u32 %v501, 16
        %v516 = vrot.slane %v514, 7
        %v517 = vshll.u32 %v501, 16
        %v519 = vor.u32 %v516, %v517
        %v520 = vsel %vm504, %v512, %v519
        %v521 = vrot.slane %v516, 4
        %v522 = vunpack.c.l.b16 %v511
        %v523 = vunpack.c.h.b16 %v511
        %v524 = vunpack.c.l.b16 0
        %v525 = vunpack.c.h.b16 0
        %vm526 = vcmp.ne.s32.totalorder %v522, %v524
        %vm527 = vcmp.ne.s32.totalorder %v523, %v525
        %vm528 = vmpackc.low %vm527, %vm526
        %v529 = vunpack.c.l.b16 %v520
        %v530 = vunpack.c.h.b16 %v520
        %v531 = vunpack.c.l.b16 0
        %v532 = vunpack.c.h.b16 0
        %vm533 = vcmp.ne.s32.totalorder %v529, %v531
        %vm534 = vcmp.ne.s32.totalorder %v530, %v532
        %vm535 = vmpackc.low %vm534, %vm533
        %v536 = vunpack.c.l.b16 %v521
        %v537 = vunpack.c.h.b16 %v521
        %v538 = vunpack.c.l.b16 0
        %v539 = vunpack.c.h.b16 0
        %vm540 = vcmp.ne.s32.totalorder %v536, %v538
        %vm541 = vcmp.ne.s32.totalorder %v537, %v539
        %vm542 = vmpackc.low %vm541, %vm540
        %v543 = vsel %vm528, 0, %v332
        %v544 = vsel %vm535, 0, %v333
        %v545 = vsel %vm542, 0, %v478
        %v546 = vsel %vm528, 0, %v335
        %v547 = vsel %vm535, 0, %v336
        %v548 = vsel %vm542, 0, %v479
        %v549 = vsel %vm528, 0, %v338
        %v550 = vsel %vm535, 0, %v339
        %v551 = vsel %vm542, 0, %v480
        %v552 = vsel %vm528, 0, %v341
        %v553 = vsel %vm535, 0, %v342
        %v554 = vsel %vm542, 0, %v481
        %v555 = vsel %vm528, 0, %v344
        %v556 = vsel %vm535, 0, %v345
        %v557 = vsel %vm542, 0, %v482
        %v558 = vsel %vm528, 0, %v347
        %v559 = vsel %vm535, 0, %v348
        %v560 = vsel %vm542, 0, %v483
        %v561 = vsel %vm528, 0, %v350
        %v562 = vsel %vm535, 0, %v351
        %v563 = vsel %vm542, 0, %v484
        %v564 = vsel %vm528, 0, %v353
        %v565 = vsel %vm535, 0, %v354
        %v566 = vsel %vm542, 0, %v485
        %v567 = vsel %vm528, 0, %v356
        %v568 = vsel %vm535, 0, %v357
        %v569 = vsel %vm542, 0, %v486
        %v570 = vsel %vm528, 0, %v359
        %v571 = vsel %vm535, 0, %v360
        %v572 = vsel %vm542, 0, %v487
        %v573 = vsel %vm528, 0, %v362
        %v574 = vsel %vm535, 0, %v363
        %v575 = vsel %vm542, 0, %v488
        %v576 = vsel %vm528, 0, %v365
        %v577 = vsel %vm535, 0, %v366
        %v578 = vsel %vm542, 0, %v489
        %v579 = vsel %vm528, 0, %v368
        %v580 = vsel %vm535, 0, %v369
        %v581 = vsel %vm542, 0, %v490
        %v582 = vsel %vm528, 0, %v371
        %v583 = vsel %vm535, 0, %v372
        %v584 = vsel %vm542, 0, %v491
        %v585 = vsel %vm528, 0, %v374
        %v586 = vsel %vm535, 0, %v375
        %v587 = vsel %vm542, 0, %v492
        %v588 = vsel %vm528, 0, %v377
        %v589 = vsel %vm535, 0, %v378
        %v590 = vsel %vm542, 0, %v493
        %v591 = vld [vmem:[%s298 + $0x4] sm:$0x8]
        %v592 = vld [vmem:[%s298 + $0x8] sm:$0xf]
        %v593 = vld [vmem:[%s298 + $0xc] sm:$0xf]
        %v594 = vld [vmem:[%s298 + $0x1c] sm:$0x8]
        %v595 = vld [vmem:[%s298 + $0x20] sm:$0xf]
        %v596 = vld [vmem:[%s298 + $0x24] sm:$0xf]
        %v597 = vld [vmem:[%s298 + $0x34] sm:$0x8]
        %v598 = vld [vmem:[%s298 + $0x38] sm:$0xf]
        %v599 = vld [vmem:[%s298 + $0x3c] sm:$0xf]
        %v600 = vld [vmem:[%s298 + $0x4c] sm:$0x8]
        %v601 = vld [vmem:[%s298 + $0x50] sm:$0xf]
        %v602 = vld [vmem:[%s298 + $0x54] sm:$0xf]
        %v603 = vld [vmem:[%s298 + $0x64] sm:$0x8]
        %v604 = vld [vmem:[%s298 + $0x68] sm:$0xf]
        %v605 = vld [vmem:[%s298 + $0x6c] sm:$0xf]
        %v606 = vld [vmem:[%s298 + $0x7c] sm:$0x8]
        %v607 = vld [vmem:[%s298 + $0x80] sm:$0xf]
        %v608 = vld [vmem:[%s298 + $0x84] sm:$0xf]
        %v609 = vld [vmem:[%s298 + $0x94] sm:$0x8]
        %v610 = vld [vmem:[%s298 + $0x98] sm:$0xf]
        %v611 = vld [vmem:[%s298 + $0x9c] sm:$0xf]
        %v612 = vld [vmem:[%s298 + $0xac] sm:$0x8]
        %v613 = vld [vmem:[%s298 + $0xb0] sm:$0xf]
        %v614 = vld [vmem:[%s298 + $0xb4] sm:$0xf]
        %v615 = vld [vmem:[%s298 + $0xc4] sm:$0x8]
        %v616 = vld [vmem:[%s298 + $0xc8] sm:$0xf]
        %v617 = vld [vmem:[%s298 + $0xcc] sm:$0xf]
        %v618 = vld [vmem:[%s298 + $0xdc] sm:$0x8]
        %v619 = vld [vmem:[%s298 + $0xe0] sm:$0xf]
        %v620 = vld [vmem:[%s298 + $0xe4] sm:$0xf]
        %v621 = vld [vmem:[%s298 + $0xf4] sm:$0x8]
        %v622 = vld [vmem:[%s298 + $0xf8] sm:$0xf]
        %v623 = vld [vmem:[%s298 + $0xfc] sm:$0xf]
        %v624 = vld [vmem:[%s298 + $0x10c] sm:$0x8]
        %v625 = vld [vmem:[%s298 + $0x110] sm:$0xf]
        %v626 = vld [vmem:[%s298 + $0x114] sm:$0xf]
        %v627 = vld [vmem:[%s298 + $0x124] sm:$0x8]
        %v628 = vld [vmem:[%s298 + $0x128] sm:$0xf]
        %v629 = vld [vmem:[%s298 + $0x12c] sm:$0xf]
        %v630 = vld [vmem:[%s298 + $0x13c] sm:$0x8]
        %v631 = vld [vmem:[%s298 + $0x140] sm:$0xf]
        %v632 = vld [vmem:[%s298 + $0x144] sm:$0xf]
        %v633 = vld [vmem:[%s298 + $0x154] sm:$0x8]
        %v634 = vld [vmem:[%s298 + $0x158] sm:$0xf]
        %v635 = vld [vmem:[%s298 + $0x15c] sm:$0xf]
        %v636 = vld [vmem:[%s298 + $0x16c] sm:$0x8]
        %v637 = vld [vmem:[%s298 + $0x170] sm:$0xf]
        %v638 = vld [vmem:[%s298 + $0x174] sm:$0xf]
        %v639 = vsel %vm415, 0, %v591
        %v640 = vsel %vm422, 0, %v592
        %v641 = vsel %vm429, 0, %v593
        %v642 = vsel %vm415, 0, %v594
        %v643 = vsel %vm422, 0, %v595
        %v644 = vsel %vm429, 0, %v596
        %v645 = vsel %vm415, 0, %v597
        %v646 = vsel %vm422, 0, %v598
        %v647 = vsel %vm429, 0, %v599
        %v648 = vsel %vm415, 0, %v600
        %v649 = vsel %vm422, 0, %v601
        %v650 = vsel %vm429, 0, %v602
        %v651 = vsel %vm415, 0, %v603
        %v652 = vsel %vm422, 0, %v604
        %v653 = vsel %vm429, 0, %v605
        %v654 = vsel %vm415, 0, %v606
        %v655 = vsel %vm422, 0, %v607
        %v656 = vsel %vm429, 0, %v608
        %v657 = vsel %vm415, 0, %v609
        %v658 = vsel %vm422, 0, %v610
        %v659 = vsel %vm429, 0, %v611
        %v660 = vsel %vm415, 0, %v612
        %v661 = vsel %vm422, 0, %v613
        %v662 = vsel %vm429, 0, %v614
        %v663 = vsel %vm415, 0, %v615
        %v664 = vsel %vm422, 0, %v616
        %v665 = vsel %vm429, 0, %v617
        %v666 = vsel %vm415, 0, %v618
        %v667 = vsel %vm422, 0, %v619
        %v668 = vsel %vm429, 0, %v620
        %v669 = vsel %vm415, 0, %v621
        %v670 = vsel %vm422, 0, %v622
        %v671 = vsel %vm429, 0, %v623
        %v672 = vsel %vm415, 0, %v624
        %v673 = vsel %vm422, 0, %v625
        %v674 = vsel %vm429, 0, %v626
        %v675 = vsel %vm415, 0, %v627
        %v676 = vsel %vm422, 0, %v628
        %v677 = vsel %vm429, 0, %v629
        %v678 = vsel %vm415, 0, %v630
        %v679 = vsel %vm422, 0, %v631
        %v680 = vsel %vm429, 0, %v632
        %v681 = vsel %vm415, 0, %v633
        %v682 = vsel %vm422, 0, %v634
        %v683 = vsel %vm429, 0, %v635
        %v684 = vsel %vm415, 0, %v636
        %v685 = vsel %vm422, 0, %v637
        %v686 = vsel %vm429, 0, %v638
        %v735 = vunpack.c.l.b16 %v430
        %v736 = vunpack.c.l.b16 %v431
        %v737 = vunpack.c.l.b16 %v432
        %v738 = vunpack.c.l.b16 %v433
        %v739 = vunpack.c.l.b16 %v434
        %v740 = vunpack.c.l.b16 %v435
        %v741 = vunpack.c.l.b16 %v436
        %v742 = vunpack.c.l.b16 %v437
        %v743 = vunpack.c.l.b16 %v438
        %v744 = vunpack.c.l.b16 %v439
        %v745 = vunpack.c.l.b16 %v440
        %v746 = vunpack.c.l.b16 %v441
        %v747 = vunpack.c.l.b16 %v442
        %v748 = vunpack.c.l.b16 %v443
        %v749 = vunpack.c.l.b16 %v444
        %v750 = vunpack.c.l.b16 %v445
        %v751 = vunpack.c.l.b16 %v446
        %v752 = vunpack.c.l.b16 %v447
        %v753 = vunpack.c.l.b16 %v448
        %v754 = vunpack.c.l.b16 %v449
        %v755 = vunpack.c.l.b16 %v450
        %v756 = vunpack.c.l.b16 %v451
        %v757 = vunpack.c.l.b16 %v452
        %v758 = vunpack.c.l.b16 %v453
        %v759 = vunpack.c.l.b16 %v454
        %v760 = vunpack.c.l.b16 %v455
        %v761 = vunpack.c.l.b16 %v456
        %v762 = vunpack.c.l.b16 %v457
        %v763 = vunpack.c.l.b16 %v458
        %v764 = vunpack.c.l.b16 %v459
        %v765 = vunpack.c.l.b16 %v460
        %v766 = vunpack.c.l.b16 %v461
        %v767 = vunpack.c.l.b16 %v462
        %v768 = vunpack.c.l.b16 %v463
        %v769 = vunpack.c.l.b16 %v464
        %v770 = vunpack.c.l.b16 %v465
        %v771 = vunpack.c.l.b16 %v466
        %v772 = vunpack.c.l.b16 %v467
        %v773 = vunpack.c.l.b16 %v468
        %v774 = vunpack.c.l.b16 %v469
        %v775 = vunpack.c.l.b16 %v470
        %v776 = vunpack.c.l.b16 %v471
        %v777 = vunpack.c.l.b16 %v472
        %v778 = vunpack.c.l.b16 %v473
        %v779 = vunpack.c.l.b16 %v474
        %v780 = vunpack.c.l.b16 %v475
        %v781 = vunpack.c.l.b16 %v476
        %v782 = vunpack.c.l.b16 %v477
        %v783 = vpack.c.b16 %v736, %v735
        %v784 = vpack.c.b16 %v737, %v737
        %v785 = vpack.c.b16 %v739, %v738
        %v786 = vpack.c.b16 %v740, %v740
        %v787 = vpack.c.b16 %v742, %v741
        %v788 = vpack.c.b16 %v743, %v743
        %v789 = vpack.c.b16 %v745, %v744
        %v790 = vpack.c.b16 %v746, %v746
        %v791 = vpack.c.b16 %v748, %v747
        %v792 = vpack.c.b16 %v749, %v749
        %v793 = vpack.c.b16 %v751, %v750
        %v794 = vpack.c.b16 %v752, %v752
        %v795 = vpack.c.b16 %v754, %v753
        %v796 = vpack.c.b16 %v755, %v755
        %v797 = vpack.c.b16 %v757, %v756
        %v798 = vpack.c.b16 %v758, %v758
        %v799 = vpack.c.b16 %v760, %v759
        %v800 = vpack.c.b16 %v761, %v761
        %v801 = vpack.c.b16 %v763, %v762
        %v802 = vpack.c.b16 %v764, %v764
        %v803 = vpack.c.b16 %v766, %v765
        %v804 = vpack.c.b16 %v767, %v767
        %v805 = vpack.c.b16 %v769, %v768
        %v806 = vpack.c.b16 %v770, %v770
        %v807 = vpack.c.b16 %v772, %v771
        %v808 = vpack.c.b16 %v773, %v773
        %v809 = vpack.c.b16 %v775, %v774
        %v810 = vpack.c.b16 %v776, %v776
        %v811 = vpack.c.b16 %v778, %v777
        %v812 = vpack.c.b16 %v779, %v779
        %v813 = vpack.c.b16 %v781, %v780
        %v814 = vpack.c.b16 %v782, %v782
        %v847 = vunpack.c.l.b16 %v332
        %v848 = vunpack.c.l.b16 %v333
        %v849 = vunpack.c.l.b16 %v335
        %v850 = vunpack.c.l.b16 %v336
        %v851 = vunpack.c.l.b16 %v338
        %v852 = vunpack.c.l.b16 %v339
        %v853 = vunpack.c.l.b16 %v341
        %v854 = vunpack.c.l.b16 %v342
        %v855 = vunpack.c.l.b16 %v344
        %v856 = vunpack.c.l.b16 %v345
        %v857 = vunpack.c.l.b16 %v347
        %v858 = vunpack.c.l.b16 %v348
        %v859 = vunpack.c.l.b16 %v350
        %v860 = vunpack.c.l.b16 %v351
        %v861 = vunpack.c.l.b16 %v353
        %v862 = vunpack.c.l.b16 %v354
        %v863 = vunpack.c.l.b16 %v356
        %v864 = vunpack.c.l.b16 %v357
        %v865 = vunpack.c.l.b16 %v359
        %v866 = vunpack.c.l.b16 %v360
        %v867 = vunpack.c.l.b16 %v362
        %v868 = vunpack.c.l.b16 %v363
        %v869 = vunpack.c.l.b16 %v365
        %v870 = vunpack.c.l.b16 %v366
        %v871 = vunpack.c.l.b16 %v368
        %v872 = vunpack.c.l.b16 %v369
        %v873 = vunpack.c.l.b16 %v371
        %v874 = vunpack.c.l.b16 %v372
        %v875 = vunpack.c.l.b16 %v374
        %v876 = vunpack.c.l.b16 %v375
        %v877 = vunpack.c.l.b16 %v377
        %v878 = vunpack.c.l.b16 %v378
        %v879 = vpack.c.b16 %v848, %v847
        %v880 = vpack.c.b16 %v850, %v849
        %v881 = vpack.c.b16 %v852, %v851
        %v882 = vpack.c.b16 %v854, %v853
        %v883 = vpack.c.b16 %v856, %v855
        %v884 = vpack.c.b16 %v858, %v857
        %v885 = vpack.c.b16 %v860, %v859
        %v886 = vpack.c.b16 %v862, %v861
        %v887 = vpack.c.b16 %v864, %v863
        %v888 = vpack.c.b16 %v866, %v865
        %v889 = vpack.c.b16 %v868, %v867
        %v890 = vpack.c.b16 %v870, %v869
        %v891 = vpack.c.b16 %v872, %v871
        %v892 = vpack.c.b16 %v874, %v873
        %v893 = vpack.c.b16 %v876, %v875
        %v894 = vpack.c.b16 %v878, %v877
        %v896 = vshrl.u32 %v879, 16
        %v898 = vrot.slane %v896, 4
        %v899 = vshll.u32 %v879, 16
        %v901 = vrot.slane %v899, 5
        %v902 = vor.u32 %v898, %v901
        %v904 = vshrl.u32 %v880, 16
        %v906 = vrot.slane %v904, 4
        %v907 = vshll.u32 %v880, 16
        %v909 = vrot.slane %v907, 5
        %v910 = vor.u32 %v906, %v909
        %v912 = vshrl.u32 %v881, 16
        %v914 = vrot.slane %v912, 4
        %v915 = vshll.u32 %v881, 16
        %v917 = vrot.slane %v915, 5
        %v918 = vor.u32 %v914, %v917
        %v920 = vshrl.u32 %v882, 16
        %v922 = vrot.slane %v920, 4
        %v923 = vshll.u32 %v882, 16
        %v925 = vrot.slane %v923, 5
        %v926 = vor.u32 %v922, %v925
        %v928 = vshrl.u32 %v883, 16
        %v930 = vrot.slane %v928, 4
        %v931 = vshll.u32 %v883, 16
        %v933 = vrot.slane %v931, 5
        %v934 = vor.u32 %v930, %v933
        %v936 = vshrl.u32 %v884, 16
        %v938 = vrot.slane %v936, 4
        %v939 = vshll.u32 %v884, 16
        %v941 = vrot.slane %v939, 5
        %v942 = vor.u32 %v938, %v941
        %v944 = vshrl.u32 %v885, 16
        %v946 = vrot.slane %v944, 4
        %v947 = vshll.u32 %v885, 16
        %v949 = vrot.slane %v947, 5
        %v950 = vor.u32 %v946, %v949
        %v952 = vshrl.u32 %v886, 16
        %v954 = vrot.slane %v952, 4
        %v955 = vshll.u32 %v886, 16
        %v957 = vrot.slane %v955, 5
        %v958 = vor.u32 %v954, %v957
        %v960 = vshrl.u32 %v887, 16
        %v962 = vrot.slane %v960, 4
        %v963 = vshll.u32 %v887, 16
        %v965 = vrot.slane %v963, 5
        %v966 = vor.u32 %v962, %v965
        %v968 = vshrl.u32 %v888, 16
        %v970 = vrot.slane %v968, 4
        %v971 = vshll.u32 %v888, 16
        %v973 = vrot.slane %v971, 5
        %v974 = vor.u32 %v970, %v973
        %v976 = vshrl.u32 %v889, 16
        %v978 = vrot.slane %v976, 4
        %v979 = vshll.u32 %v889, 16
        %v981 = vrot.slane %v979, 5
        %v982 = vor.u32 %v978, %v981
        %v984 = vshrl.u32 %v890, 16
        %v986 = vrot.slane %v984, 4
        %v987 = vshll.u32 %v890, 16
        %v989 = vrot.slane %v987, 5
        %v990 = vor.u32 %v986, %v989
        %v992 = vshrl.u32 %v891, 16
        %v994 = vrot.slane %v992, 4
        %v995 = vshll.u32 %v891, 16
        %v997 = vrot.slane %v995, 5
        %v998 = vor.u32 %v994, %v997
        %v1000 = vshrl.u32 %v892, 16
        %v1002 = vrot.slane %v1000, 4
        %v1003 = vshll.u32 %v892, 16
        %v1005 = vrot.slane %v1003, 5
        %v1006 = vor.u32 %v1002, %v1005
        %v1008 = vshrl.u32 %v893, 16
        %v1010 = vrot.slane %v1008, 4
        %v1011 = vshll.u32 %v893, 16
        %v1013 = vrot.slane %v1011, 5
        %v1014 = vor.u32 %v1010, %v1013
        %v1016 = vshrl.u32 %v894, 16
        %v1018 = vrot.slane %v1016, 4
        %v1019 = vshll.u32 %v894, 16
        %v1021 = vrot.slane %v1019, 5
        %v1022 = vor.u32 %v1018, %v1021
        %1023 = vrot.lane.b32.xlu0 %v902, 32
        %v1024 = vpop.permute.xlu0 %1023
        %1025 = vrot.lane.b32.xlu0 %v910, 32
        %v1026 = vpop.permute.xlu0 %1025
        %1027 = vrot.lane.b32.xlu0 %v918, 32
        %v1028 = vpop.permute.xlu0 %1027
        %1029 = vrot.lane.b32.xlu0 %v926, 32
        %v1030 = vpop.permute.xlu0 %1029
        %1031 = vrot.lane.b32.xlu0 %v934, 32
        %v1032 = vpop.permute.xlu0 %1031
        %1033 = vrot.lane.b32.xlu0 %v942, 32
        %v1034 = vpop.permute.xlu0 %1033
        %1035 = vrot.lane.b32.xlu0 %v950, 32
        %v1036 = vpop.permute.xlu0 %1035
        %1037 = vrot.lane.b32.xlu0 %v958, 32
        %v1038 = vpop.permute.xlu0 %1037
        %1039 = vrot.lane.b32.xlu0 %v966, 32
        %v1040 = vpop.permute.xlu0 %1039
        %1041 = vrot.lane.b32.xlu0 %v974, 32
        %v1042 = vpop.permute.xlu0 %1041
        %1043 = vrot.lane.b32.xlu0 %v982, 32
        %v1044 = vpop.permute.xlu0 %1043
        %1045 = vrot.lane.b32.xlu0 %v990, 32
        %v1046 = vpop.permute.xlu0 %1045
        %1047 = vrot.lane.b32.xlu0 %v998, 32
        %v1048 = vpop.permute.xlu0 %1047
        %1049 = vrot.lane.b32.xlu0 %v1006, 32
        %v1050 = vpop.permute.xlu0 %1049
        %1051 = vrot.lane.b32.xlu0 %v1014, 32
        %v1052 = vpop.permute.xlu0 %1051
        %1053 = vrot.lane.b32.xlu0 %v1022, 32
        %v1054 = vpop.permute.xlu0 %1053
        %v1103 = vunpack.c.l.b16 %v543
        %v1104 = vunpack.c.l.b16 %v544
        %v1105 = vunpack.c.l.b16 %v545
        %v1106 = vunpack.c.l.b16 %v546
        %v1107 = vunpack.c.l.b16 %v547
        %v1108 = vunpack.c.l.b16 %v548
        %v1109 = vunpack.c.l.b16 %v549
        %v1110 = vunpack.c.l.b16 %v550
        %v1111 = vunpack.c.l.b16 %v551
        %v1112 = vunpack.c.l.b16 %v552
        %v1113 = vunpack.c.l.b16 %v553
        %v1114 = vunpack.c.l.b16 %v554
        %v1115 = vunpack.c.l.b16 %v555
        %v1116 = vunpack.c.l.b16 %v556
        %v1117 = vunpack.c.l.b16 %v557
        %v1118 = vunpack.c.l.b16 %v558
        %v1119 = vunpack.c.l.b16 %v559
        %v1120 = vunpack.c.l.b16 %v560
        %v1121 = vunpack.c.l.b16 %v561
        %v1122 = vunpack.c.l.b16 %v562
        %v1123 = vunpack.c.l.b16 %v563
        %v1124 = vunpack.c.l.b16 %v564
        %v1125 = vunpack.c.l.b16 %v565
        %v1126 = vunpack.c.l.b16 %v566
        %v1127 = vunpack.c.l.b16 %v567
        %v1128 = vunpack.c.l.b16 %v568
        %v1129 = vunpack.c.l.b16 %v569
        %v1130 = vunpack.c.l.b16 %v570
        %v1131 = vunpack.c.l.b16 %v571
        %v1132 = vunpack.c.l.b16 %v572
        %v1133 = vunpack.c.l.b16 %v573
        %v1134 = vunpack.c.l.b16 %v574
        %v1135 = vunpack.c.l.b16 %v575
        %v1136 = vunpack.c.l.b16 %v576
        %v1137 = vunpack.c.l.b16 %v577
        %v1138 = vunpack.c.l.b16 %v578
        %v1139 = vunpack.c.l.b16 %v579
        %v1140 = vunpack.c.l.b16 %v580
        %v1141 = vunpack.c.l.b16 %v581
        %v1142 = vunpack.c.l.b16 %v582
        %v1143 = vunpack.c.l.b16 %v583
        %v1144 = vunpack.c.l.b16 %v584
        %v1145 = vunpack.c.l.b16 %v585
        %v1146 = vunpack.c.l.b16 %v586
        %v1147 = vunpack.c.l.b16 %v587
        %v1148 = vunpack.c.l.b16 %v588
        %v1149 = vunpack.c.l.b16 %v589
        %v1150 = vunpack.c.l.b16 %v590
        %v1151 = vpack.c.b16 %v1104, %v1103
        %v1152 = vpack.c.b16 %v1105, %v1105
        %v1153 = vpack.c.b16 %v1107, %v1106
        %v1154 = vpack.c.b16 %v1108, %v1108
        %v1155 = vpack.c.b16 %v1110, %v1109
        %v1156 = vpack.c.b16 %v1111, %v1111
        %v1157 = vpack.c.b16 %v1113, %v1112
        %v1158 = vpack.c.b16 %v1114, %v1114
        %v1159 = vpack.c.b16 %v1116, %v1115
        %v1160 = vpack.c.b16 %v1117, %v1117
        %v1161 = vpack.c.b16 %v1119, %v1118
        %v1162 = vpack.c.b16 %v1120, %v1120
        %v1163 = vpack.c.b16 %v1122, %v1121
        %v1164 = vpack.c.b16 %v1123, %v1123
        %v1165 = vpack.c.b16 %v1125, %v1124
        %v1166 = vpack.c.b16 %v1126, %v1126
        %v1167 = vpack.c.b16 %v1128, %v1127
        %v1168 = vpack.c.b16 %v1129, %v1129
        %v1169 = vpack.c.b16 %v1131, %v1130
        %v1170 = vpack.c.b16 %v1132, %v1132
        %v1171 = vpack.c.b16 %v1134, %v1133
        %v1172 = vpack.c.b16 %v1135, %v1135
        %v1173 = vpack.c.b16 %v1137, %v1136
        %v1174 = vpack.c.b16 %v1138, %v1138
        %v1175 = vpack.c.b16 %v1140, %v1139
        %v1176 = vpack.c.b16 %v1141, %v1141
        %v1177 = vpack.c.b16 %v1143, %v1142
        %v1178 = vpack.c.b16 %v1144, %v1144
        %v1179 = vpack.c.b16 %v1146, %v1145
        %v1180 = vpack.c.b16 %v1147, %v1147
        %v1181 = vpack.c.b16 %v1149, %v1148
        %v1182 = vpack.c.b16 %v1150, %v1150
        %vm1183 = vcmask 1042432
        %v1184 = vrot.slane %v1151, 5
        %v1185 = vrot.slane %v1152, 5
        %v1186 = vsel %vm1183, %v1184, %v1185
        %v1187 = vrot.slane %v1153, 5
        %v1188 = vrot.slane %v1154, 5
        %v1189 = vsel %vm1183, %v1187, %v1188
        %v1190 = vrot.slane %v1155, 5
        %v1191 = vrot.slane %v1156, 5
        %v1192 = vsel %vm1183, %v1190, %v1191
        %v1193 = vrot.slane %v1157, 5
        %v1194 = vrot.slane %v1158, 5
        %v1195 = vsel %vm1183, %v1193, %v1194
        %v1196 = vrot.slane %v1159, 5
        %v1197 = vrot.slane %v1160, 5
        %v1198 = vsel %vm1183, %v1196, %v1197
        %v1199 = vrot.slane %v1161, 5
        %v1200 = vrot.slane %v1162, 5
        %v1201 = vsel %vm1183, %v1199, %v1200
        %v1202 = vrot.slane %v1163, 5
        %v1203 = vrot.slane %v1164, 5
        %v1204 = vsel %vm1183, %v1202, %v1203
        %v1205 = vrot.slane %v1165, 5
        %v1206 = vrot.slane %v1166, 5
        %v1207 = vsel %vm1183, %v1205, %v1206
        %v1208 = vrot.slane %v1167, 5
        %v1209 = vrot.slane %v1168, 5
        %v1210 = vsel %vm1183, %v1208, %v1209
        %v1211 = vrot.slane %v1169, 5
        %v1212 = vrot.slane %v1170, 5
        %v1213 = vsel %vm1183, %v1211, %v1212
        %v1214 = vrot.slane %v1171, 5
        %v1215 = vrot.slane %v1172, 5
        %v1216 = vsel %vm1183, %v1214, %v1215
        %v1217 = vrot.slane %v1173, 5
        %v1218 = vrot.slane %v1174, 5
        %v1219 = vsel %vm1183, %v1217, %v1218
        %v1220 = vrot.slane %v1175, 5
        %v1221 = vrot.slane %v1176, 5
        %v1222 = vsel %vm1183, %v1220, %v1221
        %v1223 = vrot.slane %v1177, 5
        %v1224 = vrot.slane %v1178, 5
        %v1225 = vsel %vm1183, %v1223, %v1224
        %v1226 = vrot.slane %v1179, 5
        %v1227 = vrot.slane %v1180, 5
        %v1228 = vsel %vm1183, %v1226, %v1227
        %v1229 = vrot.slane %v1181, 5
        %v1230 = vrot.slane %v1182, 5
        %v1231 = vsel %vm1183, %v1229, %v1230
        %1232 = vrot.lane.b32.xlu0 %v1184, 64
        %v1233 = vpop.permute.xlu0 %1232
        %1234 = vrot.lane.b32.xlu0 %v1186, 64
        %v1235 = vpop.permute.xlu0 %1234
        %1236 = vrot.lane.b32.xlu0 %v1187, 64
        %v1237 = vpop.permute.xlu0 %1236
        %1238 = vrot.lane.b32.xlu0 %v1189, 64
        %v1239 = vpop.permute.xlu0 %1238
        %1240 = vrot.lane.b32.xlu0 %v1190, 64
        %v1241 = vpop.permute.xlu0 %1240
        %1242 = vrot.lane.b32.xlu0 %v1192, 64
        %v1243 = vpop.permute.xlu0 %1242
        %1244 = vrot.lane.b32.xlu0 %v1193, 64
        %v1245 = vpop.permute.xlu0 %1244
        %1246 = vrot.lane.b32.xlu0 %v1195, 64
        %v1247 = vpop.permute.xlu0 %1246
        %1248 = vrot.lane.b32.xlu0 %v1196, 64
        %v1249 = vpop.permute.xlu0 %1248
        %1250 = vrot.lane.b32.xlu0 %v1198, 64
        %v1251 = vpop.permute.xlu0 %1250
        %1252 = vrot.lane.b32.xlu0 %v1199, 64
        %v1253 = vpop.permute.xlu0 %1252
        %1254 = vrot.lane.b32.xlu0 %v1201, 64
        %v1255 = vpop.permute.xlu0 %1254
        %1256 = vrot.lane.b32.xlu0 %v1202, 64
        %v1257 = vpop.permute.xlu0 %1256
        %1258 = vrot.lane.b32.xlu0 %v1204, 64
        %v1259 = vpop.permute.xlu0 %1258
        %1260 = vrot.lane.b32.xlu0 %v1205, 64
        %v1261 = vpop.permute.xlu0 %1260
        %1262 = vrot.lane.b32.xlu0 %v1207, 64
        %v1263 = vpop.permute.xlu0 %1262
        %1264 = vrot.lane.b32.xlu0 %v1208, 64
        %v1265 = vpop.permute.xlu0 %1264
        %1266 = vrot.lane.b32.xlu0 %v1210, 64
        %v1267 = vpop.permute.xlu0 %1266
        %1268 = vrot.lane.b32.xlu0 %v1211, 64
        %v1269 = vpop.permute.xlu0 %1268
        %1270 = vrot.lane.b32.xlu0 %v1213, 64
        %v1271 = vpop.permute.xlu0 %1270
        %1272 = vrot.lane.b32.xlu0 %v1214, 64
        %v1273 = vpop.permute.xlu0 %1272
        %1274 = vrot.lane.b32.xlu0 %v1216, 64
        %v1275 = vpop.permute.xlu0 %1274
        %1276 = vrot.lane.b32.xlu0 %v1217, 64
        %v1277 = vpop.permute.xlu0 %1276
        %1278 = vrot.lane.b32.xlu0 %v1219, 64
        %v1279 = vpop.permute.xlu0 %1278
        %1280 = vrot.lane.b32.xlu0 %v1220, 64
        %v1281 = vpop.permute.xlu0 %1280
        %1282 = vrot.lane.b32.xlu0 %v1222, 64
        %v1283 = vpop.permute.xlu0 %1282
        %1284 = vrot.lane.b32.xlu0 %v1223, 64
        %v1285 = vpop.permute.xlu0 %1284
        %1286 = vrot.lane.b32.xlu0 %v1225, 64
        %v1287 = vpop.permute.xlu0 %1286
        %1288 = vrot.lane.b32.xlu0 %v1226, 64
        %v1289 = vpop.permute.xlu0 %1288
        %1290 = vrot.lane.b32.xlu0 %v1228, 64
        %v1291 = vpop.permute.xlu0 %1290
        %1292 = vrot.lane.b32.xlu0 %v1229, 64
        %v1293 = vpop.permute.xlu0 %1292
        %1294 = vrot.lane.b32.xlu0 %v1231, 64
        %v1295 = vpop.permute.xlu0 %1294
        %v1344 = vunpack.c.l.b16 %v639
        %v1345 = vunpack.c.l.b16 %v640
        %v1346 = vunpack.c.l.b16 %v641
        %v1347 = vunpack.c.l.b16 %v642
        %v1348 = vunpack.c.l.b16 %v643
        %v1349 = vunpack.c.l.b16 %v644
        %v1350 = vunpack.c.l.b16 %v645
        %v1351 = vunpack.c.l.b16 %v646
        %v1352 = vunpack.c.l.b16 %v647
        %v1353 = vunpack.c.l.b16 %v648
        %v1354 = vunpack.c.l.b16 %v649
        %v1355 = vunpack.c.l.b16 %v650
        %v1356 = vunpack.c.l.b16 %v651
        %v1357 = vunpack.c.l.b16 %v652
        %v1358 = vunpack.c.l.b16 %v653
        %v1359 = vunpack.c.l.b16 %v654
        %v1360 = vunpack.c.l.b16 %v655
        %v1361 = vunpack.c.l.b16 %v656
        %v1362 = vunpack.c.l.b16 %v657
        %v1363 = vunpack.c.l.b16 %v658
        %v1364 = vunpack.c.l.b16 %v659
        %v1365 = vunpack.c.l.b16 %v660
        %v1366 = vunpack.c.l.b16 %v661
        %v1367 = vunpack.c.l.b16 %v662
        %v1368 = vunpack.c.l.b16 %v663
        %v1369 = vunpack.c.l.b16 %v664
        %v1370 = vunpack.c.l.b16 %v665
        %v1371 = vunpack.c.l.b16 %v666
        %v1372 = vunpack.c.l.b16 %v667
        %v1373 = vunpack.c.l.b16 %v668
        %v1374 = vunpack.c.l.b16 %v669
        %v1375 = vunpack.c.l.b16 %v670
        %v1376 = vunpack.c.l.b16 %v671
        %v1377 = vunpack.c.l.b16 %v672
        %v1378 = vunpack.c.l.b16 %v673
        %v1379 = vunpack.c.l.b16 %v674
        %v1380 = vunpack.c.l.b16 %v675
        %v1381 = vunpack.c.l.b16 %v676
        %v1382 = vunpack.c.l.b16 %v677
        %v1383 = vunpack.c.l.b16 %v678
        %v1384 = vunpack.c.l.b16 %v679
        %v1385 = vunpack.c.l.b16 %v680
        %v1386 = vunpack.c.l.b16 %v681
        %v1387 = vunpack.c.l.b16 %v682
        %v1388 = vunpack.c.l.b16 %v683
        %v1389 = vunpack.c.l.b16 %v684
        %v1390 = vunpack.c.l.b16 %v685
        %v1391 = vunpack.c.l.b16 %v686
        %v1392 = vpack.c.b16 %v1345, %v1344
        %v1393 = vpack.c.b16 %v1346, %v1346
        %v1394 = vpack.c.b16 %v1348, %v1347
        %v1395 = vpack.c.b16 %v1349, %v1349
        %v1396 = vpack.c.b16 %v1351, %v1350
        %v1397 = vpack.c.b16 %v1352, %v1352
        %v1398 = vpack.c.b16 %v1354, %v1353
        %v1399 = vpack.c.b16 %v1355, %v1355
        %v1400 = vpack.c.b16 %v1357, %v1356
        %v1401 = vpack.c.b16 %v1358, %v1358
        %v1402 = vpack.c.b16 %v1360, %v1359
        %v1403 = vpack.c.b16 %v1361, %v1361
        %v1404 = vpack.c.b16 %v1363, %v1362
        %v1405 = vpack.c.b16 %v1364, %v1364
        %v1406 = vpack.c.b16 %v1366, %v1365
        %v1407 = vpack.c.b16 %v1367, %v1367
        %v1408 = vpack.c.b16 %v1369, %v1368
        %v1409 = vpack.c.b16 %v1370, %v1370
        %v1410 = vpack.c.b16 %v1372, %v1371
        %v1411 = vpack.c.b16 %v1373, %v1373
        %v1412 = vpack.c.b16 %v1375, %v1374
        %v1413 = vpack.c.b16 %v1376, %v1376
        %v1414 = vpack.c.b16 %v1378, %v1377
        %v1415 = vpack.c.b16 %v1379, %v1379
        %v1416 = vpack.c.b16 %v1381, %v1380
        %v1417 = vpack.c.b16 %v1382, %v1382
        %v1418 = vpack.c.b16 %v1384, %v1383
        %v1419 = vpack.c.b16 %v1385, %v1385
        %v1420 = vpack.c.b16 %v1387, %v1386
        %v1421 = vpack.c.b16 %v1388, %v1388
        %v1422 = vpack.c.b16 %v1390, %v1389
        %v1423 = vpack.c.b16 %v1391, %v1391
        %1424 = vrot.lane.b32.xlu0 %v1392, 96
        %v1425 = vpop.permute.xlu0 %1424
        %1426 = vrot.lane.b32.xlu0 %v1393, 96
        %v1427 = vpop.permute.xlu0 %1426
        %1428 = vrot.lane.b32.xlu0 %v1394, 96
        %v1429 = vpop.permute.xlu0 %1428
        %1430 = vrot.lane.b32.xlu0 %v1395, 96
        %v1431 = vpop.permute.xlu0 %1430
        %1432 = vrot.lane.b32.xlu0 %v1396, 96
        %v1433 = vpop.permute.xlu0 %1432
        %1434 = vrot.lane.b32.xlu0 %v1397, 96
        %v1435 = vpop.permute.xlu0 %1434
        %1436 = vrot.lane.b32.xlu0 %v1398, 96
        %v1437 = vpop.permute.xlu0 %1436
        %1438 = vrot.lane.b32.xlu0 %v1399, 96
        %v1439 = vpop.permute.xlu0 %1438
        %1440 = vrot.lane.b32.xlu0 %v1400, 96
        %v1441 = vpop.permute.xlu0 %1440
        %1442 = vrot.lane.b32.xlu0 %v1401, 96
        %v1443 = vpop.permute.xlu0 %1442
        %1444 = vrot.lane.b32.xlu0 %v1402, 96
        %v1445 = vpop.permute.xlu0 %1444
        %1446 = vrot.lane.b32.xlu0 %v1403, 96
        %v1447 = vpop.permute.xlu0 %1446
        %1448 = vrot.lane.b32.xlu0 %v1404, 96
        %v1449 = vpop.permute.xlu0 %1448
        %1450 = vrot.lane.b32.xlu0 %v1405, 96
        %v1451 = vpop.permute.xlu0 %1450
        %1452 = vrot.lane.b32.xlu0 %v1406, 96
        %v1453 = vpop.permute.xlu0 %1452
        %1454 = vrot.lane.b32.xlu0 %v1407, 96
        %v1455 = vpop.permute.xlu0 %1454
        %1456 = vrot.lane.b32.xlu0 %v1408, 96
        %v1457 = vpop.permute.xlu0 %1456
        %1458 = vrot.lane.b32.xlu0 %v1409, 96
        %v1459 = vpop.permute.xlu0 %1458
        %1460 = vrot.lane.b32.xlu0 %v1410, 96
        %v1461 = vpop.permute.xlu0 %1460
        %1462 = vrot.lane.b32.xlu0 %v1411, 96
        %v1463 = vpop.permute.xlu0 %1462
        %1464 = vrot.lane.b32.xlu0 %v1412, 96
        %v1465 = vpop.permute.xlu0 %1464
        %1466 = vrot.lane.b32.xlu0 %v1413, 96
        %v1467 = vpop.permute.xlu0 %1466
        %1468 = vrot.lane.b32.xlu0 %v1414, 96
        %v1469 = vpop.permute.xlu0 %1468
        %1470 = vrot.lane.b32.xlu0 %v1415, 96
        %v1471 = vpop.permute.xlu0 %1470
        %1472 = vrot.lane.b32.xlu0 %v1416, 96
        %v1473 = vpop.permute.xlu0 %1472
        %1474 = vrot.lane.b32.xlu0 %v1417, 96
        %v1475 = vpop.permute.xlu0 %1474
        %1476 = vrot.lane.b32.xlu0 %v1418, 96
        %v1477 = vpop.permute.xlu0 %1476
        %1478 = vrot.lane.b32.xlu0 %v1419, 96
        %v1479 = vpop.permute.xlu0 %1478
        %1480 = vrot.lane.b32.xlu0 %v1420, 96
        %v1481 = vpop.permute.xlu0 %1480
        %1482 = vrot.lane.b32.xlu0 %v1421, 96
        %v1483 = vpop.permute.xlu0 %1482
        %1484 = vrot.lane.b32.xlu0 %v1422, 96
        %v1485 = vpop.permute.xlu0 %1484
        %1486 = vrot.lane.b32.xlu0 %v1423, 96
        %v1487 = vpop.permute.xlu0 %1486
        %vm1488 = vcmask 261120
        %v1491 = vsel %vm1488, %v783, %v1024
        %v1493 = vsel %vm1488, %v784, %v1024
        %v1496 = vsel %vm1488, %v785, %v1026
        %v1498 = vsel %vm1488, %v786, %v1026
        %v1501 = vsel %vm1488, %v787, %v1028
        %v1503 = vsel %vm1488, %v788, %v1028
        %v1506 = vsel %vm1488, %v789, %v1030
        %v1508 = vsel %vm1488, %v790, %v1030
        %v1511 = vsel %vm1488, %v791, %v1032
        %v1513 = vsel %vm1488, %v792, %v1032
        %v1516 = vsel %vm1488, %v793, %v1034
        %v1518 = vsel %vm1488, %v794, %v1034
        %v1521 = vsel %vm1488, %v795, %v1036
        %v1523 = vsel %vm1488, %v796, %v1036
        %v1526 = vsel %vm1488, %v797, %v1038
        %v1528 = vsel %vm1488, %v798, %v1038
        %v1531 = vsel %vm1488, %v799, %v1040
        %v1533 = vsel %vm1488, %v800, %v1040
        %v1536 = vsel %vm1488, %v801, %v1042
        %v1538 = vsel %vm1488, %v802, %v1042
        %v1541 = vsel %vm1488, %v803, %v1044
        %v1543 = vsel %vm1488, %v804, %v1044
        %v1546 = vsel %vm1488, %v805, %v1046
        %v1548 = vsel %vm1488, %v806, %v1046
        %v1551 = vsel %vm1488, %v807, %v1048
        %v1553 = vsel %vm1488, %v808, %v1048
        %v1556 = vsel %vm1488, %v809, %v1050
        %v1558 = vsel %vm1488, %v810, %v1050
        %v1561 = vsel %vm1488, %v811, %v1052
        %v1563 = vsel %vm1488, %v812, %v1052
        %v1566 = vsel %vm1488, %v813, %v1054
        %v1568 = vsel %vm1488, %v814, %v1054
        %vm1569 = vcmask 523264
        %v1571 = vsel %vm1569, %v1491, %v1233
        %v1573 = vsel %vm1569, %v1493, %v1235
        %v1575 = vsel %vm1569, %v1496, %v1237
        %v1577 = vsel %vm1569, %v1498, %v1239
        %v1579 = vsel %vm1569, %v1501, %v1241
        %v1581 = vsel %vm1569, %v1503, %v1243
        %v1583 = vsel %vm1569, %v1506, %v1245
        %v1585 = vsel %vm1569, %v1508, %v1247
        %v1587 = vsel %vm1569, %v1511, %v1249
        %v1589 = vsel %vm1569, %v1513, %v1251
        %v1591 = vsel %vm1569, %v1516, %v1253
        %v1593 = vsel %vm1569, %v1518, %v1255
        %v1595 = vsel %vm1569, %v1521, %v1257
        %v1597 = vsel %vm1569, %v1523, %v1259
        %v1599 = vsel %vm1569, %v1526, %v1261
        %v1601 = vsel %vm1569, %v1528, %v1263
        %v1603 = vsel %vm1569, %v1531, %v1265
        %v1605 = vsel %vm1569, %v1533, %v1267
        %v1607 = vsel %vm1569, %v1536, %v1269
        %v1609 = vsel %vm1569, %v1538, %v1271
        %v1611 = vsel %vm1569, %v1541, %v1273
        %v1613 = vsel %vm1569, %v1543, %v1275
        %v1615 = vsel %vm1569, %v1546, %v1277
        %v1617 = vsel %vm1569, %v1548, %v1279
        %v1619 = vsel %vm1569, %v1551, %v1281
        %v1621 = vsel %vm1569, %v1553, %v1283
        %v1623 = vsel %vm1569, %v1556, %v1285
        %v1625 = vsel %vm1569, %v1558, %v1287
        %v1627 = vsel %vm1569, %v1561, %v1289
        %v1629 = vsel %vm1569, %v1563, %v1291
        %v1631 = vsel %vm1569, %v1566, %v1293
        %v1633 = vsel %vm1569, %v1568, %v1295
        %vm1634 = vcmask 785408
        %v1636 = vsel %vm1634, %v1571, %v1425
        %v1638 = vsel %vm1634, %v1573, %v1427
        %v1640 = vsel %vm1634, %v1575, %v1429
        %v1642 = vsel %vm1634, %v1577, %v1431
        %v1644 = vsel %vm1634, %v1579, %v1433
        %v1646 = vsel %vm1634, %v1581, %v1435
        %v1648 = vsel %vm1634, %v1583, %v1437
        %v1650 = vsel %vm1634, %v1585, %v1439
        %v1652 = vsel %vm1634, %v1587, %v1441
        %v1654 = vsel %vm1634, %v1589, %v1443
        %v1656 = vsel %vm1634, %v1591, %v1445
        %v1658 = vsel %vm1634, %v1593, %v1447
        %v1660 = vsel %vm1634, %v1595, %v1449
        %v1662 = vsel %vm1634, %v1597, %v1451
        %v1664 = vsel %vm1634, %v1599, %v1453
        %v1666 = vsel %vm1634, %v1601, %v1455
        %v1668 = vsel %vm1634, %v1603, %v1457
        %v1670 = vsel %vm1634, %v1605, %v1459
        %v1672 = vsel %vm1634, %v1607, %v1461
        %v1674 = vsel %vm1634, %v1609, %v1463
        %v1676 = vsel %vm1634, %v1611, %v1465
        %v1678 = vsel %vm1634, %v1613, %v1467
        %v1680 = vsel %vm1634, %v1615, %v1469
        %v1682 = vsel %vm1634, %v1617, %v1471
        %v1684 = vsel %vm1634, %v1619, %v1473
        %v1686 = vsel %vm1634, %v1621, %v1475
        %v1688 = vsel %vm1634, %v1623, %v1477
        %v1690 = vsel %vm1634, %v1625, %v1479
        %v1692 = vsel %vm1634, %v1627, %v1481
        %v1694 = vsel %vm1634, %v1629, %v1483
        %v1696 = vsel %vm1634, %v1631, %v1485
        %v1698 = vsel %vm1634, %v1633, %v1487
        %vm1699 = vsmask.f32 4352
        %v1700 = vshrl.u32 %v1636, 16
        %v1702 = vrot.slane %v1700, 3
        %v1703 = vshll.u32 %v1636, 16
        %v1705 = vrot.slane %v1703, 4
        %v1706 = vor.u32 %v1702, %v1705
        %v1707 = vshrl.u32 %v1638, 16
        %v1709 = vrot.slane %v1707, 3
        %v1710 = vshll.u32 %v1638, 16
        %v1712 = vrot.slane %v1710, 4
        %v1713 = vor.u32 %v1709, %v1712
        %v1714 = vsel %vm1699, %v1706, %v1713
        %v1715 = vshrl.u32 %v1640, 16
        %v1717 = vrot.slane %v1715, 3
        %v1718 = vshll.u32 %v1640, 16
        %v1720 = vrot.slane %v1718, 4
        %v1721 = vor.u32 %v1717, %v1720
        %v1722 = vshrl.u32 %v1642, 16
        %v1724 = vrot.slane %v1722, 3
        %v1725 = vshll.u32 %v1642, 16
        %v1727 = vrot.slane %v1725, 4
        %v1728 = vor.u32 %v1724, %v1727
        %v1729 = vsel %vm1699, %v1721, %v1728
        %v1730 = vshrl.u32 %v1644, 16
        %v1732 = vrot.slane %v1730, 3
        %v1733 = vshll.u32 %v1644, 16
        %v1735 = vrot.slane %v1733, 4
        %v1736 = vor.u32 %v1732, %v1735
        %v1737 = vshrl.u32 %v1646, 16
        %v1739 = vrot.slane %v1737, 3
        %v1740 = vshll.u32 %v1646, 16
        %v1742 = vrot.slane %v1740, 4
        %v1743 = vor.u32 %v1739, %v1742
        %v1744 = vsel %vm1699, %v1736, %v1743
        %v1745 = vshrl.u32 %v1648, 16
        %v1747 = vrot.slane %v1745, 3
        %v1748 = vshll.u32 %v1648, 16
        %v1750 = vrot.slane %v1748, 4
        %v1751 = vor.u32 %v1747, %v1750
        %v1752 = vshrl.u32 %v1650, 16
        %v1754 = vrot.slane %v1752, 3
        %v1755 = vshll.u32 %v1650, 16
        %v1757 = vrot.slane %v1755, 4
        %v1758 = vor.u32 %v1754, %v1757
        %v1759 = vsel %vm1699, %v1751, %v1758
        %v1760 = vshrl.u32 %v1652, 16
        %v1762 = vrot.slane %v1760, 3
        %v1763 = vshll.u32 %v1652, 16
        %v1765 = vrot.slane %v1763, 4
        %v1766 = vor.u32 %v1762, %v1765
        %v1767 = vshrl.u32 %v1654, 16
        %v1769 = vrot.slane %v1767, 3
        %v1770 = vshll.u32 %v1654, 16
        %v1772 = vrot.slane %v1770, 4
        %v1773 = vor.u32 %v1769, %v1772
        %v1774 = vsel %vm1699, %v1766, %v1773
        %v1775 = vshrl.u32 %v1656, 16
        %v1777 = vrot.slane %v1775, 3
        %v1778 = vshll.u32 %v1656, 16
        %v1780 = vrot.slane %v1778, 4
        %v1781 = vor.u32 %v1777, %v1780
        %v1782 = vshrl.u32 %v1658, 16
        %v1784 = vrot.slane %v1782, 3
        %v1785 = vshll.u32 %v1658, 16
        %v1787 = vrot.slane %v1785, 4
        %v1788 = vor.u32 %v1784, %v1787
        %v1789 = vsel %vm1699, %v1781, %v1788
        %v1790 = vshrl.u32 %v1660, 16
        %v1792 = vrot.slane %v1790, 3
        %v1793 = vshll.u32 %v1660, 16
        %v1795 = vrot.slane %v1793, 4
        %v1796 = vor.u32 %v1792, %v1795
        %v1797 = vshrl.u32 %v1662, 16
        %v1799 = vrot.slane %v1797, 3
        %v1800 = vshll.u32 %v1662, 16
        %v1802 = vrot.slane %v1800, 4
        %v1803 = vor.u32 %v1799, %v1802
        %v1804 = vsel %vm1699, %v1796, %v1803
        %v1805 = vshrl.u32 %v1664, 16
        %v1807 = vrot.slane %v1805, 3
        %v1808 = vshll.u32 %v1664, 16
        %v1810 = vrot.slane %v1808, 4
        %v1811 = vor.u32 %v1807, %v1810
        %v1812 = vshrl.u32 %v1666, 16
        %v1814 = vrot.slane %v1812, 3
        %v1815 = vshll.u32 %v1666, 16
        %v1817 = vrot.slane %v1815, 4
        %v1818 = vor.u32 %v1814, %v1817
        %v1819 = vsel %vm1699, %v1811, %v1818
        %v1820 = vshrl.u32 %v1668, 16
        %v1822 = vrot.slane %v1820, 3
        %v1823 = vshll.u32 %v1668, 16
        %v1825 = vrot.slane %v1823, 4
        %v1826 = vor.u32 %v1822, %v1825
        %v1827 = vshrl.u32 %v1670, 16
        %v1829 = vrot.slane %v1827, 3
        %v1830 = vshll.u32 %v1670, 16
        %v1832 = vrot.slane %v1830, 4
        %v1833 = vor.u32 %v1829, %v1832
        %v1834 = vsel %vm1699, %v1826, %v1833
        %v1835 = vshrl.u32 %v1672, 16
        %v1837 = vrot.slane %v1835, 3
        %v1838 = vshll.u32 %v1672, 16
        %v1840 = vrot.slane %v1838, 4
        %v1841 = vor.u32 %v1837, %v1840
        %v1842 = vshrl.u32 %v1674, 16
        %v1844 = vrot.slane %v1842, 3
        %v1845 = vshll.u32 %v1674, 16
        %v1847 = vrot.slane %v1845, 4
        %v1848 = vor.u32 %v1844, %v1847
        %v1849 = vsel %vm1699, %v1841, %v1848
        %v1850 = vshrl.u32 %v1676, 16
        %v1852 = vrot.slane %v1850, 3
        %v1853 = vshll.u32 %v1676, 16
        %v1855 = vrot.slane %v1853, 4
        %v1856 = vor.u32 %v1852, %v1855
        %v1857 = vshrl.u32 %v1678, 16
        %v1859 = vrot.slane %v1857, 3
        %v1860 = vshll.u32 %v1678, 16
        %v1862 = vrot.slane %v1860, 4
        %v1863 = vor.u32 %v1859, %v1862
        %v1864 = vsel %vm1699, %v1856, %v1863
        %v1865 = vshrl.u32 %v1680, 16
        %v1867 = vrot.slane %v1865, 3
        %v1868 = vshll.u32 %v1680, 16
        %v1870 = vrot.slane %v1868, 4
        %v1871 = vor.u32 %v1867, %v1870
        %v1872 = vshrl.u32 %v1682, 16
        %v1874 = vrot.slane %v1872, 3
        %v1875 = vshll.u32 %v1682, 16
        %v1877 = vrot.slane %v1875, 4
        %v1878 = vor.u32 %v1874, %v1877
        %v1879 = vsel %vm1699, %v1871, %v1878
        %v1880 = vshrl.u32 %v1684, 16
        %v1882 = vrot.slane %v1880, 3
        %v1883 = vshll.u32 %v1684, 16
        %v1885 = vrot.slane %v1883, 4
        %v1886 = vor.u32 %v1882, %v1885
        %v1887 = vshrl.u32 %v1686, 16
        %v1889 = vrot.slane %v1887, 3
        %v1890 = vshll.u32 %v1686, 16
        %v1892 = vrot.slane %v1890, 4
        %v1893 = vor.u32 %v1889, %v1892
        %v1894 = vsel %vm1699, %v1886, %v1893
        %v1895 = vshrl.u32 %v1688, 16
        %v1897 = vrot.slane %v1895, 3
        %v1898 = vshll.u32 %v1688, 16
        %v1900 = vrot.slane %v1898, 4
        %v1901 = vor.u32 %v1897, %v1900
        %v1902 = vshrl.u32 %v1690, 16
        %v1904 = vrot.slane %v1902, 3
        %v1905 = vshll.u32 %v1690, 16
        %v1907 = vrot.slane %v1905, 4
        %v1908 = vor.u32 %v1904, %v1907
        %v1909 = vsel %vm1699, %v1901, %v1908
        %v1910 = vshrl.u32 %v1692, 16
        %v1912 = vrot.slane %v1910, 3
        %v1913 = vshll.u32 %v1692, 16
        %v1915 = vrot.slane %v1913, 4
        %v1916 = vor.u32 %v1912, %v1915
        %v1917 = vshrl.u32 %v1694, 16
        %v1919 = vrot.slane %v1917, 3
        %v1920 = vshll.u32 %v1694, 16
        %v1922 = vrot.slane %v1920, 4
        %v1923 = vor.u32 %v1919, %v1922
        %v1924 = vsel %vm1699, %v1916, %v1923
        %v1925 = vshrl.u32 %v1696, 16
        %v1927 = vrot.slane %v1925, 3
        %v1928 = vshll.u32 %v1696, 16
        %v1930 = vrot.slane %v1928, 4
        %v1931 = vor.u32 %v1927, %v1930
        %v1932 = vshrl.u32 %v1698, 16
        %v1934 = vrot.slane %v1932, 3
        %v1935 = vshll.u32 %v1698, 16
        %v1937 = vrot.slane %v1935, 4
        %v1938 = vor.u32 %v1934, %v1937
        %v1939 = vsel %vm1699, %v1931, %v1938
        %v1940 = vunpack.c.l.b16 %v1714
        %v1941 = vunpack.c.h.b16 %v1714
        %v1942 = vunpack.c.l.b16 %v1729
        %v1943 = vunpack.c.h.b16 %v1729
        %v1944 = vunpack.c.l.b16 %v1744
        %v1945 = vunpack.c.h.b16 %v1744
        %v1946 = vunpack.c.l.b16 %v1759
        %v1947 = vunpack.c.h.b16 %v1759
        %v1948 = vunpack.c.l.b16 %v1774
        %v1949 = vunpack.c.h.b16 %v1774
        %v1950 = vunpack.c.l.b16 %v1789
        %v1951 = vunpack.c.h.b16 %v1789
        %v1952 = vunpack.c.l.b16 %v1804
        %v1953 = vunpack.c.h.b16 %v1804
        %v1954 = vunpack.c.l.b16 %v1819
        %v1955 = vunpack.c.h.b16 %v1819
        %v1956 = vunpack.c.l.b16 %v1834
        %v1957 = vunpack.c.h.b16 %v1834
        %v1958 = vunpack.c.l.b16 %v1849
        %v1959 = vunpack.c.h.b16 %v1849
        %v1960 = vunpack.c.l.b16 %v1864
        %v1961 = vunpack.c.h.b16 %v1864
        %v1962 = vunpack.c.l.b16 %v1879
        %v1963 = vunpack.c.h.b16 %v1879
        %v1964 = vunpack.c.l.b16 %v1894
        %v1965 = vunpack.c.h.b16 %v1894
        %v1966 = vunpack.c.l.b16 %v1909
        %v1967 = vunpack.c.h.b16 %v1909
        %v1968 = vunpack.c.l.b16 %v1924
        %v1969 = vunpack.c.h.b16 %v1924
        %v1970 = vunpack.c.l.b16 %v1939
        %v1971 = vunpack.c.h.b16 %v1939
        %v1972 = vpack.c.b16 %v1940, %v1940
        %v1973 = vpack.c.b16 %v1941, %v1941
        %v1974 = vpack.c.b16 %v1942, %v1942
        %v1975 = vpack.c.b16 %v1943, %v1943
        %v1976 = vpack.c.b16 %v1944, %v1944
        %v1977 = vpack.c.b16 %v1945, %v1945
        %v1978 = vpack.c.b16 %v1946, %v1946
        %v1979 = vpack.c.b16 %v1947, %v1947
        %v1980 = vpack.c.b16 %v1948, %v1948
        %v1981 = vpack.c.b16 %v1949, %v1949
        %v1982 = vpack.c.b16 %v1950, %v1950
        %v1983 = vpack.c.b16 %v1951, %v1951
        %v1984 = vpack.c.b16 %v1952, %v1952
        %v1985 = vpack.c.b16 %v1953, %v1953
        %v1986 = vpack.c.b16 %v1954, %v1954
        %v1987 = vpack.c.b16 %v1955, %v1955
        %v1988 = vpack.c.b16 %v1956, %v1956
        %v1989 = vpack.c.b16 %v1957, %v1957
        %v1990 = vpack.c.b16 %v1958, %v1958
        %v1991 = vpack.c.b16 %v1959, %v1959
        %v1992 = vpack.c.b16 %v1960, %v1960
        %v1993 = vpack.c.b16 %v1961, %v1961
        %v1994 = vpack.c.b16 %v1962, %v1962
        %v1995 = vpack.c.b16 %v1963, %v1963
        %v1996 = vpack.c.b16 %v1964, %v1964
        %v1997 = vpack.c.b16 %v1965, %v1965
        %v1998 = vpack.c.b16 %v1966, %v1966
        %v1999 = vpack.c.b16 %v1967, %v1967
        %v2000 = vpack.c.b16 %v1968, %v1968
        %v2001 = vpack.c.b16 %v1969, %v1969
        %v2002 = vpack.c.b16 %v1970, %v1970
        %v2003 = vpack.c.b16 %v1971, %v1971
        %2036 = vst [vmem:[#allocation3] sm:$0xf] %v1972
        %2037 = vst [vmem:[#allocation3 + $0xc] sm:$0xf] %v1973
        %2038 = vst [vmem:[#allocation3 + $0x18] sm:$0xf] %v1974
        %2039 = vst [vmem:[#allocation3 + $0x24] sm:$0xf] %v1975
        %2040 = vst [vmem:[#allocation3 + $0x30] sm:$0xf] %v1976
        %2041 = vst [vmem:[#allocation3 + $0x3c] sm:$0xf] %v1977
        %2042 = vst [vmem:[#allocation3 + $0x48] sm:$0xf] %v1978
        %2043 = vst [vmem:[#allocation3 + $0x54] sm:$0xf] %v1979
        %2044 = vst [vmem:[#allocation3 + $0x60] sm:$0xf] %v1980
        %2045 = vst [vmem:[#allocation3 + $0x6c] sm:$0xf] %v1981
        %2046 = vst [vmem:[#allocation3 + $0x78] sm:$0xf] %v1982
        %2047 = vst [vmem:[#allocation3 + $0x84] sm:$0xf] %v1983
        %2048 = vst [vmem:[#allocation3 + $0x90] sm:$0xf] %v1984
        %2049 = vst [vmem:[#allocation3 + $0x9c] sm:$0xf] %v1985
        %2050 = vst [vmem:[#allocation3 + $0xa8] sm:$0xf] %v1986
        %2051 = vst [vmem:[#allocation3 + $0xb4] sm:$0xf] %v1987
        %2052 = vst [vmem:[#allocation3 + $0xc0] sm:$0xf] %v1988
        %2053 = vst [vmem:[#allocation3 + $0xcc] sm:$0xf] %v1989
        %2054 = vst [vmem:[#allocation3 + $0xd8] sm:$0xf] %v1990
        %2055 = vst [vmem:[#allocation3 + $0xe4] sm:$0xf] %v1991
        %2056 = vst [vmem:[#allocation3 + $0xf0] sm:$0xf] %v1992
        %2057 = vst [vmem:[#allocation3 + $0xfc] sm:$0xf] %v1993
        %2058 = vst [vmem:[#allocation3 + $0x108] sm:$0xf] %v1994
        %2059 = vst [vmem:[#allocation3 + $0x114] sm:$0xf] %v1995
        %2060 = vst [vmem:[#allocation3 + $0x120] sm:$0xf] %v1996
        %2061 = vst [vmem:[#allocation3 + $0x12c] sm:$0xf] %v1997
        %2062 = vst [vmem:[#allocation3 + $0x138] sm:$0xf] %v1998
        %2063 = vst [vmem:[#allocation3 + $0x144] sm:$0xf] %v1999
        %2064 = vst [vmem:[#allocation3 + $0x150] sm:$0xf] %v2000
        %2065 = vst [vmem:[#allocation3 + $0x15c] sm:$0xf] %v2001
        %2066 = vst [vmem:[#allocation3 + $0x168] sm:$0xf] %v2002
        %2067 = vst [vmem:[#allocation3 + $0x174] sm:$0xf] %v2003
        %v2068 = vld [vmem:[%s298 + $0x8] sm:$0xf]
        %v2069 = vld [vmem:[%s298 + $0xc] sm:$0xf]
        %v2070 = vld [vmem:[%s298 + $0x20] sm:$0xf]
        %v2071 = vld [vmem:[%s298 + $0x24] sm:$0xf]
        %v2072 = vld [vmem:[%s298 + $0x38] sm:$0xf]
        %v2073 = vld [vmem:[%s298 + $0x3c] sm:$0xf]
        %v2074 = vld [vmem:[%s298 + $0x50] sm:$0xf]
        %v2075 = vld [vmem:[%s298 + $0x54] sm:$0xf]
        %v2076 = vld [vmem:[%s298 + $0x68] sm:$0xf]
        %v2077 = vld [vmem:[%s298 + $0x6c] sm:$0xf]
        %v2078 = vld [vmem:[%s298 + $0x80] sm:$0xf]
        %v2079 = vld [vmem:[%s298 + $0x84] sm:$0xf]
        %v2080 = vld [vmem:[%s298 + $0x98] sm:$0xf]
        %v2081 = vld [vmem:[%s298 + $0x9c] sm:$0xf]
        %v2082 = vld [vmem:[%s298 + $0xb0] sm:$0xf]
        %v2083 = vld [vmem:[%s298 + $0xb4] sm:$0xf]
        %v2084 = vld [vmem:[%s298 + $0xc8] sm:$0xf]
        %v2085 = vld [vmem:[%s298 + $0xcc] sm:$0xf]
        %v2086 = vld [vmem:[%s298 + $0xe0] sm:$0xf]
        %v2087 = vld [vmem:[%s298 + $0xe4] sm:$0xf]
        %v2088 = vld [vmem:[%s298 + $0xf8] sm:$0xf]
        %v2089 = vld [vmem:[%s298 + $0xfc] sm:$0xf]
        %v2090 = vld [vmem:[%s298 + $0x110] sm:$0xf]
        %v2091 = vld [vmem:[%s298 + $0x114] sm:$0xf]
        %v2092 = vld [vmem:[%s298 + $0x128] sm:$0xf]
        %v2093 = vld [vmem:[%s298 + $0x12c] sm:$0xf]
        %v2094 = vld [vmem:[%s298 + $0x140] sm:$0xf]
        %v2095 = vld [vmem:[%s298 + $0x144] sm:$0xf]
        %v2096 = vld [vmem:[%s298 + $0x158] sm:$0xf]
        %v2097 = vld [vmem:[%s298 + $0x15c] sm:$0xf]
        %v2098 = vld [vmem:[%s298 + $0x170] sm:$0xf]
        %v2099 = vld [vmem:[%s298 + $0x174] sm:$0xf]
        %v2100 = vld [vmem:[%s298 + $0x10] sm:$0x1]
        %v2101 = vld [vmem:[%s298 + $0x28] sm:$0x1]
        %v2102 = vld [vmem:[%s298 + $0x40] sm:$0x1]
        %v2103 = vld [vmem:[%s298 + $0x58] sm:$0x1]
        %v2104 = vld [vmem:[%s298 + $0x70] sm:$0x1]
        %v2105 = vld [vmem:[%s298 + $0x88] sm:$0x1]
        %v2106 = vld [vmem:[%s298 + $0xa0] sm:$0x1]
        %v2107 = vld [vmem:[%s298 + $0xb8] sm:$0x1]
        %v2108 = vld [vmem:[%s298 + $0xd0] sm:$0x1]
        %v2109 = vld [vmem:[%s298 + $0xe8] sm:$0x1]
        %v2110 = vld [vmem:[%s298 + $0x100] sm:$0x1]
        %v2111 = vld [vmem:[%s298 + $0x118] sm:$0x1]
        %v2112 = vld [vmem:[%s298 + $0x130] sm:$0x1]
        %v2113 = vld [vmem:[%s298 + $0x148] sm:$0x1]
        %v2114 = vld [vmem:[%s298 + $0x160] sm:$0x1]
        %v2115 = vld [vmem:[%s298 + $0x178] sm:$0x1]
        %v2116 = vsel %vm528, 0, %v2068
        %v2117 = vsel %vm535, 0, %v2069
        %v2118 = vsel %vm542, 0, %v2100
        %v2119 = vsel %vm528, 0, %v2070
        %v2120 = vsel %vm535, 0, %v2071
        %v2121 = vsel %vm542, 0, %v2101
        %v2122 = vsel %vm528, 0, %v2072
        %v2123 = vsel %vm535, 0, %v2073
        %v2124 = vsel %vm542, 0, %v2102
        %v2125 = vsel %vm528, 0, %v2074
        %v2126 = vsel %vm535, 0, %v2075
        %v2127 = vsel %vm542, 0, %v2103
        %v2128 = vsel %vm528, 0, %v2076
        %v2129 = vsel %vm535, 0, %v2077
        %v2130 = vsel %vm542, 0, %v2104
        %v2131 = vsel %vm528, 0, %v2078
        %v2132 = vsel %vm535, 0, %v2079
        %v2133 = vsel %vm542, 0, %v2105
        %v2134 = vsel %vm528, 0, %v2080
        %v2135 = vsel %vm535, 0, %v2081
        %v2136 = vsel %vm542, 0, %v2106
        %v2137 = vsel %vm528, 0, %v2082
        %v2138 = vsel %vm535, 0, %v2083
        %v2139 = vsel %vm542, 0, %v2107
        %v2140 = vsel %vm528, 0, %v2084
        %v2141 = vsel %vm535, 0, %v2085
        %v2142 = vsel %vm542, 0, %v2108
        %v2143 = vsel %vm528, 0, %v2086
        %v2144 = vsel %vm535, 0, %v2087
        %v2145 = vsel %vm542, 0, %v2109
        %v2146 = vsel %vm528, 0, %v2088
        %v2147 = vsel %vm535, 0, %v2089
        %v2148 = vsel %vm542, 0, %v2110
        %v2149 = vsel %vm528, 0, %v2090
        %v2150 = vsel %vm535, 0, %v2091
        %v2151 = vsel %vm542, 0, %v2111
        %v2152 = vsel %vm528, 0, %v2092
        %v2153 = vsel %vm535, 0, %v2093
        %v2154 = vsel %vm542, 0, %v2112
        %v2155 = vsel %vm528, 0, %v2094
        %v2156 = vsel %vm535, 0, %v2095
        %v2157 = vsel %vm542, 0, %v2113
        %v2158 = vsel %vm528, 0, %v2096
        %v2159 = vsel %vm535, 0, %v2097
        %v2160 = vsel %vm542, 0, %v2114
        %v2161 = vsel %vm528, 0, %v2098
        %v2162 = vsel %vm535, 0, %v2099
        %v2163 = vsel %vm542, 0, %v2115
        %s2164 = scalar_lea.vmem [#allocation2], 48
        %v2165 = vld [vmem:[%s2164 + $0x4] sm:$0x8]
        %v2166 = vld [vmem:[%s2164 + $0x8] sm:$0xf]
        %v2167 = vld [vmem:[%s2164 + $0xc] sm:$0xf]
        %v2168 = vld [vmem:[%s2164 + $0x1c] sm:$0x8]
        %v2169 = vld [vmem:[%s2164 + $0x20] sm:$0xf]
        %v2170 = vld [vmem:[%s2164 + $0x24] sm:$0xf]
        %v2171 = vld [vmem:[%s2164 + $0x34] sm:$0x8]
        %v2172 = vld [vmem:[%s2164 + $0x38] sm:$0xf]
        %v2173 = vld [vmem:[%s2164 + $0x3c] sm:$0xf]
        %v2174 = vld [vmem:[%s2164 + $0x4c] sm:$0x8]
        %v2175 = vld [vmem:[%s2164 + $0x50] sm:$0xf]
        %v2176 = vld [vmem:[%s2164 + $0x54] sm:$0xf]
        %v2177 = vld [vmem:[%s2164 + $0x64] sm:$0x8]
        %v2178 = vld [vmem:[%s2164 + $0x68] sm:$0xf]
        %v2179 = vld [vmem:[%s2164 + $0x6c] sm:$0xf]
        %v2180 = vld [vmem:[%s2164 + $0x7c] sm:$0x8]
        %v2181 = vld [vmem:[%s2164 + $0x80] sm:$0xf]
        %v2182 = vld [vmem:[%s2164 + $0x84] sm:$0xf]
        %v2183 = vld [vmem:[%s2164 + $0x94] sm:$0x8]
        %v2184 = vld [vmem:[%s2164 + $0x98] sm:$0xf]
        %v2185 = vld [vmem:[%s2164 + $0x9c] sm:$0xf]
        %v2186 = vld [vmem:[%s2164 + $0xac] sm:$0x8]
        %v2187 = vld [vmem:[%s2164 + $0xb0] sm:$0xf]
        %v2188 = vld [vmem:[%s2164 + $0xb4] sm:$0xf]
        %v2189 = vld [vmem:[%s2164 + $0xc4] sm:$0x8]
        %v2190 = vld [vmem:[%s2164 + $0xc8] sm:$0xf]
        %v2191 = vld [vmem:[%s2164 + $0xcc] sm:$0xf]
        %v2192 = vld [vmem:[%s2164 + $0xdc] sm:$0x8]
        %v2193 = vld [vmem:[%s2164 + $0xe0] sm:$0xf]
        %v2194 = vld [vmem:[%s2164 + $0xe4] sm:$0xf]
        %v2195 = vld [vmem:[%s2164 + $0xf4] sm:$0x8]
        %v2196 = vld [vmem:[%s2164 + $0xf8] sm:$0xf]
        %v2197 = vld [vmem:[%s2164 + $0xfc] sm:$0xf]
        %v2198 = vld [vmem:[%s2164 + $0x10c] sm:$0x8]
        %v2199 = vld [vmem:[%s2164 + $0x110] sm:$0xf]
        %v2200 = vld [vmem:[%s2164 + $0x114] sm:$0xf]
        %v2201 = vld [vmem:[%s2164 + $0x124] sm:$0x8]
        %v2202 = vld [vmem:[%s2164 + $0x128] sm:$0xf]
        %v2203 = vld [vmem:[%s2164 + $0x12c] sm:$0xf]
        %v2204 = vld [vmem:[%s2164 + $0x13c] sm:$0x8]
        %v2205 = vld [vmem:[%s2164 + $0x140] sm:$0xf]
        %v2206 = vld [vmem:[%s2164 + $0x144] sm:$0xf]
        %v2207 = vld [vmem:[%s2164 + $0x154] sm:$0x8]
        %v2208 = vld [vmem:[%s2164 + $0x158] sm:$0xf]
        %v2209 = vld [vmem:[%s2164 + $0x15c] sm:$0xf]
        %v2210 = vld [vmem:[%s2164 + $0x16c] sm:$0x8]
        %v2211 = vld [vmem:[%s2164 + $0x170] sm:$0xf]
        %v2212 = vld [vmem:[%s2164 + $0x174] sm:$0xf]
        %v2213 = vsel %vm415, 0, %v2165
        %v2214 = vsel %vm422, 0, %v2166
        %v2215 = vsel %vm429, 0, %v2167
        %v2216 = vsel %vm415, 0, %v2168
        %v2217 = vsel %vm422, 0, %v2169
        %v2218 = vsel %vm429, 0, %v2170
        %v2219 = vsel %vm415, 0, %v2171
        %v2220 = vsel %vm422, 0, %v2172
        %v2221 = vsel %vm429, 0, %v2173
        %v2222 = vsel %vm415, 0, %v2174
        %v2223 = vsel %vm422, 0, %v2175
        %v2224 = vsel %vm429, 0, %v2176
        %v2225 = vsel %vm415, 0, %v2177
        %v2226 = vsel %vm422, 0, %v2178
        %v2227 = vsel %vm429, 0, %v2179
        %v2228 = vsel %vm415, 0, %v2180
        %v2229 = vsel %vm422, 0, %v2181
        %v2230 = vsel %vm429, 0, %v2182
        %v2231 = vsel %vm415, 0, %v2183
        %v2232 = vsel %vm422, 0, %v2184
        %v2233 = vsel %vm429, 0, %v2185
        %v2234 = vsel %vm415, 0, %v2186
        %v2235 = vsel %vm422, 0, %v2187
        %v2236 = vsel %vm429, 0, %v2188
        %v2237 = vsel %vm415, 0, %v2189
        %v2238 = vsel %vm422, 0, %v2190
        %v2239 = vsel %vm429, 0, %v2191
        %v2240 = vsel %vm415, 0, %v2192
        %v2241 = vsel %vm422, 0, %v2193
        %v2242 = vsel %vm429, 0, %v2194
        %v2243 = vsel %vm415, 0, %v2195
        %v2244 = vsel %vm422, 0, %v2196
        %v2245 = vsel %vm429, 0, %v2197
        %v2246 = vsel %vm415, 0, %v2198
        %v2247 = vsel %vm422, 0, %v2199
        %v2248 = vsel %vm429, 0, %v2200
        %v2249 = vsel %vm415, 0, %v2201
        %v2250 = vsel %vm422, 0, %v2202
        %v2251 = vsel %vm429, 0, %v2203
        %v2252 = vsel %vm415, 0, %v2204
        %v2253 = vsel %vm422, 0, %v2205
        %v2254 = vsel %vm429, 0, %v2206
        %v2255 = vsel %vm415, 0, %v2207
        %v2256 = vsel %vm422, 0, %v2208
        %v2257 = vsel %vm429, 0, %v2209
        %v2258 = vsel %vm415, 0, %v2210
        %v2259 = vsel %vm422, 0, %v2211
        %v2260 = vsel %vm429, 0, %v2212
        %v2293 = vunpack.c.l.b16 %v2068
        %v2294 = vunpack.c.l.b16 %v2069
        %v2295 = vunpack.c.l.b16 %v2070
        %v2296 = vunpack.c.l.b16 %v2071
        %v2297 = vunpack.c.l.b16 %v2072
        %v2298 = vunpack.c.l.b16 %v2073
        %v2299 = vunpack.c.l.b16 %v2074
        %v2300 = vunpack.c.l.b16 %v2075
        %v2301 = vunpack.c.l.b16 %v2076
        %v2302 = vunpack.c.l.b16 %v2077
        %v2303 = vunpack.c.l.b16 %v2078
        %v2304 = vunpack.c.l.b16 %v2079
        %v2305 = vunpack.c.l.b16 %v2080
        %v2306 = vunpack.c.l.b16 %v2081
        %v2307 = vunpack.c.l.b16 %v2082
        %v2308 = vunpack.c.l.b16 %v2083
        %v2309 = vunpack.c.l.b16 %v2084
        %v2310 = vunpack.c.l.b16 %v2085
        %v2311 = vunpack.c.l.b16 %v2086
        %v2312 = vunpack.c.l.b16 %v2087
        %v2313 = vunpack.c.l.b16 %v2088
        %v2314 = vunpack.c.l.b16 %v2089
        %v2315 = vunpack.c.l.b16 %v2090
        %v2316 = vunpack.c.l.b16 %v2091
        %v2317 = vunpack.c.l.b16 %v2092
        %v2318 = vunpack.c.l.b16 %v2093
        %v2319 = vunpack.c.l.b16 %v2094
        %v2320 = vunpack.c.l.b16 %v2095
        %v2321 = vunpack.c.l.b16 %v2096
        %v2322 = vunpack.c.l.b16 %v2097
        %v2323 = vunpack.c.l.b16 %v2098
        %v2324 = vunpack.c.l.b16 %v2099
        %v2325 = vpack.c.b16 %v2294, %v2293
        %v2326 = vpack.c.b16 %v2296, %v2295
        %v2327 = vpack.c.b16 %v2298, %v2297
        %v2328 = vpack.c.b16 %v2300, %v2299
        %v2329 = vpack.c.b16 %v2302, %v2301
        %v2330 = vpack.c.b16 %v2304, %v2303
        %v2331 = vpack.c.b16 %v2306, %v2305
        %v2332 = vpack.c.b16 %v2308, %v2307
        %v2333 = vpack.c.b16 %v2310, %v2309
        %v2334 = vpack.c.b16 %v2312, %v2311
        %v2335 = vpack.c.b16 %v2314, %v2313
        %v2336 = vpack.c.b16 %v2316, %v2315
        %v2337 = vpack.c.b16 %v2318, %v2317
        %v2338 = vpack.c.b16 %v2320, %v2319
        %v2339 = vpack.c.b16 %v2322, %v2321
        %v2340 = vpack.c.b16 %v2324, %v2323
        %v2389 = vunpack.c.l.b16 %v2116
        %v2390 = vunpack.c.l.b16 %v2117
        %v2391 = vunpack.c.l.b16 %v2118
        %v2392 = vunpack.c.l.b16 %v2119
        %v2393 = vunpack.c.l.b16 %v2120
        %v2394 = vunpack.c.l.b16 %v2121
        %v2395 = vunpack.c.l.b16 %v2122
        %v2396 = vunpack.c.l.b16 %v2123
        %v2397 = vunpack.c.l.b16 %v2124
        %v2398 = vunpack.c.l.b16 %v2125
        %v2399 = vunpack.c.l.b16 %v2126
        %v2400 = vunpack.c.l.b16 %v2127
        %v2401 = vunpack.c.l.b16 %v2128
        %v2402 = vunpack.c.l.b16 %v2129
        %v2403 = vunpack.c.l.b16 %v2130
        %v2404 = vunpack.c.l.b16 %v2131
        %v2405 = vunpack.c.l.b16 %v2132
        %v2406 = vunpack.c.l.b16 %v2133
        %v2407 = vunpack.c.l.b16 %v2134
        %v2408 = vunpack.c.l.b16 %v2135
        %v2409 = vunpack.c.l.b16 %v2136
        %v2410 = vunpack.c.l.b16 %v2137
        %v2411 = vunpack.c.l.b16 %v2138
        %v2412 = vunpack.c.l.b16 %v2139
        %v2413 = vunpack.c.l.b16 %v2140
        %v2414 = vunpack.c.l.b16 %v2141
        %v2415 = vunpack.c.l.b16 %v2142
        %v2416 = vunpack.c.l.b16 %v2143
        %v2417 = vunpack.c.l.b16 %v2144
        %v2418 = vunpack.c.l.b16 %v2145
        %v2419 = vunpack.c.l.b16 %v2146
        %v2420 = vunpack.c.l.b16 %v2147
        %v2421 = vunpack.c.l.b16 %v2148
        %v2422 = vunpack.c.l.b16 %v2149
        %v2423 = vunpack.c.l.b16 %v2150
        %v2424 = vunpack.c.l.b16 %v2151
        %v2425 = vunpack.c.l.b16 %v2152
        %v2426 = vunpack.c.l.b16 %v2153
        %v2427 = vunpack.c.l.b16 %v2154
        %v2428 = vunpack.c.l.b16 %v2155
        %v2429 = vunpack.c.l.b16 %v2156
        %v2430 = vunpack.c.l.b16 %v2157
        %v2431 = vunpack.c.l.b16 %v2158
        %v2432 = vunpack.c.l.b16 %v2159
        %v2433 = vunpack.c.l.b16 %v2160
        %v2434 = vunpack.c.l.b16 %v2161
        %v2435 = vunpack.c.l.b16 %v2162
        %v2436 = vunpack.c.l.b16 %v2163
        %v2437 = vpack.c.b16 %v2390, %v2389
        %v2438 = vpack.c.b16 %v2391, %v2391
        %v2439 = vpack.c.b16 %v2393, %v2392
        %v2440 = vpack.c.b16 %v2394, %v2394
        %v2441 = vpack.c.b16 %v2396, %v2395
        %v2442 = vpack.c.b16 %v2397, %v2397
        %v2443 = vpack.c.b16 %v2399, %v2398
        %v2444 = vpack.c.b16 %v2400, %v2400
        %v2445 = vpack.c.b16 %v2402, %v2401
        %v2446 = vpack.c.b16 %v2403, %v2403
        %v2447 = vpack.c.b16 %v2405, %v2404
        %v2448 = vpack.c.b16 %v2406, %v2406
        %v2449 = vpack.c.b16 %v2408, %v2407
        %v2450 = vpack.c.b16 %v2409, %v2409
        %v2451 = vpack.c.b16 %v2411, %v2410
        %v2452 = vpack.c.b16 %v2412, %v2412
        %v2453 = vpack.c.b16 %v2414, %v2413
        %v2454 = vpack.c.b16 %v2415, %v2415
        %v2455 = vpack.c.b16 %v2417, %v2416
        %v2456 = vpack.c.b16 %v2418, %v2418
        %v2457 = vpack.c.b16 %v2420, %v2419
        %v2458 = vpack.c.b16 %v2421, %v2421
        %v2459 = vpack.c.b16 %v2423, %v2422
        %v2460 = vpack.c.b16 %v2424, %v2424
        %v2461 = vpack.c.b16 %v2426, %v2425
        %v2462 = vpack.c.b16 %v2427, %v2427
        %v2463 = vpack.c.b16 %v2429, %v2428
        %v2464 = vpack.c.b16 %v2430, %v2430
        %v2465 = vpack.c.b16 %v2432, %v2431
        %v2466 = vpack.c.b16 %v2433, %v2433
        %v2467 = vpack.c.b16 %v2435, %v2434
        %v2468 = vpack.c.b16 %v2436, %v2436
        %vm2469 = vsmask.f32 7424
        %v2471 = vshrl.u32 %v2437, 16
        %v2473 = vshll.u32 %v2437, 16
        %v2475 = vrot.slane %v2473, 1
        %v2476 = vor.u32 %v2471, %v2475
        %v2478 = vshll.u32 %v2438, 16
        %v2480 = vrot.slane %v2478, 1
        %v2481 = vsel %vm2469, %v2476, %v2480
        %v2483 = vshrl.u32 %v2439, 16
        %v2485 = vshll.u32 %v2439, 16
        %v2487 = vrot.slane %v2485, 1
        %v2488 = vor.u32 %v2483, %v2487
        %v2490 = vshll.u32 %v2440, 16
        %v2492 = vrot.slane %v2490, 1
        %v2493 = vsel %vm2469, %v2488, %v2492
        %v2495 = vshrl.u32 %v2441, 16
        %v2497 = vshll.u32 %v2441, 16
        %v2499 = vrot.slane %v2497, 1
        %v2500 = vor.u32 %v2495, %v2499
        %v2502 = vshll.u32 %v2442, 16
        %v2504 = vrot.slane %v2502, 1
        %v2505 = vsel %vm2469, %v2500, %v2504
        %v2507 = vshrl.u32 %v2443, 16
        %v2509 = vshll.u32 %v2443, 16
        %v2511 = vrot.slane %v2509, 1
        %v2512 = vor.u32 %v2507, %v2511
        %v2514 = vshll.u32 %v2444, 16
        %v2516 = vrot.slane %v2514, 1
        %v2517 = vsel %vm2469, %v2512, %v2516
        %v2519 = vshrl.u32 %v2445, 16
        %v2521 = vshll.u32 %v2445, 16
        %v2523 = vrot.slane %v2521, 1
        %v2524 = vor.u32 %v2519, %v2523
        %v2526 = vshll.u32 %v2446, 16
        %v2528 = vrot.slane %v2526, 1
        %v2529 = vsel %vm2469, %v2524, %v2528
        %v2531 = vshrl.u32 %v2447, 16
        %v2533 = vshll.u32 %v2447, 16
        %v2535 = vrot.slane %v2533, 1
        %v2536 = vor.u32 %v2531, %v2535
        %v2538 = vshll.u32 %v2448, 16
        %v2540 = vrot.slane %v2538, 1
        %v2541 = vsel %vm2469, %v2536, %v2540
        %v2543 = vshrl.u32 %v2449, 16
        %v2545 = vshll.u32 %v2449, 16
        %v2547 = vrot.slane %v2545, 1
        %v2548 = vor.u32 %v2543, %v2547
        %v2550 = vshll.u32 %v2450, 16
        %v2552 = vrot.slane %v2550, 1
        %v2553 = vsel %vm2469, %v2548, %v2552
        %v2555 = vshrl.u32 %v2451, 16
        %v2557 = vshll.u32 %v2451, 16
        %v2559 = vrot.slane %v2557, 1
        %v2560 = vor.u32 %v2555, %v2559
        %v2562 = vshll.u32 %v2452, 16
        %v2564 = vrot.slane %v2562, 1
        %v2565 = vsel %vm2469, %v2560, %v2564
        %v2567 = vshrl.u32 %v2453, 16
        %v2569 = vshll.u32 %v2453, 16
        %v2571 = vrot.slane %v2569, 1
        %v2572 = vor.u32 %v2567, %v2571
        %v2574 = vshll.u32 %v2454, 16
        %v2576 = vrot.slane %v2574, 1
        %v2577 = vsel %vm2469, %v2572, %v2576
        %v2579 = vshrl.u32 %v2455, 16
        %v2581 = vshll.u32 %v2455, 16
        %v2583 = vrot.slane %v2581, 1
        %v2584 = vor.u32 %v2579, %v2583
        %v2586 = vshll.u32 %v2456, 16
        %v2588 = vrot.slane %v2586, 1
        %v2589 = vsel %vm2469, %v2584, %v2588
        %v2591 = vshrl.u32 %v2457, 16
        %v2593 = vshll.u32 %v2457, 16
        %v2595 = vrot.slane %v2593, 1
        %v2596 = vor.u32 %v2591, %v2595
        %v2598 = vshll.u32 %v2458, 16
        %v2600 = vrot.slane %v2598, 1
        %v2601 = vsel %vm2469, %v2596, %v2600
        %v2603 = vshrl.u32 %v2459, 16
        %v2605 = vshll.u32 %v2459, 16
        %v2607 = vrot.slane %v2605, 1
        %v2608 = vor.u32 %v2603, %v2607
        %v2610 = vshll.u32 %v2460, 16
        %v2612 = vrot.slane %v2610, 1
        %v2613 = vsel %vm2469, %v2608, %v2612
        %v2615 = vshrl.u32 %v2461, 16
        %v2617 = vshll.u32 %v2461, 16
        %v2619 = vrot.slane %v2617, 1
        %v2620 = vor.u32 %v2615, %v2619
        %v2622 = vshll.u32 %v2462, 16
        %v2624 = vrot.slane %v2622, 1
        %v2625 = vsel %vm2469, %v2620, %v2624
        %v2627 = vshrl.u32 %v2463, 16
        %v2629 = vshll.u32 %v2463, 16
        %v2631 = vrot.slane %v2629, 1
        %v2632 = vor.u32 %v2627, %v2631
        %v2634 = vshll.u32 %v2464, 16
        %v2636 = vrot.slane %v2634, 1
        %v2637 = vsel %vm2469, %v2632, %v2636
        %v2639 = vshrl.u32 %v2465, 16
        %v2641 = vshll.u32 %v2465, 16
        %v2643 = vrot.slane %v2641, 1
        %v2644 = vor.u32 %v2639, %v2643
        %v2646 = vshll.u32 %v2466, 16
        %v2648 = vrot.slane %v2646, 1
        %v2649 = vsel %vm2469, %v2644, %v2648
        %v2651 = vshrl.u32 %v2467, 16
        %v2653 = vshll.u32 %v2467, 16
        %v2655 = vrot.slane %v2653, 1
        %v2656 = vor.u32 %v2651, %v2655
        %v2658 = vshll.u32 %v2468, 16
        %v2660 = vrot.slane %v2658, 1
        %v2661 = vsel %vm2469, %v2656, %v2660
        %2662 = vrot.lane.b32.xlu0 %v2481, 32
        %v2663 = vpop.permute.xlu0 %2662
        %2664 = vrot.lane.b32.xlu0 %v2493, 32
        %v2665 = vpop.permute.xlu0 %2664
        %2666 = vrot.lane.b32.xlu0 %v2505, 32
        %v2667 = vpop.permute.xlu0 %2666
        %2668 = vrot.lane.b32.xlu0 %v2517, 32
        %v2669 = vpop.permute.xlu0 %2668
        %2670 = vrot.lane.b32.xlu0 %v2529, 32
        %v2671 = vpop.permute.xlu0 %2670
        %2672 = vrot.lane.b32.xlu0 %v2541, 32
        %v2673 = vpop.permute.xlu0 %2672
        %2674 = vrot.lane.b32.xlu0 %v2553, 32
        %v2675 = vpop.permute.xlu0 %2674
        %2676 = vrot.lane.b32.xlu0 %v2565, 32
        %v2677 = vpop.permute.xlu0 %2676
        %2678 = vrot.lane.b32.xlu0 %v2577, 32
        %v2679 = vpop.permute.xlu0 %2678
        %2680 = vrot.lane.b32.xlu0 %v2589, 32
        %v2681 = vpop.permute.xlu0 %2680
        %2682 = vrot.lane.b32.xlu0 %v2601, 32
        %v2683 = vpop.permute.xlu0 %2682
        %2684 = vrot.lane.b32.xlu0 %v2613, 32
        %v2685 = vpop.permute.xlu0 %2684
        %2686 = vrot.lane.b32.xlu0 %v2625, 32
        %v2687 = vpop.permute.xlu0 %2686
        %2688 = vrot.lane.b32.xlu0 %v2637, 32
        %v2689 = vpop.permute.xlu0 %2688
        %2690 = vrot.lane.b32.xlu0 %v2649, 32
        %v2691 = vpop.permute.xlu0 %2690
        %2692 = vrot.lane.b32.xlu0 %v2661, 32
        %v2693 = vpop.permute.xlu0 %2692
        %v2742 = vunpack.c.l.b16 %v2213
        %v2743 = vunpack.c.l.b16 %v2214
        %v2744 = vunpack.c.l.b16 %v2215
        %v2745 = vunpack.c.l.b16 %v2216
        %v2746 = vunpack.c.l.b16 %v2217
        %v2747 = vunpack.c.l.b16 %v2218
        %v2748 = vunpack.c.l.b16 %v2219
        %v2749 = vunpack.c.l.b16 %v2220
        %v2750 = vunpack.c.l.b16 %v2221
        %v2751 = vunpack.c.l.b16 %v2222
        %v2752 = vunpack.c.l.b16 %v2223
        %v2753 = vunpack.c.l.b16 %v2224
        %v2754 = vunpack.c.l.b16 %v2225
        %v2755 = vunpack.c.l.b16 %v2226
        %v2756 = vunpack.c.l.b16 %v2227
        %v2757 = vunpack.c.l.b16 %v2228
        %v2758 = vunpack.c.l.b16 %v2229
        %v2759 = vunpack.c.l.b16 %v2230
        %v2760 = vunpack.c.l.b16 %v2231
        %v2761 = vunpack.c.l.b16 %v2232
        %v2762 = vunpack.c.l.b16 %v2233
        %v2763 = vunpack.c.l.b16 %v2234
        %v2764 = vunpack.c.l.b16 %v2235
        %v2765 = vunpack.c.l.b16 %v2236
        %v2766 = vunpack.c.l.b16 %v2237
        %v2767 = vunpack.c.l.b16 %v2238
        %v2768 = vunpack.c.l.b16 %v2239
        %v2769 = vunpack.c.l.b16 %v2240
        %v2770 = vunpack.c.l.b16 %v2241
        %v2771 = vunpack.c.l.b16 %v2242
        %v2772 = vunpack.c.l.b16 %v2243
        %v2773 = vunpack.c.l.b16 %v2244
        %v2774 = vunpack.c.l.b16 %v2245
        %v2775 = vunpack.c.l.b16 %v2246
        %v2776 = vunpack.c.l.b16 %v2247
        %v2777 = vunpack.c.l.b16 %v2248
        %v2778 = vunpack.c.l.b16 %v2249
        %v2779 = vunpack.c.l.b16 %v2250
        %v2780 = vunpack.c.l.b16 %v2251
        %v2781 = vunpack.c.l.b16 %v2252
        %v2782 = vunpack.c.l.b16 %v2253
        %v2783 = vunpack.c.l.b16 %v2254
        %v2784 = vunpack.c.l.b16 %v2255
        %v2785 = vunpack.c.l.b16 %v2256
        %v2786 = vunpack.c.l.b16 %v2257
        %v2787 = vunpack.c.l.b16 %v2258
        %v2788 = vunpack.c.l.b16 %v2259
        %v2789 = vunpack.c.l.b16 %v2260
        %v2790 = vpack.c.b16 %v2743, %v2742
        %v2791 = vpack.c.b16 %v2744, %v2744
        %v2792 = vpack.c.b16 %v2746, %v2745
        %v2793 = vpack.c.b16 %v2747, %v2747
        %v2794 = vpack.c.b16 %v2749, %v2748
        %v2795 = vpack.c.b16 %v2750, %v2750
        %v2796 = vpack.c.b16 %v2752, %v2751
        %v2797 = vpack.c.b16 %v2753, %v2753
        %v2798 = vpack.c.b16 %v2755, %v2754
        %v2799 = vpack.c.b16 %v2756, %v2756
        %v2800 = vpack.c.b16 %v2758, %v2757
        %v2801 = vpack.c.b16 %v2759, %v2759
        %v2802 = vpack.c.b16 %v2761, %v2760
        %v2803 = vpack.c.b16 %v2762, %v2762
        %v2804 = vpack.c.b16 %v2764, %v2763
        %v2805 = vpack.c.b16 %v2765, %v2765
        %v2806 = vpack.c.b16 %v2767, %v2766
        %v2807 = vpack.c.b16 %v2768, %v2768
        %v2808 = vpack.c.b16 %v2770, %v2769
        %v2809 = vpack.c.b16 %v2771, %v2771
        %v2810 = vpack.c.b16 %v2773, %v2772
        %v2811 = vpack.c.b16 %v2774, %v2774
        %v2812 = vpack.c.b16 %v2776, %v2775
        %v2813 = vpack.c.b16 %v2777, %v2777
        %v2814 = vpack.c.b16 %v2779, %v2778
        %v2815 = vpack.c.b16 %v2780, %v2780
        %v2816 = vpack.c.b16 %v2782, %v2781
        %v2817 = vpack.c.b16 %v2783, %v2783
        %v2818 = vpack.c.b16 %v2785, %v2784
        %v2819 = vpack.c.b16 %v2786, %v2786
        %v2820 = vpack.c.b16 %v2788, %v2787
        %v2821 = vpack.c.b16 %v2789, %v2789
        %v2823 = vshrl.u32 %v2790, 16
        %v2825 = vrot.slane %v2823, 3
        %v2826 = vshll.u32 %v2790, 16
        %v2828 = vrot.slane %v2826, 4
        %v2829 = vor.u32 %v2825, %v2828
        %v2831 = vshrl.u32 %v2791, 16
        %v2833 = vrot.slane %v2831, 3
        %v2834 = vshll.u32 %v2791, 16
        %v2836 = vrot.slane %v2834, 4
        %v2837 = vor.u32 %v2833, %v2836
        %v2838 = vsel %vm1699, %v2829, %v2837
        %v2840 = vshrl.u32 %v2792, 16
        %v2842 = vrot.slane %v2840, 3
        %v2843 = vshll.u32 %v2792, 16
        %v2845 = vrot.slane %v2843, 4
        %v2846 = vor.u32 %v2842, %v2845
        %v2848 = vshrl.u32 %v2793, 16
        %v2850 = vrot.slane %v2848, 3
        %v2851 = vshll.u32 %v2793, 16
        %v2853 = vrot.slane %v2851, 4
        %v2854 = vor.u32 %v2850, %v2853
        %v2855 = vsel %vm1699, %v2846, %v2854
        %v2857 = vshrl.u32 %v2794, 16
        %v2859 = vrot.slane %v2857, 3
        %v2860 = vshll.u32 %v2794, 16
        %v2862 = vrot.slane %v2860, 4
        %v2863 = vor.u32 %v2859, %v2862
        %v2865 = vshrl.u32 %v2795, 16
        %v2867 = vrot.slane %v2865, 3
        %v2868 = vshll.u32 %v2795, 16
        %v2870 = vrot.slane %v2868, 4
        %v2871 = vor.u32 %v2867, %v2870
        %v2872 = vsel %vm1699, %v2863, %v2871
        %v2874 = vshrl.u32 %v2796, 16
        %v2876 = vrot.slane %v2874, 3
        %v2877 = vshll.u32 %v2796, 16
        %v2879 = vrot.slane %v2877, 4
        %v2880 = vor.u32 %v2876, %v2879
        %v2882 = vshrl.u32 %v2797, 16
        %v2884 = vrot.slane %v2882, 3
        %v2885 = vshll.u32 %v2797, 16
        %v2887 = vrot.slane %v2885, 4
        %v2888 = vor.u32 %v2884, %v2887
        %v2889 = vsel %vm1699, %v2880, %v2888
        %v2891 = vshrl.u32 %v2798, 16
        %v2893 = vrot.slane %v2891, 3
        %v2894 = vshll.u32 %v2798, 16
        %v2896 = vrot.slane %v2894, 4
        %v2897 = vor.u32 %v2893, %v2896
        %v2899 = vshrl.u32 %v2799, 16
        %v2901 = vrot.slane %v2899, 3
        %v2902 = vshll.u32 %v2799, 16
        %v2904 = vrot.slane %v2902, 4
        %v2905 = vor.u32 %v2901, %v2904
        %v2906 = vsel %vm1699, %v2897, %v2905
        %v2908 = vshrl.u32 %v2800, 16
        %v2910 = vrot.slane %v2908, 3
        %v2911 = vshll.u32 %v2800, 16
        %v2913 = vrot.slane %v2911, 4
        %v2914 = vor.u32 %v2910, %v2913
        %v2916 = vshrl.u32 %v2801, 16
        %v2918 = vrot.slane %v2916, 3
        %v2919 = vshll.u32 %v2801, 16
        %v2921 = vrot.slane %v2919, 4
        %v2922 = vor.u32 %v2918, %v2921
        %v2923 = vsel %vm1699, %v2914, %v2922
        %v2925 = vshrl.u32 %v2802, 16
        %v2927 = vrot.slane %v2925, 3
        %v2928 = vshll.u32 %v2802, 16
        %v2930 = vrot.slane %v2928, 4
        %v2931 = vor.u32 %v2927, %v2930
        %v2933 = vshrl.u32 %v2803, 16
        %v2935 = vrot.slane %v2933, 3
        %v2936 = vshll.u32 %v2803, 16
        %v2938 = vrot.slane %v2936, 4
        %v2939 = vor.u32 %v2935, %v2938
        %v2940 = vsel %vm1699, %v2931, %v2939
        %v2942 = vshrl.u32 %v2804, 16
        %v2944 = vrot.slane %v2942, 3
        %v2945 = vshll.u32 %v2804, 16
        %v2947 = vrot.slane %v2945, 4
        %v2948 = vor.u32 %v2944, %v2947
        %v2950 = vshrl.u32 %v2805, 16
        %v2952 = vrot.slane %v2950, 3
        %v2953 = vshll.u32 %v2805, 16
        %v2955 = vrot.slane %v2953, 4
        %v2956 = vor.u32 %v2952, %v2955
        %v2957 = vsel %vm1699, %v2948, %v2956
        %v2959 = vshrl.u32 %v2806, 16
        %v2961 = vrot.slane %v2959, 3
        %v2962 = vshll.u32 %v2806, 16
        %v2964 = vrot.slane %v2962, 4
        %v2965 = vor.u32 %v2961, %v2964
        %v2967 = vshrl.u32 %v2807, 16
        %v2969 = vrot.slane %v2967, 3
        %v2970 = vshll.u32 %v2807, 16
        %v2972 = vrot.slane %v2970, 4
        %v2973 = vor.u32 %v2969, %v2972
        %v2974 = vsel %vm1699, %v2965, %v2973
        %v2976 = vshrl.u32 %v2808, 16
        %v2978 = vrot.slane %v2976, 3
        %v2979 = vshll.u32 %v2808, 16
        %v2981 = vrot.slane %v2979, 4
        %v2982 = vor.u32 %v2978, %v2981
        %v2984 = vshrl.u32 %v2809, 16
        %v2986 = vrot.slane %v2984, 3
        %v2987 = vshll.u32 %v2809, 16
        %v2989 = vrot.slane %v2987, 4
        %v2990 = vor.u32 %v2986, %v2989
        %v2991 = vsel %vm1699, %v2982, %v2990
        %v2993 = vshrl.u32 %v2810, 16
        %v2995 = vrot.slane %v2993, 3
        %v2996 = vshll.u32 %v2810, 16
        %v2998 = vrot.slane %v2996, 4
        %v2999 = vor.u32 %v2995, %v2998
        %v3001 = vshrl.u32 %v2811, 16
        %v3003 = vrot.slane %v3001, 3
        %v3004 = vshll.u32 %v2811, 16
        %v3006 = vrot.slane %v3004, 4
        %v3007 = vor.u32 %v3003, %v3006
        %v3008 = vsel %vm1699, %v2999, %v3007
        %v3010 = vshrl.u32 %v2812, 16
        %v3012 = vrot.slane %v3010, 3
        %v3013 = vshll.u32 %v2812, 16
        %v3015 = vrot.slane %v3013, 4
        %v3016 = vor.u32 %v3012, %v3015
        %v3018 = vshrl.u32 %v2813, 16
        %v3020 = vrot.slane %v3018, 3
        %v3021 = vshll.u32 %v2813, 16
        %v3023 = vrot.slane %v3021, 4
        %v3024 = vor.u32 %v3020, %v3023
        %v3025 = vsel %vm1699, %v3016, %v3024
        %v3027 = vshrl.u32 %v2814, 16
        %v3029 = vrot.slane %v3027, 3
        %v3030 = vshll.u32 %v2814, 16
        %v3032 = vrot.slane %v3030, 4
        %v3033 = vor.u32 %v3029, %v3032
        %v3035 = vshrl.u32 %v2815, 16
        %v3037 = vrot.slane %v3035, 3
        %v3038 = vshll.u32 %v2815, 16
        %v3040 = vrot.slane %v3038, 4
        %v3041 = vor.u32 %v3037, %v3040
        %v3042 = vsel %vm1699, %v3033, %v3041
        %v3044 = vshrl.u32 %v2816, 16
        %v3046 = vrot.slane %v3044, 3
        %v3047 = vshll.u32 %v2816, 16
        %v3049 = vrot.slane %v3047, 4
        %v3050 = vor.u32 %v3046, %v3049
        %v3052 = vshrl.u32 %v2817, 16
        %v3054 = vrot.slane %v3052, 3
        %v3055 = vshll.u32 %v2817, 16
        %v3057 = vrot.slane %v3055, 4
        %v3058 = vor.u32 %v3054, %v3057
        %v3059 = vsel %vm1699, %v3050, %v3058
        %v3061 = vshrl.u32 %v2818, 16
        %v3063 = vrot.slane %v3061, 3
        %v3064 = vshll.u32 %v2818, 16
        %v3066 = vrot.slane %v3064, 4
        %v3067 = vor.u32 %v3063, %v3066
        %v3069 = vshrl.u32 %v2819, 16
        %v3071 = vrot.slane %v3069, 3
        %v3072 = vshll.u32 %v2819, 16
        %v3074 = vrot.slane %v3072, 4
        %v3075 = vor.u32 %v3071, %v3074
        %v3076 = vsel %vm1699, %v3067, %v3075
        %v3078 = vshrl.u32 %v2820, 16
        %v3080 = vrot.slane %v3078, 3
        %v3081 = vshll.u32 %v2820, 16
        %v3083 = vrot.slane %v3081, 4
        %v3084 = vor.u32 %v3080, %v3083
        %v3086 = vshrl.u32 %v2821, 16
        %v3088 = vrot.slane %v3086, 3
        %v3089 = vshll.u32 %v2821, 16
        %v3091 = vrot.slane %v3089, 4
        %v3092 = vor.u32 %v3088, %v3091
        %v3093 = vsel %vm1699, %v3084, %v3092
        %3094 = vrot.lane.b32.xlu0 %v2838, 64
        %v3095 = vpop.permute.xlu0 %3094
        %3096 = vrot.lane.b32.xlu0 %v2855, 64
        %v3097 = vpop.permute.xlu0 %3096
        %3098 = vrot.lane.b32.xlu0 %v2872, 64
        %v3099 = vpop.permute.xlu0 %3098
        %3100 = vrot.lane.b32.xlu0 %v2889, 64
        %v3101 = vpop.permute.xlu0 %3100
        %3102 = vrot.lane.b32.xlu0 %v2906, 64
        %v3103 = vpop.permute.xlu0 %3102
        %3104 = vrot.lane.b32.xlu0 %v2923, 64
        %v3105 = vpop.permute.xlu0 %3104
        %3106 = vrot.lane.b32.xlu0 %v2940, 64
        %v3107 = vpop.permute.xlu0 %3106
        %3108 = vrot.lane.b32.xlu0 %v2957, 64
        %v3109 = vpop.permute.xlu0 %3108
        %3110 = vrot.lane.b32.xlu0 %v2974, 64
        %v3111 = vpop.permute.xlu0 %3110
        %3112 = vrot.lane.b32.xlu0 %v2991, 64
        %v3113 = vpop.permute.xlu0 %3112
        %3114 = vrot.lane.b32.xlu0 %v3008, 64
        %v3115 = vpop.permute.xlu0 %3114
        %3116 = vrot.lane.b32.xlu0 %v3025, 64
        %v3117 = vpop.permute.xlu0 %3116
        %3118 = vrot.lane.b32.xlu0 %v3042, 64
        %v3119 = vpop.permute.xlu0 %3118
        %3120 = vrot.lane.b32.xlu0 %v3059, 64
        %v3121 = vpop.permute.xlu0 %3120
        %3122 = vrot.lane.b32.xlu0 %v3076, 64
        %v3123 = vpop.permute.xlu0 %3122
        %3124 = vrot.lane.b32.xlu0 %v3093, 64
        %v3125 = vpop.permute.xlu0 %3124
        %v3158 = vunpack.c.l.b16 %v2166
        %v3159 = vunpack.c.l.b16 %v2167
        %v3160 = vunpack.c.l.b16 %v2169
        %v3161 = vunpack.c.l.b16 %v2170
        %v3162 = vunpack.c.l.b16 %v2172
        %v3163 = vunpack.c.l.b16 %v2173
        %v3164 = vunpack.c.l.b16 %v2175
        %v3165 = vunpack.c.l.b16 %v2176
        %v3166 = vunpack.c.l.b16 %v2178
        %v3167 = vunpack.c.l.b16 %v2179
        %v3168 = vunpack.c.l.b16 %v2181
        %v3169 = vunpack.c.l.b16 %v2182
        %v3170 = vunpack.c.l.b16 %v2184
        %v3171 = vunpack.c.l.b16 %v2185
        %v3172 = vunpack.c.l.b16 %v2187
        %v3173 = vunpack.c.l.b16 %v2188
        %v3174 = vunpack.c.l.b16 %v2190
        %v3175 = vunpack.c.l.b16 %v2191
        %v3176 = vunpack.c.l.b16 %v2193
        %v3177 = vunpack.c.l.b16 %v2194
        %v3178 = vunpack.c.l.b16 %v2196
        %v3179 = vunpack.c.l.b16 %v2197
        %v3180 = vunpack.c.l.b16 %v2199
        %v3181 = vunpack.c.l.b16 %v2200
        %v3182 = vunpack.c.l.b16 %v2202
        %v3183 = vunpack.c.l.b16 %v2203
        %v3184 = vunpack.c.l.b16 %v2205
        %v3185 = vunpack.c.l.b16 %v2206
        %v3186 = vunpack.c.l.b16 %v2208
        %v3187 = vunpack.c.l.b16 %v2209
        %v3188 = vunpack.c.l.b16 %v2211
        %v3189 = vunpack.c.l.b16 %v2212
        %v3190 = vpack.c.b16 %v3159, %v3158
        %v3191 = vpack.c.b16 %v3161, %v3160
        %v3192 = vpack.c.b16 %v3163, %v3162
        %v3193 = vpack.c.b16 %v3165, %v3164
        %v3194 = vpack.c.b16 %v3167, %v3166
        %v3195 = vpack.c.b16 %v3169, %v3168
        %v3196 = vpack.c.b16 %v3171, %v3170
        %v3197 = vpack.c.b16 %v3173, %v3172
        %v3198 = vpack.c.b16 %v3175, %v3174
        %v3199 = vpack.c.b16 %v3177, %v3176
        %v3200 = vpack.c.b16 %v3179, %v3178
        %v3201 = vpack.c.b16 %v3181, %v3180
        %v3202 = vpack.c.b16 %v3183, %v3182
        %v3203 = vpack.c.b16 %v3185, %v3184
        %v3204 = vpack.c.b16 %v3187, %v3186
        %v3205 = vpack.c.b16 %v3189, %v3188
        %3206 = vrot.lane.b32.xlu0 %v3190, 96
        %v3207 = vpop.permute.xlu0 %3206
        %3208 = vrot.lane.b32.xlu0 %v3191, 96
        %v3209 = vpop.permute.xlu0 %3208
        %3210 = vrot.lane.b32.xlu0 %v3192, 96
        %v3211 = vpop.permute.xlu0 %3210
        %3212 = vrot.lane.b32.xlu0 %v3193, 96
        %v3213 = vpop.permute.xlu0 %3212
        %3214 = vrot.lane.b32.xlu0 %v3194, 96
        %v3215 = vpop.permute.xlu0 %3214
        %3216 = vrot.lane.b32.xlu0 %v3195, 96
        %v3217 = vpop.permute.xlu0 %3216
        %3218 = vrot.lane.b32.xlu0 %v3196, 96
        %v3219 = vpop.permute.xlu0 %3218
        %3220 = vrot.lane.b32.xlu0 %v3197, 96
        %v3221 = vpop.permute.xlu0 %3220
        %3222 = vrot.lane.b32.xlu0 %v3198, 96
        %v3223 = vpop.permute.xlu0 %3222
        %3224 = vrot.lane.b32.xlu0 %v3199, 96
        %v3225 = vpop.permute.xlu0 %3224
        %3226 = vrot.lane.b32.xlu0 %v3200, 96
        %v3227 = vpop.permute.xlu0 %3226
        %3228 = vrot.lane.b32.xlu0 %v3201, 96
        %v3229 = vpop.permute.xlu0 %3228
        %3230 = vrot.lane.b32.xlu0 %v3202, 96
        %v3231 = vpop.permute.xlu0 %3230
        %3232 = vrot.lane.b32.xlu0 %v3203, 96
        %v3233 = vpop.permute.xlu0 %3232
        %3234 = vrot.lane.b32.xlu0 %v3204, 96
        %v3235 = vpop.permute.xlu0 %3234
        %3236 = vrot.lane.b32.xlu0 %v3205, 96
        %v3237 = vpop.permute.xlu0 %3236
        %v3240 = vsel %vm1488, %v2325, %v2663
        %v3243 = vsel %vm1488, %v2326, %v2665
        %v3246 = vsel %vm1488, %v2327, %v2667
        %v3249 = vsel %vm1488, %v2328, %v2669
        %v3252 = vsel %vm1488, %v2329, %v2671
        %v3255 = vsel %vm1488, %v2330, %v2673
        %v3258 = vsel %vm1488, %v2331, %v2675
        %v3261 = vsel %vm1488, %v2332, %v2677
        %v3264 = vsel %vm1488, %v2333, %v2679
        %v3267 = vsel %vm1488, %v2334, %v2681
        %v3270 = vsel %vm1488, %v2335, %v2683
        %v3273 = vsel %vm1488, %v2336, %v2685
        %v3276 = vsel %vm1488, %v2337, %v2687
        %v3279 = vsel %vm1488, %v2338, %v2689
        %v3282 = vsel %vm1488, %v2339, %v2691
        %v3285 = vsel %vm1488, %v2340, %v2693
        %v3287 = vsel %vm1569, %v3240, %v3095
        %v3289 = vsel %vm1569, %v3243, %v3097
        %v3291 = vsel %vm1569, %v3246, %v3099
        %v3293 = vsel %vm1569, %v3249, %v3101
        %v3295 = vsel %vm1569, %v3252, %v3103
        %v3297 = vsel %vm1569, %v3255, %v3105
        %v3299 = vsel %vm1569, %v3258, %v3107
        %v3301 = vsel %vm1569, %v3261, %v3109
        %v3303 = vsel %vm1569, %v3264, %v3111
        %v3305 = vsel %vm1569, %v3267, %v3113
        %v3307 = vsel %vm1569, %v3270, %v3115
        %v3309 = vsel %vm1569, %v3273, %v3117
        %v3311 = vsel %vm1569, %v3276, %v3119
        %v3313 = vsel %vm1569, %v3279, %v3121
        %v3315 = vsel %vm1569, %v3282, %v3123
        %v3317 = vsel %vm1569, %v3285, %v3125
        %v3319 = vsel %vm1634, %v3287, %v3207
        %v3321 = vsel %vm1634, %v3289, %v3209
        %v3323 = vsel %vm1634, %v3291, %v3211
        %v3325 = vsel %vm1634, %v3293, %v3213
        %v3327 = vsel %vm1634, %v3295, %v3215
        %v3329 = vsel %vm1634, %v3297, %v3217
        %v3331 = vsel %vm1634, %v3299, %v3219
        %v3333 = vsel %vm1634, %v3301, %v3221
        %v3335 = vsel %vm1634, %v3303, %v3223
        %v3337 = vsel %vm1634, %v3305, %v3225
        %v3339 = vsel %vm1634, %v3307, %v3227
        %v3341 = vsel %vm1634, %v3309, %v3229
        %v3343 = vsel %vm1634, %v3311, %v3231
        %v3345 = vsel %vm1634, %v3313, %v3233
        %v3347 = vsel %vm1634, %v3315, %v3235
        %v3349 = vsel %vm1634, %v3317, %v3237
        %v3366 = vunpack.c.l.b16 %v3319
        %v3367 = vunpack.c.h.b16 %v3319
        %v3368 = vunpack.c.l.b16 %v3321
        %v3369 = vunpack.c.h.b16 %v3321
        %v3370 = vunpack.c.l.b16 %v3323
        %v3371 = vunpack.c.h.b16 %v3323
        %v3372 = vunpack.c.l.b16 %v3325
        %v3373 = vunpack.c.h.b16 %v3325
        %v3374 = vunpack.c.l.b16 %v3327
        %v3375 = vunpack.c.h.b16 %v3327
        %v3376 = vunpack.c.l.b16 %v3329
        %v3377 = vunpack.c.h.b16 %v3329
        %v3378 = vunpack.c.l.b16 %v3331
        %v3379 = vunpack.c.h.b16 %v3331
        %v3380 = vunpack.c.l.b16 %v3333
        %v3381 = vunpack.c.h.b16 %v3333
        %v3382 = vunpack.c.l.b16 %v3335
        %v3383 = vunpack.c.h.b16 %v3335
        %v3384 = vunpack.c.l.b16 %v3337
        %v3385 = vunpack.c.h.b16 %v3337
        %v3386 = vunpack.c.l.b16 %v3339
        %v3387 = vunpack.c.h.b16 %v3339
        %v3388 = vunpack.c.l.b16 %v3341
        %v3389 = vunpack.c.h.b16 %v3341
        %v3390 = vunpack.c.l.b16 %v3343
        %v3391 = vunpack.c.h.b16 %v3343
        %v3392 = vunpack.c.l.b16 %v3345
        %v3393 = vunpack.c.h.b16 %v3345
        %v3394 = vunpack.c.l.b16 %v3347
        %v3395 = vunpack.c.h.b16 %v3347
        %v3396 = vunpack.c.l.b16 %v3349
        %v3397 = vunpack.c.h.b16 %v3349
        %v3398 = vpack.c.b16 %v3366, %v3366
        %v3399 = vpack.c.b16 %v3367, %v3367
        %v3400 = vpack.c.b16 %v3368, %v3368
        %v3401 = vpack.c.b16 %v3369, %v3369
        %v3402 = vpack.c.b16 %v3370, %v3370
        %v3403 = vpack.c.b16 %v3371, %v3371
        %v3404 = vpack.c.b16 %v3372, %v3372
        %v3405 = vpack.c.b16 %v3373, %v3373
        %v3406 = vpack.c.b16 %v3374, %v3374
        %v3407 = vpack.c.b16 %v3375, %v3375
        %v3408 = vpack.c.b16 %v3376, %v3376
        %v3409 = vpack.c.b16 %v3377, %v3377
        %v3410 = vpack.c.b16 %v3378, %v3378
        %v3411 = vpack.c.b16 %v3379, %v3379
        %v3412 = vpack.c.b16 %v3380, %v3380
        %v3413 = vpack.c.b16 %v3381, %v3381
        %v3414 = vpack.c.b16 %v3382, %v3382
        %v3415 = vpack.c.b16 %v3383, %v3383
        %v3416 = vpack.c.b16 %v3384, %v3384
        %v3417 = vpack.c.b16 %v3385, %v3385
        %v3418 = vpack.c.b16 %v3386, %v3386
        %v3419 = vpack.c.b16 %v3387, %v3387
        %v3420 = vpack.c.b16 %v3388, %v3388
        %v3421 = vpack.c.b16 %v3389, %v3389
        %v3422 = vpack.c.b16 %v3390, %v3390
        %v3423 = vpack.c.b16 %v3391, %v3391
        %v3424 = vpack.c.b16 %v3392, %v3392
        %v3425 = vpack.c.b16 %v3393, %v3393
        %v3426 = vpack.c.b16 %v3394, %v3394
        %v3427 = vpack.c.b16 %v3395, %v3395
        %v3428 = vpack.c.b16 %v3396, %v3396
        %v3429 = vpack.c.b16 %v3397, %v3397
        %3462 = vst [vmem:[#allocation3 + $0x4] sm:$0xf] %v3398
        %3463 = vst [vmem:[#allocation3 + $0x10] sm:$0xf] %v3399
        %3464 = vst [vmem:[#allocation3 + $0x1c] sm:$0xf] %v3400
        %3465 = vst [vmem:[#allocation3 + $0x28] sm:$0xf] %v3401
        %3466 = vst [vmem:[#allocation3 + $0x34] sm:$0xf] %v3402
        %3467 = vst [vmem:[#allocation3 + $0x40] sm:$0xf] %v3403
        %3468 = vst [vmem:[#allocation3 + $0x4c] sm:$0xf] %v3404
        %3469 = vst [vmem:[#allocation3 + $0x58] sm:$0xf] %v3405
        %3470 = vst [vmem:[#allocation3 + $0x64] sm:$0xf] %v3406
        %3471 = vst [vmem:[#allocation3 + $0x70] sm:$0xf] %v3407
        %3472 = vst [vmem:[#allocation3 + $0x7c] sm:$0xf] %v3408
        %3473 = vst [vmem:[#allocation3 + $0x88] sm:$0xf] %v3409
        %3474 = vst [vmem:[#allocation3 + $0x94] sm:$0xf] %v3410
        %3475 = vst [vmem:[#allocation3 + $0xa0] sm:$0xf] %v3411
        %3476 = vst [vmem:[#allocation3 + $0xac] sm:$0xf] %v3412
        %3477 = vst [vmem:[#allocation3 + $0xb8] sm:$0xf] %v3413
        %3478 = vst [vmem:[#allocation3 + $0xc4] sm:$0xf] %v3414
        %3479 = vst [vmem:[#allocation3 + $0xd0] sm:$0xf] %v3415
        %3480 = vst [vmem:[#allocation3 + $0xdc] sm:$0xf] %v3416
        %3481 = vst [vmem:[#allocation3 + $0xe8] sm:$0xf] %v3417
        %3482 = vst [vmem:[#allocation3 + $0xf4] sm:$0xf] %v3418
        %3483 = vst [vmem:[#allocation3 + $0x100] sm:$0xf] %v3419
        %3484 = vst [vmem:[#allocation3 + $0x10c] sm:$0xf] %v3420
        %3485 = vst [vmem:[#allocation3 + $0x118] sm:$0xf] %v3421
        %3486 = vst [vmem:[#allocation3 + $0x124] sm:$0xf] %v3422
        %3487 = vst [vmem:[#allocation3 + $0x130] sm:$0xf] %v3423
        %3488 = vst [vmem:[#allocation3 + $0x13c] sm:$0xf] %v3424
        %3489 = vst [vmem:[#allocation3 + $0x148] sm:$0xf] %v3425
        %3490 = vst [vmem:[#allocation3 + $0x154] sm:$0xf] %v3426
        %3491 = vst [vmem:[#allocation3 + $0x160] sm:$0xf] %v3427
        %3492 = vst [vmem:[#allocation3 + $0x16c] sm:$0xf] %v3428
        %3493 = vst [vmem:[#allocation3 + $0x178] sm:$0xf] %v3429
        %v3494 = vld [vmem:[%s2164 + $0x8] sm:$0xf]
        %v3495 = vld [vmem:[%s2164 + $0xc] sm:$0xf]
        %v3496 = vld [vmem:[%s2164 + $0x10] sm:$0x1]
        %v3497 = vld [vmem:[%s2164 + $0x20] sm:$0xf]
        %v3498 = vld [vmem:[%s2164 + $0x24] sm:$0xf]
        %v3499 = vld [vmem:[%s2164 + $0x28] sm:$0x1]
        %v3500 = vld [vmem:[%s2164 + $0x38] sm:$0xf]
        %v3501 = vld [vmem:[%s2164 + $0x3c] sm:$0xf]
        %v3502 = vld [vmem:[%s2164 + $0x40] sm:$0x1]
        %v3503 = vld [vmem:[%s2164 + $0x50] sm:$0xf]
        %v3504 = vld [vmem:[%s2164 + $0x54] sm:$0xf]
        %v3505 = vld [vmem:[%s2164 + $0x58] sm:$0x1]
        %v3506 = vld [vmem:[%s2164 + $0x68] sm:$0xf]
        %v3507 = vld [vmem:[%s2164 + $0x6c] sm:$0xf]
        %v3508 = vld [vmem:[%s2164 + $0x70] sm:$0x1]
        %v3509 = vld [vmem:[%s2164 + $0x80] sm:$0xf]
        %v3510 = vld [vmem:[%s2164 + $0x84] sm:$0xf]
        %v3511 = vld [vmem:[%s2164 + $0x88] sm:$0x1]
        %v3512 = vld [vmem:[%s2164 + $0x98] sm:$0xf]
        %v3513 = vld [vmem:[%s2164 + $0x9c] sm:$0xf]
        %v3514 = vld [vmem:[%s2164 + $0xa0] sm:$0x1]
        %v3515 = vld [vmem:[%s2164 + $0xb0] sm:$0xf]
        %v3516 = vld [vmem:[%s2164 + $0xb4] sm:$0xf]
        %v3517 = vld [vmem:[%s2164 + $0xb8] sm:$0x1]
        %v3518 = vld [vmem:[%s2164 + $0xc8] sm:$0xf]
        %v3519 = vld [vmem:[%s2164 + $0xcc] sm:$0xf]
        %v3520 = vld [vmem:[%s2164 + $0xd0] sm:$0x1]
        %v3521 = vld [vmem:[%s2164 + $0xe0] sm:$0xf]
        %v3522 = vld [vmem:[%s2164 + $0xe4] sm:$0xf]
        %v3523 = vld [vmem:[%s2164 + $0xe8] sm:$0x1]
        %v3524 = vld [vmem:[%s2164 + $0xf8] sm:$0xf]
        %v3525 = vld [vmem:[%s2164 + $0xfc] sm:$0xf]
        %v3526 = vld [vmem:[%s2164 + $0x100] sm:$0x1]
        %v3527 = vld [vmem:[%s2164 + $0x110] sm:$0xf]
        %v3528 = vld [vmem:[%s2164 + $0x114] sm:$0xf]
        %v3529 = vld [vmem:[%s2164 + $0x118] sm:$0x1]
        %v3530 = vld [vmem:[%s2164 + $0x128] sm:$0xf]
        %v3531 = vld [vmem:[%s2164 + $0x12c] sm:$0xf]
        %v3532 = vld [vmem:[%s2164 + $0x130] sm:$0x1]
        %v3533 = vld [vmem:[%s2164 + $0x140] sm:$0xf]
        %v3534 = vld [vmem:[%s2164 + $0x144] sm:$0xf]
        %v3535 = vld [vmem:[%s2164 + $0x148] sm:$0x1]
        %v3536 = vld [vmem:[%s2164 + $0x158] sm:$0xf]
        %v3537 = vld [vmem:[%s2164 + $0x15c] sm:$0xf]
        %v3538 = vld [vmem:[%s2164 + $0x160] sm:$0x1]
        %v3539 = vld [vmem:[%s2164 + $0x170] sm:$0xf]
        %v3540 = vld [vmem:[%s2164 + $0x174] sm:$0xf]
        %v3541 = vld [vmem:[%s2164 + $0x178] sm:$0x1]
        %v3542 = vsel %vm528, 0, %v3494
        %v3543 = vsel %vm535, 0, %v3495
        %v3544 = vsel %vm542, 0, %v3496
        %v3545 = vsel %vm528, 0, %v3497
        %v3546 = vsel %vm535, 0, %v3498
        %v3547 = vsel %vm542, 0, %v3499
        %v3548 = vsel %vm528, 0, %v3500
        %v3549 = vsel %vm535, 0, %v3501
        %v3550 = vsel %vm542, 0, %v3502
        %v3551 = vsel %vm528, 0, %v3503
        %v3552 = vsel %vm535, 0, %v3504
        %v3553 = vsel %vm542, 0, %v3505
        %v3554 = vsel %vm528, 0, %v3506
        %v3555 = vsel %vm535, 0, %v3507
        %v3556 = vsel %vm542, 0, %v3508
        %v3557 = vsel %vm528, 0, %v3509
        %v3558 = vsel %vm535, 0, %v3510
        %v3559 = vsel %vm542, 0, %v3511
        %v3560 = vsel %vm528, 0, %v3512
        %v3561 = vsel %vm535, 0, %v3513
        %v3562 = vsel %vm542, 0, %v3514
        %v3563 = vsel %vm528, 0, %v3515
        %v3564 = vsel %vm535, 0, %v3516
        %v3565 = vsel %vm542, 0, %v3517
        %v3566 = vsel %vm528, 0, %v3518
        %v3567 = vsel %vm535, 0, %v3519
        %v3568 = vsel %vm542, 0, %v3520
        %v3569 = vsel %vm528, 0, %v3521
        %v3570 = vsel %vm535, 0, %v3522
        %v3571 = vsel %vm542, 0, %v3523
        %v3572 = vsel %vm528, 0, %v3524
        %v3573 = vsel %vm535, 0, %v3525
        %v3574 = vsel %vm542, 0, %v3526
        %v3575 = vsel %vm528, 0, %v3527
        %v3576 = vsel %vm535, 0, %v3528
        %v3577 = vsel %vm542, 0, %v3529
        %v3578 = vsel %vm528, 0, %v3530
        %v3579 = vsel %vm535, 0, %v3531
        %v3580 = vsel %vm542, 0, %v3532
        %v3581 = vsel %vm528, 0, %v3533
        %v3582 = vsel %vm535, 0, %v3534
        %v3583 = vsel %vm542, 0, %v3535
        %v3584 = vsel %vm528, 0, %v3536
        %v3585 = vsel %vm535, 0, %v3537
        %v3586 = vsel %vm542, 0, %v3538
        %v3587 = vsel %vm528, 0, %v3539
        %v3588 = vsel %vm535, 0, %v3540
        %v3589 = vsel %vm542, 0, %v3541
        %v3638 = vunpack.c.l.b16 %v3542
        %v3639 = vunpack.c.l.b16 %v3543
        %v3640 = vunpack.c.l.b16 %v3544
        %v3641 = vunpack.c.l.b16 %v3545
        %v3642 = vunpack.c.l.b16 %v3546
        %v3643 = vunpack.c.l.b16 %v3547
        %v3644 = vunpack.c.l.b16 %v3548
        %v3645 = vunpack.c.l.b16 %v3549
        %v3646 = vunpack.c.l.b16 %v3550
        %v3647 = vunpack.c.l.b16 %v3551
        %v3648 = vunpack.c.l.b16 %v3552
        %v3649 = vunpack.c.l.b16 %v3553
        %v3650 = vunpack.c.l.b16 %v3554
        %v3651 = vunpack.c.l.b16 %v3555
        %v3652 = vunpack.c.l.b16 %v3556
        %v3653 = vunpack.c.l.b16 %v3557
        %v3654 = vunpack.c.l.b16 %v3558
        %v3655 = vunpack.c.l.b16 %v3559
        %v3656 = vunpack.c.l.b16 %v3560
        %v3657 = vunpack.c.l.b16 %v3561
        %v3658 = vunpack.c.l.b16 %v3562
        %v3659 = vunpack.c.l.b16 %v3563
        %v3660 = vunpack.c.l.b16 %v3564
        %v3661 = vunpack.c.l.b16 %v3565
        %v3662 = vunpack.c.l.b16 %v3566
        %v3663 = vunpack.c.l.b16 %v3567
        %v3664 = vunpack.c.l.b16 %v3568
        %v3665 = vunpack.c.l.b16 %v3569
        %v3666 = vunpack.c.l.b16 %v3570
        %v3667 = vunpack.c.l.b16 %v3571
        %v3668 = vunpack.c.l.b16 %v3572
        %v3669 = vunpack.c.l.b16 %v3573
        %v3670 = vunpack.c.l.b16 %v3574
        %v3671 = vunpack.c.l.b16 %v3575
        %v3672 = vunpack.c.l.b16 %v3576
        %v3673 = vunpack.c.l.b16 %v3577
        %v3674 = vunpack.c.l.b16 %v3578
        %v3675 = vunpack.c.l.b16 %v3579
        %v3676 = vunpack.c.l.b16 %v3580
        %v3677 = vunpack.c.l.b16 %v3581
        %v3678 = vunpack.c.l.b16 %v3582
        %v3679 = vunpack.c.l.b16 %v3583
        %v3680 = vunpack.c.l.b16 %v3584
        %v3681 = vunpack.c.l.b16 %v3585
        %v3682 = vunpack.c.l.b16 %v3586
        %v3683 = vunpack.c.l.b16 %v3587
        %v3684 = vunpack.c.l.b16 %v3588
        %v3685 = vunpack.c.l.b16 %v3589
        %v3686 = vpack.c.b16 %v3639, %v3638
        %v3687 = vpack.c.b16 %v3640, %v3640
        %v3688 = vpack.c.b16 %v3642, %v3641
        %v3689 = vpack.c.b16 %v3643, %v3643
        %v3690 = vpack.c.b16 %v3645, %v3644
        %v3691 = vpack.c.b16 %v3646, %v3646
        %v3692 = vpack.c.b16 %v3648, %v3647
        %v3693 = vpack.c.b16 %v3649, %v3649
        %v3694 = vpack.c.b16 %v3651, %v3650
        %v3695 = vpack.c.b16 %v3652, %v3652
        %v3696 = vpack.c.b16 %v3654, %v3653
        %v3697 = vpack.c.b16 %v3655, %v3655
        %v3698 = vpack.c.b16 %v3657, %v3656
        %v3699 = vpack.c.b16 %v3658, %v3658
        %v3700 = vpack.c.b16 %v3660, %v3659
        %v3701 = vpack.c.b16 %v3661, %v3661
        %v3702 = vpack.c.b16 %v3663, %v3662
        %v3703 = vpack.c.b16 %v3664, %v3664
        %v3704 = vpack.c.b16 %v3666, %v3665
        %v3705 = vpack.c.b16 %v3667, %v3667
        %v3706 = vpack.c.b16 %v3669, %v3668
        %v3707 = vpack.c.b16 %v3670, %v3670
        %v3708 = vpack.c.b16 %v3672, %v3671
        %v3709 = vpack.c.b16 %v3673, %v3673
        %v3710 = vpack.c.b16 %v3675, %v3674
        %v3711 = vpack.c.b16 %v3676, %v3676
        %v3712 = vpack.c.b16 %v3678, %v3677
        %v3713 = vpack.c.b16 %v3679, %v3679
        %v3714 = vpack.c.b16 %v3681, %v3680
        %v3715 = vpack.c.b16 %v3682, %v3682
        %v3716 = vpack.c.b16 %v3684, %v3683
        %v3717 = vpack.c.b16 %v3685, %v3685
        %v3720 = vsel %vm1488, %v3686, 0
        %v3722 = vsel %vm1488, %v3687, 0
        %v3724 = vsel %vm1488, %v3688, 0
        %v3726 = vsel %vm1488, %v3689, 0
        %v3728 = vsel %vm1488, %v3690, 0
        %v3730 = vsel %vm1488, %v3691, 0
        %v3732 = vsel %vm1488, %v3692, 0
        %v3734 = vsel %vm1488, %v3693, 0
        %v3736 = vsel %vm1488, %v3694, 0
        %v3738 = vsel %vm1488, %v3695, 0
        %v3740 = vsel %vm1488, %v3696, 0
        %v3742 = vsel %vm1488, %v3697, 0
        %v3744 = vsel %vm1488, %v3698, 0
        %v3746 = vsel %vm1488, %v3699, 0
        %v3748 = vsel %vm1488, %v3700, 0
        %v3750 = vsel %vm1488, %v3701, 0
        %v3752 = vsel %vm1488, %v3702, 0
        %v3754 = vsel %vm1488, %v3703, 0
        %v3756 = vsel %vm1488, %v3704, 0
        %v3758 = vsel %vm1488, %v3705, 0
        %v3760 = vsel %vm1488, %v3706, 0
        %v3762 = vsel %vm1488, %v3707, 0
        %v3764 = vsel %vm1488, %v3708, 0
        %v3766 = vsel %vm1488, %v3709, 0
        %v3768 = vsel %vm1488, %v3710, 0
        %v3770 = vsel %vm1488, %v3711, 0
        %v3772 = vsel %vm1488, %v3712, 0
        %v3774 = vsel %vm1488, %v3713, 0
        %v3776 = vsel %vm1488, %v3714, 0
        %v3778 = vsel %vm1488, %v3715, 0
        %v3780 = vsel %vm1488, %v3716, 0
        %v3782 = vsel %vm1488, %v3717, 0
        %v3783 = vsel %vm1569, %v3720, 0
        %v3784 = vsel %vm1569, %v3722, 0
        %v3785 = vsel %vm1569, %v3724, 0
        %v3786 = vsel %vm1569, %v3726, 0
        %v3787 = vsel %vm1569, %v3728, 0
        %v3788 = vsel %vm1569, %v3730, 0
        %v3789 = vsel %vm1569, %v3732, 0
        %v3790 = vsel %vm1569, %v3734, 0
        %v3791 = vsel %vm1569, %v3736, 0
        %v3792 = vsel %vm1569, %v3738, 0
        %v3793 = vsel %vm1569, %v3740, 0
        %v3794 = vsel %vm1569, %v3742, 0
        %v3795 = vsel %vm1569, %v3744, 0
        %v3796 = vsel %vm1569, %v3746, 0
        %v3797 = vsel %vm1569, %v3748, 0
        %v3798 = vsel %vm1569, %v3750, 0
        %v3799 = vsel %vm1569, %v3752, 0
        %v3800 = vsel %vm1569, %v3754, 0
        %v3801 = vsel %vm1569, %v3756, 0
        %v3802 = vsel %vm1569, %v3758, 0
        %v3803 = vsel %vm1569, %v3760, 0
        %v3804 = vsel %vm1569, %v3762, 0
        %v3805 = vsel %vm1569, %v3764, 0
        %v3806 = vsel %vm1569, %v3766, 0
        %v3807 = vsel %vm1569, %v3768, 0
        %v3808 = vsel %vm1569, %v3770, 0
        %v3809 = vsel %vm1569, %v3772, 0
        %v3810 = vsel %vm1569, %v3774, 0
        %v3811 = vsel %vm1569, %v3776, 0
        %v3812 = vsel %vm1569, %v3778, 0
        %v3813 = vsel %vm1569, %v3780, 0
        %v3814 = vsel %vm1569, %v3782, 0
        %v3815 = vsel %vm1634, %v3783, 0
        %v3816 = vsel %vm1634, %v3784, 0
        %v3817 = vsel %vm1634, %v3785, 0
        %v3818 = vsel %vm1634, %v3786, 0
        %v3819 = vsel %vm1634, %v3787, 0
        %v3820 = vsel %vm1634, %v3788, 0
        %v3821 = vsel %vm1634, %v3789, 0
        %v3822 = vsel %vm1634, %v3790, 0
        %v3823 = vsel %vm1634, %v3791, 0
        %v3824 = vsel %vm1634, %v3792, 0
        %v3825 = vsel %vm1634, %v3793, 0
        %v3826 = vsel %vm1634, %v3794, 0
        %v3827 = vsel %vm1634, %v3795, 0
        %v3828 = vsel %vm1634, %v3796, 0
        %v3829 = vsel %vm1634, %v3797, 0
        %v3830 = vsel %vm1634, %v3798, 0
        %v3831 = vsel %vm1634, %v3799, 0
        %v3832 = vsel %vm1634, %v3800, 0
        %v3833 = vsel %vm1634, %v3801, 0
        %v3834 = vsel %vm1634, %v3802, 0
        %v3835 = vsel %vm1634, %v3803, 0
        %v3836 = vsel %vm1634, %v3804, 0
        %v3837 = vsel %vm1634, %v3805, 0
        %v3838 = vsel %vm1634, %v3806, 0
        %v3839 = vsel %vm1634, %v3807, 0
        %v3840 = vsel %vm1634, %v3808, 0
        %v3841 = vsel %vm1634, %v3809, 0
        %v3842 = vsel %vm1634, %v3810, 0
        %v3843 = vsel %vm1634, %v3811, 0
        %v3844 = vsel %vm1634, %v3812, 0
        %v3845 = vsel %vm1634, %v3813, 0
        %v3846 = vsel %vm1634, %v3814, 0
        %v3847 = vshrl.u32 %v3815, 16
        %v3849 = vshll.u32 %v3815, 16
        %v3851 = vrot.slane %v3849, 1
        %v3852 = vor.u32 %v3847, %v3851
        %v3853 = vshll.u32 %v3816, 16
        %v3855 = vrot.slane %v3853, 1
        %v3856 = vsel %vm2469, %v3852, %v3855
        %v3857 = vshrl.u32 %v3817, 16
        %v3859 = vshll.u32 %v3817, 16
        %v3861 = vrot.slane %v3859, 1
        %v3862 = vor.u32 %v3857, %v3861
        %v3863 = vshll.u32 %v3818, 16
        %v3865 = vrot.slane %v3863, 1
        %v3866 = vsel %vm2469, %v3862, %v3865
        %v3867 = vshrl.u32 %v3819, 16
        %v3869 = vshll.u32 %v3819, 16
        %v3871 = vrot.slane %v3869, 1
        %v3872 = vor.u32 %v3867, %v3871
        %v3873 = vshll.u32 %v3820, 16
        %v3875 = vrot.slane %v3873, 1
        %v3876 = vsel %vm2469, %v3872, %v3875
        %v3877 = vshrl.u32 %v3821, 16
        %v3879 = vshll.u32 %v3821, 16
        %v3881 = vrot.slane %v3879, 1
        %v3882 = vor.u32 %v3877, %v3881
        %v3883 = vshll.u32 %v3822, 16
        %v3885 = vrot.slane %v3883, 1
        %v3886 = vsel %vm2469, %v3882, %v3885
        %v3887 = vshrl.u32 %v3823, 16
        %v3889 = vshll.u32 %v3823, 16
        %v3891 = vrot.slane %v3889, 1
        %v3892 = vor.u32 %v3887, %v3891
        %v3893 = vshll.u32 %v3824, 16
        %v3895 = vrot.slane %v3893, 1
        %v3896 = vsel %vm2469, %v3892, %v3895
        %v3897 = vshrl.u32 %v3825, 16
        %v3899 = vshll.u32 %v3825, 16
        %v3901 = vrot.slane %v3899, 1
        %v3902 = vor.u32 %v3897, %v3901
        %v3903 = vshll.u32 %v3826, 16
        %v3905 = vrot.slane %v3903, 1
        %v3906 = vsel %vm2469, %v3902, %v3905
        %v3907 = vshrl.u32 %v3827, 16
        %v3909 = vshll.u32 %v3827, 16
        %v3911 = vrot.slane %v3909, 1
        %v3912 = vor.u32 %v3907, %v3911
        %v3913 = vshll.u32 %v3828, 16
        %v3915 = vrot.slane %v3913, 1
        %v3916 = vsel %vm2469, %v3912, %v3915
        %v3917 = vshrl.u32 %v3829, 16
        %v3919 = vshll.u32 %v3829, 16
        %v3921 = vrot.slane %v3919, 1
        %v3922 = vor.u32 %v3917, %v3921
        %v3923 = vshll.u32 %v3830, 16
        %v3925 = vrot.slane %v3923, 1
        %v3926 = vsel %vm2469, %v3922, %v3925
        %v3927 = vshrl.u32 %v3831, 16
        %v3929 = vshll.u32 %v3831, 16
        %v3931 = vrot.slane %v3929, 1
        %v3932 = vor.u32 %v3927, %v3931
        %v3933 = vshll.u32 %v3832, 16
        %v3935 = vrot.slane %v3933, 1
        %v3936 = vsel %vm2469, %v3932, %v3935
        %v3937 = vshrl.u32 %v3833, 16
        %v3939 = vshll.u32 %v3833, 16
        %v3941 = vrot.slane %v3939, 1
        %v3942 = vor.u32 %v3937, %v3941
        %v3943 = vshll.u32 %v3834, 16
        %v3945 = vrot.slane %v3943, 1
        %v3946 = vsel %vm2469, %v3942, %v3945
        %v3947 = vshrl.u32 %v3835, 16
        %v3949 = vshll.u32 %v3835, 16
        %v3951 = vrot.slane %v3949, 1
        %v3952 = vor.u32 %v3947, %v3951
        %v3953 = vshll.u32 %v3836, 16
        %v3955 = vrot.slane %v3953, 1
        %v3956 = vsel %vm2469, %v3952, %v3955
        %v3957 = vshrl.u32 %v3837, 16
        %v3959 = vshll.u32 %v3837, 16
        %v3961 = vrot.slane %v3959, 1
        %v3962 = vor.u32 %v3957, %v3961
        %v3963 = vshll.u32 %v3838, 16
        %v3965 = vrot.slane %v3963, 1
        %v3966 = vsel %vm2469, %v3962, %v3965
        %v3967 = vshrl.u32 %v3839, 16
        %v3969 = vshll.u32 %v3839, 16
        %v3971 = vrot.slane %v3969, 1
        %v3972 = vor.u32 %v3967, %v3971
        %v3973 = vshll.u32 %v3840, 16
        %v3975 = vrot.slane %v3973, 1
        %v3976 = vsel %vm2469, %v3972, %v3975
        %v3977 = vshrl.u32 %v3841, 16
        %v3979 = vshll.u32 %v3841, 16
        %v3981 = vrot.slane %v3979, 1
        %v3982 = vor.u32 %v3977, %v3981
        %v3983 = vshll.u32 %v3842, 16
        %v3985 = vrot.slane %v3983, 1
        %v3986 = vsel %vm2469, %v3982, %v3985
        %v3987 = vshrl.u32 %v3843, 16
        %v3989 = vshll.u32 %v3843, 16
        %v3991 = vrot.slane %v3989, 1
        %v3992 = vor.u32 %v3987, %v3991
        %v3993 = vshll.u32 %v3844, 16
        %v3995 = vrot.slane %v3993, 1
        %v3996 = vsel %vm2469, %v3992, %v3995
        %v3997 = vshrl.u32 %v3845, 16
        %v3999 = vshll.u32 %v3845, 16
        %v4001 = vrot.slane %v3999, 1
        %v4002 = vor.u32 %v3997, %v4001
        %v4003 = vshll.u32 %v3846, 16
        %v4005 = vrot.slane %v4003, 1
        %v4006 = vsel %vm2469, %v4002, %v4005
        %v4007 = vunpack.c.l.b16 %v3856
        %v4008 = vunpack.c.h.b16 %v3856
        %v4009 = vunpack.c.l.b16 %v3866
        %v4010 = vunpack.c.h.b16 %v3866
        %v4011 = vunpack.c.l.b16 %v3876
        %v4012 = vunpack.c.h.b16 %v3876
        %v4013 = vunpack.c.l.b16 %v3886
        %v4014 = vunpack.c.h.b16 %v3886
        %v4015 = vunpack.c.l.b16 %v3896
        %v4016 = vunpack.c.h.b16 %v3896
        %v4017 = vunpack.c.l.b16 %v3906
        %v4018 = vunpack.c.h.b16 %v3906
        %v4019 = vunpack.c.l.b16 %v3916
        %v4020 = vunpack.c.h.b16 %v3916
        %v4021 = vunpack.c.l.b16 %v3926
        %v4022 = vunpack.c.h.b16 %v3926
        %v4023 = vunpack.c.l.b16 %v3936
        %v4024 = vunpack.c.h.b16 %v3936
        %v4025 = vunpack.c.l.b16 %v3946
        %v4026 = vunpack.c.h.b16 %v3946
        %v4027 = vunpack.c.l.b16 %v3956
        %v4028 = vunpack.c.h.b16 %v3956
        %v4029 = vunpack.c.l.b16 %v3966
        %v4030 = vunpack.c.h.b16 %v3966
        %v4031 = vunpack.c.l.b16 %v3976
        %v4032 = vunpack.c.h.b16 %v3976
        %v4033 = vunpack.c.l.b16 %v3986
        %v4034 = vunpack.c.h.b16 %v3986
        %v4035 = vunpack.c.l.b16 %v3996
        %v4036 = vunpack.c.h.b16 %v3996
        %v4037 = vunpack.c.l.b16 %v4006
        %v4038 = vunpack.c.h.b16 %v4006
        %v4039 = vpack.c.b16 %v4007, %v4007
        %v4040 = vpack.c.b16 %v4008, %v4008
        %v4041 = vpack.c.b16 %v4009, %v4009
        %v4042 = vpack.c.b16 %v4010, %v4010
        %v4043 = vpack.c.b16 %v4011, %v4011
        %v4044 = vpack.c.b16 %v4012, %v4012
        %v4045 = vpack.c.b16 %v4013, %v4013
        %v4046 = vpack.c.b16 %v4014, %v4014
        %v4047 = vpack.c.b16 %v4015, %v4015
        %v4048 = vpack.c.b16 %v4016, %v4016
        %v4049 = vpack.c.b16 %v4017, %v4017
        %v4050 = vpack.c.b16 %v4018, %v4018
        %v4051 = vpack.c.b16 %v4019, %v4019
        %v4052 = vpack.c.b16 %v4020, %v4020
        %v4053 = vpack.c.b16 %v4021, %v4021
        %v4054 = vpack.c.b16 %v4022, %v4022
        %v4055 = vpack.c.b16 %v4023, %v4023
        %v4056 = vpack.c.b16 %v4024, %v4024
        %v4057 = vpack.c.b16 %v4025, %v4025
        %v4058 = vpack.c.b16 %v4026, %v4026
        %v4059 = vpack.c.b16 %v4027, %v4027
        %v4060 = vpack.c.b16 %v4028, %v4028
        %v4061 = vpack.c.b16 %v4029, %v4029
        %v4062 = vpack.c.b16 %v4030, %v4030
        %v4063 = vpack.c.b16 %v4031, %v4031
        %v4064 = vpack.c.b16 %v4032, %v4032
        %v4065 = vpack.c.b16 %v4033, %v4033
        %v4066 = vpack.c.b16 %v4034, %v4034
        %v4067 = vpack.c.b16 %v4035, %v4035
        %v4068 = vpack.c.b16 %v4036, %v4036
        %v4069 = vpack.c.b16 %v4037, %v4037
        %v4070 = vpack.c.b16 %v4038, %v4038
        %4103 = vst [vmem:[#allocation3 + $0x8] sm:$0xf] %v4039
        %4104 = vst [vmem:[#allocation3 + $0x14] sm:$0xf] %v4040
        %4105 = vst [vmem:[#allocation3 + $0x20] sm:$0xf] %v4041
        %4106 = vst [vmem:[#allocation3 + $0x2c] sm:$0xf] %v4042
        %4107 = vst [vmem:[#allocation3 + $0x38] sm:$0xf] %v4043
        %4108 = vst [vmem:[#allocation3 + $0x44] sm:$0xf] %v4044
        %4109 = vst [vmem:[#allocation3 + $0x50] sm:$0xf] %v4045
        %4110 = vst [vmem:[#allocation3 + $0x5c] sm:$0xf] %v4046
        %4111 = vst [vmem:[#allocation3 + $0x68] sm:$0xf] %v4047
        %4112 = vst [vmem:[#allocation3 + $0x74] sm:$0xf] %v4048
        %4113 = vst [vmem:[#allocation3 + $0x80] sm:$0xf] %v4049
        %4114 = vst [vmem:[#allocation3 + $0x8c] sm:$0xf] %v4050
        %4115 = vst [vmem:[#allocation3 + $0x98] sm:$0xf] %v4051
        %4116 = vst [vmem:[#allocation3 + $0xa4] sm:$0xf] %v4052
        %4117 = vst [vmem:[#allocation3 + $0xb0] sm:$0xf] %v4053
        %4118 = vst [vmem:[#allocation3 + $0xbc] sm:$0xf] %v4054
        %4119 = vst [vmem:[#allocation3 + $0xc8] sm:$0xf] %v4055
        %4120 = vst [vmem:[#allocation3 + $0xd4] sm:$0xf] %v4056
        %4121 = vst [vmem:[#allocation3 + $0xe0] sm:$0xf] %v4057
        %4122 = vst [vmem:[#allocation3 + $0xec] sm:$0xf] %v4058
        %4123 = vst [vmem:[#allocation3 + $0xf8] sm:$0xf] %v4059
        %4124 = vst [vmem:[#allocation3 + $0x104] sm:$0xf] %v4060
        %4125 = vst [vmem:[#allocation3 + $0x110] sm:$0xf] %v4061
        %4126 = vst [vmem:[#allocation3 + $0x11c] sm:$0xf] %v4062
        %4127 = vst [vmem:[#allocation3 + $0x128] sm:$0xf] %v4063
        %4128 = vst [vmem:[#allocation3 + $0x134] sm:$0xf] %v4064
        %4129 = vst [vmem:[#allocation3 + $0x140] sm:$0xf] %v4065
        %4130 = vst [vmem:[#allocation3 + $0x14c] sm:$0xf] %v4066
        %4131 = vst [vmem:[#allocation3 + $0x158] sm:$0xf] %v4067
        %4132 = vst [vmem:[#allocation3 + $0x164] sm:$0xf] %v4068
        %4133 = vst [vmem:[#allocation3 + $0x170] sm:$0xf] %v4069
        %4134 = vst [vmem:[#allocation3 + $0x17c] sm:$0xf] %v4070
        %v4135 = vld [vmem:[#allocation3] sm:$0xff]
        %v4136 = vld [vmem:[#allocation3 + $0x8] sm:$0xf]
        %v4137 = vld [vmem:[#allocation3 + $0xc] sm:$0xff]
        %v4138 = vld [vmem:[#allocation3 + $0x14] sm:$0xf]
        %v4139 = vld [vmem:[#allocation3 + $0x18] sm:$0xff]
        %v4140 = vld [vmem:[#allocation3 + $0x20] sm:$0xf]
        %v4141 = vld [vmem:[#allocation3 + $0x24] sm:$0xff]
        %v4142 = vld [vmem:[#allocation3 + $0x2c] sm:$0xf]
        %v4143 = vld [vmem:[#allocation3 + $0x30] sm:$0xff]
        %v4144 = vld [vmem:[#allocation3 + $0x38] sm:$0xf]
        %v4145 = vld [vmem:[#allocation3 + $0x3c] sm:$0xff]
        %v4146 = vld [vmem:[#allocation3 + $0x44] sm:$0xf]
        %v4147 = vld [vmem:[#allocation3 + $0x48] sm:$0xff]
        %v4148 = vld [vmem:[#allocation3 + $0x50] sm:$0xf]
        %v4149 = vld [vmem:[#allocation3 + $0x54] sm:$0xff]
        %v4150 = vld [vmem:[#allocation3 + $0x5c] sm:$0xf]
        %v4151 = vld [vmem:[#allocation3 + $0x60] sm:$0xff]
        %v4152 = vld [vmem:[#allocation3 + $0x68] sm:$0xf]
        %v4153 = vld [vmem:[#allocation3 + $0x6c] sm:$0xff]
        %v4154 = vld [vmem:[#allocation3 + $0x74] sm:$0xf]
        %v4155 = vld [vmem:[#allocation3 + $0x78] sm:$0xff]
        %v4156 = vld [vmem:[#allocation3 + $0x80] sm:$0xf]
        %v4157 = vld [vmem:[#allocation3 + $0x84] sm:$0xff]
        %v4158 = vld [vmem:[#allocation3 + $0x8c] sm:$0xf]
        %v4159 = vld [vmem:[#allocation3 + $0x90] sm:$0xff]
        %v4160 = vld [vmem:[#allocation3 + $0x98] sm:$0xf]
        %v4161 = vld [vmem:[#allocation3 + $0x9c] sm:$0xff]
        %v4162 = vld [vmem:[#allocation3 + $0xa4] sm:$0xf]
        %v4163 = vld [vmem:[#allocation3 + $0xa8] sm:$0xff]
        %v4164 = vld [vmem:[#allocation3 + $0xb0] sm:$0xf]
        %v4165 = vld [vmem:[#allocation3 + $0xb4] sm:$0xff]
        %v4166 = vld [vmem:[#allocation3 + $0xbc] sm:$0xf]
        %v4167 = vld [vmem:[#allocation3 + $0xc0] sm:$0xff]
        %v4168 = vld [vmem:[#allocation3 + $0xc8] sm:$0xf]
        %v4169 = vld [vmem:[#allocation3 + $0xcc] sm:$0xff]
        %v4170 = vld [vmem:[#allocation3 + $0xd4] sm:$0xf]
        %v4171 = vld [vmem:[#allocation3 + $0xd8] sm:$0xff]
        %v4172 = vld [vmem:[#allocation3 + $0xe0] sm:$0xf]
        %v4173 = vld [vmem:[#allocation3 + $0xe4] sm:$0xff]
        %v4174 = vld [vmem:[#allocation3 + $0xec] sm:$0xf]
        %v4175 = vld [vmem:[#allocation3 + $0xf0] sm:$0xff]
        %v4176 = vld [vmem:[#allocation3 + $0xf8] sm:$0xf]
        %v4177 = vld [vmem:[#allocation3 + $0xfc] sm:$0xff]
        %v4178 = vld [vmem:[#allocation3 + $0x104] sm:$0xf]
        %v4179 = vld [vmem:[#allocation3 + $0x108] sm:$0xff]
        %v4180 = vld [vmem:[#allocation3 + $0x110] sm:$0xf]
        %v4181 = vld [vmem:[#allocation3 + $0x114] sm:$0xff]
        %v4182 = vld [vmem:[#allocation3 + $0x11c] sm:$0xf]
        %v4183 = vld [vmem:[#allocation3 + $0x120] sm:$0xff]
        %v4184 = vld [vmem:[#allocation3 + $0x128] sm:$0xf]
        %v4185 = vld [vmem:[#allocation3 + $0x12c] sm:$0xff]
        %v4186 = vld [vmem:[#allocation3 + $0x134] sm:$0xf]
        %v4187 = vld [vmem:[#allocation3 + $0x138] sm:$0xff]
        %v4188 = vld [vmem:[#allocation3 + $0x140] sm:$0xf]
        %v4189 = vld [vmem:[#allocation3 + $0x144] sm:$0xff]
        %v4190 = vld [vmem:[#allocation3 + $0x14c] sm:$0xf]
        %v4191 = vld [vmem:[#allocation3 + $0x150] sm:$0xff]
        %v4192 = vld [vmem:[#allocation3 + $0x158] sm:$0xf]
        %v4193 = vld [vmem:[#allocation3 + $0x15c] sm:$0xff]
        %v4194 = vld [vmem:[#allocation3 + $0x164] sm:$0xf]
        %v4195 = vld [vmem:[#allocation3 + $0x168] sm:$0xff]
        %v4196 = vld [vmem:[#allocation3 + $0x170] sm:$0xf]
        %v4197 = vld [vmem:[#allocation3 + $0x174] sm:$0xff]
        %v4198 = vld [vmem:[#allocation3 + $0x17c] sm:$0xf]
        %v4199 = vld [vmem:[%s1] sm:$0xf]
        %v4200 = vld [vmem:[%s1 + $0x4] sm:$0xf]
        %v4201 = vld [vmem:[%s1 + $0x8] sm:$0xf]
        %v4202 = vld [vmem:[%s1 + $0xc] sm:$0xf]
        %v4203 = vld [vmem:[%s1 + $0x10] sm:$0xf]
        %v4204 = vld [vmem:[%s1 + $0x14] sm:$0xf]
        %v4205 = vld [vmem:[%s1 + $0x18] sm:$0xf]
        %v4206 = vld [vmem:[%s1 + $0x1c] sm:$0xf]
        %v4207 = vld [vmem:[%s1 + $0x20] sm:$0xf]
        %v4208 = vld [vmem:[%s1 + $0x24] sm:$0xf]
        %v4209 = vld [vmem:[%s1 + $0x28] sm:$0xf]
        %v4210 = vld [vmem:[%s1 + $0x2c] sm:$0xf]
        %v4211 = vld [vmem:[%s1 + $0x30] sm:$0xf]
        %v4212 = vld [vmem:[%s1 + $0x34] sm:$0xf]
        %v4213 = vld [vmem:[%s1 + $0x38] sm:$0xf]
        %v4214 = vld [vmem:[%s1 + $0x3c] sm:$0xf]
        %v4215 = vld [vmem:[%s1 + $0x40] sm:$0xf]
        %v4216 = vld [vmem:[%s1 + $0x44] sm:$0xf]
        %v4217 = vld [vmem:[%s1 + $0x48] sm:$0xf]
        %v4218 = vld [vmem:[%s1 + $0x4c] sm:$0xf]
        %v4219 = vld [vmem:[%s1 + $0x50] sm:$0xf]
        %v4220 = vld [vmem:[%s1 + $0x54] sm:$0xf]
        %v4221 = vld [vmem:[%s1 + $0x58] sm:$0xf]
        %v4222 = vld [vmem:[%s1 + $0x5c] sm:$0xf]
        %v4223 = vld [vmem:[%s1 + $0x60] sm:$0xf]
        %v4224 = vld [vmem:[%s1 + $0x64] sm:$0xf]
        %v4225 = vld [vmem:[%s1 + $0x68] sm:$0xf]
        %v4226 = vld [vmem:[%s1 + $0x6c] sm:$0xf]
        %v4227 = vld [vmem:[%s1 + $0x70] sm:$0xf]
        %v4228 = vld [vmem:[%s1 + $0x74] sm:$0xf]
        %v4229 = vld [vmem:[%s1 + $0x78] sm:$0xf]
        %v4230 = vld [vmem:[%s1 + $0x7c] sm:$0xf]
        %v4231 = vld [vmem:[%s1 + $0x80] sm:$0xf]
        %v4232 = vld [vmem:[%s1 + $0x84] sm:$0xf]
        %v4233 = vld [vmem:[%s1 + $0x88] sm:$0xf]
        %v4234 = vld [vmem:[%s1 + $0x8c] sm:$0xf]
        %v4235 = vld [vmem:[%s1 + $0x90] sm:$0xf]
        %v4236 = vld [vmem:[%s1 + $0x94] sm:$0xf]
        %v4237 = vld [vmem:[%s1 + $0x98] sm:$0xf]
        %v4238 = vld [vmem:[%s1 + $0x9c] sm:$0xf]
        %v4239 = vld [vmem:[%s1 + $0xa0] sm:$0xf]
        %v4240 = vld [vmem:[%s1 + $0xa4] sm:$0xf]
        %v4241 = vld [vmem:[%s1 + $0xa8] sm:$0xf]
        %v4242 = vld [vmem:[%s1 + $0xac] sm:$0xf]
        %v4243 = vld [vmem:[%s1 + $0xb0] sm:$0xf]
        %v4244 = vld [vmem:[%s1 + $0xb4] sm:$0xf]
        %v4245 = vld [vmem:[%s1 + $0xb8] sm:$0xf]
        %v4246 = vld [vmem:[%s1 + $0xbc] sm:$0xf]
        %v4247 = vld [vmem:[%s3] sm:$0x1]
        %v4248 = vperm.slane %v4247, 0
        %v4313 = vunpack.c.l.b16 %v4135
        %v4314 = vunpack.c.h.b16 %v4135
        %v4315 = vunpack.c.l.b16 %v4136
        %v4316 = vunpack.c.l.b16 %v4137
        %v4317 = vunpack.c.h.b16 %v4137
        %v4318 = vunpack.c.l.b16 %v4138
        %v4319 = vunpack.c.l.b16 %v4139
        %v4320 = vunpack.c.h.b16 %v4139
        %v4321 = vunpack.c.l.b16 %v4140
        %v4322 = vunpack.c.l.b16 %v4141
        %v4323 = vunpack.c.h.b16 %v4141
        %v4324 = vunpack.c.l.b16 %v4142
        %v4325 = vunpack.c.l.b16 %v4143
        %v4326 = vunpack.c.h.b16 %v4143
        %v4327 = vunpack.c.l.b16 %v4144
        %v4328 = vunpack.c.l.b16 %v4145
        %v4329 = vunpack.c.h.b16 %v4145
        %v4330 = vunpack.c.l.b16 %v4146
        %v4331 = vunpack.c.l.b16 %v4147
        %v4332 = vunpack.c.h.b16 %v4147
        %v4333 = vunpack.c.l.b16 %v4148
        %v4334 = vunpack.c.l.b16 %v4149
        %v4335 = vunpack.c.h.b16 %v4149
        %v4336 = vunpack.c.l.b16 %v4150
        %v4337 = vunpack.c.l.b16 %v4151
        %v4338 = vunpack.c.h.b16 %v4151
        %v4339 = vunpack.c.l.b16 %v4152
        %v4340 = vunpack.c.l.b16 %v4153
        %v4341 = vunpack.c.h.b16 %v4153
        %v4342 = vunpack.c.l.b16 %v4154
        %v4343 = vunpack.c.l.b16 %v4155
        %v4344 = vunpack.c.h.b16 %v4155
        %v4345 = vunpack.c.l.b16 %v4156
        %v4346 = vunpack.c.l.b16 %v4157
        %v4347 = vunpack.c.h.b16 %v4157
        %v4348 = vunpack.c.l.b16 %v4158
        %v4349 = vunpack.c.l.b16 %v4159
        %v4350 = vunpack.c.h.b16 %v4159
        %v4351 = vunpack.c.l.b16 %v4160
        %v4352 = vunpack.c.l.b16 %v4161
        %v4353 = vunpack.c.h.b16 %v4161
        %v4354 = vunpack.c.l.b16 %v4162
        %v4355 = vunpack.c.l.b16 %v4163
        %v4356 = vunpack.c.h.b16 %v4163
        %v4357 = vunpack.c.l.b16 %v4164
        %v4358 = vunpack.c.l.b16 %v4165
        %v4359 = vunpack.c.h.b16 %v4165
        %v4360 = vunpack.c.l.b16 %v4166
        %v4361 = vunpack.c.l.b16 %v4167
        %v4362 = vunpack.c.h.b16 %v4167
        %v4363 = vunpack.c.l.b16 %v4168
        %v4364 = vunpack.c.l.b16 %v4169
        %v4365 = vunpack.c.h.b16 %v4169
        %v4366 = vunpack.c.l.b16 %v4170
        %v4367 = vunpack.c.l.b16 %v4171
        %v4368 = vunpack.c.h.b16 %v4171
        %v4369 = vunpack.c.l.b16 %v4172
        %v4370 = vunpack.c.l.b16 %v4173
        %v4371 = vunpack.c.h.b16 %v4173
        %v4372 = vunpack.c.l.b16 %v4174
        %v4373 = vunpack.c.l.b16 %v4175
        %v4374 = vunpack.c.h.b16 %v4175
        %v4375 = vunpack.c.l.b16 %v4176
        %v4376 = vunpack.c.l.b16 %v4177
        %v4377 = vunpack.c.h.b16 %v4177
        %v4378 = vunpack.c.l.b16 %v4178
        %v4379 = vunpack.c.l.b16 %v4179
        %v4380 = vunpack.c.h.b16 %v4179
        %v4381 = vunpack.c.l.b16 %v4180
        %v4382 = vunpack.c.l.b16 %v4181
        %v4383 = vunpack.c.h.b16 %v4181
        %v4384 = vunpack.c.l.b16 %v4182
        %v4385 = vunpack.c.l.b16 %v4183
        %v4386 = vunpack.c.h.b16 %v4183
        %v4387 = vunpack.c.l.b16 %v4184
        %v4388 = vunpack.c.l.b16 %v4185
        %v4389 = vunpack.c.h.b16 %v4185
        %v4390 = vunpack.c.l.b16 %v4186
        %v4391 = vunpack.c.l.b16 %v4187
        %v4392 = vunpack.c.h.b16 %v4187
        %v4393 = vunpack.c.l.b16 %v4188
        %v4394 = vunpack.c.l.b16 %v4189
        %v4395 = vunpack.c.h.b16 %v4189
        %v4396 = vunpack.c.l.b16 %v4190
        %v4397 = vunpack.c.l.b16 %v4191
        %v4398 = vunpack.c.h.b16 %v4191
        %v4399 = vunpack.c.l.b16 %v4192
        %v4400 = vunpack.c.l.b16 %v4193
        %v4401 = vunpack.c.h.b16 %v4193
        %v4402 = vunpack.c.l.b16 %v4194
        %v4403 = vunpack.c.l.b16 %v4195
        %v4404 = vunpack.c.h.b16 %v4195
        %v4405 = vunpack.c.l.b16 %v4196
        %v4406 = vunpack.c.l.b16 %v4197
        %v4407 = vunpack.c.h.b16 %v4197
        %v4408 = vunpack.c.l.b16 %v4198
        %v4409 = vpack.c.b16 %v4316, %v4313
        %v4410 = vpack.c.b16 %v4317, %v4314
        %v4411 = vpack.c.b16 %v4318, %v4315
        %v4412 = vpack.c.b16 %v4322, %v4319
        %v4413 = vpack.c.b16 %v4323, %v4320
        %v4414 = vpack.c.b16 %v4324, %v4321
        %v4415 = vpack.c.b16 %v4328, %v4325
        %v4416 = vpack.c.b16 %v4329, %v4326
        %v4417 = vpack.c.b16 %v4330, %v4327
        %v4418 = vpack.c.b16 %v4334, %v4331
        %v4419 = vpack.c.b16 %v4335, %v4332
        %v4420 = vpack.c.b16 %v4336, %v4333
        %v4421 = vpack.c.b16 %v4340, %v4337
        %v4422 = vpack.c.b16 %v4341, %v4338
        %v4423 = vpack.c.b16 %v4342, %v4339
        %v4424 = vpack.c.b16 %v4346, %v4343
        %v4425 = vpack.c.b16 %v4347, %v4344
        %v4426 = vpack.c.b16 %v4348, %v4345
        %v4427 = vpack.c.b16 %v4352, %v4349
        %v4428 = vpack.c.b16 %v4353, %v4350
        %v4429 = vpack.c.b16 %v4354, %v4351
        %v4430 = vpack.c.b16 %v4358, %v4355
        %v4431 = vpack.c.b16 %v4359, %v4356
        %v4432 = vpack.c.b16 %v4360, %v4357
        %v4433 = vpack.c.b16 %v4364, %v4361
        %v4434 = vpack.c.b16 %v4365, %v4362
        %v4435 = vpack.c.b16 %v4366, %v4363
        %v4436 = vpack.c.b16 %v4370, %v4367
        %v4437 = vpack.c.b16 %v4371, %v4368
        %v4438 = vpack.c.b16 %v4372, %v4369
        %v4439 = vpack.c.b16 %v4376, %v4373
        %v4440 = vpack.c.b16 %v4377, %v4374
        %v4441 = vpack.c.b16 %v4378, %v4375
        %v4442 = vpack.c.b16 %v4382, %v4379
        %v4443 = vpack.c.b16 %v4383, %v4380
        %v4444 = vpack.c.b16 %v4384, %v4381
        %v4445 = vpack.c.b16 %v4388, %v4385
        %v4446 = vpack.c.b16 %v4389, %v4386
        %v4447 = vpack.c.b16 %v4390, %v4387
        %v4448 = vpack.c.b16 %v4394, %v4391
        %v4449 = vpack.c.b16 %v4395, %v4392
        %v4450 = vpack.c.b16 %v4396, %v4393
        %v4451 = vpack.c.b16 %v4400, %v4397
        %v4452 = vpack.c.b16 %v4401, %v4398
        %v4453 = vpack.c.b16 %v4402, %v4399
        %v4454 = vpack.c.b16 %v4406, %v4403
        %v4455 = vpack.c.b16 %v4407, %v4404
        %v4456 = vpack.c.b16 %v4408, %v4405
        %v4553 = vunpack.c.l.b16 %v4199
        %v4554 = vunpack.c.l.b16 %v4200
        %v4555 = vunpack.c.l.b16 %v4201
        %v4556 = vunpack.c.l.b16 %v4202
        %v4557 = vunpack.c.l.b16 %v4203
        %v4558 = vunpack.c.l.b16 %v4204
        %v4559 = vunpack.c.l.b16 %v4205
        %v4560 = vunpack.c.l.b16 %v4206
        %v4561 = vunpack.c.l.b16 %v4207
        %v4562 = vunpack.c.l.b16 %v4208
        %v4563 = vunpack.c.l.b16 %v4209
        %v4564 = vunpack.c.l.b16 %v4210
        %v4565 = vunpack.c.l.b16 %v4211
        %v4566 = vunpack.c.l.b16 %v4212
        %v4567 = vunpack.c.l.b16 %v4213
        %v4568 = vunpack.c.l.b16 %v4214
        %v4569 = vunpack.c.l.b16 %v4215
        %v4570 = vunpack.c.l.b16 %v4216
        %v4571 = vunpack.c.l.b16 %v4217
        %v4572 = vunpack.c.l.b16 %v4218
        %v4573 = vunpack.c.l.b16 %v4219
        %v4574 = vunpack.c.l.b16 %v4220
        %v4575 = vunpack.c.l.b16 %v4221
        %v4576 = vunpack.c.l.b16 %v4222
        %v4577 = vunpack.c.l.b16 %v4223
        %v4578 = vunpack.c.l.b16 %v4224
        %v4579 = vunpack.c.l.b16 %v4225
        %v4580 = vunpack.c.l.b16 %v4226
        %v4581 = vunpack.c.l.b16 %v4227
        %v4582 = vunpack.c.l.b16 %v4228
        %v4583 = vunpack.c.l.b16 %v4229
        %v4584 = vunpack.c.l.b16 %v4230
        %v4585 = vunpack.c.l.b16 %v4231
        %v4586 = vunpack.c.l.b16 %v4232
        %v4587 = vunpack.c.l.b16 %v4233
        %v4588 = vunpack.c.l.b16 %v4234
        %v4589 = vunpack.c.l.b16 %v4235
        %v4590 = vunpack.c.l.b16 %v4236
        %v4591 = vunpack.c.l.b16 %v4237
        %v4592 = vunpack.c.l.b16 %v4238
        %v4593 = vunpack.c.l.b16 %v4239
        %v4594 = vunpack.c.l.b16 %v4240
        %v4595 = vunpack.c.l.b16 %v4241
        %v4596 = vunpack.c.l.b16 %v4242
        %v4597 = vunpack.c.l.b16 %v4243
        %v4598 = vunpack.c.l.b16 %v4244
        %v4599 = vunpack.c.l.b16 %v4245
        %v4600 = vunpack.c.l.b16 %v4246
        %v4601 = vpack.c.b16 %v4554, %v4553
        %v4602 = vpack.c.b16 %v4556, %v4555
        %v4603 = vpack.c.b16 %v4558, %v4557
        %v4604 = vpack.c.b16 %v4560, %v4559
        %v4605 = vpack.c.b16 %v4562, %v4561
        %v4606 = vpack.c.b16 %v4564, %v4563
        %v4607 = vpack.c.b16 %v4566, %v4565
        %v4608 = vpack.c.b16 %v4568, %v4567
        %v4609 = vpack.c.b16 %v4570, %v4569
        %v4610 = vpack.c.b16 %v4572, %v4571
        %v4611 = vpack.c.b16 %v4574, %v4573
        %v4612 = vpack.c.b16 %v4576, %v4575
        %v4613 = vpack.c.b16 %v4578, %v4577
        %v4614 = vpack.c.b16 %v4580, %v4579
        %v4615 = vpack.c.b16 %v4582, %v4581
        %v4616 = vpack.c.b16 %v4584, %v4583
        %v4617 = vpack.c.b16 %v4586, %v4585
        %v4618 = vpack.c.b16 %v4588, %v4587
        %v4619 = vpack.c.b16 %v4590, %v4589
        %v4620 = vpack.c.b16 %v4592, %v4591
        %v4621 = vpack.c.b16 %v4594, %v4593
        %v4622 = vpack.c.b16 %v4596, %v4595
        %v4623 = vpack.c.b16 %v4598, %v4597
        %v4624 = vpack.c.b16 %v4600, %v4599
        %4649 = vmatpush.bf16.msra.mxu0 %v4608
        %4650 = vmatpush.bf16.msra.mxu0 %v4607
        %4651 = vmatpush.bf16.msra.mxu0 %v4606
        %4652 = vmatpush.bf16.msra.mxu0 %v4605
        %4653 = vmatpush.bf16.msra.mxu0 %v4604
        %4654 = vmatpush.bf16.msra.mxu0 %v4603
        %4655 = vmatpush.bf16.msra.mxu0 %v4602
        %4656 = vmatpush.bf16.msra.mxu0 %v4601
        %4657 = vmatmul.bf16.gmra.mxu0 %v4409
        %v4658 = vpop.f32.mrf.mxu0
        %v4659 = vadd.f32 %v4248, %v4658
        %v4660 = vpop.f32.mrf.mxu0
        %v4661 = vadd.f32 %v4248, %v4660
        %4662 = vmatmul.bf16.gmra.mxu0 %v4412
        %v4663 = vpop.f32.mrf.mxu0
        %v4664 = vadd.f32 %v4248, %v4663
        %v4665 = vpop.f32.mrf.mxu0
        %v4666 = vadd.f32 %v4248, %v4665
        %4667 = vmatmul.bf16.gmra.mxu0 %v4415
        %v4668 = vpop.f32.mrf.mxu0
        %v4669 = vadd.f32 %v4248, %v4668
        %v4670 = vpop.f32.mrf.mxu0
        %v4671 = vadd.f32 %v4248, %v4670
        %4672 = vmatmul.bf16.gmra.mxu0 %v4418
        %v4673 = vpop.f32.mrf.mxu0
        %v4674 = vadd.f32 %v4248, %v4673
        %v4675 = vpop.f32.mrf.mxu0
        %v4676 = vadd.f32 %v4248, %v4675
        %4677 = vmatmul.bf16.gmra.mxu0 %v4421
        %v4678 = vpop.f32.mrf.mxu0
        %v4679 = vadd.f32 %v4248, %v4678
        %v4680 = vpop.f32.mrf.mxu0
        %v4681 = vadd.f32 %v4248, %v4680
        %4682 = vmatmul.bf16.gmra.mxu0 %v4424
        %v4683 = vpop.f32.mrf.mxu0
        %v4684 = vadd.f32 %v4248, %v4683
        %v4685 = vpop.f32.mrf.mxu0
        %v4686 = vadd.f32 %v4248, %v4685
        %4687 = vmatmul.bf16.gmra.mxu0 %v4427
        %v4688 = vpop.f32.mrf.mxu0
        %v4689 = vadd.f32 %v4248, %v4688
        %v4690 = vpop.f32.mrf.mxu0
        %v4691 = vadd.f32 %v4248, %v4690
        %4692 = vmatmul.bf16.gmra.mxu0 %v4430
        %v4693 = vpop.f32.mrf.mxu0
        %v4694 = vadd.f32 %v4248, %v4693
        %v4695 = vpop.f32.mrf.mxu0
        %v4696 = vadd.f32 %v4248, %v4695
        %4697 = vmatmul.bf16.gmra.mxu0 %v4433
        %v4698 = vpop.f32.mrf.mxu0
        %v4699 = vadd.f32 %v4248, %v4698
        %v4700 = vpop.f32.mrf.mxu0
        %v4701 = vadd.f32 %v4248, %v4700
        %4702 = vmatmul.bf16.gmra.mxu0 %v4436
        %v4703 = vpop.f32.mrf.mxu0
        %v4704 = vadd.f32 %v4248, %v4703
        %v4705 = vpop.f32.mrf.mxu0
        %v4706 = vadd.f32 %v4248, %v4705
        %4707 = vmatmul.bf16.gmra.mxu0 %v4439
        %v4708 = vpop.f32.mrf.mxu0
        %v4709 = vadd.f32 %v4248, %v4708
        %v4710 = vpop.f32.mrf.mxu0
        %v4711 = vadd.f32 %v4248, %v4710
        %4712 = vmatmul.bf16.gmra.mxu0 %v4442
        %v4713 = vpop.f32.mrf.mxu0
        %v4714 = vadd.f32 %v4248, %v4713
        %v4715 = vpop.f32.mrf.mxu0
        %v4716 = vadd.f32 %v4248, %v4715
        %4717 = vmatmul.bf16.gmra.mxu0 %v4445
        %v4718 = vpop.f32.mrf.mxu0
        %v4719 = vadd.f32 %v4248, %v4718
        %v4720 = vpop.f32.mrf.mxu0
        %v4721 = vadd.f32 %v4248, %v4720
        %4722 = vmatmul.bf16.gmra.mxu0 %v4448
        %v4723 = vpop.f32.mrf.mxu0
        %v4724 = vadd.f32 %v4248, %v4723
        %v4725 = vpop.f32.mrf.mxu0
        %v4726 = vadd.f32 %v4248, %v4725
        %4727 = vmatmul.bf16.gmra.mxu0 %v4451
        %v4728 = vpop.f32.mrf.mxu0
        %v4729 = vadd.f32 %v4248, %v4728
        %v4730 = vpop.f32.mrf.mxu0
        %v4731 = vadd.f32 %v4248, %v4730
        %4732 = vmatmul.bf16.gmra.mxu0 %v4454
        %v4733 = vpop.f32.mrf.mxu0
        %v4734 = vadd.f32 %v4248, %v4733
        %v4735 = vpop.f32.mrf.mxu0
        %v4736 = vadd.f32 %v4248, %v4735
        %4737 = vdwg.mxu0
        %4738 = vmatpush.bf16.msra.mxu0 %v4616
        %4739 = vmatpush.bf16.msra.mxu0 %v4615
        %4740 = vmatpush.bf16.msra.mxu0 %v4614
        %4741 = vmatpush.bf16.msra.mxu0 %v4613
        %4742 = vmatpush.bf16.msra.mxu0 %v4612
        %4743 = vmatpush.bf16.msra.mxu0 %v4611
        %4744 = vmatpush.bf16.msra.mxu0 %v4610
        %4745 = vmatpush.bf16.msra.mxu0 %v4609
        %4746 = vmatmul.bf16.gmra.mxu0 %v4410
        %v4747 = vpop.f32.mrf.mxu0
        %v4748 = vadd.f32 %v4659, %v4747
        %v4749 = vpop.f32.mrf.mxu0
        %v4750 = vadd.f32 %v4661, %v4749
        %4751 = vmatmul.bf16.gmra.mxu0 %v4413
        %v4752 = vpop.f32.mrf.mxu0
        %v4753 = vadd.f32 %v4664, %v4752
        %v4754 = vpop.f32.mrf.mxu0
        %v4755 = vadd.f32 %v4666, %v4754
        %4756 = vmatmul.bf16.gmra.mxu0 %v4416
        %v4757 = vpop.f32.mrf.mxu0
        %v4758 = vadd.f32 %v4669, %v4757
        %v4759 = vpop.f32.mrf.mxu0
        %v4760 = vadd.f32 %v4671, %v4759
        %4761 = vmatmul.bf16.gmra.mxu0 %v4419
        %v4762 = vpop.f32.mrf.mxu0
        %v4763 = vadd.f32 %v4674, %v4762
        %v4764 = vpop.f32.mrf.mxu0
        %v4765 = vadd.f32 %v4676, %v4764
        %4766 = vmatmul.bf16.gmra.mxu0 %v4422
        %v4767 = vpop.f32.mrf.mxu0
        %v4768 = vadd.f32 %v4679, %v4767
        %v4769 = vpop.f32.mrf.mxu0
        %v4770 = vadd.f32 %v4681, %v4769
        %4771 = vmatmul.bf16.gmra.mxu0 %v4425
        %v4772 = vpop.f32.mrf.mxu0
        %v4773 = vadd.f32 %v4684, %v4772
        %v4774 = vpop.f32.mrf.mxu0
        %v4775 = vadd.f32 %v4686, %v4774
        %4776 = vmatmul.bf16.gmra.mxu0 %v4428
        %v4777 = vpop.f32.mrf.mxu0
        %v4778 = vadd.f32 %v4689, %v4777
        %v4779 = vpop.f32.mrf.mxu0
        %v4780 = vadd.f32 %v4691, %v4779
        %4781 = vmatmul.bf16.gmra.mxu0 %v4431
        %v4782 = vpop.f32.mrf.mxu0
        %v4783 = vadd.f32 %v4694, %v4782
        %v4784 = vpop.f32.mrf.mxu0
        %v4785 = vadd.f32 %v4696, %v4784
        %4786 = vmatmul.bf16.gmra.mxu0 %v4434
        %v4787 = vpop.f32.mrf.mxu0
        %v4788 = vadd.f32 %v4699, %v4787
        %v4789 = vpop.f32.mrf.mxu0
        %v4790 = vadd.f32 %v4701, %v4789
        %4791 = vmatmul.bf16.gmra.mxu0 %v4437
        %v4792 = vpop.f32.mrf.mxu0
        %v4793 = vadd.f32 %v4704, %v4792
        %v4794 = vpop.f32.mrf.mxu0
        %v4795 = vadd.f32 %v4706, %v4794
        %4796 = vmatmul.bf16.gmra.mxu0 %v4440
        %v4797 = vpop.f32.mrf.mxu0
        %v4798 = vadd.f32 %v4709, %v4797
        %v4799 = vpop.f32.mrf.mxu0
        %v4800 = vadd.f32 %v4711, %v4799
        %4801 = vmatmul.bf16.gmra.mxu0 %v4443
        %v4802 = vpop.f32.mrf.mxu0
        %v4803 = vadd.f32 %v4714, %v4802
        %v4804 = vpop.f32.mrf.mxu0
        %v4805 = vadd.f32 %v4716, %v4804
        %4806 = vmatmul.bf16.gmra.mxu0 %v4446
        %v4807 = vpop.f32.mrf.mxu0
        %v4808 = vadd.f32 %v4719, %v4807
        %v4809 = vpop.f32.mrf.mxu0
        %v4810 = vadd.f32 %v4721, %v4809
        %4811 = vmatmul.bf16.gmra.mxu0 %v4449
        %v4812 = vpop.f32.mrf.mxu0
        %v4813 = vadd.f32 %v4724, %v4812
        %v4814 = vpop.f32.mrf.mxu0
        %v4815 = vadd.f32 %v4726, %v4814
        %4816 = vmatmul.bf16.gmra.mxu0 %v4452
        %v4817 = vpop.f32.mrf.mxu0
        %v4818 = vadd.f32 %v4729, %v4817
        %v4819 = vpop.f32.mrf.mxu0
        %v4820 = vadd.f32 %v4731, %v4819
        %4821 = vmatmul.bf16.gmra.mxu0 %v4455
        %v4822 = vpop.f32.mrf.mxu0
        %v4823 = vadd.f32 %v4734, %v4822
        %v4824 = vpop.f32.mrf.mxu0
        %v4825 = vadd.f32 %v4736, %v4824
        %4826 = vdwg.mxu0
        %4827 = vmatpush.bf16.msra.mxu0 %v4624
        %4828 = vmatpush.bf16.msra.mxu0 %v4623
        %4829 = vmatpush.bf16.msra.mxu0 %v4622
        %4830 = vmatpush.bf16.msra.mxu0 %v4621
        %4831 = vmatpush.bf16.msra.mxu0 %v4620
        %4832 = vmatpush.bf16.msra.mxu0 %v4619
        %4833 = vmatpush.bf16.msra.mxu0 %v4618
        %4834 = vmatpush.bf16.msra.mxu0 %v4617
        %4835 = vmatmul.bf16.gmra.mxu0 %v4411
        %v4836 = vpop.f32.mrf.mxu0
        %v4837 = vadd.f32 %v4748, %v4836
        %v4838 = vpop.f32.mrf.mxu0
        %v4839 = vadd.f32 %v4750, %v4838
        %4840 = vmatmul.bf16.gmra.mxu0 %v4414
        %v4841 = vpop.f32.mrf.mxu0
        %v4842 = vadd.f32 %v4753, %v4841
        %v4843 = vpop.f32.mrf.mxu0
        %v4844 = vadd.f32 %v4755, %v4843
        %4845 = vmatmul.bf16.gmra.mxu0 %v4417
        %v4846 = vpop.f32.mrf.mxu0
        %v4847 = vadd.f32 %v4758, %v4846
        %v4848 = vpop.f32.mrf.mxu0
        %v4849 = vadd.f32 %v4760, %v4848
        %4850 = vmatmul.bf16.gmra.mxu0 %v4420
        %v4851 = vpop.f32.mrf.mxu0
        %v4852 = vadd.f32 %v4763, %v4851
        %v4853 = vpop.f32.mrf.mxu0
        %v4854 = vadd.f32 %v4765, %v4853
        %4855 = vmatmul.bf16.gmra.mxu0 %v4423
        %v4856 = vpop.f32.mrf.mxu0
        %v4857 = vadd.f32 %v4768, %v4856
        %v4858 = vpop.f32.mrf.mxu0
        %v4859 = vadd.f32 %v4770, %v4858
        %4860 = vmatmul.bf16.gmra.mxu0 %v4426
        %v4861 = vpop.f32.mrf.mxu0
        %v4862 = vadd.f32 %v4773, %v4861
        %v4863 = vpop.f32.mrf.mxu0
        %v4864 = vadd.f32 %v4775, %v4863
        %4865 = vmatmul.bf16.gmra.mxu0 %v4429
        %v4866 = vpop.f32.mrf.mxu0
        %v4867 = vadd.f32 %v4778, %v4866
        %v4868 = vpop.f32.mrf.mxu0
        %v4869 = vadd.f32 %v4780, %v4868
        %4870 = vmatmul.bf16.gmra.mxu0 %v4432
        %v4871 = vpop.f32.mrf.mxu0
        %v4872 = vadd.f32 %v4783, %v4871
        %v4873 = vpop.f32.mrf.mxu0
        %v4874 = vadd.f32 %v4785, %v4873
        %4875 = vmatmul.bf16.gmra.mxu0 %v4435
        %v4876 = vpop.f32.mrf.mxu0
        %v4877 = vadd.f32 %v4788, %v4876
        %v4878 = vpop.f32.mrf.mxu0
        %v4879 = vadd.f32 %v4790, %v4878
        %4880 = vmatmul.bf16.gmra.mxu0 %v4438
        %v4881 = vpop.f32.mrf.mxu0
        %v4882 = vadd.f32 %v4793, %v4881
        %v4883 = vpop.f32.mrf.mxu0
        %v4884 = vadd.f32 %v4795, %v4883
        %4885 = vmatmul.bf16.gmra.mxu0 %v4441
        %v4886 = vpop.f32.mrf.mxu0
        %v4887 = vadd.f32 %v4798, %v4886
        %v4888 = vpop.f32.mrf.mxu0
        %v4889 = vadd.f32 %v4800, %v4888
        %4890 = vmatmul.bf16.gmra.mxu0 %v4444
        %v4891 = vpop.f32.mrf.mxu0
        %v4892 = vadd.f32 %v4803, %v4891
        %v4893 = vpop.f32.mrf.mxu0
        %v4894 = vadd.f32 %v4805, %v4893
        %4895 = vmatmul.bf16.gmra.mxu0 %v4447
        %v4896 = vpop.f32.mrf.mxu0
        %v4897 = vadd.f32 %v4808, %v4896
        %v4898 = vpop.f32.mrf.mxu0
        %v4899 = vadd.f32 %v4810, %v4898
        %4900 = vmatmul.bf16.gmra.mxu0 %v4450
        %v4901 = vpop.f32.mrf.mxu0
        %v4902 = vadd.f32 %v4813, %v4901
        %v4903 = vpop.f32.mrf.mxu0
        %v4904 = vadd.f32 %v4815, %v4903
        %4905 = vmatmul.bf16.gmra.mxu0 %v4453
        %v4906 = vpop.f32.mrf.mxu0
        %v4907 = vadd.f32 %v4818, %v4906
        %v4908 = vpop.f32.mrf.mxu0
        %v4909 = vadd.f32 %v4820, %v4908
        %4910 = vmatmul.bf16.gmra.mxu0 %v4456
        %v4911 = vpop.f32.mrf.mxu0
        %v4912 = vadd.f32 %v4823, %v4911
        %v4913 = vpop.f32.mrf.mxu0
        %v4914 = vadd.f32 %v4825, %v4913
        %4915 = vdwg.mxu0
        %vm4916 = vcmp.gt.f32.partialorder %v4837, 0.0
        %vm4917 = vcmp.gt.f32.partialorder %v4839, 0.0
        %vm4918 = vcmp.gt.f32.partialorder %v4842, 0.0
        %vm4919 = vcmp.gt.f32.partialorder %v4844, 0.0
        %vm4920 = vcmp.gt.f32.partialorder %v4847, 0.0
        %vm4921 = vcmp.gt.f32.partialorder %v4849, 0.0
        %vm4922 = vcmp.gt.f32.partialorder %v4852, 0.0
        %vm4923 = vcmp.gt.f32.partialorder %v4854, 0.0
        %vm4924 = vcmp.gt.f32.partialorder %v4857, 0.0
        %vm4925 = vcmp.gt.f32.partialorder %v4859, 0.0
        %vm4926 = vcmp.gt.f32.partialorder %v4862, 0.0
        %vm4927 = vcmp.gt.f32.partialorder %v4864, 0.0
        %vm4928 = vcmp.gt.f32.partialorder %v4867, 0.0
        %vm4929 = vcmp.gt.f32.partialorder %v4869, 0.0
        %vm4930 = vcmp.gt.f32.partialorder %v4872, 0.0
        %vm4931 = vcmp.gt.f32.partialorder %v4874, 0.0
        %vm4932 = vcmp.gt.f32.partialorder %v4877, 0.0
        %vm4933 = vcmp.gt.f32.partialorder %v4879, 0.0
        %vm4934 = vcmp.gt.f32.partialorder %v4882, 0.0
        %vm4935 = vcmp.gt.f32.partialorder %v4884, 0.0
        %vm4936 = vcmp.gt.f32.partialorder %v4887, 0.0
        %vm4937 = vcmp.gt.f32.partialorder %v4889, 0.0
        %vm4938 = vcmp.gt.f32.partialorder %v4892, 0.0
        %vm4939 = vcmp.gt.f32.partialorder %v4894, 0.0
        %vm4940 = vcmp.gt.f32.partialorder %v4897, 0.0
        %vm4941 = vcmp.gt.f32.partialorder %v4899, 0.0
        %vm4942 = vcmp.gt.f32.partialorder %v4902, 0.0
        %vm4943 = vcmp.gt.f32.partialorder %v4904, 0.0
        %vm4944 = vcmp.gt.f32.partialorder %v4907, 0.0
        %vm4945 = vcmp.gt.f32.partialorder %v4909, 0.0
        %vm4946 = vcmp.gt.f32.partialorder %v4912, 0.0
        %vm4947 = vcmp.gt.f32.partialorder %v4914, 0.0
        %v4948 = vmul.f32 %v4837, 0.333
        %v4949 = vmul.f32 %v4839, 0.333
        %v4950 = vmul.f32 %v4842, 0.333
        %v4951 = vmul.f32 %v4844, 0.333
        %v4952 = vmul.f32 %v4847, 0.333
        %v4953 = vmul.f32 %v4849, 0.333
        %v4954 = vmul.f32 %v4852, 0.333
        %v4955 = vmul.f32 %v4854, 0.333
        %v4956 = vmul.f32 %v4857, 0.333
        %v4957 = vmul.f32 %v4859, 0.333
        %v4958 = vmul.f32 %v4862, 0.333
        %v4959 = vmul.f32 %v4864, 0.333
        %v4960 = vmul.f32 %v4867, 0.333
        %v4961 = vmul.f32 %v4869, 0.333
        %v4962 = vmul.f32 %v4872, 0.333
        %v4963 = vmul.f32 %v4874, 0.333
        %v4964 = vmul.f32 %v4877, 0.333
        %v4965 = vmul.f32 %v4879, 0.333
        %v4966 = vmul.f32 %v4882, 0.333
        %v4967 = vmul.f32 %v4884, 0.333
        %v4968 = vmul.f32 %v4887, 0.333
        %v4969 = vmul.f32 %v4889, 0.333
        %v4970 = vmul.f32 %v4892, 0.333
        %v4971 = vmul.f32 %v4894, 0.333
        %v4972 = vmul.f32 %v4897, 0.333
        %v4973 = vmul.f32 %v4899, 0.333
        %v4974 = vmul.f32 %v4902, 0.333
        %v4975 = vmul.f32 %v4904, 0.333
        %v4976 = vmul.f32 %v4907, 0.333
        %v4977 = vmul.f32 %v4909, 0.333
        %v4978 = vmul.f32 %v4912, 0.333
        %v4979 = vmul.f32 %v4914, 0.333
        %v4980 = vsel %vm4916, %v4837, %v4948
        %v4981 = vsel %vm4917, %v4839, %v4949
        %v4982 = vsel %vm4918, %v4842, %v4950
        %v4983 = vsel %vm4919, %v4844, %v4951
        %v4984 = vsel %vm4920, %v4847, %v4952
        %v4985 = vsel %vm4921, %v4849, %v4953
        %v4986 = vsel %vm4922, %v4852, %v4954
        %v4987 = vsel %vm4923, %v4854, %v4955
        %v4988 = vsel %vm4924, %v4857, %v4956
        %v4989 = vsel %vm4925, %v4859, %v4957
        %v4990 = vsel %vm4926, %v4862, %v4958
        %v4991 = vsel %vm4927, %v4864, %v4959
        %v4992 = vsel %vm4928, %v4867, %v4960
        %v4993 = vsel %vm4929, %v4869, %v4961
        %v4994 = vsel %vm4930, %v4872, %v4962
        %v4995 = vsel %vm4931, %v4874, %v4963
        %v4996 = vsel %vm4932, %v4877, %v4964
        %v4997 = vsel %vm4933, %v4879, %v4965
        %v4998 = vsel %vm4934, %v4882, %v4966
        %v4999 = vsel %vm4935, %v4884, %v4967
        %v5000 = vsel %vm4936, %v4887, %v4968
        %v5001 = vsel %vm4937, %v4889, %v4969
        %v5002 = vsel %vm4938, %v4892, %v4970
        %v5003 = vsel %vm4939, %v4894, %v4971
        %v5004 = vsel %vm4940, %v4897, %v4972
        %v5005 = vsel %vm4941, %v4899, %v4973
        %v5006 = vsel %vm4942, %v4902, %v4974
        %v5007 = vsel %vm4943, %v4904, %v4975
        %v5008 = vsel %vm4944, %v4907, %v4976
        %v5009 = vsel %vm4945, %v4909, %v4977
        %v5010 = vsel %vm4946, %v4912, %v4978
        %v5011 = vsel %vm4947, %v4914, %v4979
        %v5012 = vpack.c.bf16 %v4980, %v4980
        %v5013 = vpack.c.bf16 %v4981, %v4981
        %v5014 = vpack.c.bf16 %v4982, %v4982
        %v5015 = vpack.c.bf16 %v4983, %v4983
        %v5016 = vpack.c.bf16 %v4984, %v4984
        %v5017 = vpack.c.bf16 %v4985, %v4985
        %v5018 = vpack.c.bf16 %v4986, %v4986
        %v5019 = vpack.c.bf16 %v4987, %v4987
        %v5020 = vpack.c.bf16 %v4988, %v4988
        %v5021 = vpack.c.bf16 %v4989, %v4989
        %v5022 = vpack.c.bf16 %v4990, %v4990
        %v5023 = vpack.c.bf16 %v4991, %v4991
        %v5024 = vpack.c.bf16 %v4992, %v4992
        %v5025 = vpack.c.bf16 %v4993, %v4993
        %v5026 = vpack.c.bf16 %v4994, %v4994
        %v5027 = vpack.c.bf16 %v4995, %v4995
        %v5028 = vpack.c.bf16 %v4996, %v4996
        %v5029 = vpack.c.bf16 %v4997, %v4997
        %v5030 = vpack.c.bf16 %v4998, %v4998
        %v5031 = vpack.c.bf16 %v4999, %v4999
        %v5032 = vpack.c.bf16 %v5000, %v5000
        %v5033 = vpack.c.bf16 %v5001, %v5001
        %v5034 = vpack.c.bf16 %v5002, %v5002
        %v5035 = vpack.c.bf16 %v5003, %v5003
        %v5036 = vpack.c.bf16 %v5004, %v5004
        %v5037 = vpack.c.bf16 %v5005, %v5005
        %v5038 = vpack.c.bf16 %v5006, %v5006
        %v5039 = vpack.c.bf16 %v5007, %v5007
        %v5040 = vpack.c.bf16 %v5008, %v5008
        %v5041 = vpack.c.bf16 %v5009, %v5009
        %v5042 = vpack.c.bf16 %v5010, %v5010
        %v5043 = vpack.c.bf16 %v5011, %v5011
        %5044 = vst.msk [vmem:[%s298 + $0x8] sm:$0xf] %vm228, %v5012
        %5045 = vst.msk [vmem:[%s298 + $0xc] sm:$0xf] %vm228, %v5013
        %5046 = vst.msk [vmem:[%s298 + $0x20] sm:$0xf] %vm228, %v5014
        %5047 = vst.msk [vmem:[%s298 + $0x24] sm:$0xf] %vm228, %v5015
        %5048 = vst.msk [vmem:[%s298 + $0x38] sm:$0xf] %vm228, %v5016
        %5049 = vst.msk [vmem:[%s298 + $0x3c] sm:$0xf] %vm228, %v5017
        %5050 = vst.msk [vmem:[%s298 + $0x50] sm:$0xf] %vm228, %v5018
        %5051 = vst.msk [vmem:[%s298 + $0x54] sm:$0xf] %vm228, %v5019
        %5052 = vst.msk [vmem:[%s298 + $0x68] sm:$0xf] %vm228, %v5020
        %5053 = vst.msk [vmem:[%s298 + $0x6c] sm:$0xf] %vm228, %v5021
        %5054 = vst.msk [vmem:[%s298 + $0x80] sm:$0xf] %vm228, %v5022
        %5055 = vst.msk [vmem:[%s298 + $0x84] sm:$0xf] %vm228, %v5023
        %5056 = vst.msk [vmem:[%s298 + $0x98] sm:$0xf] %vm228, %v5024
        %5057 = vst.msk [vmem:[%s298 + $0x9c] sm:$0xf] %vm228, %v5025
        %5058 = vst.msk [vmem:[%s298 + $0xb0] sm:$0xf] %vm228, %v5026
        %5059 = vst.msk [vmem:[%s298 + $0xb4] sm:$0xf] %vm228, %v5027
        %5060 = vst.msk [vmem:[%s298 + $0xc8] sm:$0xf] %vm228, %v5028
        %5061 = vst.msk [vmem:[%s298 + $0xcc] sm:$0xf] %vm228, %v5029
        %5062 = vst.msk [vmem:[%s298 + $0xe0] sm:$0xf] %vm228, %v5030
        %5063 = vst.msk [vmem:[%s298 + $0xe4] sm:$0xf] %vm228, %v5031
        %5064 = vst.msk [vmem:[%s298 + $0xf8] sm:$0xf] %vm228, %v5032
        %5065 = vst.msk [vmem:[%s298 + $0xfc] sm:$0xf] %vm228, %v5033
        %5066 = vst.msk [vmem:[%s298 + $0x110] sm:$0xf] %vm228, %v5034
        %5067 = vst.msk [vmem:[%s298 + $0x114] sm:$0xf] %vm228, %v5035
        %5068 = vst.msk [vmem:[%s298 + $0x128] sm:$0xf] %vm228, %v5036
        %5069 = vst.msk [vmem:[%s298 + $0x12c] sm:$0xf] %vm228, %v5037
        %5070 = vst.msk [vmem:[%s298 + $0x140] sm:$0xf] %vm228, %v5038
        %5071 = vst.msk [vmem:[%s298 + $0x144] sm:$0xf] %vm228, %v5039
        %5072 = vst.msk [vmem:[%s298 + $0x158] sm:$0xf] %vm228, %v5040
        %5073 = vst.msk [vmem:[%s298 + $0x15c] sm:$0xf] %vm228, %v5041
        %5074 = vst.msk [vmem:[%s298 + $0x170] sm:$0xf] %vm228, %v5042
        %5075 = vst.msk [vmem:[%s298 + $0x174] sm:$0xf] %vm228, %v5043
        %v5076 = vld [vmem:[#allocation2 + $0x4] sm:$0x8]
        %v5077 = vld [vmem:[#allocation2 + $0x8] sm:$0xf]
        %v5078 = vld [vmem:[#allocation2 + $0xc] sm:$0xf]
        %v5079 = vld [vmem:[#allocation2 + $0x1c] sm:$0x8]
        %v5080 = vld [vmem:[#allocation2 + $0x20] sm:$0xf]
        %v5081 = vld [vmem:[#allocation2 + $0x24] sm:$0xf]
        %v5082 = vld [vmem:[#allocation2 + $0x34] sm:$0x8]
        %v5083 = vld [vmem:[#allocation2 + $0x38] sm:$0xf]
        %v5084 = vld [vmem:[#allocation2 + $0x3c] sm:$0xf]
        %v5085 = vld [vmem:[#allocation2 + $0x4c] sm:$0x8]
        %v5086 = vld [vmem:[#allocation2 + $0x50] sm:$0xf]
        %v5087 = vld [vmem:[#allocation2 + $0x54] sm:$0xf]
        %v5088 = vld [vmem:[#allocation2 + $0x64] sm:$0x8]
        %v5089 = vld [vmem:[#allocation2 + $0x68] sm:$0xf]
        %v5090 = vld [vmem:[#allocation2 + $0x6c] sm:$0xf]
        %v5091 = vld [vmem:[#allocation2 + $0x7c] sm:$0x8]
        %v5092 = vld [vmem:[#allocation2 + $0x80] sm:$0xf]
        %v5093 = vld [vmem:[#allocation2 + $0x84] sm:$0xf]
        %v5094 = vld [vmem:[#allocation2 + $0x94] sm:$0x8]
        %v5095 = vld [vmem:[#allocation2 + $0x98] sm:$0xf]
        %v5096 = vld [vmem:[#allocation2 + $0x9c] sm:$0xf]
        %v5097 = vld [vmem:[#allocation2 + $0xac] sm:$0x8]
        %v5098 = vld [vmem:[#allocation2 + $0xb0] sm:$0xf]
        %v5099 = vld [vmem:[#allocation2 + $0xb4] sm:$0xf]
        %v5100 = vld [vmem:[#allocation2 + $0xc4] sm:$0x8]
        %v5101 = vld [vmem:[#allocation2 + $0xc8] sm:$0xf]
        %v5102 = vld [vmem:[#allocation2 + $0xcc] sm:$0xf]
        %v5103 = vld [vmem:[#allocation2 + $0xdc] sm:$0x8]
        %v5104 = vld [vmem:[#allocation2 + $0xe0] sm:$0xf]
        %v5105 = vld [vmem:[#allocation2 + $0xe4] sm:$0xf]
        %v5106 = vld [vmem:[#allocation2 + $0xf4] sm:$0x8]
        %v5107 = vld [vmem:[#allocation2 + $0xf8] sm:$0xf]
        %v5108 = vld [vmem:[#allocation2 + $0xfc] sm:$0xf]
        %v5109 = vld [vmem:[#allocation2 + $0x10c] sm:$0x8]
        %v5110 = vld [vmem:[#allocation2 + $0x110] sm:$0xf]
        %v5111 = vld [vmem:[#allocation2 + $0x114] sm:$0xf]
        %v5112 = vld [vmem:[#allocation2 + $0x124] sm:$0x8]
        %v5113 = vld [vmem:[#allocation2 + $0x128] sm:$0xf]
        %v5114 = vld [vmem:[#allocation2 + $0x12c] sm:$0xf]
        %v5115 = vld [vmem:[#allocation2 + $0x13c] sm:$0x8]
        %v5116 = vld [vmem:[#allocation2 + $0x140] sm:$0xf]
        %v5117 = vld [vmem:[#allocation2 + $0x144] sm:$0xf]
        %v5118 = vld [vmem:[#allocation2 + $0x154] sm:$0x8]
        %v5119 = vld [vmem:[#allocation2 + $0x158] sm:$0xf]
        %v5120 = vld [vmem:[#allocation2 + $0x15c] sm:$0xf]
        %v5121 = vld [vmem:[#allocation2 + $0x16c] sm:$0x8]
        %v5122 = vld [vmem:[#allocation2 + $0x170] sm:$0xf]
        %v5123 = vld [vmem:[#allocation2 + $0x174] sm:$0xf]
        %v5124 = vsel %vm415, 0, %v5076
        %v5125 = vsel %vm422, 0, %v5077
        %v5126 = vsel %vm429, 0, %v5078
        %v5127 = vsel %vm415, 0, %v5079
        %v5128 = vsel %vm422, 0, %v5080
        %v5129 = vsel %vm429, 0, %v5081
        %v5130 = vsel %vm415, 0, %v5082
        %v5131 = vsel %vm422, 0, %v5083
        %v5132 = vsel %vm429, 0, %v5084
        %v5133 = vsel %vm415, 0, %v5085
        %v5134 = vsel %vm422, 0, %v5086
        %v5135 = vsel %vm429, 0, %v5087
        %v5136 = vsel %vm415, 0, %v5088
        %v5137 = vsel %vm422, 0, %v5089
        %v5138 = vsel %vm429, 0, %v5090
        %v5139 = vsel %vm415, 0, %v5091
        %v5140 = vsel %vm422, 0, %v5092
        %v5141 = vsel %vm429, 0, %v5093
        %v5142 = vsel %vm415, 0, %v5094
        %v5143 = vsel %vm422, 0, %v5095
        %v5144 = vsel %vm429, 0, %v5096
        %v5145 = vsel %vm415, 0, %v5097
        %v5146 = vsel %vm422, 0, %v5098
        %v5147 = vsel %vm429, 0, %v5099
        %v5148 = vsel %vm415, 0, %v5100
        %v5149 = vsel %vm422, 0, %v5101
        %v5150 = vsel %vm429, 0, %v5102
        %v5151 = vsel %vm415, 0, %v5103
        %v5152 = vsel %vm422, 0, %v5104
        %v5153 = vsel %vm429, 0, %v5105
        %v5154 = vsel %vm415, 0, %v5106
        %v5155 = vsel %vm422, 0, %v5107
        %v5156 = vsel %vm429, 0, %v5108
        %v5157 = vsel %vm415, 0, %v5109
        %v5158 = vsel %vm422, 0, %v5110
        %v5159 = vsel %vm429, 0, %v5111
        %v5160 = vsel %vm415, 0, %v5112
        %v5161 = vsel %vm422, 0, %v5113
        %v5162 = vsel %vm429, 0, %v5114
        %v5163 = vsel %vm415, 0, %v5115
        %v5164 = vsel %vm422, 0, %v5116
        %v5165 = vsel %vm429, 0, %v5117
        %v5166 = vsel %vm415, 0, %v5118
        %v5167 = vsel %vm422, 0, %v5119
        %v5168 = vsel %vm429, 0, %v5120
        %v5169 = vsel %vm415, 0, %v5121
        %v5170 = vsel %vm422, 0, %v5122
        %v5171 = vsel %vm429, 0, %v5123
        %v5172 = vld [vmem:[#allocation2 + $0x10] sm:$0x1]
        %v5173 = vld [vmem:[#allocation2 + $0x28] sm:$0x1]
        %v5174 = vld [vmem:[#allocation2 + $0x40] sm:$0x1]
        %v5175 = vld [vmem:[#allocation2 + $0x58] sm:$0x1]
        %v5176 = vld [vmem:[#allocation2 + $0x70] sm:$0x1]
        %v5177 = vld [vmem:[#allocation2 + $0x88] sm:$0x1]
        %v5178 = vld [vmem:[#allocation2 + $0xa0] sm:$0x1]
        %v5179 = vld [vmem:[#allocation2 + $0xb8] sm:$0x1]
        %v5180 = vld [vmem:[#allocation2 + $0xd0] sm:$0x1]
        %v5181 = vld [vmem:[#allocation2 + $0xe8] sm:$0x1]
        %v5182 = vld [vmem:[#allocation2 + $0x100] sm:$0x1]
        %v5183 = vld [vmem:[#allocation2 + $0x118] sm:$0x1]
        %v5184 = vld [vmem:[#allocation2 + $0x130] sm:$0x1]
        %v5185 = vld [vmem:[#allocation2 + $0x148] sm:$0x1]
        %v5186 = vld [vmem:[#allocation2 + $0x160] sm:$0x1]
        %v5187 = vld [vmem:[#allocation2 + $0x178] sm:$0x1]
        %v5188 = vsel %vm528, 0, %v5077
        %v5189 = vsel %vm535, 0, %v5078
        %v5190 = vsel %vm542, 0, %v5172
        %v5191 = vsel %vm528, 0, %v5080
        %v5192 = vsel %vm535, 0, %v5081
        %v5193 = vsel %vm542, 0, %v5173
        %v5194 = vsel %vm528, 0, %v5083
        %v5195 = vsel %vm535, 0, %v5084
        %v5196 = vsel %vm542, 0, %v5174
        %v5197 = vsel %vm528, 0, %v5086
        %v5198 = vsel %vm535, 0, %v5087
        %v5199 = vsel %vm542, 0, %v5175
        %v5200 = vsel %vm528, 0, %v5089
        %v5201 = vsel %vm535, 0, %v5090
        %v5202 = vsel %vm542, 0, %v5176
        %v5203 = vsel %vm528, 0, %v5092
        %v5204 = vsel %vm535, 0, %v5093
        %v5205 = vsel %vm542, 0, %v5177
        %v5206 = vsel %vm528, 0, %v5095
        %v5207 = vsel %vm535, 0, %v5096
        %v5208 = vsel %vm542, 0, %v5178
        %v5209 = vsel %vm528, 0, %v5098
        %v5210 = vsel %vm535, 0, %v5099
        %v5211 = vsel %vm542, 0, %v5179
        %v5212 = vsel %vm528, 0, %v5101
        %v5213 = vsel %vm535, 0, %v5102
        %v5214 = vsel %vm542, 0, %v5180
        %v5215 = vsel %vm528, 0, %v5104
        %v5216 = vsel %vm535, 0, %v5105
        %v5217 = vsel %vm542, 0, %v5181
        %v5218 = vsel %vm528, 0, %v5107
        %v5219 = vsel %vm535, 0, %v5108
        %v5220 = vsel %vm542, 0, %v5182
        %v5221 = vsel %vm528, 0, %v5110
        %v5222 = vsel %vm535, 0, %v5111
        %v5223 = vsel %vm542, 0, %v5183
        %v5224 = vsel %vm528, 0, %v5113
        %v5225 = vsel %vm535, 0, %v5114
        %v5226 = vsel %vm542, 0, %v5184
        %v5227 = vsel %vm528, 0, %v5116
        %v5228 = vsel %vm535, 0, %v5117
        %v5229 = vsel %vm542, 0, %v5185
        %v5230 = vsel %vm528, 0, %v5119
        %v5231 = vsel %vm535, 0, %v5120
        %v5232 = vsel %vm542, 0, %v5186
        %v5233 = vsel %vm528, 0, %v5122
        %v5234 = vsel %vm535, 0, %v5123
        %v5235 = vsel %vm542, 0, %v5187
        %v5236 = vld [vmem:[%s298 + $0x4] sm:$0x8]
        %v5237 = vld [vmem:[%s298 + $0x8] sm:$0xf]
        %v5238 = vld [vmem:[%s298 + $0xc] sm:$0xf]
        %v5239 = vld [vmem:[%s298 + $0x1c] sm:$0x8]
        %v5240 = vld [vmem:[%s298 + $0x20] sm:$0xf]
        %v5241 = vld [vmem:[%s298 + $0x24] sm:$0xf]
        %v5242 = vld [vmem:[%s298 + $0x34] sm:$0x8]
        %v5243 = vld [vmem:[%s298 + $0x38] sm:$0xf]
        %v5244 = vld [vmem:[%s298 + $0x3c] sm:$0xf]
        %v5245 = vld [vmem:[%s298 + $0x4c] sm:$0x8]
        %v5246 = vld [vmem:[%s298 + $0x50] sm:$0xf]
        %v5247 = vld [vmem:[%s298 + $0x54] sm:$0xf]
        %v5248 = vld [vmem:[%s298 + $0x64] sm:$0x8]
        %v5249 = vld [vmem:[%s298 + $0x68] sm:$0xf]
        %v5250 = vld [vmem:[%s298 + $0x6c] sm:$0xf]
        %v5251 = vld [vmem:[%s298 + $0x7c] sm:$0x8]
        %v5252 = vld [vmem:[%s298 + $0x80] sm:$0xf]
        %v5253 = vld [vmem:[%s298 + $0x84] sm:$0xf]
        %v5254 = vld [vmem:[%s298 + $0x94] sm:$0x8]
        %v5255 = vld [vmem:[%s298 + $0x98] sm:$0xf]
        %v5256 = vld [vmem:[%s298 + $0x9c] sm:$0xf]
        %v5257 = vld [vmem:[%s298 + $0xac] sm:$0x8]
        %v5258 = vld [vmem:[%s298 + $0xb0] sm:$0xf]
        %v5259 = vld [vmem:[%s298 + $0xb4] sm:$0xf]
        %v5260 = vld [vmem:[%s298 + $0xc4] sm:$0x8]
        %v5261 = vld [vmem:[%s298 + $0xc8] sm:$0xf]
        %v5262 = vld [vmem:[%s298 + $0xcc] sm:$0xf]
        %v5263 = vld [vmem:[%s298 + $0xdc] sm:$0x8]
        %v5264 = vld [vmem:[%s298 + $0xe0] sm:$0xf]
        %v5265 = vld [vmem:[%s298 + $0xe4] sm:$0xf]
        %v5266 = vld [vmem:[%s298 + $0xf4] sm:$0x8]
        %v5267 = vld [vmem:[%s298 + $0xf8] sm:$0xf]
        %v5268 = vld [vmem:[%s298 + $0xfc] sm:$0xf]
        %v5269 = vld [vmem:[%s298 + $0x10c] sm:$0x8]
        %v5270 = vld [vmem:[%s298 + $0x110] sm:$0xf]
        %v5271 = vld [vmem:[%s298 + $0x114] sm:$0xf]
        %v5272 = vld [vmem:[%s298 + $0x124] sm:$0x8]
        %v5273 = vld [vmem:[%s298 + $0x128] sm:$0xf]
        %v5274 = vld [vmem:[%s298 + $0x12c] sm:$0xf]
        %v5275 = vld [vmem:[%s298 + $0x13c] sm:$0x8]
        %v5276 = vld [vmem:[%s298 + $0x140] sm:$0xf]
        %v5277 = vld [vmem:[%s298 + $0x144] sm:$0xf]
        %v5278 = vld [vmem:[%s298 + $0x154] sm:$0x8]
        %v5279 = vld [vmem:[%s298 + $0x158] sm:$0xf]
        %v5280 = vld [vmem:[%s298 + $0x15c] sm:$0xf]
        %v5281 = vld [vmem:[%s298 + $0x16c] sm:$0x8]
        %v5282 = vld [vmem:[%s298 + $0x170] sm:$0xf]
        %v5283 = vld [vmem:[%s298 + $0x174] sm:$0xf]
        %v5284 = vsel %vm415, 0, %v5236
        %v5285 = vsel %vm422, 0, %v5237
        %v5286 = vsel %vm429, 0, %v5238
        %v5287 = vsel %vm415, 0, %v5239
        %v5288 = vsel %vm422, 0, %v5240
        %v5289 = vsel %vm429, 0, %v5241
        %v5290 = vsel %vm415, 0, %v5242
        %v5291 = vsel %vm422, 0, %v5243
        %v5292 = vsel %vm429, 0, %v5244
        %v5293 = vsel %vm415, 0, %v5245
        %v5294 = vsel %vm422, 0, %v5246
        %v5295 = vsel %vm429, 0, %v5247
        %v5296 = vsel %vm415, 0, %v5248
        %v5297 = vsel %vm422, 0, %v5249
        %v5298 = vsel %vm429, 0, %v5250
        %v5299 = vsel %vm415, 0, %v5251
        %v5300 = vsel %vm422, 0, %v5252
        %v5301 = vsel %vm429, 0, %v5253
        %v5302 = vsel %vm415, 0, %v5254
        %v5303 = vsel %vm422, 0, %v5255
        %v5304 = vsel %vm429, 0, %v5256
        %v5305 = vsel %vm415, 0, %v5257
        %v5306 = vsel %vm422, 0, %v5258
        %v5307 = vsel %vm429, 0, %v5259
        %v5308 = vsel %vm415, 0, %v5260
        %v5309 = vsel %vm422, 0, %v5261
        %v5310 = vsel %vm429, 0, %v5262
        %v5311 = vsel %vm415, 0, %v5263
        %v5312 = vsel %vm422, 0, %v5264
        %v5313 = vsel %vm429, 0, %v5265
        %v5314 = vsel %vm415, 0, %v5266
        %v5315 = vsel %vm422, 0, %v5267
        %v5316 = vsel %vm429, 0, %v5268
        %v5317 = vsel %vm415, 0, %v5269
        %v5318 = vsel %vm422, 0, %v5270
        %v5319 = vsel %vm429, 0, %v5271
        %v5320 = vsel %vm415, 0, %v5272
        %v5321 = vsel %vm422, 0, %v5273
        %v5322 = vsel %vm429, 0, %v5274
        %v5323 = vsel %vm415, 0, %v5275
        %v5324 = vsel %vm422, 0, %v5276
        %v5325 = vsel %vm429, 0, %v5277
        %v5326 = vsel %vm415, 0, %v5278
        %v5327 = vsel %vm422, 0, %v5279
        %v5328 = vsel %vm429, 0, %v5280
        %v5329 = vsel %vm415, 0, %v5281
        %v5330 = vsel %vm422, 0, %v5282
        %v5331 = vsel %vm429, 0, %v5283
        %v5380 = vunpack.c.l.b16 %v5124
        %v5381 = vunpack.c.l.b16 %v5125
        %v5382 = vunpack.c.l.b16 %v5126
        %v5383 = vunpack.c.l.b16 %v5127
        %v5384 = vunpack.c.l.b16 %v5128
        %v5385 = vunpack.c.l.b16 %v5129
        %v5386 = vunpack.c.l.b16 %v5130
        %v5387 = vunpack.c.l.b16 %v5131
        %v5388 = vunpack.c.l.b16 %v5132
        %v5389 = vunpack.c.l.b16 %v5133
        %v5390 = vunpack.c.l.b16 %v5134
        %v5391 = vunpack.c.l.b16 %v5135
        %v5392 = vunpack.c.l.b16 %v5136
        %v5393 = vunpack.c.l.b16 %v5137
        %v5394 = vunpack.c.l.b16 %v5138
        %v5395 = vunpack.c.l.b16 %v5139
        %v5396 = vunpack.c.l.b16 %v5140
        %v5397 = vunpack.c.l.b16 %v5141
        %v5398 = vunpack.c.l.b16 %v5142
        %v5399 = vunpack.c.l.b16 %v5143
        %v5400 = vunpack.c.l.b16 %v5144
        %v5401 = vunpack.c.l.b16 %v5145
        %v5402 = vunpack.c.l.b16 %v5146
        %v5403 = vunpack.c.l.b16 %v5147
        %v5404 = vunpack.c.l.b16 %v5148
        %v5405 = vunpack.c.l.b16 %v5149
        %v5406 = vunpack.c.l.b16 %v5150
        %v5407 = vunpack.c.l.b16 %v5151
        %v5408 = vunpack.c.l.b16 %v5152
        %v5409 = vunpack.c.l.b16 %v5153
        %v5410 = vunpack.c.l.b16 %v5154
        %v5411 = vunpack.c.l.b16 %v5155
        %v5412 = vunpack.c.l.b16 %v5156
        %v5413 = vunpack.c.l.b16 %v5157
        %v5414 = vunpack.c.l.b16 %v5158
        %v5415 = vunpack.c.l.b16 %v5159
        %v5416 = vunpack.c.l.b16 %v5160
        %v5417 = vunpack.c.l.b16 %v5161
        %v5418 = vunpack.c.l.b16 %v5162
        %v5419 = vunpack.c.l.b16 %v5163
        %v5420 = vunpack.c.l.b16 %v5164
        %v5421 = vunpack.c.l.b16 %v5165
        %v5422 = vunpack.c.l.b16 %v5166
        %v5423 = vunpack.c.l.b16 %v5167
        %v5424 = vunpack.c.l.b16 %v5168
        %v5425 = vunpack.c.l.b16 %v5169
        %v5426 = vunpack.c.l.b16 %v5170
        %v5427 = vunpack.c.l.b16 %v5171
        %v5428 = vpack.c.b16 %v5381, %v5380
        %v5429 = vpack.c.b16 %v5382, %v5382
        %v5430 = vpack.c.b16 %v5384, %v5383
        %v5431 = vpack.c.b16 %v5385, %v5385
        %v5432 = vpack.c.b16 %v5387, %v5386
        %v5433 = vpack.c.b16 %v5388, %v5388
        %v5434 = vpack.c.b16 %v5390, %v5389
        %v5435 = vpack.c.b16 %v5391, %v5391
        %v5436 = vpack.c.b16 %v5393, %v5392
        %v5437 = vpack.c.b16 %v5394, %v5394
        %v5438 = vpack.c.b16 %v5396, %v5395
        %v5439 = vpack.c.b16 %v5397, %v5397
        %v5440 = vpack.c.b16 %v5399, %v5398
        %v5441 = vpack.c.b16 %v5400, %v5400
        %v5442 = vpack.c.b16 %v5402, %v5401
        %v5443 = vpack.c.b16 %v5403, %v5403
        %v5444 = vpack.c.b16 %v5405, %v5404
        %v5445 = vpack.c.b16 %v5406, %v5406
        %v5446 = vpack.c.b16 %v5408, %v5407
        %v5447 = vpack.c.b16 %v5409, %v5409
        %v5448 = vpack.c.b16 %v5411, %v5410
        %v5449 = vpack.c.b16 %v5412, %v5412
        %v5450 = vpack.c.b16 %v5414, %v5413
        %v5451 = vpack.c.b16 %v5415, %v5415
        %v5452 = vpack.c.b16 %v5417, %v5416
        %v5453 = vpack.c.b16 %v5418, %v5418
        %v5454 = vpack.c.b16 %v5420, %v5419
        %v5455 = vpack.c.b16 %v5421, %v5421
        %v5456 = vpack.c.b16 %v5423, %v5422
        %v5457 = vpack.c.b16 %v5424, %v5424
        %v5458 = vpack.c.b16 %v5426, %v5425
        %v5459 = vpack.c.b16 %v5427, %v5427
        %v5492 = vunpack.c.l.b16 %v5077
        %v5493 = vunpack.c.l.b16 %v5078
        %v5494 = vunpack.c.l.b16 %v5080
        %v5495 = vunpack.c.l.b16 %v5081
        %v5496 = vunpack.c.l.b16 %v5083
        %v5497 = vunpack.c.l.b16 %v5084
        %v5498 = vunpack.c.l.b16 %v5086
        %v5499 = vunpack.c.l.b16 %v5087
        %v5500 = vunpack.c.l.b16 %v5089
        %v5501 = vunpack.c.l.b16 %v5090
        %v5502 = vunpack.c.l.b16 %v5092
        %v5503 = vunpack.c.l.b16 %v5093
        %v5504 = vunpack.c.l.b16 %v5095
        %v5505 = vunpack.c.l.b16 %v5096
        %v5506 = vunpack.c.l.b16 %v5098
        %v5507 = vunpack.c.l.b16 %v5099
        %v5508 = vunpack.c.l.b16 %v5101
        %v5509 = vunpack.c.l.b16 %v5102
        %v5510 = vunpack.c.l.b16 %v5104
        %v5511 = vunpack.c.l.b16 %v5105
        %v5512 = vunpack.c.l.b16 %v5107
        %v5513 = vunpack.c.l.b16 %v5108
        %v5514 = vunpack.c.l.b16 %v5110
        %v5515 = vunpack.c.l.b16 %v5111
        %v5516 = vunpack.c.l.b16 %v5113
        %v5517 = vunpack.c.l.b16 %v5114
        %v5518 = vunpack.c.l.b16 %v5116
        %v5519 = vunpack.c.l.b16 %v5117
        %v5520 = vunpack.c.l.b16 %v5119
        %v5521 = vunpack.c.l.b16 %v5120
        %v5522 = vunpack.c.l.b16 %v5122
        %v5523 = vunpack.c.l.b16 %v5123
        %v5524 = vpack.c.b16 %v5493, %v5492
        %v5525 = vpack.c.b16 %v5495, %v5494
        %v5526 = vpack.c.b16 %v5497, %v5496
        %v5527 = vpack.c.b16 %v5499, %v5498
        %v5528 = vpack.c.b16 %v5501, %v5500
        %v5529 = vpack.c.b16 %v5503, %v5502
        %v5530 = vpack.c.b16 %v5505, %v5504
        %v5531 = vpack.c.b16 %v5507, %v5506
        %v5532 = vpack.c.b16 %v5509, %v5508
        %v5533 = vpack.c.b16 %v5511, %v5510
        %v5534 = vpack.c.b16 %v5513, %v5512
        %v5535 = vpack.c.b16 %v5515, %v5514
        %v5536 = vpack.c.b16 %v5517, %v5516
        %v5537 = vpack.c.b16 %v5519, %v5518
        %v5538 = vpack.c.b16 %v5521, %v5520
        %v5539 = vpack.c.b16 %v5523, %v5522
        %v5541 = vshrl.u32 %v5524, 16
        %v5543 = vrot.slane %v5541, 4
        %v5544 = vshll.u32 %v5524, 16
        %v5546 = vrot.slane %v5544, 5
        %v5547 = vor.u32 %v5543, %v5546
        %v5549 = vshrl.u32 %v5525, 16
        %v5551 = vrot.slane %v5549, 4
        %v5552 = vshll.u32 %v5525, 16
        %v5554 = vrot.slane %v5552, 5
        %v5555 = vor.u32 %v5551, %v5554
        %v5557 = vshrl.u32 %v5526, 16
        %v5559 = vrot.slane %v5557, 4
        %v5560 = vshll.u32 %v5526, 16
        %v5562 = vrot.slane %v5560, 5
        %v5563 = vor.u32 %v5559, %v5562
        %v5565 = vshrl.u32 %v5527, 16
        %v5567 = vrot.slane %v5565, 4
        %v5568 = vshll.u32 %v5527, 16
        %v5570 = vrot.slane %v5568, 5
        %v5571 = vor.u32 %v5567, %v5570
        %v5573 = vshrl.u32 %v5528, 16
        %v5575 = vrot.slane %v5573, 4
        %v5576 = vshll.u32 %v5528, 16
        %v5578 = vrot.slane %v5576, 5
        %v5579 = vor.u32 %v5575, %v5578
        %v5581 = vshrl.u32 %v5529, 16
        %v5583 = vrot.slane %v5581, 4
        %v5584 = vshll.u32 %v5529, 16
        %v5586 = vrot.slane %v5584, 5
        %v5587 = vor.u32 %v5583, %v5586
        %v5589 = vshrl.u32 %v5530, 16
        %v5591 = vrot.slane %v5589, 4
        %v5592 = vshll.u32 %v5530, 16
        %v5594 = vrot.slane %v5592, 5
        %v5595 = vor.u32 %v5591, %v5594
        %v5597 = vshrl.u32 %v5531, 16
        %v5599 = vrot.slane %v5597, 4
        %v5600 = vshll.u32 %v5531, 16
        %v5602 = vrot.slane %v5600, 5
        %v5603 = vor.u32 %v5599, %v5602
        %v5605 = vshrl.u32 %v5532, 16
        %v5607 = vrot.slane %v5605, 4
        %v5608 = vshll.u32 %v5532, 16
        %v5610 = vrot.slane %v5608, 5
        %v5611 = vor.u32 %v5607, %v5610
        %v5613 = vshrl.u32 %v5533, 16
        %v5615 = vrot.slane %v5613, 4
        %v5616 = vshll.u32 %v5533, 16
        %v5618 = vrot.slane %v5616, 5
        %v5619 = vor.u32 %v5615, %v5618
        %v5621 = vshrl.u32 %v5534, 16
        %v5623 = vrot.slane %v5621, 4
        %v5624 = vshll.u32 %v5534, 16
        %v5626 = vrot.slane %v5624, 5
        %v5627 = vor.u32 %v5623, %v5626
        %v5629 = vshrl.u32 %v5535, 16
        %v5631 = vrot.slane %v5629, 4
        %v5632 = vshll.u32 %v5535, 16
        %v5634 = vrot.slane %v5632, 5
        %v5635 = vor.u32 %v5631, %v5634
        %v5637 = vshrl.u32 %v5536, 16
        %v5639 = vrot.slane %v5637, 4
        %v5640 = vshll.u32 %v5536, 16
        %v5642 = vrot.slane %v5640, 5
        %v5643 = vor.u32 %v5639, %v5642
        %v5645 = vshrl.u32 %v5537, 16
        %v5647 = vrot.slane %v5645, 4
        %v5648 = vshll.u32 %v5537, 16
        %v5650 = vrot.slane %v5648, 5
        %v5651 = vor.u32 %v5647, %v5650
        %v5653 = vshrl.u32 %v5538, 16
        %v5655 = vrot.slane %v5653, 4
        %v5656 = vshll.u32 %v5538, 16
        %v5658 = vrot.slane %v5656, 5
        %v5659 = vor.u32 %v5655, %v5658
        %v5661 = vshrl.u32 %v5539, 16
        %v5663 = vrot.slane %v5661, 4
        %v5664 = vshll.u32 %v5539, 16
        %v5666 = vrot.slane %v5664, 5
        %v5667 = vor.u32 %v5663, %v5666
        %5668 = vrot.lane.b32.xlu0 %v5547, 32
        %v5669 = vpop.permute.xlu0 %5668
        %5670 = vrot.lane.b32.xlu0 %v5555, 32
        %v5671 = vpop.permute.xlu0 %5670
        %5672 = vrot.lane.b32.xlu0 %v5563, 32
        %v5673 = vpop.permute.xlu0 %5672
        %5674 = vrot.lane.b32.xlu0 %v5571, 32
        %v5675 = vpop.permute.xlu0 %5674
        %5676 = vrot.lane.b32.xlu0 %v5579, 32
        %v5677 = vpop.permute.xlu0 %5676
        %5678 = vrot.lane.b32.xlu0 %v5587, 32
        %v5679 = vpop.permute.xlu0 %5678
        %5680 = vrot.lane.b32.xlu0 %v5595, 32
        %v5681 = vpop.permute.xlu0 %5680
        %5682 = vrot.lane.b32.xlu0 %v5603, 32
        %v5683 = vpop.permute.xlu0 %5682
        %5684 = vrot.lane.b32.xlu0 %v5611, 32
        %v5685 = vpop.permute.xlu0 %5684
        %5686 = vrot.lane.b32.xlu0 %v5619, 32
        %v5687 = vpop.permute.xlu0 %5686
        %5688 = vrot.lane.b32.xlu0 %v5627, 32
        %v5689 = vpop.permute.xlu0 %5688
        %5690 = vrot.lane.b32.xlu0 %v5635, 32
        %v5691 = vpop.permute.xlu0 %5690
        %5692 = vrot.lane.b32.xlu0 %v5643, 32
        %v5693 = vpop.permute.xlu0 %5692
        %5694 = vrot.lane.b32.xlu0 %v5651, 32
        %v5695 = vpop.permute.xlu0 %5694
        %5696 = vrot.lane.b32.xlu0 %v5659, 32
        %v5697 = vpop.permute.xlu0 %5696
        %5698 = vrot.lane.b32.xlu0 %v5667, 32
        %v5699 = vpop.permute.xlu0 %5698
        %v5748 = vunpack.c.l.b16 %v5188
        %v5749 = vunpack.c.l.b16 %v5189
        %v5750 = vunpack.c.l.b16 %v5190
        %v5751 = vunpack.c.l.b16 %v5191
        %v5752 = vunpack.c.l.b16 %v5192
        %v5753 = vunpack.c.l.b16 %v5193
        %v5754 = vunpack.c.l.b16 %v5194
        %v5755 = vunpack.c.l.b16 %v5195
        %v5756 = vunpack.c.l.b16 %v5196
        %v5757 = vunpack.c.l.b16 %v5197
        %v5758 = vunpack.c.l.b16 %v5198
        %v5759 = vunpack.c.l.b16 %v5199
        %v5760 = vunpack.c.l.b16 %v5200
        %v5761 = vunpack.c.l.b16 %v5201
        %v5762 = vunpack.c.l.b16 %v5202
        %v5763 = vunpack.c.l.b16 %v5203
        %v5764 = vunpack.c.l.b16 %v5204
        %v5765 = vunpack.c.l.b16 %v5205
        %v5766 = vunpack.c.l.b16 %v5206
        %v5767 = vunpack.c.l.b16 %v5207
        %v5768 = vunpack.c.l.b16 %v5208
        %v5769 = vunpack.c.l.b16 %v5209
        %v5770 = vunpack.c.l.b16 %v5210
        %v5771 = vunpack.c.l.b16 %v5211
        %v5772 = vunpack.c.l.b16 %v5212
        %v5773 = vunpack.c.l.b16 %v5213
        %v5774 = vunpack.c.l.b16 %v5214
        %v5775 = vunpack.c.l.b16 %v5215
        %v5776 = vunpack.c.l.b16 %v5216
        %v5777 = vunpack.c.l.b16 %v5217
        %v5778 = vunpack.c.l.b16 %v5218
        %v5779 = vunpack.c.l.b16 %v5219
        %v5780 = vunpack.c.l.b16 %v5220
        %v5781 = vunpack.c.l.b16 %v5221
        %v5782 = vunpack.c.l.b16 %v5222
        %v5783 = vunpack.c.l.b16 %v5223
        %v5784 = vunpack.c.l.b16 %v5224
        %v5785 = vunpack.c.l.b16 %v5225
        %v5786 = vunpack.c.l.b16 %v5226
        %v5787 = vunpack.c.l.b16 %v5227
        %v5788 = vunpack.c.l.b16 %v5228
        %v5789 = vunpack.c.l.b16 %v5229
        %v5790 = vunpack.c.l.b16 %v5230
        %v5791 = vunpack.c.l.b16 %v5231
        %v5792 = vunpack.c.l.b16 %v5232
        %v5793 = vunpack.c.l.b16 %v5233
        %v5794 = vunpack.c.l.b16 %v5234
        %v5795 = vunpack.c.l.b16 %v5235
        %v5796 = vpack.c.b16 %v5749, %v5748
        %v5797 = vpack.c.b16 %v5750, %v5750
        %v5798 = vpack.c.b16 %v5752, %v5751
        %v5799 = vpack.c.b16 %v5753, %v5753
        %v5800 = vpack.c.b16 %v5755, %v5754
        %v5801 = vpack.c.b16 %v5756, %v5756
        %v5802 = vpack.c.b16 %v5758, %v5757
        %v5803 = vpack.c.b16 %v5759, %v5759
        %v5804 = vpack.c.b16 %v5761, %v5760
        %v5805 = vpack.c.b16 %v5762, %v5762
        %v5806 = vpack.c.b16 %v5764, %v5763
        %v5807 = vpack.c.b16 %v5765, %v5765
        %v5808 = vpack.c.b16 %v5767, %v5766
        %v5809 = vpack.c.b16 %v5768, %v5768
        %v5810 = vpack.c.b16 %v5770, %v5769
        %v5811 = vpack.c.b16 %v5771, %v5771
        %v5812 = vpack.c.b16 %v5773, %v5772
        %v5813 = vpack.c.b16 %v5774, %v5774
        %v5814 = vpack.c.b16 %v5776, %v5775
        %v5815 = vpack.c.b16 %v5777, %v5777
        %v5816 = vpack.c.b16 %v5779, %v5778
        %v5817 = vpack.c.b16 %v5780, %v5780
        %v5818 = vpack.c.b16 %v5782, %v5781
        %v5819 = vpack.c.b16 %v5783, %v5783
        %v5820 = vpack.c.b16 %v5785, %v5784
        %v5821 = vpack.c.b16 %v5786, %v5786
        %v5822 = vpack.c.b16 %v5788, %v5787
        %v5823 = vpack.c.b16 %v5789, %v5789
        %v5824 = vpack.c.b16 %v5791, %v5790
        %v5825 = vpack.c.b16 %v5792, %v5792
        %v5826 = vpack.c.b16 %v5794, %v5793
        %v5827 = vpack.c.b16 %v5795, %v5795
        %v5828 = vrot.slane %v5796, 5
        %v5829 = vrot.slane %v5797, 5
        %v5830 = vsel %vm1183, %v5828, %v5829
        %v5831 = vrot.slane %v5798, 5
        %v5832 = vrot.slane %v5799, 5
        %v5833 = vsel %vm1183, %v5831, %v5832
        %v5834 = vrot.slane %v5800, 5
        %v5835 = vrot.slane %v5801, 5
        %v5836 = vsel %vm1183, %v5834, %v5835
        %v5837 = vrot.slane %v5802, 5
        %v5838 = vrot.slane %v5803, 5
        %v5839 = vsel %vm1183, %v5837, %v5838
        %v5840 = vrot.slane %v5804, 5
        %v5841 = vrot.slane %v5805, 5
        %v5842 = vsel %vm1183, %v5840, %v5841
        %v5843 = vrot.slane %v5806, 5
        %v5844 = vrot.slane %v5807, 5
        %v5845 = vsel %vm1183, %v5843, %v5844
        %v5846 = vrot.slane %v5808, 5
        %v5847 = vrot.slane %v5809, 5
        %v5848 = vsel %vm1183, %v5846, %v5847
        %v5849 = vrot.slane %v5810, 5
        %v5850 = vrot.slane %v5811, 5
        %v5851 = vsel %vm1183, %v5849, %v5850
        %v5852 = vrot.slane %v5812, 5
        %v5853 = vrot.slane %v5813, 5
        %v5854 = vsel %vm1183, %v5852, %v5853
        %v5855 = vrot.slane %v5814, 5
        %v5856 = vrot.slane %v5815, 5
        %v5857 = vsel %vm1183, %v5855, %v5856
        %v5858 = vrot.slane %v5816, 5
        %v5859 = vrot.slane %v5817, 5
        %v5860 = vsel %vm1183, %v5858, %v5859
        %v5861 = vrot.slane %v5818, 5
        %v5862 = vrot.slane %v5819, 5
        %v5863 = vsel %vm1183, %v5861, %v5862
        %v5864 = vrot.slane %v5820, 5
        %v5865 = vrot.slane %v5821, 5
        %v5866 = vsel %vm1183, %v5864, %v5865
        %v5867 = vrot.slane %v5822, 5
        %v5868 = vrot.slane %v5823, 5
        %v5869 = vsel %vm1183, %v5867, %v5868
        %v5870 = vrot.slane %v5824, 5
        %v5871 = vrot.slane %v5825, 5
        %v5872 = vsel %vm1183, %v5870, %v5871
        %v5873 = vrot.slane %v5826, 5
        %v5874 = vrot.slane %v5827, 5
        %v5875 = vsel %vm1183, %v5873, %v5874
        %5876 = vrot.lane.b32.xlu0 %v5828, 64
        %v5877 = vpop.permute.xlu0 %5876
        %5878 = vrot.lane.b32.xlu0 %v5830, 64
        %v5879 = vpop.permute.xlu0 %5878
        %5880 = vrot.lane.b32.xlu0 %v5831, 64
        %v5881 = vpop.permute.xlu0 %5880
        %5882 = vrot.lane.b32.xlu0 %v5833, 64
        %v5883 = vpop.permute.xlu0 %5882
        %5884 = vrot.lane.b32.xlu0 %v5834, 64
        %v5885 = vpop.permute.xlu0 %5884
        %5886 = vrot.lane.b32.xlu0 %v5836, 64
        %v5887 = vpop.permute.xlu0 %5886
        %5888 = vrot.lane.b32.xlu0 %v5837, 64
        %v5889 = vpop.permute.xlu0 %5888
        %5890 = vrot.lane.b32.xlu0 %v5839, 64
        %v5891 = vpop.permute.xlu0 %5890
        %5892 = vrot.lane.b32.xlu0 %v5840, 64
        %v5893 = vpop.permute.xlu0 %5892
        %5894 = vrot.lane.b32.xlu0 %v5842, 64
        %v5895 = vpop.permute.xlu0 %5894
        %5896 = vrot.lane.b32.xlu0 %v5843, 64
        %v5897 = vpop.permute.xlu0 %5896
        %5898 = vrot.lane.b32.xlu0 %v5845, 64
        %v5899 = vpop.permute.xlu0 %5898
        %5900 = vrot.lane.b32.xlu0 %v5846, 64
        %v5901 = vpop.permute.xlu0 %5900
        %5902 = vrot.lane.b32.xlu0 %v5848, 64
        %v5903 = vpop.permute.xlu0 %5902
        %5904 = vrot.lane.b32.xlu0 %v5849, 64
        %v5905 = vpop.permute.xlu0 %5904
        %5906 = vrot.lane.b32.xlu0 %v5851, 64
        %v5907 = vpop.permute.xlu0 %5906
        %5908 = vrot.lane.b32.xlu0 %v5852, 64
        %v5909 = vpop.permute.xlu0 %5908
        %5910 = vrot.lane.b32.xlu0 %v5854, 64
        %v5911 = vpop.permute.xlu0 %5910
        %5912 = vrot.lane.b32.xlu0 %v5855, 64
        %v5913 = vpop.permute.xlu0 %5912
        %5914 = vrot.lane.b32.xlu0 %v5857, 64
        %v5915 = vpop.permute.xlu0 %5914
        %5916 = vrot.lane.b32.xlu0 %v5858, 64
        %v5917 = vpop.permute.xlu0 %5916
        %5918 = vrot.lane.b32.xlu0 %v5860, 64
        %v5919 = vpop.permute.xlu0 %5918
        %5920 = vrot.lane.b32.xlu0 %v5861, 64
        %v5921 = vpop.permute.xlu0 %5920
        %5922 = vrot.lane.b32.xlu0 %v5863, 64
        %v5923 = vpop.permute.xlu0 %5922
        %5924 = vrot.lane.b32.xlu0 %v5864, 64
        %v5925 = vpop.permute.xlu0 %5924
        %5926 = vrot.lane.b32.xlu0 %v5866, 64
        %v5927 = vpop.permute.xlu0 %5926
        %5928 = vrot.lane.b32.xlu0 %v5867, 64
        %v5929 = vpop.permute.xlu0 %5928
        %5930 = vrot.lane.b32.xlu0 %v5869, 64
        %v5931 = vpop.permute.xlu0 %5930
        %5932 = vrot.lane.b32.xlu0 %v5870, 64
        %v5933 = vpop.permute.xlu0 %5932
        %5934 = vrot.lane.b32.xlu0 %v5872, 64
        %v5935 = vpop.permute.xlu0 %5934
        %5936 = vrot.lane.b32.xlu0 %v5873, 64
        %v5937 = vpop.permute.xlu0 %5936
        %5938 = vrot.lane.b32.xlu0 %v5875, 64
        %v5939 = vpop.permute.xlu0 %5938
        %v5988 = vunpack.c.l.b16 %v5284
        %v5989 = vunpack.c.l.b16 %v5285
        %v5990 = vunpack.c.l.b16 %v5286
        %v5991 = vunpack.c.l.b16 %v5287
        %v5992 = vunpack.c.l.b16 %v5288
        %v5993 = vunpack.c.l.b16 %v5289
        %v5994 = vunpack.c.l.b16 %v5290
        %v5995 = vunpack.c.l.b16 %v5291
        %v5996 = vunpack.c.l.b16 %v5292
        %v5997 = vunpack.c.l.b16 %v5293
        %v5998 = vunpack.c.l.b16 %v5294
        %v5999 = vunpack.c.l.b16 %v5295
        %v6000 = vunpack.c.l.b16 %v5296
        %v6001 = vunpack.c.l.b16 %v5297
        %v6002 = vunpack.c.l.b16 %v5298
        %v6003 = vunpack.c.l.b16 %v5299
        %v6004 = vunpack.c.l.b16 %v5300
        %v6005 = vunpack.c.l.b16 %v5301
        %v6006 = vunpack.c.l.b16 %v5302
        %v6007 = vunpack.c.l.b16 %v5303
        %v6008 = vunpack.c.l.b16 %v5304
        %v6009 = vunpack.c.l.b16 %v5305
        %v6010 = vunpack.c.l.b16 %v5306
        %v6011 = vunpack.c.l.b16 %v5307
        %v6012 = vunpack.c.l.b16 %v5308
        %v6013 = vunpack.c.l.b16 %v5309
        %v6014 = vunpack.c.l.b16 %v5310
        %v6015 = vunpack.c.l.b16 %v5311
        %v6016 = vunpack.c.l.b16 %v5312
        %v6017 = vunpack.c.l.b16 %v5313
        %v6018 = vunpack.c.l.b16 %v5314
        %v6019 = vunpack.c.l.b16 %v5315
        %v6020 = vunpack.c.l.b16 %v5316
        %v6021 = vunpack.c.l.b16 %v5317
        %v6022 = vunpack.c.l.b16 %v5318
        %v6023 = vunpack.c.l.b16 %v5319
        %v6024 = vunpack.c.l.b16 %v5320
        %v6025 = vunpack.c.l.b16 %v5321
        %v6026 = vunpack.c.l.b16 %v5322
        %v6027 = vunpack.c.l.b16 %v5323
        %v6028 = vunpack.c.l.b16 %v5324
        %v6029 = vunpack.c.l.b16 %v5325
        %v6030 = vunpack.c.l.b16 %v5326
        %v6031 = vunpack.c.l.b16 %v5327
        %v6032 = vunpack.c.l.b16 %v5328
        %v6033 = vunpack.c.l.b16 %v5329
        %v6034 = vunpack.c.l.b16 %v5330
        %v6035 = vunpack.c.l.b16 %v5331
        %v6036 = vpack.c.b16 %v5989, %v5988
        %v6037 = vpack.c.b16 %v5990, %v5990
        %v6038 = vpack.c.b16 %v5992, %v5991
        %v6039 = vpack.c.b16 %v5993, %v5993
        %v6040 = vpack.c.b16 %v5995, %v5994
        %v6041 = vpack.c.b16 %v5996, %v5996
        %v6042 = vpack.c.b16 %v5998, %v5997
        %v6043 = vpack.c.b16 %v5999, %v5999
        %v6044 = vpack.c.b16 %v6001, %v6000
        %v6045 = vpack.c.b16 %v6002, %v6002
        %v6046 = vpack.c.b16 %v6004, %v6003
        %v6047 = vpack.c.b16 %v6005, %v6005
        %v6048 = vpack.c.b16 %v6007, %v6006
        %v6049 = vpack.c.b16 %v6008, %v6008
        %v6050 = vpack.c.b16 %v6010, %v6009
        %v6051 = vpack.c.b16 %v6011, %v6011
        %v6052 = vpack.c.b16 %v6013, %v6012
        %v6053 = vpack.c.b16 %v6014, %v6014
        %v6054 = vpack.c.b16 %v6016, %v6015
        %v6055 = vpack.c.b16 %v6017, %v6017
        %v6056 = vpack.c.b16 %v6019, %v6018
        %v6057 = vpack.c.b16 %v6020, %v6020
        %v6058 = vpack.c.b16 %v6022, %v6021
        %v6059 = vpack.c.b16 %v6023, %v6023
        %v6060 = vpack.c.b16 %v6025, %v6024
        %v6061 = vpack.c.b16 %v6026, %v6026
        %v6062 = vpack.c.b16 %v6028, %v6027
        %v6063 = vpack.c.b16 %v6029, %v6029
        %v6064 = vpack.c.b16 %v6031, %v6030
        %v6065 = vpack.c.b16 %v6032, %v6032
        %v6066 = vpack.c.b16 %v6034, %v6033
        %v6067 = vpack.c.b16 %v6035, %v6035
        %6068 = vrot.lane.b32.xlu0 %v6036, 96
        %v6069 = vpop.permute.xlu0 %6068
        %6070 = vrot.lane.b32.xlu0 %v6037, 96
        %v6071 = vpop.permute.xlu0 %6070
        %6072 = vrot.lane.b32.xlu0 %v6038, 96
        %v6073 = vpop.permute.xlu0 %6072
        %6074 = vrot.lane.b32.xlu0 %v6039, 96
        %v6075 = vpop.permute.xlu0 %6074
        %6076 = vrot.lane.b32.xlu0 %v6040, 96
        %v6077 = vpop.permute.xlu0 %6076
        %6078 = vrot.lane.b32.xlu0 %v6041, 96
        %v6079 = vpop.permute.xlu0 %6078
        %6080 = vrot.lane.b32.xlu0 %v6042, 96
        %v6081 = vpop.permute.xlu0 %6080
        %6082 = vrot.lane.b32.xlu0 %v6043, 96
        %v6083 = vpop.permute.xlu0 %6082
        %6084 = vrot.lane.b32.xlu0 %v6044, 96
        %v6085 = vpop.permute.xlu0 %6084
        %6086 = vrot.lane.b32.xlu0 %v6045, 96
        %v6087 = vpop.permute.xlu0 %6086
        %6088 = vrot.lane.b32.xlu0 %v6046, 96
        %v6089 = vpop.permute.xlu0 %6088
        %6090 = vrot.lane.b32.xlu0 %v6047, 96
        %v6091 = vpop.permute.xlu0 %6090
        %6092 = vrot.lane.b32.xlu0 %v6048, 96
        %v6093 = vpop.permute.xlu0 %6092
        %6094 = vrot.lane.b32.xlu0 %v6049, 96
        %v6095 = vpop.permute.xlu0 %6094
        %6096 = vrot.lane.b32.xlu0 %v6050, 96
        %v6097 = vpop.permute.xlu0 %6096
        %6098 = vrot.lane.b32.xlu0 %v6051, 96
        %v6099 = vpop.permute.xlu0 %6098
        %6100 = vrot.lane.b32.xlu0 %v6052, 96
        %v6101 = vpop.permute.xlu0 %6100
        %6102 = vrot.lane.b32.xlu0 %v6053, 96
        %v6103 = vpop.permute.xlu0 %6102
        %6104 = vrot.lane.b32.xlu0 %v6054, 96
        %v6105 = vpop.permute.xlu0 %6104
        %6106 = vrot.lane.b32.xlu0 %v6055, 96
        %v6107 = vpop.permute.xlu0 %6106
        %6108 = vrot.lane.b32.xlu0 %v6056, 96
        %v6109 = vpop.permute.xlu0 %6108
        %6110 = vrot.lane.b32.xlu0 %v6057, 96
        %v6111 = vpop.permute.xlu0 %6110
        %6112 = vrot.lane.b32.xlu0 %v6058, 96
        %v6113 = vpop.permute.xlu0 %6112
        %6114 = vrot.lane.b32.xlu0 %v6059, 96
        %v6115 = vpop.permute.xlu0 %6114
        %6116 = vrot.lane.b32.xlu0 %v6060, 96
        %v6117 = vpop.permute.xlu0 %6116
        %6118 = vrot.lane.b32.xlu0 %v6061, 96
        %v6119 = vpop.permute.xlu0 %6118
        %6120 = vrot.lane.b32.xlu0 %v6062, 96
        %v6121 = vpop.permute.xlu0 %6120
        %6122 = vrot.lane.b32.xlu0 %v6063, 96
        %v6123 = vpop.permute.xlu0 %6122
        %6124 = vrot.lane.b32.xlu0 %v6064, 96
        %v6125 = vpop.permute.xlu0 %6124
        %6126 = vrot.lane.b32.xlu0 %v6065, 96
        %v6127 = vpop.permute.xlu0 %6126
        %6128 = vrot.lane.b32.xlu0 %v6066, 96
        %v6129 = vpop.permute.xlu0 %6128
        %6130 = vrot.lane.b32.xlu0 %v6067, 96
        %v6131 = vpop.permute.xlu0 %6130
        %v6134 = vsel %vm1488, %v5428, %v5669
        %v6136 = vsel %vm1488, %v5429, %v5669
        %v6139 = vsel %vm1488, %v5430, %v5671
        %v6141 = vsel %vm1488, %v5431, %v5671
        %v6144 = vsel %vm1488, %v5432, %v5673
        %v6146 = vsel %vm1488, %v5433, %v5673
        %v6149 = vsel %vm1488, %v5434, %v5675
        %v6151 = vsel %vm1488, %v5435, %v5675
        %v6154 = vsel %vm1488, %v5436, %v5677
        %v6156 = vsel %vm1488, %v5437, %v5677
        %v6159 = vsel %vm1488, %v5438, %v5679
        %v6161 = vsel %vm1488, %v5439, %v5679
        %v6164 = vsel %vm1488, %v5440, %v5681
        %v6166 = vsel %vm1488, %v5441, %v5681
        %v6169 = vsel %vm1488, %v5442, %v5683
        %v6171 = vsel %vm1488, %v5443, %v5683
        %v6174 = vsel %vm1488, %v5444, %v5685
        %v6176 = vsel %vm1488, %v5445, %v5685
        %v6179 = vsel %vm1488, %v5446, %v5687
        %v6181 = vsel %vm1488, %v5447, %v5687
        %v6184 = vsel %vm1488, %v5448, %v5689
        %v6186 = vsel %vm1488, %v5449, %v5689
        %v6189 = vsel %vm1488, %v5450, %v5691
        %v6191 = vsel %vm1488, %v5451, %v5691
        %v6194 = vsel %vm1488, %v5452, %v5693
        %v6196 = vsel %vm1488, %v5453, %v5693
        %v6199 = vsel %vm1488, %v5454, %v5695
        %v6201 = vsel %vm1488, %v5455, %v5695
        %v6204 = vsel %vm1488, %v5456, %v5697
        %v6206 = vsel %vm1488, %v5457, %v5697
        %v6209 = vsel %vm1488, %v5458, %v5699
        %v6211 = vsel %vm1488, %v5459, %v5699
        %v6213 = vsel %vm1569, %v6134, %v5877
        %v6215 = vsel %vm1569, %v6136, %v5879
        %v6217 = vsel %vm1569, %v6139, %v5881
        %v6219 = vsel %vm1569, %v6141, %v5883
        %v6221 = vsel %vm1569, %v6144, %v5885
        %v6223 = vsel %vm1569, %v6146, %v5887
        %v6225 = vsel %vm1569, %v6149, %v5889
        %v6227 = vsel %vm1569, %v6151, %v5891
        %v6229 = vsel %vm1569, %v6154, %v5893
        %v6231 = vsel %vm1569, %v6156, %v5895
        %v6233 = vsel %vm1569, %v6159, %v5897
        %v6235 = vsel %vm1569, %v6161, %v5899
        %v6237 = vsel %vm1569, %v6164, %v5901
        %v6239 = vsel %vm1569, %v6166, %v5903
        %v6241 = vsel %vm1569, %v6169, %v5905
        %v6243 = vsel %vm1569, %v6171, %v5907
        %v6245 = vsel %vm1569, %v6174, %v5909
        %v6247 = vsel %vm1569, %v6176, %v5911
        %v6249 = vsel %vm1569, %v6179, %v5913
        %v6251 = vsel %vm1569, %v6181, %v5915
        %v6253 = vsel %vm1569, %v6184, %v5917
        %v6255 = vsel %vm1569, %v6186, %v5919
        %v6257 = vsel %vm1569, %v6189, %v5921
        %v6259 = vsel %vm1569, %v6191, %v5923
        %v6261 = vsel %vm1569, %v6194, %v5925
        %v6263 = vsel %vm1569, %v6196, %v5927
        %v6265 = vsel %vm1569, %v6199, %v5929
        %v6267 = vsel %vm1569, %v6201, %v5931
        %v6269 = vsel %vm1569, %v6204, %v5933
        %v6271 = vsel %vm1569, %v6206, %v5935
        %v6273 = vsel %vm1569, %v6209, %v5937
        %v6275 = vsel %vm1569, %v6211, %v5939
        %v6277 = vsel %vm1634, %v6213, %v6069
        %v6279 = vsel %vm1634, %v6215, %v6071
        %v6281 = vsel %vm1634, %v6217, %v6073
        %v6283 = vsel %vm1634, %v6219, %v6075
        %v6285 = vsel %vm1634, %v6221, %v6077
        %v6287 = vsel %vm1634, %v6223, %v6079
        %v6289 = vsel %vm1634, %v6225, %v6081
        %v6291 = vsel %vm1634, %v6227, %v6083
        %v6293 = vsel %vm1634, %v6229, %v6085
        %v6295 = vsel %vm1634, %v6231, %v6087
        %v6297 = vsel %vm1634, %v6233, %v6089
        %v6299 = vsel %vm1634, %v6235, %v6091
        %v6301 = vsel %vm1634, %v6237, %v6093
        %v6303 = vsel %vm1634, %v6239, %v6095
        %v6305 = vsel %vm1634, %v6241, %v6097
        %v6307 = vsel %vm1634, %v6243, %v6099
        %v6309 = vsel %vm1634, %v6245, %v6101
        %v6311 = vsel %vm1634, %v6247, %v6103
        %v6313 = vsel %vm1634, %v6249, %v6105
        %v6315 = vsel %vm1634, %v6251, %v6107
        %v6317 = vsel %vm1634, %v6253, %v6109
        %v6319 = vsel %vm1634, %v6255, %v6111
        %v6321 = vsel %vm1634, %v6257, %v6113
        %v6323 = vsel %vm1634, %v6259, %v6115
        %v6325 = vsel %vm1634, %v6261, %v6117
        %v6327 = vsel %vm1634, %v6263, %v6119
        %v6329 = vsel %vm1634, %v6265, %v6121
        %v6331 = vsel %vm1634, %v6267, %v6123
        %v6333 = vsel %vm1634, %v6269, %v6125
        %v6335 = vsel %vm1634, %v6271, %v6127
        %v6337 = vsel %vm1634, %v6273, %v6129
        %v6339 = vsel %vm1634, %v6275, %v6131
        %v6340 = vshrl.u32 %v6277, 16
        %v6342 = vrot.slane %v6340, 3
        %v6343 = vshll.u32 %v6277, 16
        %v6345 = vrot.slane %v6343, 4
        %v6346 = vor.u32 %v6342, %v6345
        %v6347 = vshrl.u32 %v6279, 16
        %v6349 = vrot.slane %v6347, 3
        %v6350 = vshll.u32 %v6279, 16
        %v6352 = vrot.slane %v6350, 4
        %v6353 = vor.u32 %v6349, %v6352
        %v6354 = vsel %vm1699, %v6346, %v6353
        %v6355 = vshrl.u32 %v6281, 16
        %v6357 = vrot.slane %v6355, 3
        %v6358 = vshll.u32 %v6281, 16
        %v6360 = vrot.slane %v6358, 4
        %v6361 = vor.u32 %v6357, %v6360
        %v6362 = vshrl.u32 %v6283, 16
        %v6364 = vrot.slane %v6362, 3
        %v6365 = vshll.u32 %v6283, 16
        %v6367 = vrot.slane %v6365, 4
        %v6368 = vor.u32 %v6364, %v6367
        %v6369 = vsel %vm1699, %v6361, %v6368
        %v6370 = vshrl.u32 %v6285, 16
        %v6372 = vrot.slane %v6370, 3
        %v6373 = vshll.u32 %v6285, 16
        %v6375 = vrot.slane %v6373, 4
        %v6376 = vor.u32 %v6372, %v6375
        %v6377 = vshrl.u32 %v6287, 16
        %v6379 = vrot.slane %v6377, 3
        %v6380 = vshll.u32 %v6287, 16
        %v6382 = vrot.slane %v6380, 4
        %v6383 = vor.u32 %v6379, %v6382
        %v6384 = vsel %vm1699, %v6376, %v6383
        %v6385 = vshrl.u32 %v6289, 16
        %v6387 = vrot.slane %v6385, 3
        %v6388 = vshll.u32 %v6289, 16
        %v6390 = vrot.slane %v6388, 4
        %v6391 = vor.u32 %v6387, %v6390
        %v6392 = vshrl.u32 %v6291, 16
        %v6394 = vrot.slane %v6392, 3
        %v6395 = vshll.u32 %v6291, 16
        %v6397 = vrot.slane %v6395, 4
        %v6398 = vor.u32 %v6394, %v6397
        %v6399 = vsel %vm1699, %v6391, %v6398
        %v6400 = vshrl.u32 %v6293, 16
        %v6402 = vrot.slane %v6400, 3
        %v6403 = vshll.u32 %v6293, 16
        %v6405 = vrot.slane %v6403, 4
        %v6406 = vor.u32 %v6402, %v6405
        %v6407 = vshrl.u32 %v6295, 16
        %v6409 = vrot.slane %v6407, 3
        %v6410 = vshll.u32 %v6295, 16
        %v6412 = vrot.slane %v6410, 4
        %v6413 = vor.u32 %v6409, %v6412
        %v6414 = vsel %vm1699, %v6406, %v6413
        %v6415 = vshrl.u32 %v6297, 16
        %v6417 = vrot.slane %v6415, 3
        %v6418 = vshll.u32 %v6297, 16
        %v6420 = vrot.slane %v6418, 4
        %v6421 = vor.u32 %v6417, %v6420
        %v6422 = vshrl.u32 %v6299, 16
        %v6424 = vrot.slane %v6422, 3
        %v6425 = vshll.u32 %v6299, 16
        %v6427 = vrot.slane %v6425, 4
        %v6428 = vor.u32 %v6424, %v6427
        %v6429 = vsel %vm1699, %v6421, %v6428
        %v6430 = vshrl.u32 %v6301, 16
        %v6432 = vrot.slane %v6430, 3
        %v6433 = vshll.u32 %v6301, 16
        %v6435 = vrot.slane %v6433, 4
        %v6436 = vor.u32 %v6432, %v6435
        %v6437 = vshrl.u32 %v6303, 16
        %v6439 = vrot.slane %v6437, 3
        %v6440 = vshll.u32 %v6303, 16
        %v6442 = vrot.slane %v6440, 4
        %v6443 = vor.u32 %v6439, %v6442
        %v6444 = vsel %vm1699, %v6436, %v6443
        %v6445 = vshrl.u32 %v6305, 16
        %v6447 = vrot.slane %v6445, 3
        %v6448 = vshll.u32 %v6305, 16
        %v6450 = vrot.slane %v6448, 4
        %v6451 = vor.u32 %v6447, %v6450
        %v6452 = vshrl.u32 %v6307, 16
        %v6454 = vrot.slane %v6452, 3
        %v6455 = vshll.u32 %v6307, 16
        %v6457 = vrot.slane %v6455, 4
        %v6458 = vor.u32 %v6454, %v6457
        %v6459 = vsel %vm1699, %v6451, %v6458
        %v6460 = vshrl.u32 %v6309, 16
        %v6462 = vrot.slane %v6460, 3
        %v6463 = vshll.u32 %v6309, 16
        %v6465 = vrot.slane %v6463, 4
        %v6466 = vor.u32 %v6462, %v6465
        %v6467 = vshrl.u32 %v6311, 16
        %v6469 = vrot.slane %v6467, 3
        %v6470 = vshll.u32 %v6311, 16
        %v6472 = vrot.slane %v6470, 4
        %v6473 = vor.u32 %v6469, %v6472
        %v6474 = vsel %vm1699, %v6466, %v6473
        %v6475 = vshrl.u32 %v6313, 16
        %v6477 = vrot.slane %v6475, 3
        %v6478 = vshll.u32 %v6313, 16
        %v6480 = vrot.slane %v6478, 4
        %v6481 = vor.u32 %v6477, %v6480
        %v6482 = vshrl.u32 %v6315, 16
        %v6484 = vrot.slane %v6482, 3
        %v6485 = vshll.u32 %v6315, 16
        %v6487 = vrot.slane %v6485, 4
        %v6488 = vor.u32 %v6484, %v6487
        %v6489 = vsel %vm1699, %v6481, %v6488
        %v6490 = vshrl.u32 %v6317, 16
        %v6492 = vrot.slane %v6490, 3
        %v6493 = vshll.u32 %v6317, 16
        %v6495 = vrot.slane %v6493, 4
        %v6496 = vor.u32 %v6492, %v6495
        %v6497 = vshrl.u32 %v6319, 16
        %v6499 = vrot.slane %v6497, 3
        %v6500 = vshll.u32 %v6319, 16
        %v6502 = vrot.slane %v6500, 4
        %v6503 = vor.u32 %v6499, %v6502
        %v6504 = vsel %vm1699, %v6496, %v6503
        %v6505 = vshrl.u32 %v6321, 16
        %v6507 = vrot.slane %v6505, 3
        %v6508 = vshll.u32 %v6321, 16
        %v6510 = vrot.slane %v6508, 4
        %v6511 = vor.u32 %v6507, %v6510
        %v6512 = vshrl.u32 %v6323, 16
        %v6514 = vrot.slane %v6512, 3
        %v6515 = vshll.u32 %v6323, 16
        %v6517 = vrot.slane %v6515, 4
        %v6518 = vor.u32 %v6514, %v6517
        %v6519 = vsel %vm1699, %v6511, %v6518
        %v6520 = vshrl.u32 %v6325, 16
        %v6522 = vrot.slane %v6520, 3
        %v6523 = vshll.u32 %v6325, 16
        %v6525 = vrot.slane %v6523, 4
        %v6526 = vor.u32 %v6522, %v6525
        %v6527 = vshrl.u32 %v6327, 16
        %v6529 = vrot.slane %v6527, 3
        %v6530 = vshll.u32 %v6327, 16
        %v6532 = vrot.slane %v6530, 4
        %v6533 = vor.u32 %v6529, %v6532
        %v6534 = vsel %vm1699, %v6526, %v6533
        %v6535 = vshrl.u32 %v6329, 16
        %v6537 = vrot.slane %v6535, 3
        %v6538 = vshll.u32 %v6329, 16
        %v6540 = vrot.slane %v6538, 4
        %v6541 = vor.u32 %v6537, %v6540
        %v6542 = vshrl.u32 %v6331, 16
        %v6544 = vrot.slane %v6542, 3
        %v6545 = vshll.u32 %v6331, 16
        %v6547 = vrot.slane %v6545, 4
        %v6548 = vor.u32 %v6544, %v6547
        %v6549 = vsel %vm1699, %v6541, %v6548
        %v6550 = vshrl.u32 %v6333, 16
        %v6552 = vrot.slane %v6550, 3
        %v6553 = vshll.u32 %v6333, 16
        %v6555 = vrot.slane %v6553, 4
        %v6556 = vor.u32 %v6552, %v6555
        %v6557 = vshrl.u32 %v6335, 16
        %v6559 = vrot.slane %v6557, 3
        %v6560 = vshll.u32 %v6335, 16
        %v6562 = vrot.slane %v6560, 4
        %v6563 = vor.u32 %v6559, %v6562
        %v6564 = vsel %vm1699, %v6556, %v6563
        %v6565 = vshrl.u32 %v6337, 16
        %v6567 = vrot.slane %v6565, 3
        %v6568 = vshll.u32 %v6337, 16
        %v6570 = vrot.slane %v6568, 4
        %v6571 = vor.u32 %v6567, %v6570
        %v6572 = vshrl.u32 %v6339, 16
        %v6574 = vrot.slane %v6572, 3
        %v6575 = vshll.u32 %v6339, 16
        %v6577 = vrot.slane %v6575, 4
        %v6578 = vor.u32 %v6574, %v6577
        %v6579 = vsel %vm1699, %v6571, %v6578
        %v6580 = vunpack.c.l.b16 %v6354
        %v6581 = vunpack.c.h.b16 %v6354
        %v6582 = vunpack.c.l.b16 %v6369
        %v6583 = vunpack.c.h.b16 %v6369
        %v6584 = vunpack.c.l.b16 %v6384
        %v6585 = vunpack.c.h.b16 %v6384
        %v6586 = vunpack.c.l.b16 %v6399
        %v6587 = vunpack.c.h.b16 %v6399
        %v6588 = vunpack.c.l.b16 %v6414
        %v6589 = vunpack.c.h.b16 %v6414
        %v6590 = vunpack.c.l.b16 %v6429
        %v6591 = vunpack.c.h.b16 %v6429
        %v6592 = vunpack.c.l.b16 %v6444
        %v6593 = vunpack.c.h.b16 %v6444
        %v6594 = vunpack.c.l.b16 %v6459
        %v6595 = vunpack.c.h.b16 %v6459
        %v6596 = vunpack.c.l.b16 %v6474
        %v6597 = vunpack.c.h.b16 %v6474
        %v6598 = vunpack.c.l.b16 %v6489
        %v6599 = vunpack.c.h.b16 %v6489
        %v6600 = vunpack.c.l.b16 %v6504
        %v6601 = vunpack.c.h.b16 %v6504
        %v6602 = vunpack.c.l.b16 %v6519
        %v6603 = vunpack.c.h.b16 %v6519
        %v6604 = vunpack.c.l.b16 %v6534
        %v6605 = vunpack.c.h.b16 %v6534
        %v6606 = vunpack.c.l.b16 %v6549
        %v6607 = vunpack.c.h.b16 %v6549
        %v6608 = vunpack.c.l.b16 %v6564
        %v6609 = vunpack.c.h.b16 %v6564
        %v6610 = vunpack.c.l.b16 %v6579
        %v6611 = vunpack.c.h.b16 %v6579
        %v6612 = vpack.c.b16 %v6580, %v6580
        %v6613 = vpack.c.b16 %v6581, %v6581
        %v6614 = vpack.c.b16 %v6582, %v6582
        %v6615 = vpack.c.b16 %v6583, %v6583
        %v6616 = vpack.c.b16 %v6584, %v6584
        %v6617 = vpack.c.b16 %v6585, %v6585
        %v6618 = vpack.c.b16 %v6586, %v6586
        %v6619 = vpack.c.b16 %v6587, %v6587
        %v6620 = vpack.c.b16 %v6588, %v6588
        %v6621 = vpack.c.b16 %v6589, %v6589
        %v6622 = vpack.c.b16 %v6590, %v6590
        %v6623 = vpack.c.b16 %v6591, %v6591
        %v6624 = vpack.c.b16 %v6592, %v6592
        %v6625 = vpack.c.b16 %v6593, %v6593
        %v6626 = vpack.c.b16 %v6594, %v6594
        %v6627 = vpack.c.b16 %v6595, %v6595
        %v6628 = vpack.c.b16 %v6596, %v6596
        %v6629 = vpack.c.b16 %v6597, %v6597
        %v6630 = vpack.c.b16 %v6598, %v6598
        %v6631 = vpack.c.b16 %v6599, %v6599
        %v6632 = vpack.c.b16 %v6600, %v6600
        %v6633 = vpack.c.b16 %v6601, %v6601
        %v6634 = vpack.c.b16 %v6602, %v6602
        %v6635 = vpack.c.b16 %v6603, %v6603
        %v6636 = vpack.c.b16 %v6604, %v6604
        %v6637 = vpack.c.b16 %v6605, %v6605
        %v6638 = vpack.c.b16 %v6606, %v6606
        %v6639 = vpack.c.b16 %v6607, %v6607
        %v6640 = vpack.c.b16 %v6608, %v6608
        %v6641 = vpack.c.b16 %v6609, %v6609
        %v6642 = vpack.c.b16 %v6610, %v6610
        %v6643 = vpack.c.b16 %v6611, %v6611
        %6676 = vst [vmem:[#allocation3] sm:$0xf] %v6612
        %6677 = vst [vmem:[#allocation3 + $0xc] sm:$0xf] %v6613
        %6678 = vst [vmem:[#allocation3 + $0x18] sm:$0xf] %v6614
        %6679 = vst [vmem:[#allocation3 + $0x24] sm:$0xf] %v6615
        %6680 = vst [vmem:[#allocation3 + $0x30] sm:$0xf] %v6616
        %6681 = vst [vmem:[#allocation3 + $0x3c] sm:$0xf] %v6617
        %6682 = vst [vmem:[#allocation3 + $0x48] sm:$0xf] %v6618
        %6683 = vst [vmem:[#allocation3 + $0x54] sm:$0xf] %v6619
        %6684 = vst [vmem:[#allocation3 + $0x60] sm:$0xf] %v6620
        %6685 = vst [vmem:[#allocation3 + $0x6c] sm:$0xf] %v6621
        %6686 = vst [vmem:[#allocation3 + $0x78] sm:$0xf] %v6622
        %6687 = vst [vmem:[#allocation3 + $0x84] sm:$0xf] %v6623
        %6688 = vst [vmem:[#allocation3 + $0x90] sm:$0xf] %v6624
        %6689 = vst [vmem:[#allocation3 + $0x9c] sm:$0xf] %v6625
        %6690 = vst [vmem:[#allocation3 + $0xa8] sm:$0xf] %v6626
        %6691 = vst [vmem:[#allocation3 + $0xb4] sm:$0xf] %v6627
        %6692 = vst [vmem:[#allocation3 + $0xc0] sm:$0xf] %v6628
        %6693 = vst [vmem:[#allocation3 + $0xcc] sm:$0xf] %v6629
        %6694 = vst [vmem:[#allocation3 + $0xd8] sm:$0xf] %v6630
        %6695 = vst [vmem:[#allocation3 + $0xe4] sm:$0xf] %v6631
        %6696 = vst [vmem:[#allocation3 + $0xf0] sm:$0xf] %v6632
        %6697 = vst [vmem:[#allocation3 + $0xfc] sm:$0xf] %v6633
        %6698 = vst [vmem:[#allocation3 + $0x108] sm:$0xf] %v6634
        %6699 = vst [vmem:[#allocation3 + $0x114] sm:$0xf] %v6635
        %6700 = vst [vmem:[#allocation3 + $0x120] sm:$0xf] %v6636
        %6701 = vst [vmem:[#allocation3 + $0x12c] sm:$0xf] %v6637
        %6702 = vst [vmem:[#allocation3 + $0x138] sm:$0xf] %v6638
        %6703 = vst [vmem:[#allocation3 + $0x144] sm:$0xf] %v6639
        %6704 = vst [vmem:[#allocation3 + $0x150] sm:$0xf] %v6640
        %6705 = vst [vmem:[#allocation3 + $0x15c] sm:$0xf] %v6641
        %6706 = vst [vmem:[#allocation3 + $0x168] sm:$0xf] %v6642
        %6707 = vst [vmem:[#allocation3 + $0x174] sm:$0xf] %v6643
        %v6708 = vld [vmem:[%s298 + $0x8] sm:$0xf]
        %v6709 = vld [vmem:[%s298 + $0xc] sm:$0xf]
        %v6710 = vld [vmem:[%s298 + $0x20] sm:$0xf]
        %v6711 = vld [vmem:[%s298 + $0x24] sm:$0xf]
        %v6712 = vld [vmem:[%s298 + $0x38] sm:$0xf]
        %v6713 = vld [vmem:[%s298 + $0x3c] sm:$0xf]
        %v6714 = vld [vmem:[%s298 + $0x50] sm:$0xf]
        %v6715 = vld [vmem:[%s298 + $0x54] sm:$0xf]
        %v6716 = vld [vmem:[%s298 + $0x68] sm:$0xf]
        %v6717 = vld [vmem:[%s298 + $0x6c] sm:$0xf]
        %v6718 = vld [vmem:[%s298 + $0x80] sm:$0xf]
        %v6719 = vld [vmem:[%s298 + $0x84] sm:$0xf]
        %v6720 = vld [vmem:[%s298 + $0x98] sm:$0xf]
        %v6721 = vld [vmem:[%s298 + $0x9c] sm:$0xf]
        %v6722 = vld [vmem:[%s298 + $0xb0] sm:$0xf]
        %v6723 = vld [vmem:[%s298 + $0xb4] sm:$0xf]
        %v6724 = vld [vmem:[%s298 + $0xc8] sm:$0xf]
        %v6725 = vld [vmem:[%s298 + $0xcc] sm:$0xf]
        %v6726 = vld [vmem:[%s298 + $0xe0] sm:$0xf]
        %v6727 = vld [vmem:[%s298 + $0xe4] sm:$0xf]
        %v6728 = vld [vmem:[%s298 + $0xf8] sm:$0xf]
        %v6729 = vld [vmem:[%s298 + $0xfc] sm:$0xf]
        %v6730 = vld [vmem:[%s298 + $0x110] sm:$0xf]
        %v6731 = vld [vmem:[%s298 + $0x114] sm:$0xf]
        %v6732 = vld [vmem:[%s298 + $0x128] sm:$0xf]
        %v6733 = vld [vmem:[%s298 + $0x12c] sm:$0xf]
        %v6734 = vld [vmem:[%s298 + $0x140] sm:$0xf]
        %v6735 = vld [vmem:[%s298 + $0x144] sm:$0xf]
        %v6736 = vld [vmem:[%s298 + $0x158] sm:$0xf]
        %v6737 = vld [vmem:[%s298 + $0x15c] sm:$0xf]
        %v6738 = vld [vmem:[%s298 + $0x170] sm:$0xf]
        %v6739 = vld [vmem:[%s298 + $0x174] sm:$0xf]
        %v6740 = vld [vmem:[%s298 + $0x10] sm:$0x1]
        %v6741 = vld [vmem:[%s298 + $0x28] sm:$0x1]
        %v6742 = vld [vmem:[%s298 + $0x40] sm:$0x1]
        %v6743 = vld [vmem:[%s298 + $0x58] sm:$0x1]
        %v6744 = vld [vmem:[%s298 + $0x70] sm:$0x1]
        %v6745 = vld [vmem:[%s298 + $0x88] sm:$0x1]
        %v6746 = vld [vmem:[%s298 + $0xa0] sm:$0x1]
        %v6747 = vld [vmem:[%s298 + $0xb8] sm:$0x1]
        %v6748 = vld [vmem:[%s298 + $0xd0] sm:$0x1]
        %v6749 = vld [vmem:[%s298 + $0xe8] sm:$0x1]
        %v6750 = vld [vmem:[%s298 + $0x100] sm:$0x1]
        %v6751 = vld [vmem:[%s298 + $0x118] sm:$0x1]
        %v6752 = vld [vmem:[%s298 + $0x130] sm:$0x1]
        %v6753 = vld [vmem:[%s298 + $0x148] sm:$0x1]
        %v6754 = vld [vmem:[%s298 + $0x160] sm:$0x1]
        %v6755 = vld [vmem:[%s298 + $0x178] sm:$0x1]
        %v6756 = vsel %vm528, 0, %v6708
        %v6757 = vsel %vm535, 0, %v6709
        %v6758 = vsel %vm542, 0, %v6740
        %v6759 = vsel %vm528, 0, %v6710
        %v6760 = vsel %vm535, 0, %v6711
        %v6761 = vsel %vm542, 0, %v6741
        %v6762 = vsel %vm528, 0, %v6712
        %v6763 = vsel %vm535, 0, %v6713
        %v6764 = vsel %vm542, 0, %v6742
        %v6765 = vsel %vm528, 0, %v6714
        %v6766 = vsel %vm535, 0, %v6715
        %v6767 = vsel %vm542, 0, %v6743
        %v6768 = vsel %vm528, 0, %v6716
        %v6769 = vsel %vm535, 0, %v6717
        %v6770 = vsel %vm542, 0, %v6744
        %v6771 = vsel %vm528, 0, %v6718
        %v6772 = vsel %vm535, 0, %v6719
        %v6773 = vsel %vm542, 0, %v6745
        %v6774 = vsel %vm528, 0, %v6720
        %v6775 = vsel %vm535, 0, %v6721
        %v6776 = vsel %vm542, 0, %v6746
        %v6777 = vsel %vm528, 0, %v6722
        %v6778 = vsel %vm535, 0, %v6723
        %v6779 = vsel %vm542, 0, %v6747
        %v6780 = vsel %vm528, 0, %v6724
        %v6781 = vsel %vm535, 0, %v6725
        %v6782 = vsel %vm542, 0, %v6748
        %v6783 = vsel %vm528, 0, %v6726
        %v6784 = vsel %vm535, 0, %v6727
        %v6785 = vsel %vm542, 0, %v6749
        %v6786 = vsel %vm528, 0, %v6728
        %v6787 = vsel %vm535, 0, %v6729
        %v6788 = vsel %vm542, 0, %v6750
        %v6789 = vsel %vm528, 0, %v6730
        %v6790 = vsel %vm535, 0, %v6731
        %v6791 = vsel %vm542, 0, %v6751
        %v6792 = vsel %vm528, 0, %v6732
        %v6793 = vsel %vm535, 0, %v6733
        %v6794 = vsel %vm542, 0, %v6752
        %v6795 = vsel %vm528, 0, %v6734
        %v6796 = vsel %vm535, 0, %v6735
        %v6797 = vsel %vm542, 0, %v6753
        %v6798 = vsel %vm528, 0, %v6736
        %v6799 = vsel %vm535, 0, %v6737
        %v6800 = vsel %vm542, 0, %v6754
        %v6801 = vsel %vm528, 0, %v6738
        %v6802 = vsel %vm535, 0, %v6739
        %v6803 = vsel %vm542, 0, %v6755
        %v6804 = vld [vmem:[%s2164 + $0x4] sm:$0x8]
        %v6805 = vld [vmem:[%s2164 + $0x8] sm:$0xf]
        %v6806 = vld [vmem:[%s2164 + $0xc] sm:$0xf]
        %v6807 = vld [vmem:[%s2164 + $0x1c] sm:$0x8]
        %v6808 = vld [vmem:[%s2164 + $0x20] sm:$0xf]
        %v6809 = vld [vmem:[%s2164 + $0x24] sm:$0xf]
        %v6810 = vld [vmem:[%s2164 + $0x34] sm:$0x8]
        %v6811 = vld [vmem:[%s2164 + $0x38] sm:$0xf]
        %v6812 = vld [vmem:[%s2164 + $0x3c] sm:$0xf]
        %v6813 = vld [vmem:[%s2164 + $0x4c] sm:$0x8]
        %v6814 = vld [vmem:[%s2164 + $0x50] sm:$0xf]
        %v6815 = vld [vmem:[%s2164 + $0x54] sm:$0xf]
        %v6816 = vld [vmem:[%s2164 + $0x64] sm:$0x8]
        %v6817 = vld [vmem:[%s2164 + $0x68] sm:$0xf]
        %v6818 = vld [vmem:[%s2164 + $0x6c] sm:$0xf]
        %v6819 = vld [vmem:[%s2164 + $0x7c] sm:$0x8]
        %v6820 = vld [vmem:[%s2164 + $0x80] sm:$0xf]
        %v6821 = vld [vmem:[%s2164 + $0x84] sm:$0xf]
        %v6822 = vld [vmem:[%s2164 + $0x94] sm:$0x8]
        %v6823 = vld [vmem:[%s2164 + $0x98] sm:$0xf]
        %v6824 = vld [vmem:[%s2164 + $0x9c] sm:$0xf]
        %v6825 = vld [vmem:[%s2164 + $0xac] sm:$0x8]
        %v6826 = vld [vmem:[%s2164 + $0xb0] sm:$0xf]
        %v6827 = vld [vmem:[%s2164 + $0xb4] sm:$0xf]
        %v6828 = vld [vmem:[%s2164 + $0xc4] sm:$0x8]
        %v6829 = vld [vmem:[%s2164 + $0xc8] sm:$0xf]
        %v6830 = vld [vmem:[%s2164 + $0xcc] sm:$0xf]
        %v6831 = vld [vmem:[%s2164 + $0xdc] sm:$0x8]
        %v6832 = vld [vmem:[%s2164 + $0xe0] sm:$0xf]
        %v6833 = vld [vmem:[%s2164 + $0xe4] sm:$0xf]
        %v6834 = vld [vmem:[%s2164 + $0xf4] sm:$0x8]
        %v6835 = vld [vmem:[%s2164 + $0xf8] sm:$0xf]
        %v6836 = vld [vmem:[%s2164 + $0xfc] sm:$0xf]
        %v6837 = vld [vmem:[%s2164 + $0x10c] sm:$0x8]
        %v6838 = vld [vmem:[%s2164 + $0x110] sm:$0xf]
        %v6839 = vld [vmem:[%s2164 + $0x114] sm:$0xf]
        %v6840 = vld [vmem:[%s2164 + $0x124] sm:$0x8]
        %v6841 = vld [vmem:[%s2164 + $0x128] sm:$0xf]
        %v6842 = vld [vmem:[%s2164 + $0x12c] sm:$0xf]
        %v6843 = vld [vmem:[%s2164 + $0x13c] sm:$0x8]
        %v6844 = vld [vmem:[%s2164 + $0x140] sm:$0xf]
        %v6845 = vld [vmem:[%s2164 + $0x144] sm:$0xf]
        %v6846 = vld [vmem:[%s2164 + $0x154] sm:$0x8]
        %v6847 = vld [vmem:[%s2164 + $0x158] sm:$0xf]
        %v6848 = vld [vmem:[%s2164 + $0x15c] sm:$0xf]
        %v6849 = vld [vmem:[%s2164 + $0x16c] sm:$0x8]
        %v6850 = vld [vmem:[%s2164 + $0x170] sm:$0xf]
        %v6851 = vld [vmem:[%s2164 + $0x174] sm:$0xf]
        %v6852 = vsel %vm415, 0, %v6804
        %v6853 = vsel %vm422, 0, %v6805
        %v6854 = vsel %vm429, 0, %v6806
        %v6855 = vsel %vm415, 0, %v6807
        %v6856 = vsel %vm422, 0, %v6808
        %v6857 = vsel %vm429, 0, %v6809
        %v6858 = vsel %vm415, 0, %v6810
        %v6859 = vsel %vm422, 0, %v6811
        %v6860 = vsel %vm429, 0, %v6812
        %v6861 = vsel %vm415, 0, %v6813
        %v6862 = vsel %vm422, 0, %v6814
        %v6863 = vsel %vm429, 0, %v6815
        %v6864 = vsel %vm415, 0, %v6816
        %v6865 = vsel %vm422, 0, %v6817
        %v6866 = vsel %vm429, 0, %v6818
        %v6867 = vsel %vm415, 0, %v6819
        %v6868 = vsel %vm422, 0, %v6820
        %v6869 = vsel %vm429, 0, %v6821
        %v6870 = vsel %vm415, 0, %v6822
        %v6871 = vsel %vm422, 0, %v6823
        %v6872 = vsel %vm429, 0, %v6824
        %v6873 = vsel %vm415, 0, %v6825
        %v6874 = vsel %vm422, 0, %v6826
        %v6875 = vsel %vm429, 0, %v6827
        %v6876 = vsel %vm415, 0, %v6828
        %v6877 = vsel %vm422, 0, %v6829
        %v6878 = vsel %vm429, 0, %v6830
        %v6879 = vsel %vm415, 0, %v6831
        %v6880 = vsel %vm422, 0, %v6832
        %v6881 = vsel %vm429, 0, %v6833
        %v6882 = vsel %vm415, 0, %v6834
        %v6883 = vsel %vm422, 0, %v6835
        %v6884 = vsel %vm429, 0, %v6836
        %v6885 = vsel %vm415, 0, %v6837
        %v6886 = vsel %vm422, 0, %v6838
        %v6887 = vsel %vm429, 0, %v6839
        %v6888 = vsel %vm415, 0, %v6840
        %v6889 = vsel %vm422, 0, %v6841
        %v6890 = vsel %vm429, 0, %v6842
        %v6891 = vsel %vm415, 0, %v6843
        %v6892 = vsel %vm422, 0, %v6844
        %v6893 = vsel %vm429, 0, %v6845
        %v6894 = vsel %vm415, 0, %v6846
        %v6895 = vsel %vm422, 0, %v6847
        %v6896 = vsel %vm429, 0, %v6848
        %v6897 = vsel %vm415, 0, %v6849
        %v6898 = vsel %vm422, 0, %v6850
        %v6899 = vsel %vm429, 0, %v6851
        %v6932 = vunpack.c.l.b16 %v6708
        %v6933 = vunpack.c.l.b16 %v6709
        %v6934 = vunpack.c.l.b16 %v6710
        %v6935 = vunpack.c.l.b16 %v6711
        %v6936 = vunpack.c.l.b16 %v6712
        %v6937 = vunpack.c.l.b16 %v6713
        %v6938 = vunpack.c.l.b16 %v6714
        %v6939 = vunpack.c.l.b16 %v6715
        %v6940 = vunpack.c.l.b16 %v6716
        %v6941 = vunpack.c.l.b16 %v6717
        %v6942 = vunpack.c.l.b16 %v6718
        %v6943 = vunpack.c.l.b16 %v6719
        %v6944 = vunpack.c.l.b16 %v6720
        %v6945 = vunpack.c.l.b16 %v6721
        %v6946 = vunpack.c.l.b16 %v6722
        %v6947 = vunpack.c.l.b16 %v6723
        %v6948 = vunpack.c.l.b16 %v6724
        %v6949 = vunpack.c.l.b16 %v6725
        %v6950 = vunpack.c.l.b16 %v6726
        %v6951 = vunpack.c.l.b16 %v6727
        %v6952 = vunpack.c.l.b16 %v6728
        %v6953 = vunpack.c.l.b16 %v6729
        %v6954 = vunpack.c.l.b16 %v6730
        %v6955 = vunpack.c.l.b16 %v6731
        %v6956 = vunpack.c.l.b16 %v6732
        %v6957 = vunpack.c.l.b16 %v6733
        %v6958 = vunpack.c.l.b16 %v6734
        %v6959 = vunpack.c.l.b16 %v6735
        %v6960 = vunpack.c.l.b16 %v6736
        %v6961 = vunpack.c.l.b16 %v6737
        %v6962 = vunpack.c.l.b16 %v6738
        %v6963 = vunpack.c.l.b16 %v6739
        %v6964 = vpack.c.b16 %v6933, %v6932
        %v6965 = vpack.c.b16 %v6935, %v6934
        %v6966 = vpack.c.b16 %v6937, %v6936
        %v6967 = vpack.c.b16 %v6939, %v6938
        %v6968 = vpack.c.b16 %v6941, %v6940
        %v6969 = vpack.c.b16 %v6943, %v6942
        %v6970 = vpack.c.b16 %v6945, %v6944
        %v6971 = vpack.c.b16 %v6947, %v6946
        %v6972 = vpack.c.b16 %v6949, %v6948
        %v6973 = vpack.c.b16 %v6951, %v6950
        %v6974 = vpack.c.b16 %v6953, %v6952
        %v6975 = vpack.c.b16 %v6955, %v6954
        %v6976 = vpack.c.b16 %v6957, %v6956
        %v6977 = vpack.c.b16 %v6959, %v6958
        %v6978 = vpack.c.b16 %v6961, %v6960
        %v6979 = vpack.c.b16 %v6963, %v6962
        %v7028 = vunpack.c.l.b16 %v6756
        %v7029 = vunpack.c.l.b16 %v6757
        %v7030 = vunpack.c.l.b16 %v6758
        %v7031 = vunpack.c.l.b16 %v6759
        %v7032 = vunpack.c.l.b16 %v6760
        %v7033 = vunpack.c.l.b16 %v6761
        %v7034 = vunpack.c.l.b16 %v6762
        %v7035 = vunpack.c.l.b16 %v6763
        %v7036 = vunpack.c.l.b16 %v6764
        %v7037 = vunpack.c.l.b16 %v6765
        %v7038 = vunpack.c.l.b16 %v6766
        %v7039 = vunpack.c.l.b16 %v6767
        %v7040 = vunpack.c.l.b16 %v6768
        %v7041 = vunpack.c.l.b16 %v6769
        %v7042 = vunpack.c.l.b16 %v6770
        %v7043 = vunpack.c.l.b16 %v6771
        %v7044 = vunpack.c.l.b16 %v6772
        %v7045 = vunpack.c.l.b16 %v6773
        %v7046 = vunpack.c.l.b16 %v6774
        %v7047 = vunpack.c.l.b16 %v6775
        %v7048 = vunpack.c.l.b16 %v6776
        %v7049 = vunpack.c.l.b16 %v6777
        %v7050 = vunpack.c.l.b16 %v6778
        %v7051 = vunpack.c.l.b16 %v6779
        %v7052 = vunpack.c.l.b16 %v6780
        %v7053 = vunpack.c.l.b16 %v6781
        %v7054 = vunpack.c.l.b16 %v6782
        %v7055 = vunpack.c.l.b16 %v6783
        %v7056 = vunpack.c.l.b16 %v6784
        %v7057 = vunpack.c.l.b16 %v6785
        %v7058 = vunpack.c.l.b16 %v6786
        %v7059 = vunpack.c.l.b16 %v6787
        %v7060 = vunpack.c.l.b16 %v6788
        %v7061 = vunpack.c.l.b16 %v6789
        %v7062 = vunpack.c.l.b16 %v6790
        %v7063 = vunpack.c.l.b16 %v6791
        %v7064 = vunpack.c.l.b16 %v6792
        %v7065 = vunpack.c.l.b16 %v6793
        %v7066 = vunpack.c.l.b16 %v6794
        %v7067 = vunpack.c.l.b16 %v6795
        %v7068 = vunpack.c.l.b16 %v6796
        %v7069 = vunpack.c.l.b16 %v6797
        %v7070 = vunpack.c.l.b16 %v6798
        %v7071 = vunpack.c.l.b16 %v6799
        %v7072 = vunpack.c.l.b16 %v6800
        %v7073 = vunpack.c.l.b16 %v6801
        %v7074 = vunpack.c.l.b16 %v6802
        %v7075 = vunpack.c.l.b16 %v6803
        %v7076 = vpack.c.b16 %v7029, %v7028
        %v7077 = vpack.c.b16 %v7030, %v7030
        %v7078 = vpack.c.b16 %v7032, %v7031
        %v7079 = vpack.c.b16 %v7033, %v7033
        %v7080 = vpack.c.b16 %v7035, %v7034
        %v7081 = vpack.c.b16 %v7036, %v7036
        %v7082 = vpack.c.b16 %v7038, %v7037
        %v7083 = vpack.c.b16 %v7039, %v7039
        %v7084 = vpack.c.b16 %v7041, %v7040
        %v7085 = vpack.c.b16 %v7042, %v7042
        %v7086 = vpack.c.b16 %v7044, %v7043
        %v7087 = vpack.c.b16 %v7045, %v7045
        %v7088 = vpack.c.b16 %v7047, %v7046
        %v7089 = vpack.c.b16 %v7048, %v7048
        %v7090 = vpack.c.b16 %v7050, %v7049
        %v7091 = vpack.c.b16 %v7051, %v7051
        %v7092 = vpack.c.b16 %v7053, %v7052
        %v7093 = vpack.c.b16 %v7054, %v7054
        %v7094 = vpack.c.b16 %v7056, %v7055
        %v7095 = vpack.c.b16 %v7057, %v7057
        %v7096 = vpack.c.b16 %v7059, %v7058
        %v7097 = vpack.c.b16 %v7060, %v7060
        %v7098 = vpack.c.b16 %v7062, %v7061
        %v7099 = vpack.c.b16 %v7063, %v7063
        %v7100 = vpack.c.b16 %v7065, %v7064
        %v7101 = vpack.c.b16 %v7066, %v7066
        %v7102 = vpack.c.b16 %v7068, %v7067
        %v7103 = vpack.c.b16 %v7069, %v7069
        %v7104 = vpack.c.b16 %v7071, %v7070
        %v7105 = vpack.c.b16 %v7072, %v7072
        %v7106 = vpack.c.b16 %v7074, %v7073
        %v7107 = vpack.c.b16 %v7075, %v7075
        %v7109 = vshrl.u32 %v7076, 16
        %v7111 = vshll.u32 %v7076, 16
        %v7113 = vrot.slane %v7111, 1
        %v7114 = vor.u32 %v7109, %v7113
        %v7116 = vshll.u32 %v7077, 16
        %v7118 = vrot.slane %v7116, 1
        %v7119 = vsel %vm2469, %v7114, %v7118
        %v7121 = vshrl.u32 %v7078, 16
        %v7123 = vshll.u32 %v7078, 16
        %v7125 = vrot.slane %v7123, 1
        %v7126 = vor.u32 %v7121, %v7125
        %v7128 = vshll.u32 %v7079, 16
        %v7130 = vrot.slane %v7128, 1
        %v7131 = vsel %vm2469, %v7126, %v7130
        %v7133 = vshrl.u32 %v7080, 16
        %v7135 = vshll.u32 %v7080, 16
        %v7137 = vrot.slane %v7135, 1
        %v7138 = vor.u32 %v7133, %v7137
        %v7140 = vshll.u32 %v7081, 16
        %v7142 = vrot.slane %v7140, 1
        %v7143 = vsel %vm2469, %v7138, %v7142
        %v7145 = vshrl.u32 %v7082, 16
        %v7147 = vshll.u32 %v7082, 16
        %v7149 = vrot.slane %v7147, 1
        %v7150 = vor.u32 %v7145, %v7149
        %v7152 = vshll.u32 %v7083, 16
        %v7154 = vrot.slane %v7152, 1
        %v7155 = vsel %vm2469, %v7150, %v7154
        %v7157 = vshrl.u32 %v7084, 16
        %v7159 = vshll.u32 %v7084, 16
        %v7161 = vrot.slane %v7159, 1
        %v7162 = vor.u32 %v7157, %v7161
        %v7164 = vshll.u32 %v7085, 16
        %v7166 = vrot.slane %v7164, 1
        %v7167 = vsel %vm2469, %v7162, %v7166
        %v7169 = vshrl.u32 %v7086, 16
        %v7171 = vshll.u32 %v7086, 16
        %v7173 = vrot.slane %v7171, 1
        %v7174 = vor.u32 %v7169, %v7173
        %v7176 = vshll.u32 %v7087, 16
        %v7178 = vrot.slane %v7176, 1
        %v7179 = vsel %vm2469, %v7174, %v7178
        %v7181 = vshrl.u32 %v7088, 16
        %v7183 = vshll.u32 %v7088, 16
        %v7185 = vrot.slane %v7183, 1
        %v7186 = vor.u32 %v7181, %v7185
        %v7188 = vshll.u32 %v7089, 16
        %v7190 = vrot.slane %v7188, 1
        %v7191 = vsel %vm2469, %v7186, %v7190
        %v7193 = vshrl.u32 %v7090, 16
        %v7195 = vshll.u32 %v7090, 16
        %v7197 = vrot.slane %v7195, 1
        %v7198 = vor.u32 %v7193, %v7197
        %v7200 = vshll.u32 %v7091, 16
        %v7202 = vrot.slane %v7200, 1
        %v7203 = vsel %vm2469, %v7198, %v7202
        %v7205 = vshrl.u32 %v7092, 16
        %v7207 = vshll.u32 %v7092, 16
        %v7209 = vrot.slane %v7207, 1
        %v7210 = vor.u32 %v7205, %v7209
        %v7212 = vshll.u32 %v7093, 16
        %v7214 = vrot.slane %v7212, 1
        %v7215 = vsel %vm2469, %v7210, %v7214
        %v7217 = vshrl.u32 %v7094, 16
        %v7219 = vshll.u32 %v7094, 16
        %v7221 = vrot.slane %v7219, 1
        %v7222 = vor.u32 %v7217, %v7221
        %v7224 = vshll.u32 %v7095, 16
        %v7226 = vrot.slane %v7224, 1
        %v7227 = vsel %vm2469, %v7222, %v7226
        %v7229 = vshrl.u32 %v7096, 16
        %v7231 = vshll.u32 %v7096, 16
        %v7233 = vrot.slane %v7231, 1
        %v7234 = vor.u32 %v7229, %v7233
        %v7236 = vshll.u32 %v7097, 16
        %v7238 = vrot.slane %v7236, 1
        %v7239 = vsel %vm2469, %v7234, %v7238
        %v7241 = vshrl.u32 %v7098, 16
        %v7243 = vshll.u32 %v7098, 16
        %v7245 = vrot.slane %v7243, 1
        %v7246 = vor.u32 %v7241, %v7245
        %v7248 = vshll.u32 %v7099, 16
        %v7250 = vrot.slane %v7248, 1
        %v7251 = vsel %vm2469, %v7246, %v7250
        %v7253 = vshrl.u32 %v7100, 16
        %v7255 = vshll.u32 %v7100, 16
        %v7257 = vrot.slane %v7255, 1
        %v7258 = vor.u32 %v7253, %v7257
        %v7260 = vshll.u32 %v7101, 16
        %v7262 = vrot.slane %v7260, 1
        %v7263 = vsel %vm2469, %v7258, %v7262
        %v7265 = vshrl.u32 %v7102, 16
        %v7267 = vshll.u32 %v7102, 16
        %v7269 = vrot.slane %v7267, 1
        %v7270 = vor.u32 %v7265, %v7269
        %v7272 = vshll.u32 %v7103, 16
        %v7274 = vrot.slane %v7272, 1
        %v7275 = vsel %vm2469, %v7270, %v7274
        %v7277 = vshrl.u32 %v7104, 16
        %v7279 = vshll.u32 %v7104, 16
        %v7281 = vrot.slane %v7279, 1
        %v7282 = vor.u32 %v7277, %v7281
        %v7284 = vshll.u32 %v7105, 16
        %v7286 = vrot.slane %v7284, 1
        %v7287 = vsel %vm2469, %v7282, %v7286
        %v7289 = vshrl.u32 %v7106, 16
        %v7291 = vshll.u32 %v7106, 16
        %v7293 = vrot.slane %v7291, 1
        %v7294 = vor.u32 %v7289, %v7293
        %v7296 = vshll.u32 %v7107, 16
        %v7298 = vrot.slane %v7296, 1
        %v7299 = vsel %vm2469, %v7294, %v7298
        %7300 = vrot.lane.b32.xlu0 %v7119, 32
        %v7301 = vpop.permute.xlu0 %7300
        %7302 = vrot.lane.b32.xlu0 %v7131, 32
        %v7303 = vpop.permute.xlu0 %7302
        %7304 = vrot.lane.b32.xlu0 %v7143, 32
        %v7305 = vpop.permute.xlu0 %7304
        %7306 = vrot.lane.b32.xlu0 %v7155, 32
        %v7307 = vpop.permute.xlu0 %7306
        %7308 = vrot.lane.b32.xlu0 %v7167, 32
        %v7309 = vpop.permute.xlu0 %7308
        %7310 = vrot.lane.b32.xlu0 %v7179, 32
        %v7311 = vpop.permute.xlu0 %7310
        %7312 = vrot.lane.b32.xlu0 %v7191, 32
        %v7313 = vpop.permute.xlu0 %7312
        %7314 = vrot.lane.b32.xlu0 %v7203, 32
        %v7315 = vpop.permute.xlu0 %7314
        %7316 = vrot.lane.b32.xlu0 %v7215, 32
        %v7317 = vpop.permute.xlu0 %7316
        %7318 = vrot.lane.b32.xlu0 %v7227, 32
        %v7319 = vpop.permute.xlu0 %7318
        %7320 = vrot.lane.b32.xlu0 %v7239, 32
        %v7321 = vpop.permute.xlu0 %7320
        %7322 = vrot.lane.b32.xlu0 %v7251, 32
        %v7323 = vpop.permute.xlu0 %7322
        %7324 = vrot.lane.b32.xlu0 %v7263, 32
        %v7325 = vpop.permute.xlu0 %7324
        %7326 = vrot.lane.b32.xlu0 %v7275, 32
        %v7327 = vpop.permute.xlu0 %7326
        %7328 = vrot.lane.b32.xlu0 %v7287, 32
        %v7329 = vpop.permute.xlu0 %7328
        %7330 = vrot.lane.b32.xlu0 %v7299, 32
        %v7331 = vpop.permute.xlu0 %7330
        %v7380 = vunpack.c.l.b16 %v6852
        %v7381 = vunpack.c.l.b16 %v6853
        %v7382 = vunpack.c.l.b16 %v6854
        %v7383 = vunpack.c.l.b16 %v6855
        %v7384 = vunpack.c.l.b16 %v6856
        %v7385 = vunpack.c.l.b16 %v6857
        %v7386 = vunpack.c.l.b16 %v6858
        %v7387 = vunpack.c.l.b16 %v6859
        %v7388 = vunpack.c.l.b16 %v6860
        %v7389 = vunpack.c.l.b16 %v6861
        %v7390 = vunpack.c.l.b16 %v6862
        %v7391 = vunpack.c.l.b16 %v6863
        %v7392 = vunpack.c.l.b16 %v6864
        %v7393 = vunpack.c.l.b16 %v6865
        %v7394 = vunpack.c.l.b16 %v6866
        %v7395 = vunpack.c.l.b16 %v6867
        %v7396 = vunpack.c.l.b16 %v6868
        %v7397 = vunpack.c.l.b16 %v6869
        %v7398 = vunpack.c.l.b16 %v6870
        %v7399 = vunpack.c.l.b16 %v6871
        %v7400 = vunpack.c.l.b16 %v6872
        %v7401 = vunpack.c.l.b16 %v6873
        %v7402 = vunpack.c.l.b16 %v6874
        %v7403 = vunpack.c.l.b16 %v6875
        %v7404 = vunpack.c.l.b16 %v6876
        %v7405 = vunpack.c.l.b16 %v6877
        %v7406 = vunpack.c.l.b16 %v6878
        %v7407 = vunpack.c.l.b16 %v6879
        %v7408 = vunpack.c.l.b16 %v6880
        %v7409 = vunpack.c.l.b16 %v6881
        %v7410 = vunpack.c.l.b16 %v6882
        %v7411 = vunpack.c.l.b16 %v6883
        %v7412 = vunpack.c.l.b16 %v6884
        %v7413 = vunpack.c.l.b16 %v6885
        %v7414 = vunpack.c.l.b16 %v6886
        %v7415 = vunpack.c.l.b16 %v6887
        %v7416 = vunpack.c.l.b16 %v6888
        %v7417 = vunpack.c.l.b16 %v6889
        %v7418 = vunpack.c.l.b16 %v6890
        %v7419 = vunpack.c.l.b16 %v6891
        %v7420 = vunpack.c.l.b16 %v6892
        %v7421 = vunpack.c.l.b16 %v6893
        %v7422 = vunpack.c.l.b16 %v6894
        %v7423 = vunpack.c.l.b16 %v6895
        %v7424 = vunpack.c.l.b16 %v6896
        %v7425 = vunpack.c.l.b16 %v6897
        %v7426 = vunpack.c.l.b16 %v6898
        %v7427 = vunpack.c.l.b16 %v6899
        %v7428 = vpack.c.b16 %v7381, %v7380
        %v7429 = vpack.c.b16 %v7382, %v7382
        %v7430 = vpack.c.b16 %v7384, %v7383
        %v7431 = vpack.c.b16 %v7385, %v7385
        %v7432 = vpack.c.b16 %v7387, %v7386
        %v7433 = vpack.c.b16 %v7388, %v7388
        %v7434 = vpack.c.b16 %v7390, %v7389
        %v7435 = vpack.c.b16 %v7391, %v7391
        %v7436 = vpack.c.b16 %v7393, %v7392
        %v7437 = vpack.c.b16 %v7394, %v7394
        %v7438 = vpack.c.b16 %v7396, %v7395
        %v7439 = vpack.c.b16 %v7397, %v7397
        %v7440 = vpack.c.b16 %v7399, %v7398
        %v7441 = vpack.c.b16 %v7400, %v7400
        %v7442 = vpack.c.b16 %v7402, %v7401
        %v7443 = vpack.c.b16 %v7403, %v7403
        %v7444 = vpack.c.b16 %v7405, %v7404
        %v7445 = vpack.c.b16 %v7406, %v7406
        %v7446 = vpack.c.b16 %v7408, %v7407
        %v7447 = vpack.c.b16 %v7409, %v7409
        %v7448 = vpack.c.b16 %v7411, %v7410
        %v7449 = vpack.c.b16 %v7412, %v7412
        %v7450 = vpack.c.b16 %v7414, %v7413
        %v7451 = vpack.c.b16 %v7415, %v7415
        %v7452 = vpack.c.b16 %v7417, %v7416
        %v7453 = vpack.c.b16 %v7418, %v7418
        %v7454 = vpack.c.b16 %v7420, %v7419
        %v7455 = vpack.c.b16 %v7421, %v7421
        %v7456 = vpack.c.b16 %v7423, %v7422
        %v7457 = vpack.c.b16 %v7424, %v7424
        %v7458 = vpack.c.b16 %v7426, %v7425
        %v7459 = vpack.c.b16 %v7427, %v7427
        %v7461 = vshrl.u32 %v7428, 16
        %v7463 = vrot.slane %v7461, 3
        %v7464 = vshll.u32 %v7428, 16
        %v7466 = vrot.slane %v7464, 4
        %v7467 = vor.u32 %v7463, %v7466
        %v7469 = vshrl.u32 %v7429, 16
        %v7471 = vrot.slane %v7469, 3
        %v7472 = vshll.u32 %v7429, 16
        %v7474 = vrot.slane %v7472, 4
        %v7475 = vor.u32 %v7471, %v7474
        %v7476 = vsel %vm1699, %v7467, %v7475
        %v7478 = vshrl.u32 %v7430, 16
        %v7480 = vrot.slane %v7478, 3
        %v7481 = vshll.u32 %v7430, 16
        %v7483 = vrot.slane %v7481, 4
        %v7484 = vor.u32 %v7480, %v7483
        %v7486 = vshrl.u32 %v7431, 16
        %v7488 = vrot.slane %v7486, 3
        %v7489 = vshll.u32 %v7431, 16
        %v7491 = vrot.slane %v7489, 4
        %v7492 = vor.u32 %v7488, %v7491
        %v7493 = vsel %vm1699, %v7484, %v7492
        %v7495 = vshrl.u32 %v7432, 16
        %v7497 = vrot.slane %v7495, 3
        %v7498 = vshll.u32 %v7432, 16
        %v7500 = vrot.slane %v7498, 4
        %v7501 = vor.u32 %v7497, %v7500
        %v7503 = vshrl.u32 %v7433, 16
        %v7505 = vrot.slane %v7503, 3
        %v7506 = vshll.u32 %v7433, 16
        %v7508 = vrot.slane %v7506, 4
        %v7509 = vor.u32 %v7505, %v7508
        %v7510 = vsel %vm1699, %v7501, %v7509
        %v7512 = vshrl.u32 %v7434, 16
        %v7514 = vrot.slane %v7512, 3
        %v7515 = vshll.u32 %v7434, 16
        %v7517 = vrot.slane %v7515, 4
        %v7518 = vor.u32 %v7514, %v7517
        %v7520 = vshrl.u32 %v7435, 16
        %v7522 = vrot.slane %v7520, 3
        %v7523 = vshll.u32 %v7435, 16
        %v7525 = vrot.slane %v7523, 4
        %v7526 = vor.u32 %v7522, %v7525
        %v7527 = vsel %vm1699, %v7518, %v7526
        %v7529 = vshrl.u32 %v7436, 16
        %v7531 = vrot.slane %v7529, 3
        %v7532 = vshll.u32 %v7436, 16
        %v7534 = vrot.slane %v7532, 4
        %v7535 = vor.u32 %v7531, %v7534
        %v7537 = vshrl.u32 %v7437, 16
        %v7539 = vrot.slane %v7537, 3
        %v7540 = vshll.u32 %v7437, 16
        %v7542 = vrot.slane %v7540, 4
        %v7543 = vor.u32 %v7539, %v7542
        %v7544 = vsel %vm1699, %v7535, %v7543
        %v7546 = vshrl.u32 %v7438, 16
        %v7548 = vrot.slane %v7546, 3
        %v7549 = vshll.u32 %v7438, 16
        %v7551 = vrot.slane %v7549, 4
        %v7552 = vor.u32 %v7548, %v7551
        %v7554 = vshrl.u32 %v7439, 16
        %v7556 = vrot.slane %v7554, 3
        %v7557 = vshll.u32 %v7439, 16
        %v7559 = vrot.slane %v7557, 4
        %v7560 = vor.u32 %v7556, %v7559
        %v7561 = vsel %vm1699, %v7552, %v7560
        %v7563 = vshrl.u32 %v7440, 16
        %v7565 = vrot.slane %v7563, 3
        %v7566 = vshll.u32 %v7440, 16
        %v7568 = vrot.slane %v7566, 4
        %v7569 = vor.u32 %v7565, %v7568
        %v7571 = vshrl.u32 %v7441, 16
        %v7573 = vrot.slane %v7571, 3
        %v7574 = vshll.u32 %v7441, 16
        %v7576 = vrot.slane %v7574, 4
        %v7577 = vor.u32 %v7573, %v7576
        %v7578 = vsel %vm1699, %v7569, %v7577
        %v7580 = vshrl.u32 %v7442, 16
        %v7582 = vrot.slane %v7580, 3
        %v7583 = vshll.u32 %v7442, 16
        %v7585 = vrot.slane %v7583, 4
        %v7586 = vor.u32 %v7582, %v7585
        %v7588 = vshrl.u32 %v7443, 16
        %v7590 = vrot.slane %v7588, 3
        %v7591 = vshll.u32 %v7443, 16
        %v7593 = vrot.slane %v7591, 4
        %v7594 = vor.u32 %v7590, %v7593
        %v7595 = vsel %vm1699, %v7586, %v7594
        %v7597 = vshrl.u32 %v7444, 16
        %v7599 = vrot.slane %v7597, 3
        %v7600 = vshll.u32 %v7444, 16
        %v7602 = vrot.slane %v7600, 4
        %v7603 = vor.u32 %v7599, %v7602
        %v7605 = vshrl.u32 %v7445, 16
        %v7607 = vrot.slane %v7605, 3
        %v7608 = vshll.u32 %v7445, 16
        %v7610 = vrot.slane %v7608, 4
        %v7611 = vor.u32 %v7607, %v7610
        %v7612 = vsel %vm1699, %v7603, %v7611
        %v7614 = vshrl.u32 %v7446, 16
        %v7616 = vrot.slane %v7614, 3
        %v7617 = vshll.u32 %v7446, 16
        %v7619 = vrot.slane %v7617, 4
        %v7620 = vor.u32 %v7616, %v7619
        %v7622 = vshrl.u32 %v7447, 16
        %v7624 = vrot.slane %v7622, 3
        %v7625 = vshll.u32 %v7447, 16
        %v7627 = vrot.slane %v7625, 4
        %v7628 = vor.u32 %v7624, %v7627
        %v7629 = vsel %vm1699, %v7620, %v7628
        %v7631 = vshrl.u32 %v7448, 16
        %v7633 = vrot.slane %v7631, 3
        %v7634 = vshll.u32 %v7448, 16
        %v7636 = vrot.slane %v7634, 4
        %v7637 = vor.u32 %v7633, %v7636
        %v7639 = vshrl.u32 %v7449, 16
        %v7641 = vrot.slane %v7639, 3
        %v7642 = vshll.u32 %v7449, 16
        %v7644 = vrot.slane %v7642, 4
        %v7645 = vor.u32 %v7641, %v7644
        %v7646 = vsel %vm1699, %v7637, %v7645
        %v7648 = vshrl.u32 %v7450, 16
        %v7650 = vrot.slane %v7648, 3
        %v7651 = vshll.u32 %v7450, 16
        %v7653 = vrot.slane %v7651, 4
        %v7654 = vor.u32 %v7650, %v7653
        %v7656 = vshrl.u32 %v7451, 16
        %v7658 = vrot.slane %v7656, 3
        %v7659 = vshll.u32 %v7451, 16
        %v7661 = vrot.slane %v7659, 4
        %v7662 = vor.u32 %v7658, %v7661
        %v7663 = vsel %vm1699, %v7654, %v7662
        %v7665 = vshrl.u32 %v7452, 16
        %v7667 = vrot.slane %v7665, 3
        %v7668 = vshll.u32 %v7452, 16
        %v7670 = vrot.slane %v7668, 4
        %v7671 = vor.u32 %v7667, %v7670
        %v7673 = vshrl.u32 %v7453, 16
        %v7675 = vrot.slane %v7673, 3
        %v7676 = vshll.u32 %v7453, 16
        %v7678 = vrot.slane %v7676, 4
        %v7679 = vor.u32 %v7675, %v7678
        %v7680 = vsel %vm1699, %v7671, %v7679
        %v7682 = vshrl.u32 %v7454, 16
        %v7684 = vrot.slane %v7682, 3
        %v7685 = vshll.u32 %v7454, 16
        %v7687 = vrot.slane %v7685, 4
        %v7688 = vor.u32 %v7684, %v7687
        %v7690 = vshrl.u32 %v7455, 16
        %v7692 = vrot.slane %v7690, 3
        %v7693 = vshll.u32 %v7455, 16
        %v7695 = vrot.slane %v7693, 4
        %v7696 = vor.u32 %v7692, %v7695
        %v7697 = vsel %vm1699, %v7688, %v7696
        %v7699 = vshrl.u32 %v7456, 16
        %v7701 = vrot.slane %v7699, 3
        %v7702 = vshll.u32 %v7456, 16
        %v7704 = vrot.slane %v7702, 4
        %v7705 = vor.u32 %v7701, %v7704
        %v7707 = vshrl.u32 %v7457, 16
        %v7709 = vrot.slane %v7707, 3
        %v7710 = vshll.u32 %v7457, 16
        %v7712 = vrot.slane %v7710, 4
        %v7713 = vor.u32 %v7709, %v7712
        %v7714 = vsel %vm1699, %v7705, %v7713
        %v7716 = vshrl.u32 %v7458, 16
        %v7718 = vrot.slane %v7716, 3
        %v7719 = vshll.u32 %v7458, 16
        %v7721 = vrot.slane %v7719, 4
        %v7722 = vor.u32 %v7718, %v7721
        %v7724 = vshrl.u32 %v7459, 16
        %v7726 = vrot.slane %v7724, 3
        %v7727 = vshll.u32 %v7459, 16
        %v7729 = vrot.slane %v7727, 4
        %v7730 = vor.u32 %v7726, %v7729
        %v7731 = vsel %vm1699, %v7722, %v7730
        %7732 = vrot.lane.b32.xlu0 %v7476, 64
        %v7733 = vpop.permute.xlu0 %7732
        %7734 = vrot.lane.b32.xlu0 %v7493, 64
        %v7735 = vpop.permute.xlu0 %7734
        %7736 = vrot.lane.b32.xlu0 %v7510, 64
        %v7737 = vpop.permute.xlu0 %7736
        %7738 = vrot.lane.b32.xlu0 %v7527, 64
        %v7739 = vpop.permute.xlu0 %7738
        %7740 = vrot.lane.b32.xlu0 %v7544, 64
        %v7741 = vpop.permute.xlu0 %7740
        %7742 = vrot.lane.b32.xlu0 %v7561, 64
        %v7743 = vpop.permute.xlu0 %7742
        %7744 = vrot.lane.b32.xlu0 %v7578, 64
        %v7745 = vpop.permute.xlu0 %7744
        %7746 = vrot.lane.b32.xlu0 %v7595, 64
        %v7747 = vpop.permute.xlu0 %7746
        %7748 = vrot.lane.b32.xlu0 %v7612, 64
        %v7749 = vpop.permute.xlu0 %7748
        %7750 = vrot.lane.b32.xlu0 %v7629, 64
        %v7751 = vpop.permute.xlu0 %7750
        %7752 = vrot.lane.b32.xlu0 %v7646, 64
        %v7753 = vpop.permute.xlu0 %7752
        %7754 = vrot.lane.b32.xlu0 %v7663, 64
        %v7755 = vpop.permute.xlu0 %7754
        %7756 = vrot.lane.b32.xlu0 %v7680, 64
        %v7757 = vpop.permute.xlu0 %7756
        %7758 = vrot.lane.b32.xlu0 %v7697, 64
        %v7759 = vpop.permute.xlu0 %7758
        %7760 = vrot.lane.b32.xlu0 %v7714, 64
        %v7761 = vpop.permute.xlu0 %7760
        %7762 = vrot.lane.b32.xlu0 %v7731, 64
        %v7763 = vpop.permute.xlu0 %7762
        %v7796 = vunpack.c.l.b16 %v6805
        %v7797 = vunpack.c.l.b16 %v6806
        %v7798 = vunpack.c.l.b16 %v6808
        %v7799 = vunpack.c.l.b16 %v6809
        %v7800 = vunpack.c.l.b16 %v6811
        %v7801 = vunpack.c.l.b16 %v6812
        %v7802 = vunpack.c.l.b16 %v6814
        %v7803 = vunpack.c.l.b16 %v6815
        %v7804 = vunpack.c.l.b16 %v6817
        %v7805 = vunpack.c.l.b16 %v6818
        %v7806 = vunpack.c.l.b16 %v6820
        %v7807 = vunpack.c.l.b16 %v6821
        %v7808 = vunpack.c.l.b16 %v6823
        %v7809 = vunpack.c.l.b16 %v6824
        %v7810 = vunpack.c.l.b16 %v6826
        %v7811 = vunpack.c.l.b16 %v6827
        %v7812 = vunpack.c.l.b16 %v6829
        %v7813 = vunpack.c.l.b16 %v6830
        %v7814 = vunpack.c.l.b16 %v6832
        %v7815 = vunpack.c.l.b16 %v6833
        %v7816 = vunpack.c.l.b16 %v6835
        %v7817 = vunpack.c.l.b16 %v6836
        %v7818 = vunpack.c.l.b16 %v6838
        %v7819 = vunpack.c.l.b16 %v6839
        %v7820 = vunpack.c.l.b16 %v6841
        %v7821 = vunpack.c.l.b16 %v6842
        %v7822 = vunpack.c.l.b16 %v6844
        %v7823 = vunpack.c.l.b16 %v6845
        %v7824 = vunpack.c.l.b16 %v6847
        %v7825 = vunpack.c.l.b16 %v6848
        %v7826 = vunpack.c.l.b16 %v6850
        %v7827 = vunpack.c.l.b16 %v6851
        %v7828 = vpack.c.b16 %v7797, %v7796
        %v7829 = vpack.c.b16 %v7799, %v7798
        %v7830 = vpack.c.b16 %v7801, %v7800
        %v7831 = vpack.c.b16 %v7803, %v7802
        %v7832 = vpack.c.b16 %v7805, %v7804
        %v7833 = vpack.c.b16 %v7807, %v7806
        %v7834 = vpack.c.b16 %v7809, %v7808
        %v7835 = vpack.c.b16 %v7811, %v7810
        %v7836 = vpack.c.b16 %v7813, %v7812
        %v7837 = vpack.c.b16 %v7815, %v7814
        %v7838 = vpack.c.b16 %v7817, %v7816
        %v7839 = vpack.c.b16 %v7819, %v7818
        %v7840 = vpack.c.b16 %v7821, %v7820
        %v7841 = vpack.c.b16 %v7823, %v7822
        %v7842 = vpack.c.b16 %v7825, %v7824
        %v7843 = vpack.c.b16 %v7827, %v7826
        %7844 = vrot.lane.b32.xlu0 %v7828, 96
        %v7845 = vpop.permute.xlu0 %7844
        %7846 = vrot.lane.b32.xlu0 %v7829, 96
        %v7847 = vpop.permute.xlu0 %7846
        %7848 = vrot.lane.b32.xlu0 %v7830, 96
        %v7849 = vpop.permute.xlu0 %7848
        %7850 = vrot.lane.b32.xlu0 %v7831, 96
        %v7851 = vpop.permute.xlu0 %7850
        %7852 = vrot.lane.b32.xlu0 %v7832, 96
        %v7853 = vpop.permute.xlu0 %7852
        %7854 = vrot.lane.b32.xlu0 %v7833, 96
        %v7855 = vpop.permute.xlu0 %7854
        %7856 = vrot.lane.b32.xlu0 %v7834, 96
        %v7857 = vpop.permute.xlu0 %7856
        %7858 = vrot.lane.b32.xlu0 %v7835, 96
        %v7859 = vpop.permute.xlu0 %7858
        %7860 = vrot.lane.b32.xlu0 %v7836, 96
        %v7861 = vpop.permute.xlu0 %7860
        %7862 = vrot.lane.b32.xlu0 %v7837, 96
        %v7863 = vpop.permute.xlu0 %7862
        %7864 = vrot.lane.b32.xlu0 %v7838, 96
        %v7865 = vpop.permute.xlu0 %7864
        %7866 = vrot.lane.b32.xlu0 %v7839, 96
        %v7867 = vpop.permute.xlu0 %7866
        %7868 = vrot.lane.b32.xlu0 %v7840, 96
        %v7869 = vpop.permute.xlu0 %7868
        %7870 = vrot.lane.b32.xlu0 %v7841, 96
        %v7871 = vpop.permute.xlu0 %7870
        %7872 = vrot.lane.b32.xlu0 %v7842, 96
        %v7873 = vpop.permute.xlu0 %7872
        %7874 = vrot.lane.b32.xlu0 %v7843, 96
        %v7875 = vpop.permute.xlu0 %7874
        %v7878 = vsel %vm1488, %v6964, %v7301
        %v7881 = vsel %vm1488, %v6965, %v7303
        %v7884 = vsel %vm1488, %v6966, %v7305
        %v7887 = vsel %vm1488, %v6967, %v7307
        %v7890 = vsel %vm1488, %v6968, %v7309
        %v7893 = vsel %vm1488, %v6969, %v7311
        %v7896 = vsel %vm1488, %v6970, %v7313
        %v7899 = vsel %vm1488, %v6971, %v7315
        %v7902 = vsel %vm1488, %v6972, %v7317
        %v7905 = vsel %vm1488, %v6973, %v7319
        %v7908 = vsel %vm1488, %v6974, %v7321
        %v7911 = vsel %vm1488, %v6975, %v7323
        %v7914 = vsel %vm1488, %v6976, %v7325
        %v7917 = vsel %vm1488, %v6977, %v7327
        %v7920 = vsel %vm1488, %v6978, %v7329
        %v7923 = vsel %vm1488, %v6979, %v7331
        %v7925 = vsel %vm1569, %v7878, %v7733
        %v7927 = vsel %vm1569, %v7881, %v7735
        %v7929 = vsel %vm1569, %v7884, %v7737
        %v7931 = vsel %vm1569, %v7887, %v7739
        %v7933 = vsel %vm1569, %v7890, %v7741
        %v7935 = vsel %vm1569, %v7893, %v7743
        %v7937 = vsel %vm1569, %v7896, %v7745
        %v7939 = vsel %vm1569, %v7899, %v7747
        %v7941 = vsel %vm1569, %v7902, %v7749
        %v7943 = vsel %vm1569, %v7905, %v7751
        %v7945 = vsel %vm1569, %v7908, %v7753
        %v7947 = vsel %vm1569, %v7911, %v7755
        %v7949 = vsel %vm1569, %v7914, %v7757
        %v7951 = vsel %vm1569, %v7917, %v7759
        %v7953 = vsel %vm1569, %v7920, %v7761
        %v7955 = vsel %vm1569, %v7923, %v7763
        %v7957 = vsel %vm1634, %v7925, %v7845
        %v7959 = vsel %vm1634, %v7927, %v7847
        %v7961 = vsel %vm1634, %v7929, %v7849
        %v7963 = vsel %vm1634, %v7931, %v7851
        %v7965 = vsel %vm1634, %v7933, %v7853
        %v7967 = vsel %vm1634, %v7935, %v7855
        %v7969 = vsel %vm1634, %v7937, %v7857
        %v7971 = vsel %vm1634, %v7939, %v7859
        %v7973 = vsel %vm1634, %v7941, %v7861
        %v7975 = vsel %vm1634, %v7943, %v7863
        %v7977 = vsel %vm1634, %v7945, %v7865
        %v7979 = vsel %vm1634, %v7947, %v7867
        %v7981 = vsel %vm1634, %v7949, %v7869
        %v7983 = vsel %vm1634, %v7951, %v7871
        %v7985 = vsel %vm1634, %v7953, %v7873
        %v7987 = vsel %vm1634, %v7955, %v7875
        %v8004 = vunpack.c.l.b16 %v7957
        %v8005 = vunpack.c.h.b16 %v7957
        %v8006 = vunpack.c.l.b16 %v7959
        %v8007 = vunpack.c.h.b16 %v7959
        %v8008 = vunpack.c.l.b16 %v7961
        %v8009 = vunpack.c.h.b16 %v7961
        %v8010 = vunpack.c.l.b16 %v7963
        %v8011 = vunpack.c.h.b16 %v7963
        %v8012 = vunpack.c.l.b16 %v7965
        %v8013 = vunpack.c.h.b16 %v7965
        %v8014 = vunpack.c.l.b16 %v7967
        %v8015 = vunpack.c.h.b16 %v7967
        %v8016 = vunpack.c.l.b16 %v7969
        %v8017 = vunpack.c.h.b16 %v7969
        %v8018 = vunpack.c.l.b16 %v7971
        %v8019 = vunpack.c.h.b16 %v7971
        %v8020 = vunpack.c.l.b16 %v7973
        %v8021 = vunpack.c.h.b16 %v7973
        %v8022 = vunpack.c.l.b16 %v7975
        %v8023 = vunpack.c.h.b16 %v7975
        %v8024 = vunpack.c.l.b16 %v7977
        %v8025 = vunpack.c.h.b16 %v7977
        %v8026 = vunpack.c.l.b16 %v7979
        %v8027 = vunpack.c.h.b16 %v7979
        %v8028 = vunpack.c.l.b16 %v7981
        %v8029 = vunpack.c.h.b16 %v7981
        %v8030 = vunpack.c.l.b16 %v7983
        %v8031 = vunpack.c.h.b16 %v7983
        %v8032 = vunpack.c.l.b16 %v7985
        %v8033 = vunpack.c.h.b16 %v7985
        %v8034 = vunpack.c.l.b16 %v7987
        %v8035 = vunpack.c.h.b16 %v7987
        %v8036 = vpack.c.b16 %v8004, %v8004
        %v8037 = vpack.c.b16 %v8005, %v8005
        %v8038 = vpack.c.b16 %v8006, %v8006
        %v8039 = vpack.c.b16 %v8007, %v8007
        %v8040 = vpack.c.b16 %v8008, %v8008
        %v8041 = vpack.c.b16 %v8009, %v8009
        %v8042 = vpack.c.b16 %v8010, %v8010
        %v8043 = vpack.c.b16 %v8011, %v8011
        %v8044 = vpack.c.b16 %v8012, %v8012
        %v8045 = vpack.c.b16 %v8013, %v8013
        %v8046 = vpack.c.b16 %v8014, %v8014
        %v8047 = vpack.c.b16 %v8015, %v8015
        %v8048 = vpack.c.b16 %v8016, %v8016
        %v8049 = vpack.c.b16 %v8017, %v8017
        %v8050 = vpack.c.b16 %v8018, %v8018
        %v8051 = vpack.c.b16 %v8019, %v8019
        %v8052 = vpack.c.b16 %v8020, %v8020
        %v8053 = vpack.c.b16 %v8021, %v8021
        %v8054 = vpack.c.b16 %v8022, %v8022
        %v8055 = vpack.c.b16 %v8023, %v8023
        %v8056 = vpack.c.b16 %v8024, %v8024
        %v8057 = vpack.c.b16 %v8025, %v8025
        %v8058 = vpack.c.b16 %v8026, %v8026
        %v8059 = vpack.c.b16 %v8027, %v8027
        %v8060 = vpack.c.b16 %v8028, %v8028
        %v8061 = vpack.c.b16 %v8029, %v8029
        %v8062 = vpack.c.b16 %v8030, %v8030
        %v8063 = vpack.c.b16 %v8031, %v8031
        %v8064 = vpack.c.b16 %v8032, %v8032
        %v8065 = vpack.c.b16 %v8033, %v8033
        %v8066 = vpack.c.b16 %v8034, %v8034
        %v8067 = vpack.c.b16 %v8035, %v8035
        %8100 = vst [vmem:[#allocation3 + $0x4] sm:$0xf] %v8036
        %8101 = vst [vmem:[#allocation3 + $0x10] sm:$0xf] %v8037
        %8102 = vst [vmem:[#allocation3 + $0x1c] sm:$0xf] %v8038
        %8103 = vst [vmem:[#allocation3 + $0x28] sm:$0xf] %v8039
        %8104 = vst [vmem:[#allocation3 + $0x34] sm:$0xf] %v8040
        %8105 = vst [vmem:[#allocation3 + $0x40] sm:$0xf] %v8041
        %8106 = vst [vmem:[#allocation3 + $0x4c] sm:$0xf] %v8042
        %8107 = vst [vmem:[#allocation3 + $0x58] sm:$0xf] %v8043
        %8108 = vst [vmem:[#allocation3 + $0x64] sm:$0xf] %v8044
        %8109 = vst [vmem:[#allocation3 + $0x70] sm:$0xf] %v8045
        %8110 = vst [vmem:[#allocation3 + $0x7c] sm:$0xf] %v8046
        %8111 = vst [vmem:[#allocation3 + $0x88] sm:$0xf] %v8047
        %8112 = vst [vmem:[#allocation3 + $0x94] sm:$0xf] %v8048
        %8113 = vst [vmem:[#allocation3 + $0xa0] sm:$0xf] %v8049
        %8114 = vst [vmem:[#allocation3 + $0xac] sm:$0xf] %v8050
        %8115 = vst [vmem:[#allocation3 + $0xb8] sm:$0xf] %v8051
        %8116 = vst [vmem:[#allocation3 + $0xc4] sm:$0xf] %v8052
        %8117 = vst [vmem:[#allocation3 + $0xd0] sm:$0xf] %v8053
        %8118 = vst [vmem:[#allocation3 + $0xdc] sm:$0xf] %v8054
        %8119 = vst [vmem:[#allocation3 + $0xe8] sm:$0xf] %v8055
        %8120 = vst [vmem:[#allocation3 + $0xf4] sm:$0xf] %v8056
        %8121 = vst [vmem:[#allocation3 + $0x100] sm:$0xf] %v8057
        %8122 = vst [vmem:[#allocation3 + $0x10c] sm:$0xf] %v8058
        %8123 = vst [vmem:[#allocation3 + $0x118] sm:$0xf] %v8059
        %8124 = vst [vmem:[#allocation3 + $0x124] sm:$0xf] %v8060
        %8125 = vst [vmem:[#allocation3 + $0x130] sm:$0xf] %v8061
        %8126 = vst [vmem:[#allocation3 + $0x13c] sm:$0xf] %v8062
        %8127 = vst [vmem:[#allocation3 + $0x148] sm:$0xf] %v8063
        %8128 = vst [vmem:[#allocation3 + $0x154] sm:$0xf] %v8064
        %8129 = vst [vmem:[#allocation3 + $0x160] sm:$0xf] %v8065
        %8130 = vst [vmem:[#allocation3 + $0x16c] sm:$0xf] %v8066
        %8131 = vst [vmem:[#allocation3 + $0x178] sm:$0xf] %v8067
        %v8132 = vld [vmem:[%s2164 + $0x8] sm:$0xf]
        %v8133 = vld [vmem:[%s2164 + $0xc] sm:$0xf]
        %v8134 = vld [vmem:[%s2164 + $0x10] sm:$0x1]
        %v8135 = vld [vmem:[%s2164 + $0x20] sm:$0xf]
        %v8136 = vld [vmem:[%s2164 + $0x24] sm:$0xf]
        %v8137 = vld [vmem:[%s2164 + $0x28] sm:$0x1]
        %v8138 = vld [vmem:[%s2164 + $0x38] sm:$0xf]
        %v8139 = vld [vmem:[%s2164 + $0x3c] sm:$0xf]
        %v8140 = vld [vmem:[%s2164 + $0x40] sm:$0x1]
        %v8141 = vld [vmem:[%s2164 + $0x50] sm:$0xf]
        %v8142 = vld [vmem:[%s2164 + $0x54] sm:$0xf]
        %v8143 = vld [vmem:[%s2164 + $0x58] sm:$0x1]
        %v8144 = vld [vmem:[%s2164 + $0x68] sm:$0xf]
        %v8145 = vld [vmem:[%s2164 + $0x6c] sm:$0xf]
        %v8146 = vld [vmem:[%s2164 + $0x70] sm:$0x1]
        %v8147 = vld [vmem:[%s2164 + $0x80] sm:$0xf]
        %v8148 = vld [vmem:[%s2164 + $0x84] sm:$0xf]
        %v8149 = vld [vmem:[%s2164 + $0x88] sm:$0x1]
        %v8150 = vld [vmem:[%s2164 + $0x98] sm:$0xf]
        %v8151 = vld [vmem:[%s2164 + $0x9c] sm:$0xf]
        %v8152 = vld [vmem:[%s2164 + $0xa0] sm:$0x1]
        %v8153 = vld [vmem:[%s2164 + $0xb0] sm:$0xf]
        %v8154 = vld [vmem:[%s2164 + $0xb4] sm:$0xf]
        %v8155 = vld [vmem:[%s2164 + $0xb8] sm:$0x1]
        %v8156 = vld [vmem:[%s2164 + $0xc8] sm:$0xf]
        %v8157 = vld [vmem:[%s2164 + $0xcc] sm:$0xf]
        %v8158 = vld [vmem:[%s2164 + $0xd0] sm:$0x1]
        %v8159 = vld [vmem:[%s2164 + $0xe0] sm:$0xf]
        %v8160 = vld [vmem:[%s2164 + $0xe4] sm:$0xf]
        %v8161 = vld [vmem:[%s2164 + $0xe8] sm:$0x1]
        %v8162 = vld [vmem:[%s2164 + $0xf8] sm:$0xf]
        %v8163 = vld [vmem:[%s2164 + $0xfc] sm:$0xf]
        %v8164 = vld [vmem:[%s2164 + $0x100] sm:$0x1]
        %v8165 = vld [vmem:[%s2164 + $0x110] sm:$0xf]
        %v8166 = vld [vmem:[%s2164 + $0x114] sm:$0xf]
        %v8167 = vld [vmem:[%s2164 + $0x118] sm:$0x1]
        %v8168 = vld [vmem:[%s2164 + $0x128] sm:$0xf]
        %v8169 = vld [vmem:[%s2164 + $0x12c] sm:$0xf]
        %v8170 = vld [vmem:[%s2164 + $0x130] sm:$0x1]
        %v8171 = vld [vmem:[%s2164 + $0x140] sm:$0xf]
        %v8172 = vld [vmem:[%s2164 + $0x144] sm:$0xf]
        %v8173 = vld [vmem:[%s2164 + $0x148] sm:$0x1]
        %v8174 = vld [vmem:[%s2164 + $0x158] sm:$0xf]
        %v8175 = vld [vmem:[%s2164 + $0x15c] sm:$0xf]
        %v8176 = vld [vmem:[%s2164 + $0x160] sm:$0x1]
        %v8177 = vld [vmem:[%s2164 + $0x170] sm:$0xf]
        %v8178 = vld [vmem:[%s2164 + $0x174] sm:$0xf]
        %v8179 = vld [vmem:[%s2164 + $0x178] sm:$0x1]
        %v8180 = vsel %vm528, 0, %v8132
        %v8181 = vsel %vm535, 0, %v8133
        %v8182 = vsel %vm542, 0, %v8134
        %v8183 = vsel %vm528, 0, %v8135
        %v8184 = vsel %vm535, 0, %v8136
        %v8185 = vsel %vm542, 0, %v8137
        %v8186 = vsel %vm528, 0, %v8138
        %v8187 = vsel %vm535, 0, %v8139
        %v8188 = vsel %vm542, 0, %v8140
        %v8189 = vsel %vm528, 0, %v8141
        %v8190 = vsel %vm535, 0, %v8142
        %v8191 = vsel %vm542, 0, %v8143
        %v8192 = vsel %vm528, 0, %v8144
        %v8193 = vsel %vm535, 0, %v8145
        %v8194 = vsel %vm542, 0, %v8146
        %v8195 = vsel %vm528, 0, %v8147
        %v8196 = vsel %vm535, 0, %v8148
        %v8197 = vsel %vm542, 0, %v8149
        %v8198 = vsel %vm528, 0, %v8150
        %v8199 = vsel %vm535, 0, %v8151
        %v8200 = vsel %vm542, 0, %v8152
        %v8201 = vsel %vm528, 0, %v8153
        %v8202 = vsel %vm535, 0, %v8154
        %v8203 = vsel %vm542, 0, %v8155
        %v8204 = vsel %vm528, 0, %v8156
        %v8205 = vsel %vm535, 0, %v8157
        %v8206 = vsel %vm542, 0, %v8158
        %v8207 = vsel %vm528, 0, %v8159
        %v8208 = vsel %vm535, 0, %v8160
        %v8209 = vsel %vm542, 0, %v8161
        %v8210 = vsel %vm528, 0, %v8162
        %v8211 = vsel %vm535, 0, %v8163
        %v8212 = vsel %vm542, 0, %v8164
        %v8213 = vsel %vm528, 0, %v8165
        %v8214 = vsel %vm535, 0, %v8166
        %v8215 = vsel %vm542, 0, %v8167
        %v8216 = vsel %vm528, 0, %v8168
        %v8217 = vsel %vm535, 0, %v8169
        %v8218 = vsel %vm542, 0, %v8170
        %v8219 = vsel %vm528, 0, %v8171
        %v8220 = vsel %vm535, 0, %v8172
        %v8221 = vsel %vm542, 0, %v8173
        %v8222 = vsel %vm528, 0, %v8174
        %v8223 = vsel %vm535, 0, %v8175
        %v8224 = vsel %vm542, 0, %v8176
        %v8225 = vsel %vm528, 0, %v8177
        %v8226 = vsel %vm535, 0, %v8178
        %v8227 = vsel %vm542, 0, %v8179
        %v8276 = vunpack.c.l.b16 %v8180
        %v8277 = vunpack.c.l.b16 %v8181
        %v8278 = vunpack.c.l.b16 %v8182
        %v8279 = vunpack.c.l.b16 %v8183
        %v8280 = vunpack.c.l.b16 %v8184
        %v8281 = vunpack.c.l.b16 %v8185
        %v8282 = vunpack.c.l.b16 %v8186
        %v8283 = vunpack.c.l.b16 %v8187
        %v8284 = vunpack.c.l.b16 %v8188
        %v8285 = vunpack.c.l.b16 %v8189
        %v8286 = vunpack.c.l.b16 %v8190
        %v8287 = vunpack.c.l.b16 %v8191
        %v8288 = vunpack.c.l.b16 %v8192
        %v8289 = vunpack.c.l.b16 %v8193
        %v8290 = vunpack.c.l.b16 %v8194
        %v8291 = vunpack.c.l.b16 %v8195
        %v8292 = vunpack.c.l.b16 %v8196
        %v8293 = vunpack.c.l.b16 %v8197
        %v8294 = vunpack.c.l.b16 %v8198
        %v8295 = vunpack.c.l.b16 %v8199
        %v8296 = vunpack.c.l.b16 %v8200
        %v8297 = vunpack.c.l.b16 %v8201
        %v8298 = vunpack.c.l.b16 %v8202
        %v8299 = vunpack.c.l.b16 %v8203
        %v8300 = vunpack.c.l.b16 %v8204
        %v8301 = vunpack.c.l.b16 %v8205
        %v8302 = vunpack.c.l.b16 %v8206
        %v8303 = vunpack.c.l.b16 %v8207
        %v8304 = vunpack.c.l.b16 %v8208
        %v8305 = vunpack.c.l.b16 %v8209
        %v8306 = vunpack.c.l.b16 %v8210
        %v8307 = vunpack.c.l.b16 %v8211
        %v8308 = vunpack.c.l.b16 %v8212
        %v8309 = vunpack.c.l.b16 %v8213
        %v8310 = vunpack.c.l.b16 %v8214
        %v8311 = vunpack.c.l.b16 %v8215
        %v8312 = vunpack.c.l.b16 %v8216
        %v8313 = vunpack.c.l.b16 %v8217
        %v8314 = vunpack.c.l.b16 %v8218
        %v8315 = vunpack.c.l.b16 %v8219
        %v8316 = vunpack.c.l.b16 %v8220
        %v8317 = vunpack.c.l.b16 %v8221
        %v8318 = vunpack.c.l.b16 %v8222
        %v8319 = vunpack.c.l.b16 %v8223
        %v8320 = vunpack.c.l.b16 %v8224
        %v8321 = vunpack.c.l.b16 %v8225
        %v8322 = vunpack.c.l.b16 %v8226
        %v8323 = vunpack.c.l.b16 %v8227
        %v8324 = vpack.c.b16 %v8277, %v8276
        %v8325 = vpack.c.b16 %v8278, %v8278
        %v8326 = vpack.c.b16 %v8280, %v8279
        %v8327 = vpack.c.b16 %v8281, %v8281
        %v8328 = vpack.c.b16 %v8283, %v8282
        %v8329 = vpack.c.b16 %v8284, %v8284
        %v8330 = vpack.c.b16 %v8286, %v8285
        %v8331 = vpack.c.b16 %v8287, %v8287
        %v8332 = vpack.c.b16 %v8289, %v8288
        %v8333 = vpack.c.b16 %v8290, %v8290
        %v8334 = vpack.c.b16 %v8292, %v8291
        %v8335 = vpack.c.b16 %v8293, %v8293
        %v8336 = vpack.c.b16 %v8295, %v8294
        %v8337 = vpack.c.b16 %v8296, %v8296
        %v8338 = vpack.c.b16 %v8298, %v8297
        %v8339 = vpack.c.b16 %v8299, %v8299
        %v8340 = vpack.c.b16 %v8301, %v8300
        %v8341 = vpack.c.b16 %v8302, %v8302
        %v8342 = vpack.c.b16 %v8304, %v8303
        %v8343 = vpack.c.b16 %v8305, %v8305
        %v8344 = vpack.c.b16 %v8307, %v8306
        %v8345 = vpack.c.b16 %v8308, %v8308
        %v8346 = vpack.c.b16 %v8310, %v8309
        %v8347 = vpack.c.b16 %v8311, %v8311
        %v8348 = vpack.c.b16 %v8313, %v8312
        %v8349 = vpack.c.b16 %v8314, %v8314
        %v8350 = vpack.c.b16 %v8316, %v8315
        %v8351 = vpack.c.b16 %v8317, %v8317
        %v8352 = vpack.c.b16 %v8319, %v8318
        %v8353 = vpack.c.b16 %v8320, %v8320
        %v8354 = vpack.c.b16 %v8322, %v8321
        %v8355 = vpack.c.b16 %v8323, %v8323
        %v8357 = vsel %vm1488, %v8324, 0
        %v8359 = vsel %vm1488, %v8325, 0
        %v8361 = vsel %vm1488, %v8326, 0
        %v8363 = vsel %vm1488, %v8327, 0
        %v8365 = vsel %vm1488, %v8328, 0
        %v8367 = vsel %vm1488, %v8329, 0
        %v8369 = vsel %vm1488, %v8330, 0
        %v8371 = vsel %vm1488, %v8331, 0
        %v8373 = vsel %vm1488, %v8332, 0
        %v8375 = vsel %vm1488, %v8333, 0
        %v8377 = vsel %vm1488, %v8334, 0
        %v8379 = vsel %vm1488, %v8335, 0
        %v8381 = vsel %vm1488, %v8336, 0
        %v8383 = vsel %vm1488, %v8337, 0
        %v8385 = vsel %vm1488, %v8338, 0
        %v8387 = vsel %vm1488, %v8339, 0
        %v8389 = vsel %vm1488, %v8340, 0
        %v8391 = vsel %vm1488, %v8341, 0
        %v8393 = vsel %vm1488, %v8342, 0
        %v8395 = vsel %vm1488, %v8343, 0
        %v8397 = vsel %vm1488, %v8344, 0
        %v8399 = vsel %vm1488, %v8345, 0
        %v8401 = vsel %vm1488, %v8346, 0
        %v8403 = vsel %vm1488, %v8347, 0
        %v8405 = vsel %vm1488, %v8348, 0
        %v8407 = vsel %vm1488, %v8349, 0
        %v8409 = vsel %vm1488, %v8350, 0
        %v8411 = vsel %vm1488, %v8351, 0
        %v8413 = vsel %vm1488, %v8352, 0
        %v8415 = vsel %vm1488, %v8353, 0
        %v8417 = vsel %vm1488, %v8354, 0
        %v8419 = vsel %vm1488, %v8355, 0
        %v8420 = vsel %vm1569, %v8357, 0
        %v8421 = vsel %vm1569, %v8359, 0
        %v8422 = vsel %vm1569, %v8361, 0
        %v8423 = vsel %vm1569, %v8363, 0
        %v8424 = vsel %vm1569, %v8365, 0
        %v8425 = vsel %vm1569, %v8367, 0
        %v8426 = vsel %vm1569, %v8369, 0
        %v8427 = vsel %vm1569, %v8371, 0
        %v8428 = vsel %vm1569, %v8373, 0
        %v8429 = vsel %vm1569, %v8375, 0
        %v8430 = vsel %vm1569, %v8377, 0
        %v8431 = vsel %vm1569, %v8379, 0
        %v8432 = vsel %vm1569, %v8381, 0
        %v8433 = vsel %vm1569, %v8383, 0
        %v8434 = vsel %vm1569, %v8385, 0
        %v8435 = vsel %vm1569, %v8387, 0
        %v8436 = vsel %vm1569, %v8389, 0
        %v8437 = vsel %vm1569, %v8391, 0
        %v8438 = vsel %vm1569, %v8393, 0
        %v8439 = vsel %vm1569, %v8395, 0
        %v8440 = vsel %vm1569, %v8397, 0
        %v8441 = vsel %vm1569, %v8399, 0
        %v8442 = vsel %vm1569, %v8401, 0
        %v8443 = vsel %vm1569, %v8403, 0
        %v8444 = vsel %vm1569, %v8405, 0
        %v8445 = vsel %vm1569, %v8407, 0
        %v8446 = vsel %vm1569, %v8409, 0
        %v8447 = vsel %vm1569, %v8411, 0
        %v8448 = vsel %vm1569, %v8413, 0
        %v8449 = vsel %vm1569, %v8415, 0
        %v8450 = vsel %vm1569, %v8417, 0
        %v8451 = vsel %vm1569, %v8419, 0
        %v8452 = vsel %vm1634, %v8420, 0
        %v8453 = vsel %vm1634, %v8421, 0
        %v8454 = vsel %vm1634, %v8422, 0
        %v8455 = vsel %vm1634, %v8423, 0
        %v8456 = vsel %vm1634, %v8424, 0
        %v8457 = vsel %vm1634, %v8425, 0
        %v8458 = vsel %vm1634, %v8426, 0
        %v8459 = vsel %vm1634, %v8427, 0
        %v8460 = vsel %vm1634, %v8428, 0
        %v8461 = vsel %vm1634, %v8429, 0
        %v8462 = vsel %vm1634, %v8430, 0
        %v8463 = vsel %vm1634, %v8431, 0
        %v8464 = vsel %vm1634, %v8432, 0
        %v8465 = vsel %vm1634, %v8433, 0
        %v8466 = vsel %vm1634, %v8434, 0
        %v8467 = vsel %vm1634, %v8435, 0
        %v8468 = vsel %vm1634, %v8436, 0
        %v8469 = vsel %vm1634, %v8437, 0
        %v8470 = vsel %vm1634, %v8438, 0
        %v8471 = vsel %vm1634, %v8439, 0
        %v8472 = vsel %vm1634, %v8440, 0
        %v8473 = vsel %vm1634, %v8441, 0
        %v8474 = vsel %vm1634, %v8442, 0
        %v8475 = vsel %vm1634, %v8443, 0
        %v8476 = vsel %vm1634, %v8444, 0
        %v8477 = vsel %vm1634, %v8445, 0
        %v8478 = vsel %vm1634, %v8446, 0
        %v8479 = vsel %vm1634, %v8447, 0
        %v8480 = vsel %vm1634, %v8448, 0
        %v8481 = vsel %vm1634, %v8449, 0
        %v8482 = vsel %vm1634, %v8450, 0
        %v8483 = vsel %vm1634, %v8451, 0
        %v8484 = vshrl.u32 %v8452, 16
        %v8486 = vshll.u32 %v8452, 16
        %v8488 = vrot.slane %v8486, 1
        %v8489 = vor.u32 %v8484, %v8488
        %v8490 = vshll.u32 %v8453, 16
        %v8492 = vrot.slane %v8490, 1
        %v8493 = vsel %vm2469, %v8489, %v8492
        %v8494 = vshrl.u32 %v8454, 16
        %v8496 = vshll.u32 %v8454, 16
        %v8498 = vrot.slane %v8496, 1
        %v8499 = vor.u32 %v8494, %v8498
        %v8500 = vshll.u32 %v8455, 16
        %v8502 = vrot.slane %v8500, 1
        %v8503 = vsel %vm2469, %v8499, %v8502
        %v8504 = vshrl.u32 %v8456, 16
        %v8506 = vshll.u32 %v8456, 16
        %v8508 = vrot.slane %v8506, 1
        %v8509 = vor.u32 %v8504, %v8508
        %v8510 = vshll.u32 %v8457, 16
        %v8512 = vrot.slane %v8510, 1
        %v8513 = vsel %vm2469, %v8509, %v8512
        %v8514 = vshrl.u32 %v8458, 16
        %v8516 = vshll.u32 %v8458, 16
        %v8518 = vrot.slane %v8516, 1
        %v8519 = vor.u32 %v8514, %v8518
        %v8520 = vshll.u32 %v8459, 16
        %v8522 = vrot.slane %v8520, 1
        %v8523 = vsel %vm2469, %v8519, %v8522
        %v8524 = vshrl.u32 %v8460, 16
        %v8526 = vshll.u32 %v8460, 16
        %v8528 = vrot.slane %v8526, 1
        %v8529 = vor.u32 %v8524, %v8528
        %v8530 = vshll.u32 %v8461, 16
        %v8532 = vrot.slane %v8530, 1
        %v8533 = vsel %vm2469, %v8529, %v8532
        %v8534 = vshrl.u32 %v8462, 16
        %v8536 = vshll.u32 %v8462, 16
        %v8538 = vrot.slane %v8536, 1
        %v8539 = vor.u32 %v8534, %v8538
        %v8540 = vshll.u32 %v8463, 16
        %v8542 = vrot.slane %v8540, 1
        %v8543 = vsel %vm2469, %v8539, %v8542
        %v8544 = vshrl.u32 %v8464, 16
        %v8546 = vshll.u32 %v8464, 16
        %v8548 = vrot.slane %v8546, 1
        %v8549 = vor.u32 %v8544, %v8548
        %v8550 = vshll.u32 %v8465, 16
        %v8552 = vrot.slane %v8550, 1
        %v8553 = vsel %vm2469, %v8549, %v8552
        %v8554 = vshrl.u32 %v8466, 16
        %v8556 = vshll.u32 %v8466, 16
        %v8558 = vrot.slane %v8556, 1
        %v8559 = vor.u32 %v8554, %v8558
        %v8560 = vshll.u32 %v8467, 16
        %v8562 = vrot.slane %v8560, 1
        %v8563 = vsel %vm2469, %v8559, %v8562
        %v8564 = vshrl.u32 %v8468, 16
        %v8566 = vshll.u32 %v8468, 16
        %v8568 = vrot.slane %v8566, 1
        %v8569 = vor.u32 %v8564, %v8568
        %v8570 = vshll.u32 %v8469, 16
        %v8572 = vrot.slane %v8570, 1
        %v8573 = vsel %vm2469, %v8569, %v8572
        %v8574 = vshrl.u32 %v8470, 16
        %v8576 = vshll.u32 %v8470, 16
        %v8578 = vrot.slane %v8576, 1
        %v8579 = vor.u32 %v8574, %v8578
        %v8580 = vshll.u32 %v8471, 16
        %v8582 = vrot.slane %v8580, 1
        %v8583 = vsel %vm2469, %v8579, %v8582
        %v8584 = vshrl.u32 %v8472, 16
        %v8586 = vshll.u32 %v8472, 16
        %v8588 = vrot.slane %v8586, 1
        %v8589 = vor.u32 %v8584, %v8588
        %v8590 = vshll.u32 %v8473, 16
        %v8592 = vrot.slane %v8590, 1
        %v8593 = vsel %vm2469, %v8589, %v8592
        %v8594 = vshrl.u32 %v8474, 16
        %v8596 = vshll.u32 %v8474, 16
        %v8598 = vrot.slane %v8596, 1
        %v8599 = vor.u32 %v8594, %v8598
        %v8600 = vshll.u32 %v8475, 16
        %v8602 = vrot.slane %v8600, 1
        %v8603 = vsel %vm2469, %v8599, %v8602
        %v8604 = vshrl.u32 %v8476, 16
        %v8606 = vshll.u32 %v8476, 16
        %v8608 = vrot.slane %v8606, 1
        %v8609 = vor.u32 %v8604, %v8608
        %v8610 = vshll.u32 %v8477, 16
        %v8612 = vrot.slane %v8610, 1
        %v8613 = vsel %vm2469, %v8609, %v8612
        %v8614 = vshrl.u32 %v8478, 16
        %v8616 = vshll.u32 %v8478, 16
        %v8618 = vrot.slane %v8616, 1
        %v8619 = vor.u32 %v8614, %v8618
        %v8620 = vshll.u32 %v8479, 16
        %v8622 = vrot.slane %v8620, 1
        %v8623 = vsel %vm2469, %v8619, %v8622
        %v8624 = vshrl.u32 %v8480, 16
        %v8626 = vshll.u32 %v8480, 16
        %v8628 = vrot.slane %v8626, 1
        %v8629 = vor.u32 %v8624, %v8628
        %v8630 = vshll.u32 %v8481, 16
        %v8632 = vrot.slane %v8630, 1
        %v8633 = vsel %vm2469, %v8629, %v8632
        %v8634 = vshrl.u32 %v8482, 16
        %v8636 = vshll.u32 %v8482, 16
        %v8638 = vrot.slane %v8636, 1
        %v8639 = vor.u32 %v8634, %v8638
        %v8640 = vshll.u32 %v8483, 16
        %v8642 = vrot.slane %v8640, 1
        %v8643 = vsel %vm2469, %v8639, %v8642
        %v8644 = vunpack.c.l.b16 %v8493
        %v8645 = vunpack.c.h.b16 %v8493
        %v8646 = vunpack.c.l.b16 %v8503
        %v8647 = vunpack.c.h.b16 %v8503
        %v8648 = vunpack.c.l.b16 %v8513
        %v8649 = vunpack.c.h.b16 %v8513
        %v8650 = vunpack.c.l.b16 %v8523
        %v8651 = vunpack.c.h.b16 %v8523
        %v8652 = vunpack.c.l.b16 %v8533
        %v8653 = vunpack.c.h.b16 %v8533
        %v8654 = vunpack.c.l.b16 %v8543
        %v8655 = vunpack.c.h.b16 %v8543
        %v8656 = vunpack.c.l.b16 %v8553
        %v8657 = vunpack.c.h.b16 %v8553
        %v8658 = vunpack.c.l.b16 %v8563
        %v8659 = vunpack.c.h.b16 %v8563
        %v8660 = vunpack.c.l.b16 %v8573
        %v8661 = vunpack.c.h.b16 %v8573
        %v8662 = vunpack.c.l.b16 %v8583
        %v8663 = vunpack.c.h.b16 %v8583
        %v8664 = vunpack.c.l.b16 %v8593
        %v8665 = vunpack.c.h.b16 %v8593
        %v8666 = vunpack.c.l.b16 %v8603
        %v8667 = vunpack.c.h.b16 %v8603
        %v8668 = vunpack.c.l.b16 %v8613
        %v8669 = vunpack.c.h.b16 %v8613
        %v8670 = vunpack.c.l.b16 %v8623
        %v8671 = vunpack.c.h.b16 %v8623
        %v8672 = vunpack.c.l.b16 %v8633
        %v8673 = vunpack.c.h.b16 %v8633
        %v8674 = vunpack.c.l.b16 %v8643
        %v8675 = vunpack.c.h.b16 %v8643
        %v8676 = vpack.c.b16 %v8644, %v8644
        %v8677 = vpack.c.b16 %v8645, %v8645
        %v8678 = vpack.c.b16 %v8646, %v8646
        %v8679 = vpack.c.b16 %v8647, %v8647
        %v8680 = vpack.c.b16 %v8648, %v8648
        %v8681 = vpack.c.b16 %v8649, %v8649
        %v8682 = vpack.c.b16 %v8650, %v8650
        %v8683 = vpack.c.b16 %v8651, %v8651
        %v8684 = vpack.c.b16 %v8652, %v8652
        %v8685 = vpack.c.b16 %v8653, %v8653
        %v8686 = vpack.c.b16 %v8654, %v8654
        %v8687 = vpack.c.b16 %v8655, %v8655
        %v8688 = vpack.c.b16 %v8656, %v8656
        %v8689 = vpack.c.b16 %v8657, %v8657
        %v8690 = vpack.c.b16 %v8658, %v8658
        %v8691 = vpack.c.b16 %v8659, %v8659
        %v8692 = vpack.c.b16 %v8660, %v8660
        %v8693 = vpack.c.b16 %v8661, %v8661
        %v8694 = vpack.c.b16 %v8662, %v8662
        %v8695 = vpack.c.b16 %v8663, %v8663
        %v8696 = vpack.c.b16 %v8664, %v8664
        %v8697 = vpack.c.b16 %v8665, %v8665
        %v8698 = vpack.c.b16 %v8666, %v8666
        %v8699 = vpack.c.b16 %v8667, %v8667
        %v8700 = vpack.c.b16 %v8668, %v8668
        %v8701 = vpack.c.b16 %v8669, %v8669
        %v8702 = vpack.c.b16 %v8670, %v8670
        %v8703 = vpack.c.b16 %v8671, %v8671
        %v8704 = vpack.c.b16 %v8672, %v8672
        %v8705 = vpack.c.b16 %v8673, %v8673
        %v8706 = vpack.c.b16 %v8674, %v8674
        %v8707 = vpack.c.b16 %v8675, %v8675
        %8740 = vst [vmem:[#allocation3 + $0x8] sm:$0xf] %v8676
        %8741 = vst [vmem:[#allocation3 + $0x14] sm:$0xf] %v8677
        %8742 = vst [vmem:[#allocation3 + $0x20] sm:$0xf] %v8678
        %8743 = vst [vmem:[#allocation3 + $0x2c] sm:$0xf] %v8679
        %8744 = vst [vmem:[#allocation3 + $0x38] sm:$0xf] %v8680
        %8745 = vst [vmem:[#allocation3 + $0x44] sm:$0xf] %v8681
        %8746 = vst [vmem:[#allocation3 + $0x50] sm:$0xf] %v8682
        %8747 = vst [vmem:[#allocation3 + $0x5c] sm:$0xf] %v8683
        %8748 = vst [vmem:[#allocation3 + $0x68] sm:$0xf] %v8684
        %8749 = vst [vmem:[#allocation3 + $0x74] sm:$0xf] %v8685
        %8750 = vst [vmem:[#allocation3 + $0x80] sm:$0xf] %v8686
        %8751 = vst [vmem:[#allocation3 + $0x8c] sm:$0xf] %v8687
        %8752 = vst [vmem:[#allocation3 + $0x98] sm:$0xf] %v8688
        %8753 = vst [vmem:[#allocation3 + $0xa4] sm:$0xf] %v8689
        %8754 = vst [vmem:[#allocation3 + $0xb0] sm:$0xf] %v8690
        %8755 = vst [vmem:[#allocation3 + $0xbc] sm:$0xf] %v8691
        %8756 = vst [vmem:[#allocation3 + $0xc8] sm:$0xf] %v8692
        %8757 = vst [vmem:[#allocation3 + $0xd4] sm:$0xf] %v8693
        %8758 = vst [vmem:[#allocation3 + $0xe0] sm:$0xf] %v8694
        %8759 = vst [vmem:[#allocation3 + $0xec] sm:$0xf] %v8695
        %8760 = vst [vmem:[#allocation3 + $0xf8] sm:$0xf] %v8696
        %8761 = vst [vmem:[#allocation3 + $0x104] sm:$0xf] %v8697
        %8762 = vst [vmem:[#allocation3 + $0x110] sm:$0xf] %v8698
        %8763 = vst [vmem:[#allocation3 + $0x11c] sm:$0xf] %v8699
        %8764 = vst [vmem:[#allocation3 + $0x128] sm:$0xf] %v8700
        %8765 = vst [vmem:[#allocation3 + $0x134] sm:$0xf] %v8701
        %8766 = vst [vmem:[#allocation3 + $0x140] sm:$0xf] %v8702
        %8767 = vst [vmem:[#allocation3 + $0x14c] sm:$0xf] %v8703
        %8768 = vst [vmem:[#allocation3 + $0x158] sm:$0xf] %v8704
        %8769 = vst [vmem:[#allocation3 + $0x164] sm:$0xf] %v8705
        %8770 = vst [vmem:[#allocation3 + $0x170] sm:$0xf] %v8706
        %8771 = vst [vmem:[#allocation3 + $0x17c] sm:$0xf] %v8707
        %v8772 = vld [vmem:[#allocation3] sm:$0xff]
        %v8773 = vld [vmem:[#allocation3 + $0x8] sm:$0xf]
        %v8774 = vld [vmem:[#allocation3 + $0xc] sm:$0xff]
        %v8775 = vld [vmem:[#allocation3 + $0x14] sm:$0xf]
        %v8776 = vld [vmem:[#allocation3 + $0x18] sm:$0xff]
        %v8777 = vld [vmem:[#allocation3 + $0x20] sm:$0xf]
        %v8778 = vld [vmem:[#allocation3 + $0x24] sm:$0xff]
        %v8779 = vld [vmem:[#allocation3 + $0x2c] sm:$0xf]
        %v8780 = vld [vmem:[#allocation3 + $0x30] sm:$0xff]
        %v8781 = vld [vmem:[#allocation3 + $0x38] sm:$0xf]
        %v8782 = vld [vmem:[#allocation3 + $0x3c] sm:$0xff]
        %v8783 = vld [vmem:[#allocation3 + $0x44] sm:$0xf]
        %v8784 = vld [vmem:[#allocation3 + $0x48] sm:$0xff]
        %v8785 = vld [vmem:[#allocation3 + $0x50] sm:$0xf]
        %v8786 = vld [vmem:[#allocation3 + $0x54] sm:$0xff]
        %v8787 = vld [vmem:[#allocation3 + $0x5c] sm:$0xf]
        %v8788 = vld [vmem:[#allocation3 + $0x60] sm:$0xff]
        %v8789 = vld [vmem:[#allocation3 + $0x68] sm:$0xf]
        %v8790 = vld [vmem:[#allocation3 + $0x6c] sm:$0xff]
        %v8791 = vld [vmem:[#allocation3 + $0x74] sm:$0xf]
        %v8792 = vld [vmem:[#allocation3 + $0x78] sm:$0xff]
        %v8793 = vld [vmem:[#allocation3 + $0x80] sm:$0xf]
        %v8794 = vld [vmem:[#allocation3 + $0x84] sm:$0xff]
        %v8795 = vld [vmem:[#allocation3 + $0x8c] sm:$0xf]
        %v8796 = vld [vmem:[#allocation3 + $0x90] sm:$0xff]
        %v8797 = vld [vmem:[#allocation3 + $0x98] sm:$0xf]
        %v8798 = vld [vmem:[#allocation3 + $0x9c] sm:$0xff]
        %v8799 = vld [vmem:[#allocation3 + $0xa4] sm:$0xf]
        %v8800 = vld [vmem:[#allocation3 + $0xa8] sm:$0xff]
        %v8801 = vld [vmem:[#allocation3 + $0xb0] sm:$0xf]
        %v8802 = vld [vmem:[#allocation3 + $0xb4] sm:$0xff]
        %v8803 = vld [vmem:[#allocation3 + $0xbc] sm:$0xf]
        %v8804 = vld [vmem:[#allocation3 + $0xc0] sm:$0xff]
        %v8805 = vld [vmem:[#allocation3 + $0xc8] sm:$0xf]
        %v8806 = vld [vmem:[#allocation3 + $0xcc] sm:$0xff]
        %v8807 = vld [vmem:[#allocation3 + $0xd4] sm:$0xf]
        %v8808 = vld [vmem:[#allocation3 + $0xd8] sm:$0xff]
        %v8809 = vld [vmem:[#allocation3 + $0xe0] sm:$0xf]
        %v8810 = vld [vmem:[#allocation3 + $0xe4] sm:$0xff]
        %v8811 = vld [vmem:[#allocation3 + $0xec] sm:$0xf]
        %v8812 = vld [vmem:[#allocation3 + $0xf0] sm:$0xff]
        %v8813 = vld [vmem:[#allocation3 + $0xf8] sm:$0xf]
        %v8814 = vld [vmem:[#allocation3 + $0xfc] sm:$0xff]
        %v8815 = vld [vmem:[#allocation3 + $0x104] sm:$0xf]
        %v8816 = vld [vmem:[#allocation3 + $0x108] sm:$0xff]
        %v8817 = vld [vmem:[#allocation3 + $0x110] sm:$0xf]
        %v8818 = vld [vmem:[#allocation3 + $0x114] sm:$0xff]
        %v8819 = vld [vmem:[#allocation3 + $0x11c] sm:$0xf]
        %v8820 = vld [vmem:[#allocation3 + $0x120] sm:$0xff]
        %v8821 = vld [vmem:[#allocation3 + $0x128] sm:$0xf]
        %v8822 = vld [vmem:[#allocation3 + $0x12c] sm:$0xff]
        %v8823 = vld [vmem:[#allocation3 + $0x134] sm:$0xf]
        %v8824 = vld [vmem:[#allocation3 + $0x138] sm:$0xff]
        %v8825 = vld [vmem:[#allocation3 + $0x140] sm:$0xf]
        %v8826 = vld [vmem:[#allocation3 + $0x144] sm:$0xff]
        %v8827 = vld [vmem:[#allocation3 + $0x14c] sm:$0xf]
        %v8828 = vld [vmem:[#allocation3 + $0x150] sm:$0xff]
        %v8829 = vld [vmem:[#allocation3 + $0x158] sm:$0xf]
        %v8830 = vld [vmem:[#allocation3 + $0x15c] sm:$0xff]
        %v8831 = vld [vmem:[#allocation3 + $0x164] sm:$0xf]
        %v8832 = vld [vmem:[#allocation3 + $0x168] sm:$0xff]
        %v8833 = vld [vmem:[#allocation3 + $0x170] sm:$0xf]
        %v8834 = vld [vmem:[#allocation3 + $0x174] sm:$0xff]
        %v8835 = vld [vmem:[#allocation3 + $0x17c] sm:$0xf]
        %v8836 = vld [vmem:[%s2] sm:$0xf]
        %v8837 = vld [vmem:[%s2 + $0x4] sm:$0xf]
        %v8838 = vld [vmem:[%s2 + $0x8] sm:$0xf]
        %v8839 = vld [vmem:[%s2 + $0xc] sm:$0xf]
        %v8840 = vld [vmem:[%s2 + $0x10] sm:$0xf]
        %v8841 = vld [vmem:[%s2 + $0x14] sm:$0xf]
        %v8842 = vld [vmem:[%s2 + $0x18] sm:$0xf]
        %v8843 = vld [vmem:[%s2 + $0x1c] sm:$0xf]
        %v8844 = vld [vmem:[%s2 + $0x20] sm:$0xf]
        %v8845 = vld [vmem:[%s2 + $0x24] sm:$0xf]
        %v8846 = vld [vmem:[%s2 + $0x28] sm:$0xf]
        %v8847 = vld [vmem:[%s2 + $0x2c] sm:$0xf]
        %v8848 = vld [vmem:[%s2 + $0x30] sm:$0xf]
        %v8849 = vld [vmem:[%s2 + $0x34] sm:$0xf]
        %v8850 = vld [vmem:[%s2 + $0x38] sm:$0xf]
        %v8851 = vld [vmem:[%s2 + $0x3c] sm:$0xf]
        %v8852 = vld [vmem:[%s2 + $0x40] sm:$0xf]
        %v8853 = vld [vmem:[%s2 + $0x44] sm:$0xf]
        %v8854 = vld [vmem:[%s2 + $0x48] sm:$0xf]
        %v8855 = vld [vmem:[%s2 + $0x4c] sm:$0xf]
        %v8856 = vld [vmem:[%s2 + $0x50] sm:$0xf]
        %v8857 = vld [vmem:[%s2 + $0x54] sm:$0xf]
        %v8858 = vld [vmem:[%s2 + $0x58] sm:$0xf]
        %v8859 = vld [vmem:[%s2 + $0x5c] sm:$0xf]
        %v8860 = vld [vmem:[%s2 + $0x60] sm:$0xf]
        %v8861 = vld [vmem:[%s2 + $0x64] sm:$0xf]
        %v8862 = vld [vmem:[%s2 + $0x68] sm:$0xf]
        %v8863 = vld [vmem:[%s2 + $0x6c] sm:$0xf]
        %v8864 = vld [vmem:[%s2 + $0x70] sm:$0xf]
        %v8865 = vld [vmem:[%s2 + $0x74] sm:$0xf]
        %v8866 = vld [vmem:[%s2 + $0x78] sm:$0xf]
        %v8867 = vld [vmem:[%s2 + $0x7c] sm:$0xf]
        %v8868 = vld [vmem:[%s2 + $0x80] sm:$0xf]
        %v8869 = vld [vmem:[%s2 + $0x84] sm:$0xf]
        %v8870 = vld [vmem:[%s2 + $0x88] sm:$0xf]
        %v8871 = vld [vmem:[%s2 + $0x8c] sm:$0xf]
        %v8872 = vld [vmem:[%s2 + $0x90] sm:$0xf]
        %v8873 = vld [vmem:[%s2 + $0x94] sm:$0xf]
        %v8874 = vld [vmem:[%s2 + $0x98] sm:$0xf]
        %v8875 = vld [vmem:[%s2 + $0x9c] sm:$0xf]
        %v8876 = vld [vmem:[%s2 + $0xa0] sm:$0xf]
        %v8877 = vld [vmem:[%s2 + $0xa4] sm:$0xf]
        %v8878 = vld [vmem:[%s2 + $0xa8] sm:$0xf]
        %v8879 = vld [vmem:[%s2 + $0xac] sm:$0xf]
        %v8880 = vld [vmem:[%s2 + $0xb0] sm:$0xf]
        %v8881 = vld [vmem:[%s2 + $0xb4] sm:$0xf]
        %v8882 = vld [vmem:[%s2 + $0xb8] sm:$0xf]
        %v8883 = vld [vmem:[%s2 + $0xbc] sm:$0xf]
        %v8884 = vld [vmem:[%s3 + $0x1] sm:$0x1]
        %v8885 = vperm.slane %v8884, 0
        %v8950 = vunpack.c.l.b16 %v8772
        %v8951 = vunpack.c.h.b16 %v8772
        %v8952 = vunpack.c.l.b16 %v8773
        %v8953 = vunpack.c.l.b16 %v8774
        %v8954 = vunpack.c.h.b16 %v8774
        %v8955 = vunpack.c.l.b16 %v8775
        %v8956 = vunpack.c.l.b16 %v8776
        %v8957 = vunpack.c.h.b16 %v8776
        %v8958 = vunpack.c.l.b16 %v8777
        %v8959 = vunpack.c.l.b16 %v8778
        %v8960 = vunpack.c.h.b16 %v8778
        %v8961 = vunpack.c.l.b16 %v8779
        %v8962 = vunpack.c.l.b16 %v8780
        %v8963 = vunpack.c.h.b16 %v8780
        %v8964 = vunpack.c.l.b16 %v8781
        %v8965 = vunpack.c.l.b16 %v8782
        %v8966 = vunpack.c.h.b16 %v8782
        %v8967 = vunpack.c.l.b16 %v8783
        %v8968 = vunpack.c.l.b16 %v8784
        %v8969 = vunpack.c.h.b16 %v8784
        %v8970 = vunpack.c.l.b16 %v8785
        %v8971 = vunpack.c.l.b16 %v8786
        %v8972 = vunpack.c.h.b16 %v8786
        %v8973 = vunpack.c.l.b16 %v8787
        %v8974 = vunpack.c.l.b16 %v8788
        %v8975 = vunpack.c.h.b16 %v8788
        %v8976 = vunpack.c.l.b16 %v8789
        %v8977 = vunpack.c.l.b16 %v8790
        %v8978 = vunpack.c.h.b16 %v8790
        %v8979 = vunpack.c.l.b16 %v8791
        %v8980 = vunpack.c.l.b16 %v8792
        %v8981 = vunpack.c.h.b16 %v8792
        %v8982 = vunpack.c.l.b16 %v8793
        %v8983 = vunpack.c.l.b16 %v8794
        %v8984 = vunpack.c.h.b16 %v8794
        %v8985 = vunpack.c.l.b16 %v8795
        %v8986 = vunpack.c.l.b16 %v8796
        %v8987 = vunpack.c.h.b16 %v8796
        %v8988 = vunpack.c.l.b16 %v8797
        %v8989 = vunpack.c.l.b16 %v8798
        %v8990 = vunpack.c.h.b16 %v8798
        %v8991 = vunpack.c.l.b16 %v8799
        %v8992 = vunpack.c.l.b16 %v8800
        %v8993 = vunpack.c.h.b16 %v8800
        %v8994 = vunpack.c.l.b16 %v8801
        %v8995 = vunpack.c.l.b16 %v8802
        %v8996 = vunpack.c.h.b16 %v8802
        %v8997 = vunpack.c.l.b16 %v8803
        %v8998 = vunpack.c.l.b16 %v8804
        %v8999 = vunpack.c.h.b16 %v8804
        %v9000 = vunpack.c.l.b16 %v8805
        %v9001 = vunpack.c.l.b16 %v8806
        %v9002 = vunpack.c.h.b16 %v8806
        %v9003 = vunpack.c.l.b16 %v8807
        %v9004 = vunpack.c.l.b16 %v8808
        %v9005 = vunpack.c.h.b16 %v8808
        %v9006 = vunpack.c.l.b16 %v8809
        %v9007 = vunpack.c.l.b16 %v8810
        %v9008 = vunpack.c.h.b16 %v8810
        %v9009 = vunpack.c.l.b16 %v8811
        %v9010 = vunpack.c.l.b16 %v8812
        %v9011 = vunpack.c.h.b16 %v8812
        %v9012 = vunpack.c.l.b16 %v8813
        %v9013 = vunpack.c.l.b16 %v8814
        %v9014 = vunpack.c.h.b16 %v8814
        %v9015 = vunpack.c.l.b16 %v8815
        %v9016 = vunpack.c.l.b16 %v8816
        %v9017 = vunpack.c.h.b16 %v8816
        %v9018 = vunpack.c.l.b16 %v8817
        %v9019 = vunpack.c.l.b16 %v8818
        %v9020 = vunpack.c.h.b16 %v8818
        %v9021 = vunpack.c.l.b16 %v8819
        %v9022 = vunpack.c.l.b16 %v8820
        %v9023 = vunpack.c.h.b16 %v8820
        %v9024 = vunpack.c.l.b16 %v8821
        %v9025 = vunpack.c.l.b16 %v8822
        %v9026 = vunpack.c.h.b16 %v8822
        %v9027 = vunpack.c.l.b16 %v8823
        %v9028 = vunpack.c.l.b16 %v8824
        %v9029 = vunpack.c.h.b16 %v8824
        %v9030 = vunpack.c.l.b16 %v8825
        %v9031 = vunpack.c.l.b16 %v8826
        %v9032 = vunpack.c.h.b16 %v8826
        %v9033 = vunpack.c.l.b16 %v8827
        %v9034 = vunpack.c.l.b16 %v8828
        %v9035 = vunpack.c.h.b16 %v8828
        %v9036 = vunpack.c.l.b16 %v8829
        %v9037 = vunpack.c.l.b16 %v8830
        %v9038 = vunpack.c.h.b16 %v8830
        %v9039 = vunpack.c.l.b16 %v8831
        %v9040 = vunpack.c.l.b16 %v8832
        %v9041 = vunpack.c.h.b16 %v8832
        %v9042 = vunpack.c.l.b16 %v8833
        %v9043 = vunpack.c.l.b16 %v8834
        %v9044 = vunpack.c.h.b16 %v8834
        %v9045 = vunpack.c.l.b16 %v8835
        %v9046 = vpack.c.b16 %v8953, %v8950
        %v9047 = vpack.c.b16 %v8954, %v8951
        %v9048 = vpack.c.b16 %v8955, %v8952
        %v9049 = vpack.c.b16 %v8959, %v8956
        %v9050 = vpack.c.b16 %v8960, %v8957
        %v9051 = vpack.c.b16 %v8961, %v8958
        %v9052 = vpack.c.b16 %v8965, %v8962
        %v9053 = vpack.c.b16 %v8966, %v8963
        %v9054 = vpack.c.b16 %v8967, %v8964
        %v9055 = vpack.c.b16 %v8971, %v8968
        %v9056 = vpack.c.b16 %v8972, %v8969
        %v9057 = vpack.c.b16 %v8973, %v8970
        %v9058 = vpack.c.b16 %v8977, %v8974
        %v9059 = vpack.c.b16 %v8978, %v8975
        %v9060 = vpack.c.b16 %v8979, %v8976
        %v9061 = vpack.c.b16 %v8983, %v8980
        %v9062 = vpack.c.b16 %v8984, %v8981
        %v9063 = vpack.c.b16 %v8985, %v8982
        %v9064 = vpack.c.b16 %v8989, %v8986
        %v9065 = vpack.c.b16 %v8990, %v8987
        %v9066 = vpack.c.b16 %v8991, %v8988
        %v9067 = vpack.c.b16 %v8995, %v8992
        %v9068 = vpack.c.b16 %v8996, %v8993
        %v9069 = vpack.c.b16 %v8997, %v8994
        %v9070 = vpack.c.b16 %v9001, %v8998
        %v9071 = vpack.c.b16 %v9002, %v8999
        %v9072 = vpack.c.b16 %v9003, %v9000
        %v9073 = vpack.c.b16 %v9007, %v9004
        %v9074 = vpack.c.b16 %v9008, %v9005
        %v9075 = vpack.c.b16 %v9009, %v9006
        %v9076 = vpack.c.b16 %v9013, %v9010
        %v9077 = vpack.c.b16 %v9014, %v9011
        %v9078 = vpack.c.b16 %v9015, %v9012
        %v9079 = vpack.c.b16 %v9019, %v9016
        %v9080 = vpack.c.b16 %v9020, %v9017
        %v9081 = vpack.c.b16 %v9021, %v9018
        %v9082 = vpack.c.b16 %v9025, %v9022
        %v9083 = vpack.c.b16 %v9026, %v9023
        %v9084 = vpack.c.b16 %v9027, %v9024
        %v9085 = vpack.c.b16 %v9031, %v9028
        %v9086 = vpack.c.b16 %v9032, %v9029
        %v9087 = vpack.c.b16 %v9033, %v9030
        %v9088 = vpack.c.b16 %v9037, %v9034
        %v9089 = vpack.c.b16 %v9038, %v9035
        %v9090 = vpack.c.b16 %v9039, %v9036
        %v9091 = vpack.c.b16 %v9043, %v9040
        %v9092 = vpack.c.b16 %v9044, %v9041
        %v9093 = vpack.c.b16 %v9045, %v9042
        %v9190 = vunpack.c.l.b16 %v8836
        %v9191 = vunpack.c.l.b16 %v8837
        %v9192 = vunpack.c.l.b16 %v8838
        %v9193 = vunpack.c.l.b16 %v8839
        %v9194 = vunpack.c.l.b16 %v8840
        %v9195 = vunpack.c.l.b16 %v8841
        %v9196 = vunpack.c.l.b16 %v8842
        %v9197 = vunpack.c.l.b16 %v8843
        %v9198 = vunpack.c.l.b16 %v8844
        %v9199 = vunpack.c.l.b16 %v8845
        %v9200 = vunpack.c.l.b16 %v8846
        %v9201 = vunpack.c.l.b16 %v8847
        %v9202 = vunpack.c.l.b16 %v8848
        %v9203 = vunpack.c.l.b16 %v8849
        %v9204 = vunpack.c.l.b16 %v8850
        %v9205 = vunpack.c.l.b16 %v8851
        %v9206 = vunpack.c.l.b16 %v8852
        %v9207 = vunpack.c.l.b16 %v8853
        %v9208 = vunpack.c.l.b16 %v8854
        %v9209 = vunpack.c.l.b16 %v8855
        %v9210 = vunpack.c.l.b16 %v8856
        %v9211 = vunpack.c.l.b16 %v8857
        %v9212 = vunpack.c.l.b16 %v8858
        %v9213 = vunpack.c.l.b16 %v8859
        %v9214 = vunpack.c.l.b16 %v8860
        %v9215 = vunpack.c.l.b16 %v8861
        %v9216 = vunpack.c.l.b16 %v8862
        %v9217 = vunpack.c.l.b16 %v8863
        %v9218 = vunpack.c.l.b16 %v8864
        %v9219 = vunpack.c.l.b16 %v8865
        %v9220 = vunpack.c.l.b16 %v8866
        %v9221 = vunpack.c.l.b16 %v8867
        %v9222 = vunpack.c.l.b16 %v8868
        %v9223 = vunpack.c.l.b16 %v8869
        %v9224 = vunpack.c.l.b16 %v8870
        %v9225 = vunpack.c.l.b16 %v8871
        %v9226 = vunpack.c.l.b16 %v8872
        %v9227 = vunpack.c.l.b16 %v8873
        %v9228 = vunpack.c.l.b16 %v8874
        %v9229 = vunpack.c.l.b16 %v8875
        %v9230 = vunpack.c.l.b16 %v8876
        %v9231 = vunpack.c.l.b16 %v8877
        %v9232 = vunpack.c.l.b16 %v8878
        %v9233 = vunpack.c.l.b16 %v8879
        %v9234 = vunpack.c.l.b16 %v8880
        %v9235 = vunpack.c.l.b16 %v8881
        %v9236 = vunpack.c.l.b16 %v8882
        %v9237 = vunpack.c.l.b16 %v8883
        %v9238 = vpack.c.b16 %v9191, %v9190
        %v9239 = vpack.c.b16 %v9193, %v9192
        %v9240 = vpack.c.b16 %v9195, %v9194
        %v9241 = vpack.c.b16 %v9197, %v9196
        %v9242 = vpack.c.b16 %v9199, %v9198
        %v9243 = vpack.c.b16 %v9201, %v9200
        %v9244 = vpack.c.b16 %v9203, %v9202
        %v9245 = vpack.c.b16 %v9205, %v9204
        %v9246 = vpack.c.b16 %v9207, %v9206
        %v9247 = vpack.c.b16 %v9209, %v9208
        %v9248 = vpack.c.b16 %v9211, %v9210
        %v9249 = vpack.c.b16 %v9213, %v9212
        %v9250 = vpack.c.b16 %v9215, %v9214
        %v9251 = vpack.c.b16 %v9217, %v9216
        %v9252 = vpack.c.b16 %v9219, %v9218
        %v9253 = vpack.c.b16 %v9221, %v9220
        %v9254 = vpack.c.b16 %v9223, %v9222
        %v9255 = vpack.c.b16 %v9225, %v9224
        %v9256 = vpack.c.b16 %v9227, %v9226
        %v9257 = vpack.c.b16 %v9229, %v9228
        %v9258 = vpack.c.b16 %v9231, %v9230
        %v9259 = vpack.c.b16 %v9233, %v9232
        %v9260 = vpack.c.b16 %v9235, %v9234
        %v9261 = vpack.c.b16 %v9237, %v9236
        %9286 = vmatpush.bf16.msra.mxu0 %v9245
        %9287 = vmatpush.bf16.msra.mxu0 %v9244
        %9288 = vmatpush.bf16.msra.mxu0 %v9243
        %9289 = vmatpush.bf16.msra.mxu0 %v9242
        %9290 = vmatpush.bf16.msra.mxu0 %v9241
        %9291 = vmatpush.bf16.msra.mxu0 %v9240
        %9292 = vmatpush.bf16.msra.mxu0 %v9239
        %9293 = vmatpush.bf16.msra.mxu0 %v9238
        %9294 = vmatmul.bf16.gmra.mxu0 %v9046
        %v9295 = vpop.f32.mrf.mxu0
        %v9296 = vadd.f32 %v8885, %v9295
        %v9297 = vpop.f32.mrf.mxu0
        %v9298 = vadd.f32 %v8885, %v9297
        %9299 = vmatmul.bf16.gmra.mxu0 %v9049
        %v9300 = vpop.f32.mrf.mxu0
        %v9301 = vadd.f32 %v8885, %v9300
        %v9302 = vpop.f32.mrf.mxu0
        %v9303 = vadd.f32 %v8885, %v9302
        %9304 = vmatmul.bf16.gmra.mxu0 %v9052
        %v9305 = vpop.f32.mrf.mxu0
        %v9306 = vadd.f32 %v8885, %v9305
        %v9307 = vpop.f32.mrf.mxu0
        %v9308 = vadd.f32 %v8885, %v9307
        %9309 = vmatmul.bf16.gmra.mxu0 %v9055
        %v9310 = vpop.f32.mrf.mxu0
        %v9311 = vadd.f32 %v8885, %v9310
        %v9312 = vpop.f32.mrf.mxu0
        %v9313 = vadd.f32 %v8885, %v9312
        %9314 = vmatmul.bf16.gmra.mxu0 %v9058
        %v9315 = vpop.f32.mrf.mxu0
        %v9316 = vadd.f32 %v8885, %v9315
        %v9317 = vpop.f32.mrf.mxu0
        %v9318 = vadd.f32 %v8885, %v9317
        %9319 = vmatmul.bf16.gmra.mxu0 %v9061
        %v9320 = vpop.f32.mrf.mxu0
        %v9321 = vadd.f32 %v8885, %v9320
        %v9322 = vpop.f32.mrf.mxu0
        %v9323 = vadd.f32 %v8885, %v9322
        %9324 = vmatmul.bf16.gmra.mxu0 %v9064
        %v9325 = vpop.f32.mrf.mxu0
        %v9326 = vadd.f32 %v8885, %v9325
        %v9327 = vpop.f32.mrf.mxu0
        %v9328 = vadd.f32 %v8885, %v9327
        %9329 = vmatmul.bf16.gmra.mxu0 %v9067
        %v9330 = vpop.f32.mrf.mxu0
        %v9331 = vadd.f32 %v8885, %v9330
        %v9332 = vpop.f32.mrf.mxu0
        %v9333 = vadd.f32 %v8885, %v9332
        %9334 = vmatmul.bf16.gmra.mxu0 %v9070
        %v9335 = vpop.f32.mrf.mxu0
        %v9336 = vadd.f32 %v8885, %v9335
        %v9337 = vpop.f32.mrf.mxu0
        %v9338 = vadd.f32 %v8885, %v9337
        %9339 = vmatmul.bf16.gmra.mxu0 %v9073
        %v9340 = vpop.f32.mrf.mxu0
        %v9341 = vadd.f32 %v8885, %v9340
        %v9342 = vpop.f32.mrf.mxu0
        %v9343 = vadd.f32 %v8885, %v9342
        %9344 = vmatmul.bf16.gmra.mxu0 %v9076
        %v9345 = vpop.f32.mrf.mxu0
        %v9346 = vadd.f32 %v8885, %v9345
        %v9347 = vpop.f32.mrf.mxu0
        %v9348 = vadd.f32 %v8885, %v9347
        %9349 = vmatmul.bf16.gmra.mxu0 %v9079
        %v9350 = vpop.f32.mrf.mxu0
        %v9351 = vadd.f32 %v8885, %v9350
        %v9352 = vpop.f32.mrf.mxu0
        %v9353 = vadd.f32 %v8885, %v9352
        %9354 = vmatmul.bf16.gmra.mxu0 %v9082
        %v9355 = vpop.f32.mrf.mxu0
        %v9356 = vadd.f32 %v8885, %v9355
        %v9357 = vpop.f32.mrf.mxu0
        %v9358 = vadd.f32 %v8885, %v9357
        %9359 = vmatmul.bf16.gmra.mxu0 %v9085
        %v9360 = vpop.f32.mrf.mxu0
        %v9361 = vadd.f32 %v8885, %v9360
        %v9362 = vpop.f32.mrf.mxu0
        %v9363 = vadd.f32 %v8885, %v9362
        %9364 = vmatmul.bf16.gmra.mxu0 %v9088
        %v9365 = vpop.f32.mrf.mxu0
        %v9366 = vadd.f32 %v8885, %v9365
        %v9367 = vpop.f32.mrf.mxu0
        %v9368 = vadd.f32 %v8885, %v9367
        %9369 = vmatmul.bf16.gmra.mxu0 %v9091
        %v9370 = vpop.f32.mrf.mxu0
        %v9371 = vadd.f32 %v8885, %v9370
        %v9372 = vpop.f32.mrf.mxu0
        %v9373 = vadd.f32 %v8885, %v9372
        %9374 = vdwg.mxu0
        %9375 = vmatpush.bf16.msra.mxu0 %v9253
        %9376 = vmatpush.bf16.msra.mxu0 %v9252
        %9377 = vmatpush.bf16.msra.mxu0 %v9251
        %9378 = vmatpush.bf16.msra.mxu0 %v9250
        %9379 = vmatpush.bf16.msra.mxu0 %v9249
        %9380 = vmatpush.bf16.msra.mxu0 %v9248
        %9381 = vmatpush.bf16.msra.mxu0 %v9247
        %9382 = vmatpush.bf16.msra.mxu0 %v9246
        %9383 = vmatmul.bf16.gmra.mxu0 %v9047
        %v9384 = vpop.f32.mrf.mxu0
        %v9385 = vadd.f32 %v9296, %v9384
        %v9386 = vpop.f32.mrf.mxu0
        %v9387 = vadd.f32 %v9298, %v9386
        %9388 = vmatmul.bf16.gmra.mxu0 %v9050
        %v9389 = vpop.f32.mrf.mxu0
        %v9390 = vadd.f32 %v9301, %v9389
        %v9391 = vpop.f32.mrf.mxu0
        %v9392 = vadd.f32 %v9303, %v9391
        %9393 = vmatmul.bf16.gmra.mxu0 %v9053
        %v9394 = vpop.f32.mrf.mxu0
        %v9395 = vadd.f32 %v9306, %v9394
        %v9396 = vpop.f32.mrf.mxu0
        %v9397 = vadd.f32 %v9308, %v9396
        %9398 = vmatmul.bf16.gmra.mxu0 %v9056
        %v9399 = vpop.f32.mrf.mxu0
        %v9400 = vadd.f32 %v9311, %v9399
        %v9401 = vpop.f32.mrf.mxu0
        %v9402 = vadd.f32 %v9313, %v9401
        %9403 = vmatmul.bf16.gmra.mxu0 %v9059
        %v9404 = vpop.f32.mrf.mxu0
        %v9405 = vadd.f32 %v9316, %v9404
        %v9406 = vpop.f32.mrf.mxu0
        %v9407 = vadd.f32 %v9318, %v9406
        %9408 = vmatmul.bf16.gmra.mxu0 %v9062
        %v9409 = vpop.f32.mrf.mxu0
        %v9410 = vadd.f32 %v9321, %v9409
        %v9411 = vpop.f32.mrf.mxu0
        %v9412 = vadd.f32 %v9323, %v9411
        %9413 = vmatmul.bf16.gmra.mxu0 %v9065
        %v9414 = vpop.f32.mrf.mxu0
        %v9415 = vadd.f32 %v9326, %v9414
        %v9416 = vpop.f32.mrf.mxu0
        %v9417 = vadd.f32 %v9328, %v9416
        %9418 = vmatmul.bf16.gmra.mxu0 %v9068
        %v9419 = vpop.f32.mrf.mxu0
        %v9420 = vadd.f32 %v9331, %v9419
        %v9421 = vpop.f32.mrf.mxu0
        %v9422 = vadd.f32 %v9333, %v9421
        %9423 = vmatmul.bf16.gmra.mxu0 %v9071
        %v9424 = vpop.f32.mrf.mxu0
        %v9425 = vadd.f32 %v9336, %v9424
        %v9426 = vpop.f32.mrf.mxu0
        %v9427 = vadd.f32 %v9338, %v9426
        %9428 = vmatmul.bf16.gmra.mxu0 %v9074
        %v9429 = vpop.f32.mrf.mxu0
        %v9430 = vadd.f32 %v9341, %v9429
        %v9431 = vpop.f32.mrf.mxu0
        %v9432 = vadd.f32 %v9343, %v9431
        %9433 = vmatmul.bf16.gmra.mxu0 %v9077
        %v9434 = vpop.f32.mrf.mxu0
        %v9435 = vadd.f32 %v9346, %v9434
        %v9436 = vpop.f32.mrf.mxu0
        %v9437 = vadd.f32 %v9348, %v9436
        %9438 = vmatmul.bf16.gmra.mxu0 %v9080
        %v9439 = vpop.f32.mrf.mxu0
        %v9440 = vadd.f32 %v9351, %v9439
        %v9441 = vpop.f32.mrf.mxu0
        %v9442 = vadd.f32 %v9353, %v9441
        %9443 = vmatmul.bf16.gmra.mxu0 %v9083
        %v9444 = vpop.f32.mrf.mxu0
        %v9445 = vadd.f32 %v9356, %v9444
        %v9446 = vpop.f32.mrf.mxu0
        %v9447 = vadd.f32 %v9358, %v9446
        %9448 = vmatmul.bf16.gmra.mxu0 %v9086
        %v9449 = vpop.f32.mrf.mxu0
        %v9450 = vadd.f32 %v9361, %v9449
        %v9451 = vpop.f32.mrf.mxu0
        %v9452 = vadd.f32 %v9363, %v9451
        %9453 = vmatmul.bf16.gmra.mxu0 %v9089
        %v9454 = vpop.f32.mrf.mxu0
        %v9455 = vadd.f32 %v9366, %v9454
        %v9456 = vpop.f32.mrf.mxu0
        %v9457 = vadd.f32 %v9368, %v9456
        %9458 = vmatmul.bf16.gmra.mxu0 %v9092
        %v9459 = vpop.f32.mrf.mxu0
        %v9460 = vadd.f32 %v9371, %v9459
        %v9461 = vpop.f32.mrf.mxu0
        %v9462 = vadd.f32 %v9373, %v9461
        %9463 = vdwg.mxu0
        %9464 = vmatpush.bf16.msra.mxu0 %v9261
        %9465 = vmatpush.bf16.msra.mxu0 %v9260
        %9466 = vmatpush.bf16.msra.mxu0 %v9259
        %9467 = vmatpush.bf16.msra.mxu0 %v9258
        %9468 = vmatpush.bf16.msra.mxu0 %v9257
        %9469 = vmatpush.bf16.msra.mxu0 %v9256
        %9470 = vmatpush.bf16.msra.mxu0 %v9255
        %9471 = vmatpush.bf16.msra.mxu0 %v9254
        %9472 = vmatmul.bf16.gmra.mxu0 %v9048
        %v9473 = vpop.f32.mrf.mxu0
        %v9474 = vadd.f32 %v9385, %v9473
        %v9475 = vpop.f32.mrf.mxu0
        %v9476 = vadd.f32 %v9387, %v9475
        %9477 = vmatmul.bf16.gmra.mxu0 %v9051
        %v9478 = vpop.f32.mrf.mxu0
        %v9479 = vadd.f32 %v9390, %v9478
        %v9480 = vpop.f32.mrf.mxu0
        %v9481 = vadd.f32 %v9392, %v9480
        %9482 = vmatmul.bf16.gmra.mxu0 %v9054
        %v9483 = vpop.f32.mrf.mxu0
        %v9484 = vadd.f32 %v9395, %v9483
        %v9485 = vpop.f32.mrf.mxu0
        %v9486 = vadd.f32 %v9397, %v9485
        %9487 = vmatmul.bf16.gmra.mxu0 %v9057
        %v9488 = vpop.f32.mrf.mxu0
        %v9489 = vadd.f32 %v9400, %v9488
        %v9490 = vpop.f32.mrf.mxu0
        %v9491 = vadd.f32 %v9402, %v9490
        %9492 = vmatmul.bf16.gmra.mxu0 %v9060
        %v9493 = vpop.f32.mrf.mxu0
        %v9494 = vadd.f32 %v9405, %v9493
        %v9495 = vpop.f32.mrf.mxu0
        %v9496 = vadd.f32 %v9407, %v9495
        %9497 = vmatmul.bf16.gmra.mxu0 %v9063
        %v9498 = vpop.f32.mrf.mxu0
        %v9499 = vadd.f32 %v9410, %v9498
        %v9500 = vpop.f32.mrf.mxu0
        %v9501 = vadd.f32 %v9412, %v9500
        %9502 = vmatmul.bf16.gmra.mxu0 %v9066
        %v9503 = vpop.f32.mrf.mxu0
        %v9504 = vadd.f32 %v9415, %v9503
        %v9505 = vpop.f32.mrf.mxu0
        %v9506 = vadd.f32 %v9417, %v9505
        %9507 = vmatmul.bf16.gmra.mxu0 %v9069
        %v9508 = vpop.f32.mrf.mxu0
        %v9509 = vadd.f32 %v9420, %v9508
        %v9510 = vpop.f32.mrf.mxu0
        %v9511 = vadd.f32 %v9422, %v9510
        %9512 = vmatmul.bf16.gmra.mxu0 %v9072
        %v9513 = vpop.f32.mrf.mxu0
        %v9514 = vadd.f32 %v9425, %v9513
        %v9515 = vpop.f32.mrf.mxu0
        %v9516 = vadd.f32 %v9427, %v9515
        %9517 = vmatmul.bf16.gmra.mxu0 %v9075
        %v9518 = vpop.f32.mrf.mxu0
        %v9519 = vadd.f32 %v9430, %v9518
        %v9520 = vpop.f32.mrf.mxu0
        %v9521 = vadd.f32 %v9432, %v9520
        %9522 = vmatmul.bf16.gmra.mxu0 %v9078
        %v9523 = vpop.f32.mrf.mxu0
        %v9524 = vadd.f32 %v9435, %v9523
        %v9525 = vpop.f32.mrf.mxu0
        %v9526 = vadd.f32 %v9437, %v9525
        %9527 = vmatmul.bf16.gmra.mxu0 %v9081
        %v9528 = vpop.f32.mrf.mxu0
        %v9529 = vadd.f32 %v9440, %v9528
        %v9530 = vpop.f32.mrf.mxu0
        %v9531 = vadd.f32 %v9442, %v9530
        %9532 = vmatmul.bf16.gmra.mxu0 %v9084
        %v9533 = vpop.f32.mrf.mxu0
        %v9534 = vadd.f32 %v9445, %v9533
        %v9535 = vpop.f32.mrf.mxu0
        %v9536 = vadd.f32 %v9447, %v9535
        %9537 = vmatmul.bf16.gmra.mxu0 %v9087
        %v9538 = vpop.f32.mrf.mxu0
        %v9539 = vadd.f32 %v9450, %v9538
        %v9540 = vpop.f32.mrf.mxu0
        %v9541 = vadd.f32 %v9452, %v9540
        %9542 = vmatmul.bf16.gmra.mxu0 %v9090
        %v9543 = vpop.f32.mrf.mxu0
        %v9544 = vadd.f32 %v9455, %v9543
        %v9545 = vpop.f32.mrf.mxu0
        %v9546 = vadd.f32 %v9457, %v9545
        %9547 = vmatmul.bf16.gmra.mxu0 %v9093
        %v9548 = vpop.f32.mrf.mxu0
        %v9549 = vadd.f32 %v9460, %v9548
        %v9550 = vpop.f32.mrf.mxu0
        %v9551 = vadd.f32 %v9462, %v9550
        %9552 = vdwg.mxu0
        %v9553 = vld [vmem:[%s192] sm:$0xff]
        %v9554 = vld [vmem:[%s192 + $0x8] sm:$0xff]
        %v9555 = vld [vmem:[%s192 + $0x10] sm:$0xff]
        %v9556 = vld [vmem:[%s192 + $0x18] sm:$0xff]
        %v9557 = vld [vmem:[%s192 + $0x20] sm:$0xff]
        %v9558 = vld [vmem:[%s192 + $0x28] sm:$0xff]
        %v9559 = vld [vmem:[%s192 + $0x30] sm:$0xff]
        %v9560 = vld [vmem:[%s192 + $0x38] sm:$0xff]
        %v9561 = vld [vmem:[%s192 + $0x40] sm:$0xff]
        %v9562 = vld [vmem:[%s192 + $0x48] sm:$0xff]
        %v9563 = vld [vmem:[%s192 + $0x50] sm:$0xff]
        %v9564 = vld [vmem:[%s192 + $0x58] sm:$0xff]
        %v9565 = vld [vmem:[%s192 + $0x60] sm:$0xff]
        %v9566 = vld [vmem:[%s192 + $0x68] sm:$0xff]
        %v9567 = vld [vmem:[%s192 + $0x70] sm:$0xff]
        %v9568 = vld [vmem:[%s192 + $0x78] sm:$0xff]
        %v9569 = vld [vmem:[%s192 + $0x80] sm:$0xff]
        %v9570 = vld [vmem:[%s192 + $0x88] sm:$0xff]
        %v9571 = vld [vmem:[%s192 + $0x90] sm:$0xff]
        %v9572 = vld [vmem:[%s192 + $0x98] sm:$0xff]
        %v9573 = vld [vmem:[%s192 + $0xa0] sm:$0xff]
        %v9574 = vld [vmem:[%s192 + $0xa8] sm:$0xff]
        %v9575 = vld [vmem:[%s192 + $0xb0] sm:$0xff]
        %v9576 = vld [vmem:[%s192 + $0xb8] sm:$0xff]
        %v9577 = vld [vmem:[%s192 + $0xc0] sm:$0xff]
        %v9578 = vld [vmem:[%s192 + $0xc8] sm:$0xff]
        %v9579 = vld [vmem:[%s192 + $0xd0] sm:$0xff]
        %v9580 = vld [vmem:[%s192 + $0xd8] sm:$0xff]
        %v9581 = vld [vmem:[%s192 + $0xe0] sm:$0xff]
        %v9582 = vld [vmem:[%s192 + $0xe8] sm:$0xff]
        %v9583 = vld [vmem:[%s192 + $0xf0] sm:$0xff]
        %v9584 = vld [vmem:[%s192 + $0xf8] sm:$0xff]
        %v9585 = vadd.f32 %v9474, %v9553
        %v9586 = vadd.f32 %v9476, %v9554
        %v9587 = vadd.f32 %v9479, %v9555
        %v9588 = vadd.f32 %v9481, %v9556
        %v9589 = vadd.f32 %v9484, %v9557
        %v9590 = vadd.f32 %v9486, %v9558
        %v9591 = vadd.f32 %v9489, %v9559
        %v9592 = vadd.f32 %v9491, %v9560
        %v9593 = vadd.f32 %v9494, %v9561
        %v9594 = vadd.f32 %v9496, %v9562
        %v9595 = vadd.f32 %v9499, %v9563
        %v9596 = vadd.f32 %v9501, %v9564
        %v9597 = vadd.f32 %v9504, %v9565
        %v9598 = vadd.f32 %v9506, %v9566
        %v9599 = vadd.f32 %v9509, %v9567
        %v9600 = vadd.f32 %v9511, %v9568
        %v9601 = vadd.f32 %v9514, %v9569
        %v9602 = vadd.f32 %v9516, %v9570
        %v9603 = vadd.f32 %v9519, %v9571
        %v9604 = vadd.f32 %v9521, %v9572
        %v9605 = vadd.f32 %v9524, %v9573
        %v9606 = vadd.f32 %v9526, %v9574
        %v9607 = vadd.f32 %v9529, %v9575
        %v9608 = vadd.f32 %v9531, %v9576
        %v9609 = vadd.f32 %v9534, %v9577
        %v9610 = vadd.f32 %v9536, %v9578
        %v9611 = vadd.f32 %v9539, %v9579
        %v9612 = vadd.f32 %v9541, %v9580
        %v9613 = vadd.f32 %v9544, %v9581
        %v9614 = vadd.f32 %v9546, %v9582
        %v9615 = vadd.f32 %v9549, %v9583
        %v9616 = vadd.f32 %v9551, %v9584
        %vm9617 = vcmp.gt.f32.partialorder %v9585, 0.0
        %vm9618 = vcmp.gt.f32.partialorder %v9586, 0.0
        %vm9619 = vcmp.gt.f32.partialorder %v9587, 0.0
        %vm9620 = vcmp.gt.f32.partialorder %v9588, 0.0
        %vm9621 = vcmp.gt.f32.partialorder %v9589, 0.0
        %vm9622 = vcmp.gt.f32.partialorder %v9590, 0.0
        %vm9623 = vcmp.gt.f32.partialorder %v9591, 0.0
        %vm9624 = vcmp.gt.f32.partialorder %v9592, 0.0
        %vm9625 = vcmp.gt.f32.partialorder %v9593, 0.0
        %vm9626 = vcmp.gt.f32.partialorder %v9594, 0.0
        %vm9627 = vcmp.gt.f32.partialorder %v9595, 0.0
        %vm9628 = vcmp.gt.f32.partialorder %v9596, 0.0
        %vm9629 = vcmp.gt.f32.partialorder %v9597, 0.0
        %vm9630 = vcmp.gt.f32.partialorder %v9598, 0.0
        %vm9631 = vcmp.gt.f32.partialorder %v9599, 0.0
        %vm9632 = vcmp.gt.f32.partialorder %v9600, 0.0
        %vm9633 = vcmp.gt.f32.partialorder %v9601, 0.0
        %vm9634 = vcmp.gt.f32.partialorder %v9602, 0.0
        %vm9635 = vcmp.gt.f32.partialorder %v9603, 0.0
        %vm9636 = vcmp.gt.f32.partialorder %v9604, 0.0
        %vm9637 = vcmp.gt.f32.partialorder %v9605, 0.0
        %vm9638 = vcmp.gt.f32.partialorder %v9606, 0.0
        %vm9639 = vcmp.gt.f32.partialorder %v9607, 0.0
        %vm9640 = vcmp.gt.f32.partialorder %v9608, 0.0
        %vm9641 = vcmp.gt.f32.partialorder %v9609, 0.0
        %vm9642 = vcmp.gt.f32.partialorder %v9610, 0.0
        %vm9643 = vcmp.gt.f32.partialorder %v9611, 0.0
        %vm9644 = vcmp.gt.f32.partialorder %v9612, 0.0
        %vm9645 = vcmp.gt.f32.partialorder %v9613, 0.0
        %vm9646 = vcmp.gt.f32.partialorder %v9614, 0.0
        %vm9647 = vcmp.gt.f32.partialorder %v9615, 0.0
        %vm9648 = vcmp.gt.f32.partialorder %v9616, 0.0
        %v9649 = vmul.f32 %v9585, 0.333
        %v9650 = vmul.f32 %v9586, 0.333
        %v9651 = vmul.f32 %v9587, 0.333
        %v9652 = vmul.f32 %v9588, 0.333
        %v9653 = vmul.f32 %v9589, 0.333
        %v9654 = vmul.f32 %v9590, 0.333
        %v9655 = vmul.f32 %v9591, 0.333
        %v9656 = vmul.f32 %v9592, 0.333
        %v9657 = vmul.f32 %v9593, 0.333
        %v9658 = vmul.f32 %v9594, 0.333
        %v9659 = vmul.f32 %v9595, 0.333
        %v9660 = vmul.f32 %v9596, 0.333
        %v9661 = vmul.f32 %v9597, 0.333
        %v9662 = vmul.f32 %v9598, 0.333
        %v9663 = vmul.f32 %v9599, 0.333
        %v9664 = vmul.f32 %v9600, 0.333
        %v9665 = vmul.f32 %v9601, 0.333
        %v9666 = vmul.f32 %v9602, 0.333
        %v9667 = vmul.f32 %v9603, 0.333
        %v9668 = vmul.f32 %v9604, 0.333
        %v9669 = vmul.f32 %v9605, 0.333
        %v9670 = vmul.f32 %v9606, 0.333
        %v9671 = vmul.f32 %v9607, 0.333
        %v9672 = vmul.f32 %v9608, 0.333
        %v9673 = vmul.f32 %v9609, 0.333
        %v9674 = vmul.f32 %v9610, 0.333
        %v9675 = vmul.f32 %v9611, 0.333
        %v9676 = vmul.f32 %v9612, 0.333
        %v9677 = vmul.f32 %v9613, 0.333
        %v9678 = vmul.f32 %v9614, 0.333
        %v9679 = vmul.f32 %v9615, 0.333
        %v9680 = vmul.f32 %v9616, 0.333
        %v9681 = vsel %vm9617, %v9585, %v9649
        %v9682 = vsel %vm9618, %v9586, %v9650
        %v9683 = vsel %vm9619, %v9587, %v9651
        %v9684 = vsel %vm9620, %v9588, %v9652
        %v9685 = vsel %vm9621, %v9589, %v9653
        %v9686 = vsel %vm9622, %v9590, %v9654
        %v9687 = vsel %vm9623, %v9591, %v9655
        %v9688 = vsel %vm9624, %v9592, %v9656
        %v9689 = vsel %vm9625, %v9593, %v9657
        %v9690 = vsel %vm9626, %v9594, %v9658
        %v9691 = vsel %vm9627, %v9595, %v9659
        %v9692 = vsel %vm9628, %v9596, %v9660
        %v9693 = vsel %vm9629, %v9597, %v9661
        %v9694 = vsel %vm9630, %v9598, %v9662
        %v9695 = vsel %vm9631, %v9599, %v9663
        %v9696 = vsel %vm9632, %v9600, %v9664
        %v9697 = vsel %vm9633, %v9601, %v9665
        %v9698 = vsel %vm9634, %v9602, %v9666
        %v9699 = vsel %vm9635, %v9603, %v9667
        %v9700 = vsel %vm9636, %v9604, %v9668
        %v9701 = vsel %vm9637, %v9605, %v9669
        %v9702 = vsel %vm9638, %v9606, %v9670
        %v9703 = vsel %vm9639, %v9607, %v9671
        %v9704 = vsel %vm9640, %v9608, %v9672
        %v9705 = vsel %vm9641, %v9609, %v9673
        %v9706 = vsel %vm9642, %v9610, %v9674
        %v9707 = vsel %vm9643, %v9611, %v9675
        %v9708 = vsel %vm9644, %v9612, %v9676
        %v9709 = vsel %vm9645, %v9613, %v9677
        %v9710 = vsel %vm9646, %v9614, %v9678
        %v9711 = vsel %vm9647, %v9615, %v9679
        %v9712 = vsel %vm9648, %v9616, %v9680
        %9713 = vst.msk [vmem:[%s217] sm:$0xff] %vm1488, %v9681
        %9714 = vst.msk [vmem:[%s217 + $0x8] sm:$0xff] %vm1488, %v9682
        %9715 = vst.msk [vmem:[%s217 + $0x10] sm:$0xff] %vm1488, %v9683
        %9716 = vst.msk [vmem:[%s217 + $0x18] sm:$0xff] %vm1488, %v9684
        %9717 = vst.msk [vmem:[%s217 + $0x20] sm:$0xff] %vm1488, %v9685
        %9718 = vst.msk [vmem:[%s217 + $0x28] sm:$0xff] %vm1488, %v9686
        %9719 = vst.msk [vmem:[%s217 + $0x30] sm:$0xff] %vm1488, %v9687
        %9720 = vst.msk [vmem:[%s217 + $0x38] sm:$0xff] %vm1488, %v9688
        %9721 = vst.msk [vmem:[%s217 + $0x40] sm:$0xff] %vm1488, %v9689
        %9722 = vst.msk [vmem:[%s217 + $0x48] sm:$0xff] %vm1488, %v9690
        %9723 = vst.msk [vmem:[%s217 + $0x50] sm:$0xff] %vm1488, %v9691
        %9724 = vst.msk [vmem:[%s217 + $0x58] sm:$0xff] %vm1488, %v9692
        %9725 = vst.msk [vmem:[%s217 + $0x60] sm:$0xff] %vm1488, %v9693
        %9726 = vst.msk [vmem:[%s217 + $0x68] sm:$0xff] %vm1488, %v9694
        %9727 = vst.msk [vmem:[%s217 + $0x70] sm:$0xff] %vm1488, %v9695
        %9728 = vst.msk [vmem:[%s217 + $0x78] sm:$0xff] %vm1488, %v9696
        %9729 = vst.msk [vmem:[%s217 + $0x80] sm:$0xff] %vm1488, %v9697
        %9730 = vst.msk [vmem:[%s217 + $0x88] sm:$0xff] %vm1488, %v9698
        %9731 = vst.msk [vmem:[%s217 + $0x90] sm:$0xff] %vm1488, %v9699
        %9732 = vst.msk [vmem:[%s217 + $0x98] sm:$0xff] %vm1488, %v9700
        %9733 = vst.msk [vmem:[%s217 + $0xa0] sm:$0xff] %vm1488, %v9701
        %9734 = vst.msk [vmem:[%s217 + $0xa8] sm:$0xff] %vm1488, %v9702
        %9735 = vst.msk [vmem:[%s217 + $0xb0] sm:$0xff] %vm1488, %v9703
        %9736 = vst.msk [vmem:[%s217 + $0xb8] sm:$0xff] %vm1488, %v9704
        %9737 = vst.msk [vmem:[%s217 + $0xc0] sm:$0xff] %vm1488, %v9705
        %9738 = vst.msk [vmem:[%s217 + $0xc8] sm:$0xff] %vm1488, %v9706
        %9739 = vst.msk [vmem:[%s217 + $0xd0] sm:$0xff] %vm1488, %v9707
        %9740 = vst.msk [vmem:[%s217 + $0xd8] sm:$0xff] %vm1488, %v9708
        %9741 = vst.msk [vmem:[%s217 + $0xe0] sm:$0xff] %vm1488, %v9709
        %9742 = vst.msk [vmem:[%s217 + $0xe8] sm:$0xff] %vm1488, %v9710
        %9743 = vst.msk [vmem:[%s217 + $0xf0] sm:$0xff] %vm1488, %v9711
        %9744 = vst.msk [vmem:[%s217 + $0xf8] sm:$0xff] %vm1488, %v9712
        %s9745 = sand.u32 %s118, 1
        %s9746 = scalar_lea.sflag [#allocation6], %s9745
        %s9747 = sand.u32 %s118, 1
        %s9748 = smul.addr %s9747, 256
        %s9749 = scalar_lea.vmem [#allocation7], %s9748
        // Predicated region
        $region41: #{tpu_custom_call.1} parent=35 // pred_check
          %p9750 = pneg %p128
        $region42: #{tpu_custom_call.1} parent=35 // pred_check_branch
          %9752 = sbr.rel (%p9750) target = $region44
        $region43: #{tpu_custom_call.1} parent=35 // pred_region
          %9754 = vsyncadd %s9746, 0
          %s9755 = smul.addr %s21, 32
          %s9756 = smul.addr %s9755, 8
          %s9757 = scalar_lea.hbm %s4, %s9756
          %s9758 = sshll.u32 %s9749, 4
          %s9759 = int_to_ptr.vmem [resolvable:$true] %s9758
          %s9760 = sshll.u32 %s9757, 4
          %s9761 = int_to_ptr.hbm [resolvable:$true] %s9760
          %9766 = dma.vmem_to_hbm [thread:$0]  %s9759, 4096, %s9761, %s9746, 128, 128, 8
        $region44: #{tpu_custom_call.1} parent=35 // pred_fallthru
          _
      $region36: #{tpu_custom_call.1} parent=5 // pred_fallthru
        _
      %p9767 = scmp.le.s32.totalorder 2, %s16
      // Predicated region
      $region45: #{tpu_custom_call.1} parent=5 // pred_check
        %p9768 = pneg %p9767
      $region46: #{tpu_custom_call.1} parent=5 // pred_check_branch
        %9770 = sbr.rel (%p9768) target = $region48
      $region47: #{tpu_custom_call.1} parent=5 // pred_region
        %s9771 = ssub.s32 %s16, 2
        // Predicated region
        $region49: #{tpu_custom_call.1} parent=47 // pred_check
          %p9772 = pneg %p134
        $region50: #{tpu_custom_call.1} parent=47 // pred_check_branch
          %9774 = sbr.rel (%p9772) target = $region52
        $region51: #{tpu_custom_call.1} parent=47 // pred_region
          %s9775 = sand.u32 %s119, 1
          %s9776 = scalar_lea.sflag [#allocation6], %s9775
          %s9777 = sand.u32 %s119, 1
          %s9778 = smul.addr %s9777, 256
          %s9779 = scalar_lea.vmem [#allocation7], %s9778
          %9781 = dma.done %s9776, 4096
        $region52: #{tpu_custom_call.1} parent=47 // pred_fallthru
          _
      $region48: #{tpu_custom_call.1} parent=5 // pred_fallthru
        _
    $region6: #{tpu_custom_call.1} parent=1 // loop_footer
      %s20 = sadd.s32 1, %s16
    $region7: #{tpu_custom_call.1} parent=1 // loop_footer_branch
      %15 = sbr.rel target = $region3
    $region8: #{tpu_custom_call.1} parent=1 // loop_exit
      _
    %9782 = vsyncpa [#allocation5], 1
    %s9783 = scalar_lea.sflag [#allocation5], 1
    %9784 = vsyncpa %s9783, 1
    %9785 = vsyncpa [#allocation6], 1
    %s9786 = scalar_lea.sflag [#allocation6], 1
    %9787 = vsyncpa %s9786, 1

</llo_original>
